<compile_context>
chip_gen: v7x
topology: tpu7x:2x2x1
jax: 0.10.0
libtpu: 0.0.40
codegen_flags: <defaults>
</compile_context>

<pallas_src>
from functools import partial
import math

import jax
import jax.numpy as jnp
from jax import lax
from jax.experimental import pallas as pl
from jax.experimental.pallas import tpu as pltpu

# MXU operand dtype (accumulation is always f32 via preferred_element_type).
MATMUL_DTYPE = jnp.bfloat16


def _round_up(a, b):
    return ((a + b - 1) // b) * b


# ----------------------------------------------------------------------------
# Kernel 1: K/V prep — query_mlp + all four K/V projections, once per batch.
# ----------------------------------------------------------------------------
def _kv_prep_kernel(*refs, num_mlp_layers):
    q_ref, word_ref, tpos_ref = refs[:3]
    idx = 3
    mlp = refs[idx: idx + 2 * num_mlp_layers]; idx += 2 * num_mlp_layers
    wk1, bk1, wv1, bv1, wk2, bk2, wv2, bv2 = refs[idx: idx + 8]; idx += 8
    k1_ref, v1_ref, k2_ref, v2_ref = refs[idx: idx + 4]

    cdt = MATMUL_DTYPE

    def proj(xf32, w_ref, b_ref):
        return jnp.dot(xf32.astype(cdt), w_ref[...],
                       preferred_element_type=jnp.float32) + b_ref[...]

    # query_mlp (Linear layers, ReLU between all but the last).
    h = q_ref[0].astype(jnp.float32)                           # (nq, Cin)
    for i in range(num_mlp_layers):
        h = proj(h, mlp[2 * i], mlp[2 * i + 1])
        if i < num_mlp_layers - 1:
            h = jnp.maximum(h, 0.0)
    # h: (nq, E) — projected queries (key/value source of MHA1)

    k1_ref[0] = proj(h, wk1, bk1).astype(k1_ref.dtype)
    v1_ref[0] = proj(h, wv1, bv1).astype(v1_ref.dtype)

    word = word_ref[0].astype(jnp.float32)                     # (nw, E)
    wtp = word + tpos_ref[0].astype(jnp.float32)               # key source of MHA2
    k2_ref[0] = proj(wtp, wk2, bk2).astype(k2_ref.dtype)
    v2_ref[0] = proj(word, wv2, bv2).astype(v2_ref.dtype)


def kv_prep_pallas(query, word, txt_pos_b, p):
    """query:(B,nq,Cin) word:(B,nw,E) txt_pos_b:(B,nw,E) -> K1,V1:(B,nq,E) K2,V2:(B,nw,E)."""
    B, nq, cin = query.shape
    nw = word.shape[1]
    E = p["attn1"]["wk"].shape[1]
    nl = len(p["query_mlp_w"])
    kv_dt = MATMUL_DTYPE

    args = [query, word, txt_pos_b]
    in_specs = [
        pl.BlockSpec((1, nq, cin), lambda b: (b, 0, 0)),
        pl.BlockSpec((1, nw, E), lambda b: (b, 0, 0)),
        pl.BlockSpec((1, nw, E), lambda b: (b, 0, 0)),
    ]
    for w, bb in zip(p["query_mlp_w"], p["query_mlp_b"]):
        args += [w, bb]
        in_specs += [pl.BlockSpec(w.shape, lambda b: (0, 0)),
                     pl.BlockSpec(bb.shape, lambda b: (0, 0))]
    for name in ("attn1", "attn2"):
        for wn, bn in (("wk", "bk"), ("wv", "bv")):
            w, bb = p[name][wn], p[name][bn]
            args += [w, bb]
            in_specs += [pl.BlockSpec(w.shape, lambda b: (0, 0)),
                         pl.BlockSpec(bb.shape, lambda b: (0, 0))]

    out_shape = (jax.ShapeDtypeStruct((B, nq, E), kv_dt),
                 jax.ShapeDtypeStruct((B, nq, E), kv_dt),
                 jax.ShapeDtypeStruct((B, nw, E), kv_dt),
                 jax.ShapeDtypeStruct((B, nw, E), kv_dt))
    out_specs = (pl.BlockSpec((1, nq, E), lambda b: (b, 0, 0)),
                 pl.BlockSpec((1, nq, E), lambda b: (b, 0, 0)),
                 pl.BlockSpec((1, nw, E), lambda b: (b, 0, 0)),
                 pl.BlockSpec((1, nw, E), lambda b: (b, 0, 0)))

    return pl.pallas_call(
        partial(_kv_prep_kernel, num_mlp_layers=nl),
        out_shape=out_shape,
        grid=(B,),
        in_specs=in_specs,
        out_specs=out_specs,
        compiler_params=pltpu.CompilerParams(dimension_semantics=("parallel",)),
    )(*args)


# ----------------------------------------------------------------------------
# Kernel 2: fused per-pixel chain  pix_mlp -> +vis -> MHA1 -> +vis -> MHA2.
# ----------------------------------------------------------------------------
def _pix_chain_kernel(*refs, num_mlp_layers, num_heads):
    x_ref, vis_ref, k1_ref, v1_ref, k2_ref, v2_ref = refs[:6]
    idx = 6
    mlp = refs[idx: idx + 2 * num_mlp_layers]; idx += 2 * num_mlp_layers
    wq1, bq1, wo1, bo1, wq2, bq2, wo2, bo2 = refs[idx: idx + 8]; idx += 8
    o_ref = refs[idx]

    cdt = MATMUL_DTYPE

    # ---- pix_mlp on the (Cin, TL) tile: first layer contracts Cin directly
    #      (feature map consumed in native NC(hw) layout, no transpose).
    xt = x_ref[0].astype(cdt)                                   # (Cin, TL)
    h = lax.dot_general(xt, mlp[0][...], (((0,), (0,)), ((), ())),
                        preferred_element_type=jnp.float32) + mlp[1][...]
    if num_mlp_layers > 1:
        h = jnp.maximum(h, 0.0)
    for i in range(1, num_mlp_layers):
        h = jnp.dot(h.astype(cdt), mlp[2 * i][...],
                    preferred_element_type=jnp.float32) + mlp[2 * i + 1][...]
        if i < num_mlp_layers - 1:
            h = jnp.maximum(h, 0.0)
    # h: (TL, E) f32 — per-pixel embedding

    vis = vis_ref[0].astype(jnp.float32)                        # (TL, E)
    E = h.shape[-1]
    dh = E // num_heads

    def mha(q_in, k_ref, v_ref, wq_ref, bq_ref, wo_ref, bo_ref):
        # q_in (TL, E) f32; 1/sqrt(dh) already folded into wq/bq.
        q = jnp.dot(q_in.astype(cdt), wq_ref[...],
                    preferred_element_type=jnp.float32) + bq_ref[...]
        k_all = k_ref[0]                                        # (S, E) bf16
        v_all = v_ref[0]
        out = None
        for hd in range(num_heads):                             # static unroll
            lo, hi = hd * dh, (hd + 1) * dh
            qh = q[:, lo:hi].astype(cdt)                        # (TL, dh)
            kh = k_all[:, lo:hi]                                # (S, dh)
            vh = v_all[:, lo:hi]                                # (S, dh)
            # Scores laid out (S, TL): S keys on sublanes, TL lane-dense.
            s = lax.dot_general(kh, qh, (((1,), (1,)), ((), ())),
                                preferred_element_type=jnp.float32)      # (S, TL)
            m = jnp.max(s, axis=0, keepdims=True)                        # (1, TL)
            p = jnp.exp(s - m)
            denom = jnp.sum(p, axis=0, keepdims=True)
            p = p * pl.reciprocal(denom, approx=True)           # EUP slot
            hout = lax.dot_general(p.astype(cdt), vh, (((0,), (0,)), ((), ())),
                                   preferred_element_type=jnp.float32)   # (TL, dh)
            # Per-head accumulation through a static sublane slice of wo
            # (no lane-shuffling head concat).
            contrib = jnp.dot(hout.astype(cdt), wo_ref[lo:hi, :],
                              preferred_element_type=jnp.float32)        # (TL, E)
            out = contrib if out is None else out + contrib
        return out + bo_ref[...]

    pix1 = mha(h + vis, k1_ref, v1_ref, wq1, bq1, wo1, bo1)     # (TL, E)
    mask = mha(pix1 + vis, k2_ref, v2_ref, wq2, bq2, wo2, bo2)  # (TL, E)

    # Store transposed: output already (B, E, hw); lane-dense (TL mult. of 128).
    o_ref[0] = mask.T.astype(o_ref.dtype)


def pix_chain_pallas(x_flat, vis_pos_b, k1, v1, k2, v2, p, *, num_heads, tl_cap=256):
    """x_flat:(B,Cin,hw) vis_pos_b:(B,hw,E) -> (B, E, hw)."""
    B, cin, hw = x_flat.shape
    E = p["attn1"]["wq"].shape[0]
    nq, nw = k1.shape[1], k2.shape[1]
    nl = len(p["pix_mlp_w"])

    TL = min(tl_cap, _round_up(hw, 128))
    # Keep >= 2 total parallel grid steps so both v7x TensorCores get work.
    if (B * (_round_up(hw, TL) // TL)) < 2 and TL > 128:
        TL = 128
    hw_p = _round_up(hw, TL)
    if hw_p != hw:
        x_flat = jnp.pad(x_flat, ((0, 0), (0, 0), (0, hw_p - hw)))
        vis_pos_b = jnp.pad(vis_pos_b, ((0, 0), (0, hw_p - hw), (0, 0)))

    in_specs = [
        pl.BlockSpec((1, cin, TL), lambda b, l: (b, 0, l)),
        pl.BlockSpec((1, TL, E), lambda b, l: (b, l, 0)),
        pl.BlockSpec((1, nq, E), lambda b, l: (b, 0, 0)),
        pl.BlockSpec((1, nq, E), lambda b, l: (b, 0, 0)),
        pl.BlockSpec((1, nw, E), lambda b, l: (b, 0, 0)),
        pl.BlockSpec((1, nw, E), lambda b, l: (b, 0, 0)),
    ]
    args = [x_flat, vis_pos_b, k1, v1, k2, v2]
    for w, bb in zip(p["pix_mlp_w"], p["pix_mlp_b"]):
        args += [w, bb]
        in_specs += [pl.BlockSpec(w.shape, lambda b, l: (0, 0)),
                     pl.BlockSpec(bb.shape, lambda b, l: (0, 0))]
    for name in ("attn1", "attn2"):
        for wn, bn in (("wq", "bq"), ("wo", "bo")):
            w, bb = p[name][wn], p[name][bn]
            args += [w, bb]
            in_specs += [pl.BlockSpec(w.shape, lambda b, l: (0, 0)),
                         pl.BlockSpec(bb.shape, lambda b, l: (0, 0))]

    out = pl.pallas_call(
        partial(_pix_chain_kernel, num_mlp_layers=nl, num_heads=num_heads),
        out_shape=jax.ShapeDtypeStruct((B, E, hw_p), x_flat.dtype),
        grid=(B, hw_p // TL),
        in_specs=in_specs,
        out_specs=pl.BlockSpec((1, E, TL), lambda b, l: (b, 0, l)),
        compiler_params=pltpu.CompilerParams(
            dimension_semantics=("parallel", "parallel")),
    )(*args)
    return out[:, :, :hw] if hw_p != hw else out


# ----------------------------------------------------------------------------
# Full module forward
# ----------------------------------------------------------------------------
def mlp_mask_decoder_forward(params, word, vis_pos, txt_pos, query, x,
                             *, num_heads=4, tl_cap=256):
    """word:(b,nw,E) vis_pos:(hw,b,E) txt_pos:(nw,b,E) query:(b,nq,Cin)
    x:(b,Cin,h,w) -> (b, E, hw).
    TODO(synk): attention-weight dropout (p=0.1) is training-only; omitted (eval)."""
    b, nq, cin = query.shape
    _, _, h, w = x.shape
    hw = h * w

    # Tiny per-batch K/V sets (nq, nw ~ 8) projected once in a single fused call.
    txt_pos_b = jnp.transpose(txt_pos, (1, 0, 2))          # (b, nw, E) — tiny
    k1, v1, k2, v2 = kv_prep_pallas(query, word, txt_pos_b, params)

    # Per-pixel chain in one fused call; x consumed in native (b, Cin, hw) layout.
    x_flat = x.reshape(b, cin, hw)                         # metadata-only reshape
    vis_pos_b = jnp.transpose(vis_pos, (1, 0, 2))          # (b, hw, E)
    # TODO(synk): the vis_pos transpose is the only remaining standalone layout
    # op; could be absorbed by blocking the native (hw,b,E) layout directly.
    return pix_chain_pallas(x_flat, vis_pos_b, k1, v1, k2, v2, params,
                            num_heads=num_heads, tl_cap=tl_cap)   # (b, E, hw)


# ----------------------------------------------------------------------------
# Deterministic parameter construction + kernel-ready preparation
# ----------------------------------------------------------------------------
def _mlp_params(key, dims, scale=0.05):
    ws, bs = [], []
    for i in range(len(dims) - 1):
        key, kw, kb = jax.random.split(key, 3)
        ws.append(scale * jax.random.normal(kw, (dims[i], dims[i + 1]), jnp.float32))
        bs.append(scale * jax.random.normal(kb, (dims[i + 1],), jnp.float32))
    return ws, bs, key


def _mha_params(key, embed, scale=0.05):
    p = {}
    for name in ("wq", "wk", "wv", "wo"):
        key, k1 = jax.random.split(key)
        p[name] = scale * jax.random.normal(k1, (embed, embed), jnp.float32)
    for name in ("bq", "bk", "bv", "bo"):
        key, k1 = jax.random.split(key)
        p[name] = scale * jax.random.normal(k1, (embed,), jnp.float32)
    return p, key


def init_params(key, *, in_channels, mlp_channels, embed_channels, mlp_num_layers):
    dims = [in_channels] + [mlp_channels] * (mlp_num_layers - 1) + [embed_channels]
    params = {}
    params["query_mlp_w"], params["query_mlp_b"], key = _mlp_params(key, dims)
    params["pix_mlp_w"], params["pix_mlp_b"], key = _mlp_params(key, dims)
    params["attn1"], key = _mha_params(key, embed_channels)
    params["attn2"], key = _mha_params(key, embed_channels)
    return params


def prepare_params(params, *, num_heads):
    """Kernel-ready params: weights in (in, out) layout cast to MATMUL_DTYPE,
    biases as (1, N) f32, and 1/sqrt(head_dim) folded into wq/bq once.
    NOTE: torch state dicts store Linear weights as (out, in) — transpose when importing."""
    E = params["attn1"]["wq"].shape[0]
    scale = 1.0 / math.sqrt(E // num_heads)
    wdt = MATMUL_DTYPE
    out = {}
    for mlp in ("query_mlp", "pix_mlp"):
        out[mlp + "_w"] = [w.astype(wdt) for w in params[mlp + "_w"]]
        out[mlp + "_b"] = [b.reshape(1, -1).astype(jnp.float32)
                           for b in params[mlp + "_b"]]
    for name in ("attn1", "attn2"):
        a = params[name]
        out[name] = {
            "wq": (a["wq"] * scale).astype(wdt),
            "bq": (a["bq"] * scale).reshape(1, -1).astype(jnp.float32),
            "wk": a["wk"].astype(wdt), "bk": a["bk"].reshape(1, -1).astype(jnp.float32),
            "wv": a["wv"].astype(wdt), "bv": a["bv"].reshape(1, -1).astype(jnp.float32),
            "wo": a["wo"].astype(wdt), "bo": a["bo"].reshape(1, -1).astype(jnp.float32),
        }
    return out


# ----------------------------------------------------------------------------
if __name__ == "__main__":
    B = 2
    IN_CH = 32
    MLP_CH = 64
    EMBED = 64          # divisible by 4 heads -> head_dim 16
    NUM_HEADS = 4
    NQ = 8              # number of queries
    NW = 8              # number of words
    H = W = 16          # spatial; hw = 256
    HW = H * W

    key = jax.random.PRNGKey(0)
    key, k_q, k_x, k_w, k_vp, k_tp = jax.random.split(key, 6)

    query = jax.random.normal(k_q, (B, NQ, IN_CH), jnp.float32)
    x = jax.random.normal(k_x, (B, IN_CH, H, W), jnp.float32)        # NCHW
    word = jax.random.normal(k_w, (B, NW, EMBED), jnp.float32)
    vis_pos = jax.random.normal(k_vp, (HW, B, EMBED), jnp.float32)
    txt_pos = jax.random.normal(k_tp, (NW, B, EMBED), jnp.float32)

    raw_params = init_params(jax.random.PRNGKey(42),
                             in_channels=IN_CH, mlp_channels=MLP_CH,
                             embed_channels=EMBED, mlp_num_layers=3)
    params = prepare_params(raw_params, num_heads=NUM_HEADS)

    fwd = jax.jit(partial(mlp_mask_decoder_forward, num_heads=NUM_HEADS))
    out = fwd(params, word, vis_pos, txt_pos, query, x)
    out = jax.block_until_ready(out)

    assert out.shape == (B, EMBED, HW), out.shape
    assert bool(jnp.all(jnp.isfinite(out)))
    print("KERNEL_OK")
</pallas_src>

<mosaic_0001>
module attributes {stable_mosaic.version = 11 : i64} {
  func.func @_kv_prep_kernel(%arg0: i32, %arg1: memref<1x8x32xf32, #tpu.memory_space<vmem>>, %arg2: memref<1x8x64xf32, #tpu.memory_space<vmem>>, %arg3: memref<1x8x64xf32, #tpu.memory_space<vmem>>, %arg4: memref<32x64xbf16, #tpu.memory_space<vmem>>, %arg5: memref<1x64xf32, #tpu.memory_space<vmem>>, %arg6: memref<64x64xbf16, #tpu.memory_space<vmem>>, %arg7: memref<1x64xf32, #tpu.memory_space<vmem>>, %arg8: memref<64x64xbf16, #tpu.memory_space<vmem>>, %arg9: memref<1x64xf32, #tpu.memory_space<vmem>>, %arg10: memref<64x64xbf16, #tpu.memory_space<vmem>>, %arg11: memref<1x64xf32, #tpu.memory_space<vmem>>, %arg12: memref<64x64xbf16, #tpu.memory_space<vmem>>, %arg13: memref<1x64xf32, #tpu.memory_space<vmem>>, %arg14: memref<64x64xbf16, #tpu.memory_space<vmem>>, %arg15: memref<1x64xf32, #tpu.memory_space<vmem>>, %arg16: memref<64x64xbf16, #tpu.memory_space<vmem>>, %arg17: memref<1x64xf32, #tpu.memory_space<vmem>>, %arg18: memref<1x8x64xbf16, #tpu.memory_space<vmem>>, %arg19: memref<1x8x64xbf16, #tpu.memory_space<vmem>>, %arg20: memref<1x8x64xbf16, #tpu.memory_space<vmem>>, %arg21: memref<1x8x64xbf16, #tpu.memory_space<vmem>>) attributes {dimension_semantics = [#tpu.dimension_semantics<parallel>], iteration_bounds = array<i64: 2>, scalar_prefetch = 0 : i64, scratch_operands = 0 : i64, tpu.core_type = #tpu.core_type<tc>, window_params = [{transform_indices = @transform_0, window_bounds = array<i64: 1, 8, 32>}, {transform_indices = @transform_1, window_bounds = array<i64: 1, 8, 64>}, {transform_indices = @transform_2, window_bounds = array<i64: 1, 8, 64>}, {pipeline_mode = #tpu.pipeline_mode<synchronous>, transform_indices = @transform_3, window_bounds = array<i64: 32, 64>}, {pipeline_mode = #tpu.pipeline_mode<synchronous>, transform_indices = @transform_4, window_bounds = array<i64: 1, 64>}, {pipeline_mode = #tpu.pipeline_mode<synchronous>, transform_indices = @transform_5, window_bounds = array<i64: 64, 64>}, {pipeline_mode = #tpu.pipeline_mode<synchronous>, transform_indices = @transform_6, window_bounds = array<i64: 1, 64>}, {pipeline_mode = #tpu.pipeline_mode<synchronous>, transform_indices = @transform_7, window_bounds = array<i64: 64, 64>}, {pipeline_mode = #tpu.pipeline_mode<synchronous>, transform_indices = @transform_8, window_bounds = array<i64: 1, 64>}, {pipeline_mode = #tpu.pipeline_mode<synchronous>, transform_indices = @transform_9, window_bounds = array<i64: 64, 64>}, {pipeline_mode = #tpu.pipeline_mode<synchronous>, transform_indices = @transform_10, window_bounds = array<i64: 1, 64>}, {pipeline_mode = #tpu.pipeline_mode<synchronous>, transform_indices = @transform_11, window_bounds = array<i64: 64, 64>}, {pipeline_mode = #tpu.pipeline_mode<synchronous>, transform_indices = @transform_12, window_bounds = array<i64: 1, 64>}, {pipeline_mode = #tpu.pipeline_mode<synchronous>, transform_indices = @transform_13, window_bounds = array<i64: 64, 64>}, {pipeline_mode = #tpu.pipeline_mode<synchronous>, transform_indices = @transform_14, window_bounds = array<i64: 1, 64>}, {pipeline_mode = #tpu.pipeline_mode<synchronous>, transform_indices = @transform_15, window_bounds = array<i64: 64, 64>}, {pipeline_mode = #tpu.pipeline_mode<synchronous>, transform_indices = @transform_16, window_bounds = array<i64: 1, 64>}, {transform_indices = @transform_17, window_bounds = array<i64: 1, 8, 64>}, {transform_indices = @transform_18, window_bounds = array<i64: 1, 8, 64>}, {transform_indices = @transform_19, window_bounds = array<i64: 1, 8, 64>}, {transform_indices = @transform_20, window_bounds = array<i64: 1, 8, 64>}]} {
    %c0 = arith.constant 0 : index
    %c0_0 = arith.constant 0 : index
    %c0_1 = arith.constant 0 : index
    %0 = vector.load %arg1[%c0, %c0_0, %c0_1] : memref<1x8x32xf32, #tpu.memory_space<vmem>>, vector<1x8x32xf32>
    %1 = vector.shape_cast %0 : vector<1x8x32xf32> to vector<8x32xf32>
    %2 = arith.truncf %1 : vector<8x32xf32> to vector<8x32xbf16>
    %c0_2 = arith.constant 0 : index
    %c0_3 = arith.constant 0 : index
    %3 = vector.load %arg4[%c0_2, %c0_3] : memref<32x64xbf16, #tpu.memory_space<vmem>>, vector<32x64xbf16>
    %cst = arith.constant dense<0.000000e+00> : vector<8x64xf32>
    %4 = tpu.matmul %2, %3, %cst {dimension_numbers = #tpu.dot_dimension_numbers<[1], [0], [0], [1], [0, 0, 1, 1], [], []>} : vector<8x32xbf16>, vector<32x64xbf16>, vector<8x64xf32> -> vector<8x64xf32>
    %c0_4 = arith.constant 0 : index
    %c0_5 = arith.constant 0 : index
    %5 = vector.load %arg5[%c0_4, %c0_5] : memref<1x64xf32, #tpu.memory_space<vmem>>, vector<1x64xf32>
    %6 = vector.broadcast %5 : vector<1x64xf32> to vector<8x64xf32>
    %7 = arith.addf %4, %6 : vector<8x64xf32>
    %cst_6 = arith.constant 0.000000e+00 : f32
    %8 = vector.broadcast %cst_6 : f32 to vector<8x64xf32>
    %9 = arith.maximumf %7, %8 : vector<8x64xf32>
    %10 = arith.truncf %9 : vector<8x64xf32> to vector<8x64xbf16>
    %c0_7 = arith.constant 0 : index
    %c0_8 = arith.constant 0 : index
    %11 = vector.load %arg6[%c0_7, %c0_8] : memref<64x64xbf16, #tpu.memory_space<vmem>>, vector<64x64xbf16>
    %cst_9 = arith.constant dense<0.000000e+00> : vector<8x64xf32>
    %12 = tpu.matmul %10, %11, %cst_9 {dimension_numbers = #tpu.dot_dimension_numbers<[1], [0], [0], [1], [0, 0, 1, 1], [], []>} : vector<8x64xbf16>, vector<64x64xbf16>, vector<8x64xf32> -> vector<8x64xf32>
    %c0_10 = arith.constant 0 : index
    %c0_11 = arith.constant 0 : index
    %13 = vector.load %arg7[%c0_10, %c0_11] : memref<1x64xf32, #tpu.memory_space<vmem>>, vector<1x64xf32>
    %14 = vector.broadcast %13 : vector<1x64xf32> to vector<8x64xf32>
    %15 = arith.addf %12, %14 : vector<8x64xf32>
    %cst_12 = arith.constant 0.000000e+00 : f32
    %16 = vector.broadcast %cst_12 : f32 to vector<8x64xf32>
    %17 = arith.maximumf %15, %16 : vector<8x64xf32>
    %18 = arith.truncf %17 : vector<8x64xf32> to vector<8x64xbf16>
    %c0_13 = arith.constant 0 : index
    %c0_14 = arith.constant 0 : index
    %19 = vector.load %arg8[%c0_13, %c0_14] : memref<64x64xbf16, #tpu.memory_space<vmem>>, vector<64x64xbf16>
    %cst_15 = arith.constant dense<0.000000e+00> : vector<8x64xf32>
    %20 = tpu.matmul %18, %19, %cst_15 {dimension_numbers = #tpu.dot_dimension_numbers<[1], [0], [0], [1], [0, 0, 1, 1], [], []>} : vector<8x64xbf16>, vector<64x64xbf16>, vector<8x64xf32> -> vector<8x64xf32>
    %c0_16 = arith.constant 0 : index
    %c0_17 = arith.constant 0 : index
    %21 = vector.load %arg9[%c0_16, %c0_17] : memref<1x64xf32, #tpu.memory_space<vmem>>, vector<1x64xf32>
    %22 = vector.broadcast %21 : vector<1x64xf32> to vector<8x64xf32>
    %23 = arith.addf %20, %22 : vector<8x64xf32>
    %24 = arith.truncf %23 : vector<8x64xf32> to vector<8x64xbf16>
    %c0_18 = arith.constant 0 : index
    %c0_19 = arith.constant 0 : index
    %25 = vector.load %arg10[%c0_18, %c0_19] : memref<64x64xbf16, #tpu.memory_space<vmem>>, vector<64x64xbf16>
    %cst_20 = arith.constant dense<0.000000e+00> : vector<8x64xf32>
    %26 = tpu.matmul %24, %25, %cst_20 {dimension_numbers = #tpu.dot_dimension_numbers<[1], [0], [0], [1], [0, 0, 1, 1], [], []>} : vector<8x64xbf16>, vector<64x64xbf16>, vector<8x64xf32> -> vector<8x64xf32>
    %c0_21 = arith.constant 0 : index
    %c0_22 = arith.constant 0 : index
    %27 = vector.load %arg11[%c0_21, %c0_22] : memref<1x64xf32, #tpu.memory_space<vmem>>, vector<1x64xf32>
    %28 = vector.broadcast %27 : vector<1x64xf32> to vector<8x64xf32>
    %29 = arith.addf %26, %28 : vector<8x64xf32>
    %30 = arith.truncf %29 : vector<8x64xf32> to vector<8x64xbf16>
    %c0_23 = arith.constant 0 : index
    %c0_24 = arith.constant 0 : index
    %c0_25 = arith.constant 0 : index
    %31 = vector.load %arg18[%c0_23, %c0_24, %c0_25] : memref<1x8x64xbf16, #tpu.memory_space<vmem>>, vector<1x8x64xbf16>
    %32 = vector.shape_cast %31 : vector<1x8x64xbf16> to vector<8x64xbf16>
    %33 = vector.shape_cast %30 : vector<8x64xbf16> to vector<1x8x64xbf16>
    tpu.vector_store %arg18[%c0_23, %c0_24, %c0_25], %33 {strides = array<i32>} : memref<1x8x64xbf16, #tpu.memory_space<vmem>>, vector<1x8x64xbf16>,
    %34 = arith.truncf %23 : vector<8x64xf32> to vector<8x64xbf16>
    %c0_26 = arith.constant 0 : index
    %c0_27 = arith.constant 0 : index
    %35 = vector.load %arg12[%c0_26, %c0_27] : memref<64x64xbf16, #tpu.memory_space<vmem>>, vector<64x64xbf16>
    %cst_28 = arith.constant dense<0.000000e+00> : vector<8x64xf32>
    %36 = tpu.matmul %34, %35, %cst_28 {dimension_numbers = #tpu.dot_dimension_numbers<[1], [0], [0], [1], [0, 0, 1, 1], [], []>} : vector<8x64xbf16>, vector<64x64xbf16>, vector<8x64xf32> -> vector<8x64xf32>
    %c0_29 = arith.constant 0 : index
    %c0_30 = arith.constant 0 : index
    %37 = vector.load %arg13[%c0_29, %c0_30] : memref<1x64xf32, #tpu.memory_space<vmem>>, vector<1x64xf32>
    %38 = vector.broadcast %37 : vector<1x64xf32> to vector<8x64xf32>
    %39 = arith.addf %36, %38 : vector<8x64xf32>
    %40 = arith.truncf %39 : vector<8x64xf32> to vector<8x64xbf16>
    %c0_31 = arith.constant 0 : index
    %c0_32 = arith.constant 0 : index
    %c0_33 = arith.constant 0 : index
    %41 = vector.load %arg19[%c0_31, %c0_32, %c0_33] : memref<1x8x64xbf16, #tpu.memory_space<vmem>>, vector<1x8x64xbf16>
    %42 = vector.shape_cast %41 : vector<1x8x64xbf16> to vector<8x64xbf16>
    %43 = vector.shape_cast %40 : vector<8x64xbf16> to vector<1x8x64xbf16>
    tpu.vector_store %arg19[%c0_31, %c0_32, %c0_33], %43 {strides = array<i32>} : memref<1x8x64xbf16, #tpu.memory_space<vmem>>, vector<1x8x64xbf16>,
    %c0_34 = arith.constant 0 : index
    %c0_35 = arith.constant 0 : index
    %c0_36 = arith.constant 0 : index
    %44 = vector.load %arg2[%c0_34, %c0_35, %c0_36] : memref<1x8x64xf32, #tpu.memory_space<vmem>>, vector<1x8x64xf32>
    %45 = vector.shape_cast %44 : vector<1x8x64xf32> to vector<8x64xf32>
    %c0_37 = arith.constant 0 : index
    %c0_38 = arith.constant 0 : index
    %c0_39 = arith.constant 0 : index
    %46 = vector.load %arg3[%c0_37, %c0_38, %c0_39] : memref<1x8x64xf32, #tpu.memory_space<vmem>>, vector<1x8x64xf32>
    %47 = vector.shape_cast %46 : vector<1x8x64xf32> to vector<8x64xf32>
    %48 = arith.addf %45, %47 : vector<8x64xf32>
    %49 = arith.truncf %48 : vector<8x64xf32> to vector<8x64xbf16>
    %c0_40 = arith.constant 0 : index
    %c0_41 = arith.constant 0 : index
    %50 = vector.load %arg14[%c0_40, %c0_41] : memref<64x64xbf16, #tpu.memory_space<vmem>>, vector<64x64xbf16>
    %cst_42 = arith.constant dense<0.000000e+00> : vector<8x64xf32>
    %51 = tpu.matmul %49, %50, %cst_42 {dimension_numbers = #tpu.dot_dimension_numbers<[1], [0], [0], [1], [0, 0, 1, 1], [], []>} : vector<8x64xbf16>, vector<64x64xbf16>, vector<8x64xf32> -> vector<8x64xf32>
    %c0_43 = arith.constant 0 : index
    %c0_44 = arith.constant 0 : index
    %52 = vector.load %arg15[%c0_43, %c0_44] : memref<1x64xf32, #tpu.memory_space<vmem>>, vector<1x64xf32>
    %53 = vector.broadcast %52 : vector<1x64xf32> to vector<8x64xf32>
    %54 = arith.addf %51, %53 : vector<8x64xf32>
    %55 = arith.truncf %54 : vector<8x64xf32> to vector<8x64xbf16>
    %c0_45 = arith.constant 0 : index
    %c0_46 = arith.constant 0 : index
    %c0_47 = arith.constant 0 : index
    %56 = vector.load %arg20[%c0_45, %c0_46, %c0_47] : memref<1x8x64xbf16, #tpu.memory_space<vmem>>, vector<1x8x64xbf16>
    %57 = vector.shape_cast %56 : vector<1x8x64xbf16> to vector<8x64xbf16>
    %58 = vector.shape_cast %55 : vector<8x64xbf16> to vector<1x8x64xbf16>
    tpu.vector_store %arg20[%c0_45, %c0_46, %c0_47], %58 {strides = array<i32>} : memref<1x8x64xbf16, #tpu.memory_space<vmem>>, vector<1x8x64xbf16>,
    %59 = arith.truncf %45 : vector<8x64xf32> to vector<8x64xbf16>
    %c0_48 = arith.constant 0 : index
    %c0_49 = arith.constant 0 : index
    %60 = vector.load %arg16[%c0_48, %c0_49] : memref<64x64xbf16, #tpu.memory_space<vmem>>, vector<64x64xbf16>
    %cst_50 = arith.constant dense<0.000000e+00> : vector<8x64xf32>
    %61 = tpu.matmul %59, %60, %cst_50 {dimension_numbers = #tpu.dot_dimension_numbers<[1], [0], [0], [1], [0, 0, 1, 1], [], []>} : vector<8x64xbf16>, vector<64x64xbf16>, vector<8x64xf32> -> vector<8x64xf32>
    %c0_51 = arith.constant 0 : index
    %c0_52 = arith.constant 0 : index
    %62 = vector.load %arg17[%c0_51, %c0_52] : memref<1x64xf32, #tpu.memory_space<vmem>>, vector<1x64xf32>
    %63 = vector.broadcast %62 : vector<1x64xf32> to vector<8x64xf32>
    %64 = arith.addf %61, %63 : vector<8x64xf32>
    %65 = arith.truncf %64 : vector<8x64xf32> to vector<8x64xbf16>
    %c0_53 = arith.constant 0 : index
    %c0_54 = arith.constant 0 : index
    %c0_55 = arith.constant 0 : index
    %66 = vector.load %arg21[%c0_53, %c0_54, %c0_55] : memref<1x8x64xbf16, #tpu.memory_space<vmem>>, vector<1x8x64xbf16>
    %67 = vector.shape_cast %66 : vector<1x8x64xbf16> to vector<8x64xbf16>
    %68 = vector.shape_cast %65 : vector<8x64xbf16> to vector<1x8x64xbf16>
    tpu.vector_store %arg21[%c0_53, %c0_54, %c0_55], %68 {strides = array<i32>} : memref<1x8x64xbf16, #tpu.memory_space<vmem>>, vector<1x8x64xbf16>,
    return
  }
  func.func @transform_0(%arg0: i32) -> (i32, i32, i32) {
    %c0_i32 = arith.constant 0 : i32
    %c0_i32_0 = arith.constant 0 : i32
    %c0_i32_1 = arith.constant 0 : i32
    return %arg0, %c0_i32, %c0_i32_0 : i32, i32, i32
  }
  func.func @transform_1(%arg0: i32) -> (i32, i32, i32) {
    %c0_i32 = arith.constant 0 : i32
    %c0_i32_0 = arith.constant 0 : i32
    %c0_i32_1 = arith.constant 0 : i32
    return %arg0, %c0_i32, %c0_i32_0 : i32, i32, i32
  }
  func.func @transform_2(%arg0: i32) -> (i32, i32, i32) {
    %c0_i32 = arith.constant 0 : i32
    %c0_i32_0 = arith.constant 0 : i32
    %c0_i32_1 = arith.constant 0 : i32
    return %arg0, %c0_i32, %c0_i32_0 : i32, i32, i32
  }
  func.func @transform_3(%arg0: i32) -> (i32, i32) {
    %c0_i32 = arith.constant 0 : i32
    %c0_i32_0 = arith.constant 0 : i32
    %c0_i32_1 = arith.constant 0 : i32
    return %c0_i32, %c0_i32_0 : i32, i32
  }
  func.func @transform_4(%arg0: i32) -> (i32, i32) {
    %c0_i32 = arith.constant 0 : i32
    %c0_i32_0 = arith.constant 0 : i32
    %c0_i32_1 = arith.constant 0 : i32
    return %c0_i32, %c0_i32_0 : i32, i32
  }
  func.func @transform_5(%arg0: i32) -> (i32, i32) {
    %c0_i32 = arith.constant 0 : i32
    %c0_i32_0 = arith.constant 0 : i32
    %c0_i32_1 = arith.constant 0 : i32
    return %c0_i32, %c0_i32_0 : i32, i32
  }
  func.func @transform_6(%arg0: i32) -> (i32, i32) {
    %c0_i32 = arith.constant 0 : i32
    %c0_i32_0 = arith.constant 0 : i32
    %c0_i32_1 = arith.constant 0 : i32
    return %c0_i32, %c0_i32_0 : i32, i32
  }
  func.func @transform_7(%arg0: i32) -> (i32, i32) {
    %c0_i32 = arith.constant 0 : i32
    %c0_i32_0 = arith.constant 0 : i32
    %c0_i32_1 = arith.constant 0 : i32
    return %c0_i32, %c0_i32_0 : i32, i32
  }
  func.func @transform_8(%arg0: i32) -> (i32, i32) {
    %c0_i32 = arith.constant 0 : i32
    %c0_i32_0 = arith.constant 0 : i32
    %c0_i32_1 = arith.constant 0 : i32
    return %c0_i32, %c0_i32_0 : i32, i32
  }
  func.func @transform_9(%arg0: i32) -> (i32, i32) {
    %c0_i32 = arith.constant 0 : i32
    %c0_i32_0 = arith.constant 0 : i32
    %c0_i32_1 = arith.constant 0 : i32
    return %c0_i32, %c0_i32_0 : i32, i32
  }
  func.func @transform_10(%arg0: i32) -> (i32, i32) {
    %c0_i32 = arith.constant 0 : i32
    %c0_i32_0 = arith.constant 0 : i32
    %c0_i32_1 = arith.constant 0 : i32
    return %c0_i32, %c0_i32_0 : i32, i32
  }
  func.func @transform_11(%arg0: i32) -> (i32, i32) {
    %c0_i32 = arith.constant 0 : i32
    %c0_i32_0 = arith.constant 0 : i32
    %c0_i32_1 = arith.constant 0 : i32
    return %c0_i32, %c0_i32_0 : i32, i32
  }
  func.func @transform_12(%arg0: i32) -> (i32, i32) {
    %c0_i32 = arith.constant 0 : i32
    %c0_i32_0 = arith.constant 0 : i32
    %c0_i32_1 = arith.constant 0 : i32
    return %c0_i32, %c0_i32_0 : i32, i32
  }
  func.func @transform_13(%arg0: i32) -> (i32, i32) {
    %c0_i32 = arith.constant 0 : i32
    %c0_i32_0 = arith.constant 0 : i32
    %c0_i32_1 = arith.constant 0 : i32
    return %c0_i32, %c0_i32_0 : i32, i32
  }
  func.func @transform_14(%arg0: i32) -> (i32, i32) {
    %c0_i32 = arith.constant 0 : i32
    %c0_i32_0 = arith.constant 0 : i32
    %c0_i32_1 = arith.constant 0 : i32
    return %c0_i32, %c0_i32_0 : i32, i32
  }
  func.func @transform_15(%arg0: i32) -> (i32, i32) {
    %c0_i32 = arith.constant 0 : i32
    %c0_i32_0 = arith.constant 0 : i32
    %c0_i32_1 = arith.constant 0 : i32
    return %c0_i32, %c0_i32_0 : i32, i32
  }
  func.func @transform_16(%arg0: i32) -> (i32, i32) {
    %c0_i32 = arith.constant 0 : i32
    %c0_i32_0 = arith.constant 0 : i32
    %c0_i32_1 = arith.constant 0 : i32
    return %c0_i32, %c0_i32_0 : i32, i32
  }
  func.func @transform_17(%arg0: i32) -> (i32, i32, i32) {
    %c0_i32 = arith.constant 0 : i32
    %c0_i32_0 = arith.constant 0 : i32
    %c0_i32_1 = arith.constant 0 : i32
    return %arg0, %c0_i32, %c0_i32_0 : i32, i32, i32
  }
  func.func @transform_18(%arg0: i32) -> (i32, i32, i32) {
    %c0_i32 = arith.constant 0 : i32
    %c0_i32_0 = arith.constant 0 : i32
    %c0_i32_1 = arith.constant 0 : i32
    return %arg0, %c0_i32, %c0_i32_0 : i32, i32, i32
  }
  func.func @transform_19(%arg0: i32) -> (i32, i32, i32) {
    %c0_i32 = arith.constant 0 : i32
    %c0_i32_0 = arith.constant 0 : i32
    %c0_i32_1 = arith.constant 0 : i32
    return %arg0, %c0_i32, %c0_i32_0 : i32, i32, i32
  }
  func.func @transform_20(%arg0: i32) -> (i32, i32, i32) {
    %c0_i32 = arith.constant 0 : i32
    %c0_i32_0 = arith.constant 0 : i32
    %c0_i32_1 = arith.constant 0 : i32
    return %arg0, %c0_i32, %c0_i32_0 : i32, i32, i32
  }
}

module attributes {stable_mosaic.version = 11 : i64} {
  func.func @_pix_chain_kernel(%arg0: i32, %arg1: i32, %arg2: memref<1x32x256xf32, #tpu.memory_space<vmem>>, %arg3: memref<1x256x64xf32, #tpu.memory_space<vmem>>, %arg4: memref<1x8x64xbf16, #tpu.memory_space<vmem>>, %arg5: memref<1x8x64xbf16, #tpu.memory_space<vmem>>, %arg6: memref<1x8x64xbf16, #tpu.memory_space<vmem>>, %arg7: memref<1x8x64xbf16, #tpu.memory_space<vmem>>, %arg8: memref<32x64xbf16, #tpu.memory_space<vmem>>, %arg9: memref<1x64xf32, #tpu.memory_space<vmem>>, %arg10: memref<64x64xbf16, #tpu.memory_space<vmem>>, %arg11: memref<1x64xf32, #tpu.memory_space<vmem>>, %arg12: memref<64x64xbf16, #tpu.memory_space<vmem>>, %arg13: memref<1x64xf32, #tpu.memory_space<vmem>>, %arg14: memref<64x64xbf16, #tpu.memory_space<vmem>>, %arg15: memref<1x64xf32, #tpu.memory_space<vmem>>, %arg16: memref<64x64xbf16, #tpu.memory_space<vmem>>, %arg17: memref<1x64xf32, #tpu.memory_space<vmem>>, %arg18: memref<64x64xbf16, #tpu.memory_space<vmem>>, %arg19: memref<1x64xf32, #tpu.memory_space<vmem>>, %arg20: memref<64x64xbf16, #tpu.memory_space<vmem>>, %arg21: memref<1x64xf32, #tpu.memory_space<vmem>>, %arg22: memref<1x64x256xf32, #tpu.memory_space<vmem>>) attributes {dimension_semantics = [#tpu.dimension_semantics<parallel>, #tpu.dimension_semantics<parallel>], iteration_bounds = array<i64: 2, 1>, scalar_prefetch = 0 : i64, scratch_operands = 0 : i64, tpu.core_type = #tpu.core_type<tc>, window_params = [{transform_indices = @transform_0, window_bounds = array<i64: 1, 32, 256>}, {transform_indices = @transform_1, window_bounds = array<i64: 1, 256, 64>}, {transform_indices = @transform_2, window_bounds = array<i64: 1, 8, 64>}, {transform_indices = @transform_3, window_bounds = array<i64: 1, 8, 64>}, {transform_indices = @transform_4, window_bounds = array<i64: 1, 8, 64>}, {transform_indices = @transform_5, window_bounds = array<i64: 1, 8, 64>}, {pipeline_mode = #tpu.pipeline_mode<synchronous>, transform_indices = @transform_6, window_bounds = array<i64: 32, 64>}, {pipeline_mode = #tpu.pipeline_mode<synchronous>, transform_indices = @transform_7, window_bounds = array<i64: 1, 64>}, {pipeline_mode = #tpu.pipeline_mode<synchronous>, transform_indices = @transform_8, window_bounds = array<i64: 64, 64>}, {pipeline_mode = #tpu.pipeline_mode<synchronous>, transform_indices = @transform_9, window_bounds = array<i64: 1, 64>}, {pipeline_mode = #tpu.pipeline_mode<synchronous>, transform_indices = @transform_10, window_bounds = array<i64: 64, 64>}, {pipeline_mode = #tpu.pipeline_mode<synchronous>, transform_indices = @transform_11, window_bounds = array<i64: 1, 64>}, {pipeline_mode = #tpu.pipeline_mode<synchronous>, transform_indices = @transform_12, window_bounds = array<i64: 64, 64>}, {pipeline_mode = #tpu.pipeline_mode<synchronous>, transform_indices = @transform_13, window_bounds = array<i64: 1, 64>}, {pipeline_mode = #tpu.pipeline_mode<synchronous>, transform_indices = @transform_14, window_bounds = array<i64: 64, 64>}, {pipeline_mode = #tpu.pipeline_mode<synchronous>, transform_indices = @transform_15, window_bounds = array<i64: 1, 64>}, {pipeline_mode = #tpu.pipeline_mode<synchronous>, transform_indices = @transform_16, window_bounds = array<i64: 64, 64>}, {pipeline_mode = #tpu.pipeline_mode<synchronous>, transform_indices = @transform_17, window_bounds = array<i64: 1, 64>}, {pipeline_mode = #tpu.pipeline_mode<synchronous>, transform_indices = @transform_18, window_bounds = array<i64: 64, 64>}, {pipeline_mode = #tpu.pipeline_mode<synchronous>, transform_indices = @transform_19, window_bounds = array<i64: 1, 64>}, {transform_indices = @transform_20, window_bounds = array<i64: 1, 64, 256>}]} {
    %c0 = arith.constant 0 : index
    %c0_0 = arith.constant 0 : index
    %c0_1 = arith.constant 0 : index
    %0 = vector.load %arg2[%c0, %c0_0, %c0_1] : memref<1x32x256xf32, #tpu.memory_space<vmem>>, vector<1x32x256xf32>
    %1 = vector.shape_cast %0 : vector<1x32x256xf32> to vector<32x256xf32>
    %2 = arith.truncf %1 : vector<32x256xf32> to vector<32x256xbf16>
    %c0_2 = arith.constant 0 : index
    %c0_3 = arith.constant 0 : index
    %3 = vector.load %arg8[%c0_2, %c0_3] : memref<32x64xbf16, #tpu.memory_space<vmem>>, vector<32x64xbf16>
    %cst = arith.constant dense<0.000000e+00> : vector<256x64xf32>
    %4 = tpu.matmul %2, %3, %cst {dimension_numbers = #tpu.dot_dimension_numbers<[0], [0], [1], [1], [0, 1, 1, 1], [], []>} : vector<32x256xbf16>, vector<32x64xbf16>, vector<256x64xf32> -> vector<256x64xf32>
    %c0_4 = arith.constant 0 : index
    %c0_5 = arith.constant 0 : index
    %5 = vector.load %arg9[%c0_4, %c0_5] : memref<1x64xf32, #tpu.memory_space<vmem>>, vector<1x64xf32>
    %6 = vector.broadcast %5 : vector<1x64xf32> to vector<256x64xf32>
    %7 = arith.addf %4, %6 : vector<256x64xf32>
    %cst_6 = arith.constant 0.000000e+00 : f32
    %8 = vector.broadcast %cst_6 : f32 to vector<256x64xf32>
    %9 = arith.maximumf %7, %8 : vector<256x64xf32>
    %10 = arith.truncf %9 : vector<256x64xf32> to vector<256x64xbf16>
    %c0_7 = arith.constant 0 : index
    %c0_8 = arith.constant 0 : index
    %11 = vector.load %arg10[%c0_7, %c0_8] : memref<64x64xbf16, #tpu.memory_space<vmem>>, vector<64x64xbf16>
    %cst_9 = arith.constant dense<0.000000e+00> : vector<256x64xf32>
    %12 = tpu.matmul %10, %11, %cst_9 {dimension_numbers = #tpu.dot_dimension_numbers<[1], [0], [0], [1], [0, 0, 1, 1], [], []>} : vector<256x64xbf16>, vector<64x64xbf16>, vector<256x64xf32> -> vector<256x64xf32>
    %c0_10 = arith.constant 0 : index
    %c0_11 = arith.constant 0 : index
    %13 = vector.load %arg11[%c0_10, %c0_11] : memref<1x64xf32, #tpu.memory_space<vmem>>, vector<1x64xf32>
    %14 = vector.broadcast %13 : vector<1x64xf32> to vector<256x64xf32>
    %15 = arith.addf %12, %14 : vector<256x64xf32>
    %cst_12 = arith.constant 0.000000e+00 : f32
    %16 = vector.broadcast %cst_12 : f32 to vector<256x64xf32>
    %17 = arith.maximumf %15, %16 : vector<256x64xf32>
    %18 = arith.truncf %17 : vector<256x64xf32> to vector<256x64xbf16>
    %c0_13 = arith.constant 0 : index
    %c0_14 = arith.constant 0 : index
    %19 = vector.load %arg12[%c0_13, %c0_14] : memref<64x64xbf16, #tpu.memory_space<vmem>>, vector<64x64xbf16>
    %cst_15 = arith.constant dense<0.000000e+00> : vector<256x64xf32>
    %20 = tpu.matmul %18, %19, %cst_15 {dimension_numbers = #tpu.dot_dimension_numbers<[1], [0], [0], [1], [0, 0, 1, 1], [], []>} : vector<256x64xbf16>, vector<64x64xbf16>, vector<256x64xf32> -> vector<256x64xf32>
    %c0_16 = arith.constant 0 : index
    %c0_17 = arith.constant 0 : index
    %21 = vector.load %arg13[%c0_16, %c0_17] : memref<1x64xf32, #tpu.memory_space<vmem>>, vector<1x64xf32>
    %22 = vector.broadcast %21 : vector<1x64xf32> to vector<256x64xf32>
    %23 = arith.addf %20, %22 : vector<256x64xf32>
    %c0_18 = arith.constant 0 : index
    %c0_19 = arith.constant 0 : index
    %c0_20 = arith.constant 0 : index
    %24 = vector.load %arg3[%c0_18, %c0_19, %c0_20] : memref<1x256x64xf32, #tpu.memory_space<vmem>>, vector<1x256x64xf32>
    %25 = vector.shape_cast %24 : vector<1x256x64xf32> to vector<256x64xf32>
    %26 = arith.addf %23, %25 : vector<256x64xf32>
    %27 = arith.truncf %26 : vector<256x64xf32> to vector<256x64xbf16>
    %c0_21 = arith.constant 0 : index
    %c0_22 = arith.constant 0 : index
    %28 = vector.load %arg14[%c0_21, %c0_22] : memref<64x64xbf16, #tpu.memory_space<vmem>>, vector<64x64xbf16>
    %cst_23 = arith.constant dense<0.000000e+00> : vector<256x64xf32>
    %29 = tpu.matmul %27, %28, %cst_23 {dimension_numbers = #tpu.dot_dimension_numbers<[1], [0], [0], [1], [0, 0, 1, 1], [], []>} : vector<256x64xbf16>, vector<64x64xbf16>, vector<256x64xf32> -> vector<256x64xf32>
    %c0_24 = arith.constant 0 : index
    %c0_25 = arith.constant 0 : index
    %30 = vector.load %arg15[%c0_24, %c0_25] : memref<1x64xf32, #tpu.memory_space<vmem>>, vector<1x64xf32>
    %31 = vector.broadcast %30 : vector<1x64xf32> to vector<256x64xf32>
    %32 = arith.addf %29, %31 : vector<256x64xf32>
    %c0_26 = arith.constant 0 : index
    %c0_27 = arith.constant 0 : index
    %c0_28 = arith.constant 0 : index
    %33 = vector.load %arg4[%c0_26, %c0_27, %c0_28] : memref<1x8x64xbf16, #tpu.memory_space<vmem>>, vector<1x8x64xbf16>
    %34 = vector.shape_cast %33 : vector<1x8x64xbf16> to vector<8x64xbf16>
    %c0_29 = arith.constant 0 : index
    %c0_30 = arith.constant 0 : index
    %c0_31 = arith.constant 0 : index
    %35 = vector.load %arg5[%c0_29, %c0_30, %c0_31] : memref<1x8x64xbf16, #tpu.memory_space<vmem>>, vector<1x8x64xbf16>
    %36 = vector.shape_cast %35 : vector<1x8x64xbf16> to vector<8x64xbf16>
    %37 = vector.extract_strided_slice %32 {offsets = [0, 0], sizes = [256, 16], strides = [1, 1]} : vector<256x64xf32> to vector<256x16xf32>
    %38 = arith.truncf %37 : vector<256x16xf32> to vector<256x16xbf16>
    %39 = vector.extract_strided_slice %34 {offsets = [0, 0], sizes = [8, 16], strides = [1, 1]} : vector<8x64xbf16> to vector<8x16xbf16>
    %40 = vector.extract_strided_slice %36 {offsets = [0, 0], sizes = [8, 16], strides = [1, 1]} : vector<8x64xbf16> to vector<8x16xbf16>
    %cst_32 = arith.constant dense<0.000000e+00> : vector<8x256xf32>
    %41 = tpu.matmul %39, %38, %cst_32 {dimension_numbers = #tpu.dot_dimension_numbers<[1], [1], [0], [0], [0, 0, 1, 0], [], []>} : vector<8x16xbf16>, vector<256x16xbf16>, vector<8x256xf32> -> vector<8x256xf32>
    %cst_33 = arith.constant dense<0xFF800000> : vector<256xf32>
    %42 = vector.multi_reduction <maximumf>, %41, %cst_33 [0] : vector<8x256xf32> to vector<256xf32>
    %43 = vector.shape_cast %42 : vector<256xf32> to vector<1x256xf32>
    %44 = vector.broadcast %43 : vector<1x256xf32> to vector<8x256xf32>
    %45 = arith.subf %41, %44 : vector<8x256xf32>
    %46 = math.exp %45 : vector<8x256xf32>
    %cst_34 = arith.constant dense<0.000000e+00> : vector<256xf32>
    %47 = vector.multi_reduction <add>, %46, %cst_34 [0] : vector<8x256xf32> to vector<256xf32>
    %48 = vector.shape_cast %47 : vector<256xf32> to vector<1x256xf32>
    %49 = tpu.reciprocal %48 {approx = true} : vector<1x256xf32> -> vector<1x256xf32>
    %50 = vector.broadcast %49 : vector<1x256xf32> to vector<8x256xf32>
    %51 = arith.mulf %46, %50 : vector<8x256xf32>
    %52 = arith.truncf %51 : vector<8x256xf32> to vector<8x256xbf16>
    %cst_35 = arith.constant dense<0.000000e+00> : vector<256x16xf32>
    %53 = tpu.matmul %52, %40, %cst_35 {dimension_numbers = #tpu.dot_dimension_numbers<[0], [0], [1], [1], [0, 1, 1, 1], [], []>} : vector<8x256xbf16>, vector<8x16xbf16>, vector<256x16xf32> -> vector<256x16xf32>
    %54 = arith.truncf %53 : vector<256x16xf32> to vector<256x16xbf16>
    %c0_36 = arith.constant 0 : index
    %c0_37 = arith.constant 0 : index
    %55 = vector.load %arg16[%c0_36, %c0_37] : memref<64x64xbf16, #tpu.memory_space<vmem>>, vector<16x64xbf16>
    %cst_38 = arith.constant dense<0.000000e+00> : vector<256x64xf32>
    %56 = tpu.matmul %54, %55, %cst_38 {dimension_numbers = #tpu.dot_dimension_numbers<[1], [0], [0], [1], [0, 0, 1, 1], [], []>} : vector<256x16xbf16>, vector<16x64xbf16>, vector<256x64xf32> -> vector<256x64xf32>
    %57 = vector.extract_strided_slice %32 {offsets = [0, 16], sizes = [256, 16], strides = [1, 1]} : vector<256x64xf32> to vector<256x16xf32>
    %58 = arith.truncf %57 : vector<256x16xf32> to vector<256x16xbf16>
    %59 = vector.extract_strided_slice %34 {offsets = [0, 16], sizes = [8, 16], strides = [1, 1]} : vector<8x64xbf16> to vector<8x16xbf16>
    %60 = vector.extract_strided_slice %36 {offsets = [0, 16], sizes = [8, 16], strides = [1, 1]} : vector<8x64xbf16> to vector<8x16xbf16>
    %cst_39 = arith.constant dense<0.000000e+00> : vector<8x256xf32>
    %61 = tpu.matmul %59, %58, %cst_39 {dimension_numbers = #tpu.dot_dimension_numbers<[1], [1], [0], [0], [0, 0, 1, 0], [], []>} : vector<8x16xbf16>, vector<256x16xbf16>, vector<8x256xf32> -> vector<8x256xf32>
    %cst_40 = arith.constant dense<0xFF800000> : vector<256xf32>
    %62 = vector.multi_reduction <maximumf>, %61, %cst_40 [0] : vector<8x256xf32> to vector<256xf32>
    %63 = vector.shape_cast %62 : vector<256xf32> to vector<1x256xf32>
    %64 = vector.broadcast %63 : vector<1x256xf32> to vector<8x256xf32>
    %65 = arith.subf %61, %64 : vector<8x256xf32>
    %66 = math.exp %65 : vector<8x256xf32>
    %cst_41 = arith.constant dense<0.000000e+00> : vector<256xf32>
    %67 = vector.multi_reduction <add>, %66, %cst_41 [0] : vector<8x256xf32> to vector<256xf32>
    %68 = vector.shape_cast %67 : vector<256xf32> to vector<1x256xf32>
    %69 = tpu.reciprocal %68 {approx = true} : vector<1x256xf32> -> vector<1x256xf32>
    %70 = vector.broadcast %69 : vector<1x256xf32> to vector<8x256xf32>
    %71 = arith.mulf %66, %70 : vector<8x256xf32>
    %72 = arith.truncf %71 : vector<8x256xf32> to vector<8x256xbf16>
    %cst_42 = arith.constant dense<0.000000e+00> : vector<256x16xf32>
    %73 = tpu.matmul %72, %60, %cst_42 {dimension_numbers = #tpu.dot_dimension_numbers<[0], [0], [1], [1], [0, 1, 1, 1], [], []>} : vector<8x256xbf16>, vector<8x16xbf16>, vector<256x16xf32> -> vector<256x16xf32>
    %74 = arith.truncf %73 : vector<256x16xf32> to vector<256x16xbf16>
    %c16 = arith.constant 16 : index
    %c0_43 = arith.constant 0 : index
    %75 = vector.load %arg16[%c16, %c0_43] : memref<64x64xbf16, #tpu.memory_space<vmem>>, vector<16x64xbf16>
    %cst_44 = arith.constant dense<0.000000e+00> : vector<256x64xf32>
    %76 = tpu.matmul %74, %75, %cst_44 {dimension_numbers = #tpu.dot_dimension_numbers<[1], [0], [0], [1], [0, 0, 1, 1], [], []>} : vector<256x16xbf16>, vector<16x64xbf16>, vector<256x64xf32> -> vector<256x64xf32>
    %77 = arith.addf %56, %76 : vector<256x64xf32>
    %78 = vector.extract_strided_slice %32 {offsets = [0, 32], sizes = [256, 16], strides = [1, 1]} : vector<256x64xf32> to vector<256x16xf32>
    %79 = arith.truncf %78 : vector<256x16xf32> to vector<256x16xbf16>
    %80 = vector.extract_strided_slice %34 {offsets = [0, 32], sizes = [8, 16], strides = [1, 1]} : vector<8x64xbf16> to vector<8x16xbf16>
    %81 = vector.extract_strided_slice %36 {offsets = [0, 32], sizes = [8, 16], strides = [1, 1]} : vector<8x64xbf16> to vector<8x16xbf16>
    %cst_45 = arith.constant dense<0.000000e+00> : vector<8x256xf32>
    %82 = tpu.matmul %80, %79, %cst_45 {dimension_numbers = #tpu.dot_dimension_numbers<[1], [1], [0], [0], [0, 0, 1, 0], [], []>} : vector<8x16xbf16>, vector<256x16xbf16>, vector<8x256xf32> -> vector<8x256xf32>
    %cst_46 = arith.constant dense<0xFF800000> : vector<256xf32>
    %83 = vector.multi_reduction <maximumf>, %82, %cst_46 [0] : vector<8x256xf32> to vector<256xf32>
    %84 = vector.shape_cast %83 : vector<256xf32> to vector<1x256xf32>
    %85 = vector.broadcast %84 : vector<1x256xf32> to vector<8x256xf32>
    %86 = arith.subf %82, %85 : vector<8x256xf32>
    %87 = math.exp %86 : vector<8x256xf32>
    %cst_47 = arith.constant dense<0.000000e+00> : vector<256xf32>
    %88 = vector.multi_reduction <add>, %87, %cst_47 [0] : vector<8x256xf32> to vector<256xf32>
    %89 = vector.shape_cast %88 : vector<256xf32> to vector<1x256xf32>
    %90 = tpu.reciprocal %89 {approx = true} : vector<1x256xf32> -> vector<1x256xf32>
    %91 = vector.broadcast %90 : vector<1x256xf32> to vector<8x256xf32>
    %92 = arith.mulf %87, %91 : vector<8x256xf32>
    %93 = arith.truncf %92 : vector<8x256xf32> to vector<8x256xbf16>
    %cst_48 = arith.constant dense<0.000000e+00> : vector<256x16xf32>
    %94 = tpu.matmul %93, %81, %cst_48 {dimension_numbers = #tpu.dot_dimension_numbers<[0], [0], [1], [1], [0, 1, 1, 1], [], []>} : vector<8x256xbf16>, vector<8x16xbf16>, vector<256x16xf32> -> vector<256x16xf32>
    %95 = arith.truncf %94 : vector<256x16xf32> to vector<256x16xbf16>
    %c32 = arith.constant 32 : index
    %c0_49 = arith.constant 0 : index
    %96 = vector.load %arg16[%c32, %c0_49] : memref<64x64xbf16, #tpu.memory_space<vmem>>, vector<16x64xbf16>
    %cst_50 = arith.constant dense<0.000000e+00> : vector<256x64xf32>
    %97 = tpu.matmul %95, %96, %cst_50 {dimension_numbers = #tpu.dot_dimension_numbers<[1], [0], [0], [1], [0, 0, 1, 1], [], []>} : vector<256x16xbf16>, vector<16x64xbf16>, vector<256x64xf32> -> vector<256x64xf32>
    %98 = arith.addf %77, %97 : vector<256x64xf32>
    %99 = vector.extract_strided_slice %32 {offsets = [0, 48], sizes = [256, 16], strides = [1, 1]} : vector<256x64xf32> to vector<256x16xf32>
    %100 = arith.truncf %99 : vector<256x16xf32> to vector<256x16xbf16>
    %101 = vector.extract_strided_slice %34 {offsets = [0, 48], sizes = [8, 16], strides = [1, 1]} : vector<8x64xbf16> to vector<8x16xbf16>
    %102 = vector.extract_strided_slice %36 {offsets = [0, 48], sizes = [8, 16], strides = [1, 1]} : vector<8x64xbf16> to vector<8x16xbf16>
    %cst_51 = arith.constant dense<0.000000e+00> : vector<8x256xf32>
    %103 = tpu.matmul %101, %100, %cst_51 {dimension_numbers = #tpu.dot_dimension_numbers<[1], [1], [0], [0], [0, 0, 1, 0], [], []>} : vector<8x16xbf16>, vector<256x16xbf16>, vector<8x256xf32> -> vector<8x256xf32>
    %cst_52 = arith.constant dense<0xFF800000> : vector<256xf32>
    %104 = vector.multi_reduction <maximumf>, %103, %cst_52 [0] : vector<8x256xf32> to vector<256xf32>
    %105 = vector.shape_cast %104 : vector<256xf32> to vector<1x256xf32>
    %106 = vector.broadcast %105 : vector<1x256xf32> to vector<8x256xf32>
    %107 = arith.subf %103, %106 : vector<8x256xf32>
    %108 = math.exp %107 : vector<8x256xf32>
    %cst_53 = arith.constant dense<0.000000e+00> : vector<256xf32>
    %109 = vector.multi_reduction <add>, %108, %cst_53 [0] : vector<8x256xf32> to vector<256xf32>
    %110 = vector.shape_cast %109 : vector<256xf32> to vector<1x256xf32>
    %111 = tpu.reciprocal %110 {approx = true} : vector<1x256xf32> -> vector<1x256xf32>
    %112 = vector.broadcast %111 : vector<1x256xf32> to vector<8x256xf32>
    %113 = arith.mulf %108, %112 : vector<8x256xf32>
    %114 = arith.truncf %113 : vector<8x256xf32> to vector<8x256xbf16>
    %cst_54 = arith.constant dense<0.000000e+00> : vector<256x16xf32>
    %115 = tpu.matmul %114, %102, %cst_54 {dimension_numbers = #tpu.dot_dimension_numbers<[0], [0], [1], [1], [0, 1, 1, 1], [], []>} : vector<8x256xbf16>, vector<8x16xbf16>, vector<256x16xf32> -> vector<256x16xf32>
    %116 = arith.truncf %115 : vector<256x16xf32> to vector<256x16xbf16>
    %c48 = arith.constant 48 : index
    %c0_55 = arith.constant 0 : index
    %117 = vector.load %arg16[%c48, %c0_55] : memref<64x64xbf16, #tpu.memory_space<vmem>>, vector<16x64xbf16>
    %cst_56 = arith.constant dense<0.000000e+00> : vector<256x64xf32>
    %118 = tpu.matmul %116, %117, %cst_56 {dimension_numbers = #tpu.dot_dimension_numbers<[1], [0], [0], [1], [0, 0, 1, 1], [], []>} : vector<256x16xbf16>, vector<16x64xbf16>, vector<256x64xf32> -> vector<256x64xf32>
    %119 = arith.addf %98, %118 : vector<256x64xf32>
    %c0_57 = arith.constant 0 : index
    %c0_58 = arith.constant 0 : index
    %120 = vector.load %arg17[%c0_57, %c0_58] : memref<1x64xf32, #tpu.memory_space<vmem>>, vector<1x64xf32>
    %121 = vector.broadcast %120 : vector<1x64xf32> to vector<256x64xf32>
    %122 = arith.addf %119, %121 : vector<256x64xf32>
    %123 = arith.addf %122, %25 : vector<256x64xf32>
    %124 = arith.truncf %123 : vector<256x64xf32> to vector<256x64xbf16>
    %c0_59 = arith.constant 0 : index
    %c0_60 = arith.constant 0 : index
    %125 = vector.load %arg18[%c0_59, %c0_60] : memref<64x64xbf16, #tpu.memory_space<vmem>>, vector<64x64xbf16>
    %cst_61 = arith.constant dense<0.000000e+00> : vector<256x64xf32>
    %126 = tpu.matmul %124, %125, %cst_61 {dimension_numbers = #tpu.dot_dimension_numbers<[1], [0], [0], [1], [0, 0, 1, 1], [], []>} : vector<256x64xbf16>, vector<64x64xbf16>, vector<256x64xf32> -> vector<256x64xf32>
    %c0_62 = arith.constant 0 : index
    %c0_63 = arith.constant 0 : index
    %127 = vector.load %arg19[%c0_62, %c0_63] : memref<1x64xf32, #tpu.memory_space<vmem>>, vector<1x64xf32>
    %128 = vector.broadcast %127 : vector<1x64xf32> to vector<256x64xf32>
    %129 = arith.addf %126, %128 : vector<256x64xf32>
    %c0_64 = arith.constant 0 : index
    %c0_65 = arith.constant 0 : index
    %c0_66 = arith.constant 0 : index
    %130 = vector.load %arg6[%c0_64, %c0_65, %c0_66] : memref<1x8x64xbf16, #tpu.memory_space<vmem>>, vector<1x8x64xbf16>
    %131 = vector.shape_cast %130 : vector<1x8x64xbf16> to vector<8x64xbf16>
    %c0_67 = arith.constant 0 : index
    %c0_68 = arith.constant 0 : index
    %c0_69 = arith.constant 0 : index
    %132 = vector.load %arg7[%c0_67, %c0_68, %c0_69] : memref<1x8x64xbf16, #tpu.memory_space<vmem>>, vector<1x8x64xbf16>
    %133 = vector.shape_cast %132 : vector<1x8x64xbf16> to vector<8x64xbf16>
    %134 = vector.extract_strided_slice %129 {offsets = [0, 0], sizes = [256, 16], strides = [1, 1]} : vector<256x64xf32> to vector<256x16xf32>
    %135 = arith.truncf %134 : vector<256x16xf32> to vector<256x16xbf16>
    %136 = vector.extract_strided_slice %131 {offsets = [0, 0], sizes = [8, 16], strides = [1, 1]} : vector<8x64xbf16> to vector<8x16xbf16>
    %137 = vector.extract_strided_slice %133 {offsets = [0, 0], sizes = [8, 16], strides = [1, 1]} : vector<8x64xbf16> to vector<8x16xbf16>
    %cst_70 = arith.constant dense<0.000000e+00> : vector<8x256xf32>
    %138 = tpu.matmul %136, %135, %cst_70 {dimension_numbers = #tpu.dot_dimension_numbers<[1], [1], [0], [0], [0, 0, 1, 0], [], []>} : vector<8x16xbf16>, vector<256x16xbf16>, vector<8x256xf32> -> vector<8x256xf32>
    %cst_71 = arith.constant dense<0xFF800000> : vector<256xf32>
    %139 = vector.multi_reduction <maximumf>, %138, %cst_71 [0] : vector<8x256xf32> to vector<256xf32>
    %140 = vector.shape_cast %139 : vector<256xf32> to vector<1x256xf32>
    %141 = vector.broadcast %140 : vector<1x256xf32> to vector<8x256xf32>
    %142 = arith.subf %138, %141 : vector<8x256xf32>
    %143 = math.exp %142 : vector<8x256xf32>
    %cst_72 = arith.constant dense<0.000000e+00> : vector<256xf32>
    %144 = vector.multi_reduction <add>, %143, %cst_72 [0] : vector<8x256xf32> to vector<256xf32>
    %145 = vector.shape_cast %144 : vector<256xf32> to vector<1x256xf32>
    %146 = tpu.reciprocal %145 {approx = true} : vector<1x256xf32> -> vector<1x256xf32>
    %147 = vector.broadcast %146 : vector<1x256xf32> to vector<8x256xf32>
    %148 = arith.mulf %143, %147 : vector<8x256xf32>
    %149 = arith.truncf %148 : vector<8x256xf32> to vector<8x256xbf16>
    %cst_73 = arith.constant dense<0.000000e+00> : vector<256x16xf32>
    %150 = tpu.matmul %149, %137, %cst_73 {dimension_numbers = #tpu.dot_dimension_numbers<[0], [0], [1], [1], [0, 1, 1, 1], [], []>} : vector<8x256xbf16>, vector<8x16xbf16>, vector<256x16xf32> -> vector<256x16xf32>
    %151 = arith.truncf %150 : vector<256x16xf32> to vector<256x16xbf16>
    %c0_74 = arith.constant 0 : index
    %c0_75 = arith.constant 0 : index
    %152 = vector.load %arg20[%c0_74, %c0_75] : memref<64x64xbf16, #tpu.memory_space<vmem>>, vector<16x64xbf16>
    %cst_76 = arith.constant dense<0.000000e+00> : vector<256x64xf32>
    %153 = tpu.matmul %151, %152, %cst_76 {dimension_numbers = #tpu.dot_dimension_numbers<[1], [0], [0], [1], [0, 0, 1, 1], [], []>} : vector<256x16xbf16>, vector<16x64xbf16>, vector<256x64xf32> -> vector<256x64xf32>
    %154 = vector.extract_strided_slice %129 {offsets = [0, 16], sizes = [256, 16], strides = [1, 1]} : vector<256x64xf32> to vector<256x16xf32>
    %155 = arith.truncf %154 : vector<256x16xf32> to vector<256x16xbf16>
    %156 = vector.extract_strided_slice %131 {offsets = [0, 16], sizes = [8, 16], strides = [1, 1]} : vector<8x64xbf16> to vector<8x16xbf16>
    %157 = vector.extract_strided_slice %133 {offsets = [0, 16], sizes = [8, 16], strides = [1, 1]} : vector<8x64xbf16> to vector<8x16xbf16>
    %cst_77 = arith.constant dense<0.000000e+00> : vector<8x256xf32>
    %158 = tpu.matmul %156, %155, %cst_77 {dimension_numbers = #tpu.dot_dimension_numbers<[1], [1], [0], [0], [0, 0, 1, 0], [], []>} : vector<8x16xbf16>, vector<256x16xbf16>, vector<8x256xf32> -> vector<8x256xf32>
    %cst_78 = arith.constant dense<0xFF800000> : vector<256xf32>
    %159 = vector.multi_reduction <maximumf>, %158, %cst_78 [0] : vector<8x256xf32> to vector<256xf32>
    %160 = vector.shape_cast %159 : vector<256xf32> to vector<1x256xf32>
    %161 = vector.broadcast %160 : vector<1x256xf32> to vector<8x256xf32>
    %162 = arith.subf %158, %161 : vector<8x256xf32>
    %163 = math.exp %162 : vector<8x256xf32>
    %cst_79 = arith.constant dense<0.000000e+00> : vector<256xf32>
    %164 = vector.multi_reduction <add>, %163, %cst_79 [0] : vector<8x256xf32> to vector<256xf32>
    %165 = vector.shape_cast %164 : vector<256xf32> to vector<1x256xf32>
    %166 = tpu.reciprocal %165 {approx = true} : vector<1x256xf32> -> vector<1x256xf32>
    %167 = vector.broadcast %166 : vector<1x256xf32> to vector<8x256xf32>
    %168 = arith.mulf %163, %167 : vector<8x256xf32>
    %169 = arith.truncf %168 : vector<8x256xf32> to vector<8x256xbf16>
    %cst_80 = arith.constant dense<0.000000e+00> : vector<256x16xf32>
    %170 = tpu.matmul %169, %157, %cst_80 {dimension_numbers = #tpu.dot_dimension_numbers<[0], [0], [1], [1], [0, 1, 1, 1], [], []>} : vector<8x256xbf16>, vector<8x16xbf16>, vector<256x16xf32> -> vector<256x16xf32>
    %171 = arith.truncf %170 : vector<256x16xf32> to vector<256x16xbf16>
    %c16_81 = arith.constant 16 : index
    %c0_82 = arith.constant 0 : index
    %172 = vector.load %arg20[%c16_81, %c0_82] : memref<64x64xbf16, #tpu.memory_space<vmem>>, vector<16x64xbf16>
    %cst_83 = arith.constant dense<0.000000e+00> : vector<256x64xf32>
    %173 = tpu.matmul %171, %172, %cst_83 {dimension_numbers = #tpu.dot_dimension_numbers<[1], [0], [0], [1], [0, 0, 1, 1], [], []>} : vector<256x16xbf16>, vector<16x64xbf16>, vector<256x64xf32> -> vector<256x64xf32>
    %174 = arith.addf %153, %173 : vector<256x64xf32>
    %175 = vector.extract_strided_slice %129 {offsets = [0, 32], sizes = [256, 16], strides = [1, 1]} : vector<256x64xf32> to vector<256x16xf32>
    %176 = arith.truncf %175 : vector<256x16xf32> to vector<256x16xbf16>
    %177 = vector.extract_strided_slice %131 {offsets = [0, 32], sizes = [8, 16], strides = [1, 1]} : vector<8x64xbf16> to vector<8x16xbf16>
    %178 = vector.extract_strided_slice %133 {offsets = [0, 32], sizes = [8, 16], strides = [1, 1]} : vector<8x64xbf16> to vector<8x16xbf16>
    %cst_84 = arith.constant dense<0.000000e+00> : vector<8x256xf32>
    %179 = tpu.matmul %177, %176, %cst_84 {dimension_numbers = #tpu.dot_dimension_numbers<[1], [1], [0], [0], [0, 0, 1, 0], [], []>} : vector<8x16xbf16>, vector<256x16xbf16>, vector<8x256xf32> -> vector<8x256xf32>
    %cst_85 = arith.constant dense<0xFF800000> : vector<256xf32>
    %180 = vector.multi_reduction <maximumf>, %179, %cst_85 [0] : vector<8x256xf32> to vector<256xf32>
    %181 = vector.shape_cast %180 : vector<256xf32> to vector<1x256xf32>
    %182 = vector.broadcast %181 : vector<1x256xf32> to vector<8x256xf32>
    %183 = arith.subf %179, %182 : vector<8x256xf32>
    %184 = math.exp %183 : vector<8x256xf32>
    %cst_86 = arith.constant dense<0.000000e+00> : vector<256xf32>
    %185 = vector.multi_reduction <add>, %184, %cst_86 [0] : vector<8x256xf32> to vector<256xf32>
    %186 = vector.shape_cast %185 : vector<256xf32> to vector<1x256xf32>
    %187 = tpu.reciprocal %186 {approx = true} : vector<1x256xf32> -> vector<1x256xf32>
    %188 = vector.broadcast %187 : vector<1x256xf32> to vector<8x256xf32>
    %189 = arith.mulf %184, %188 : vector<8x256xf32>
    %190 = arith.truncf %189 : vector<8x256xf32> to vector<8x256xbf16>
    %cst_87 = arith.constant dense<0.000000e+00> : vector<256x16xf32>
    %191 = tpu.matmul %190, %178, %cst_87 {dimension_numbers = #tpu.dot_dimension_numbers<[0], [0], [1], [1], [0, 1, 1, 1], [], []>} : vector<8x256xbf16>, vector<8x16xbf16>, vector<256x16xf32> -> vector<256x16xf32>
    %192 = arith.truncf %191 : vector<256x16xf32> to vector<256x16xbf16>
    %c32_88 = arith.constant 32 : index
    %c0_89 = arith.constant 0 : index
    %193 = vector.load %arg20[%c32_88, %c0_89] : memref<64x64xbf16, #tpu.memory_space<vmem>>, vector<16x64xbf16>
    %cst_90 = arith.constant dense<0.000000e+00> : vector<256x64xf32>
    %194 = tpu.matmul %192, %193, %cst_90 {dimension_numbers = #tpu.dot_dimension_numbers<[1], [0], [0], [1], [0, 0, 1, 1], [], []>} : vector<256x16xbf16>, vector<16x64xbf16>, vector<256x64xf32> -> vector<256x64xf32>
    %195 = arith.addf %174, %194 : vector<256x64xf32>
    %196 = vector.extract_strided_slice %129 {offsets = [0, 48], sizes = [256, 16], strides = [1, 1]} : vector<256x64xf32> to vector<256x16xf32>
    %197 = arith.truncf %196 : vector<256x16xf32> to vector<256x16xbf16>
    %198 = vector.extract_strided_slice %131 {offsets = [0, 48], sizes = [8, 16], strides = [1, 1]} : vector<8x64xbf16> to vector<8x16xbf16>
    %199 = vector.extract_strided_slice %133 {offsets = [0, 48], sizes = [8, 16], strides = [1, 1]} : vector<8x64xbf16> to vector<8x16xbf16>
    %cst_91 = arith.constant dense<0.000000e+00> : vector<8x256xf32>
    %200 = tpu.matmul %198, %197, %cst_91 {dimension_numbers = #tpu.dot_dimension_numbers<[1], [1], [0], [0], [0, 0, 1, 0], [], []>} : vector<8x16xbf16>, vector<256x16xbf16>, vector<8x256xf32> -> vector<8x256xf32>
    %cst_92 = arith.constant dense<0xFF800000> : vector<256xf32>
    %201 = vector.multi_reduction <maximumf>, %200, %cst_92 [0] : vector<8x256xf32> to vector<256xf32>
    %202 = vector.shape_cast %201 : vector<256xf32> to vector<1x256xf32>
    %203 = vector.broadcast %202 : vector<1x256xf32> to vector<8x256xf32>
    %204 = arith.subf %200, %203 : vector<8x256xf32>
    %205 = math.exp %204 : vector<8x256xf32>
    %cst_93 = arith.constant dense<0.000000e+00> : vector<256xf32>
    %206 = vector.multi_reduction <add>, %205, %cst_93 [0] : vector<8x256xf32> to vector<256xf32>
    %207 = vector.shape_cast %206 : vector<256xf32> to vector<1x256xf32>
    %208 = tpu.reciprocal %207 {approx = true} : vector<1x256xf32> -> vector<1x256xf32>
    %209 = vector.broadcast %208 : vector<1x256xf32> to vector<8x256xf32>
    %210 = arith.mulf %205, %209 : vector<8x256xf32>
    %211 = arith.truncf %210 : vector<8x256xf32> to vector<8x256xbf16>
    %cst_94 = arith.constant dense<0.000000e+00> : vector<256x16xf32>
    %212 = tpu.matmul %211, %199, %cst_94 {dimension_numbers = #tpu.dot_dimension_numbers<[0], [0], [1], [1], [0, 1, 1, 1], [], []>} : vector<8x256xbf16>, vector<8x16xbf16>, vector<256x16xf32> -> vector<256x16xf32>
    %213 = arith.truncf %212 : vector<256x16xf32> to vector<256x16xbf16>
    %c48_95 = arith.constant 48 : index
    %c0_96 = arith.constant 0 : index
    %214 = vector.load %arg20[%c48_95, %c0_96] : memref<64x64xbf16, #tpu.memory_space<vmem>>, vector<16x64xbf16>
    %cst_97 = arith.constant dense<0.000000e+00> : vector<256x64xf32>
    %215 = tpu.matmul %213, %214, %cst_97 {dimension_numbers = #tpu.dot_dimension_numbers<[1], [0], [0], [1], [0, 0, 1, 1], [], []>} : vector<256x16xbf16>, vector<16x64xbf16>, vector<256x64xf32> -> vector<256x64xf32>
    %216 = arith.addf %195, %215 : vector<256x64xf32>
    %c0_98 = arith.constant 0 : index
    %c0_99 = arith.constant 0 : index
    %217 = vector.load %arg21[%c0_98, %c0_99] : memref<1x64xf32, #tpu.memory_space<vmem>>, vector<1x64xf32>
    %218 = vector.broadcast %217 : vector<1x64xf32> to vector<256x64xf32>
    %219 = arith.addf %216, %218 : vector<256x64xf32>
    %220 = tpu.transpose %219, [1, 0] : vector<256x64xf32> -> vector<64x256xf32>
    %c0_100 = arith.constant 0 : index
    %c0_101 = arith.constant 0 : index
    %c0_102 = arith.constant 0 : index
    %221 = vector.load %arg22[%c0_100, %c0_101, %c0_102] : memref<1x64x256xf32, #tpu.memory_space<vmem>>, vector<1x64x256xf32>
    %222 = vector.shape_cast %221 : vector<1x64x256xf32> to vector<64x256xf32>
    %223 = vector.shape_cast %220 : vector<64x256xf32> to vector<1x64x256xf32>
    tpu.vector_store %arg22[%c0_100, %c0_101, %c0_102], %223 {strides = array<i32>} : memref<1x64x256xf32, #tpu.memory_space<vmem>>, vector<1x64x256xf32>,
    return
  }
  func.func @transform_0(%arg0: i32, %arg1: i32) -> (i32, i32, i32) {
    %c0_i32 = arith.constant 0 : i32
    %c0_i32_0 = arith.constant 0 : i32
    return %arg0, %c0_i32, %arg1 : i32, i32, i32
  }
  func.func @transform_1(%arg0: i32, %arg1: i32) -> (i32, i32, i32) {
    %c0_i32 = arith.constant 0 : i32
    %c0_i32_0 = arith.constant 0 : i32
    return %arg0, %arg1, %c0_i32 : i32, i32, i32
  }
  func.func @transform_2(%arg0: i32, %arg1: i32) -> (i32, i32, i32) {
    %c0_i32 = arith.constant 0 : i32
    %c0_i32_0 = arith.constant 0 : i32
    %c0_i32_1 = arith.constant 0 : i32
    return %arg0, %c0_i32, %c0_i32_0 : i32, i32, i32
  }
  func.func @transform_3(%arg0: i32, %arg1: i32) -> (i32, i32, i32) {
    %c0_i32 = arith.constant 0 : i32
    %c0_i32_0 = arith.constant 0 : i32
    %c0_i32_1 = arith.constant 0 : i32
    return %arg0, %c0_i32, %c0_i32_0 : i32, i32, i32
  }
  func.func @transform_4(%arg0: i32, %arg1: i32) -> (i32, i32, i32) {
    %c0_i32 = arith.constant 0 : i32
    %c0_i32_0 = arith.constant 0 : i32
    %c0_i32_1 = arith.constant 0 : i32
    return %arg0, %c0_i32, %c0_i32_0 : i32, i32, i32
  }
  func.func @transform_5(%arg0: i32, %arg1: i32) -> (i32, i32, i32) {
    %c0_i32 = arith.constant 0 : i32
    %c0_i32_0 = arith.constant 0 : i32
    %c0_i32_1 = arith.constant 0 : i32
    return %arg0, %c0_i32, %c0_i32_0 : i32, i32, i32
  }
  func.func @transform_6(%arg0: i32, %arg1: i32) -> (i32, i32) {
    %c0_i32 = arith.constant 0 : i32
    %c0_i32_0 = arith.constant 0 : i32
    %c0_i32_1 = arith.constant 0 : i32
    return %c0_i32, %c0_i32_0 : i32, i32
  }
  func.func @transform_7(%arg0: i32, %arg1: i32) -> (i32, i32) {
    %c0_i32 = arith.constant 0 : i32
    %c0_i32_0 = arith.constant 0 : i32
    %c0_i32_1 = arith.constant 0 : i32
    return %c0_i32, %c0_i32_0 : i32, i32
  }
  func.func @transform_8(%arg0: i32, %arg1: i32) -> (i32, i32) {
    %c0_i32 = arith.constant 0 : i32
    %c0_i32_0 = arith.constant 0 : i32
    %c0_i32_1 = arith.constant 0 : i32
    return %c0_i32, %c0_i32_0 : i32, i32
  }
  func.func @transform_9(%arg0: i32, %arg1: i32) -> (i32, i32) {
    %c0_i32 = arith.constant 0 : i32
    %c0_i32_0 = arith.constant 0 : i32
    %c0_i32_1 = arith.constant 0 : i32
    return %c0_i32, %c0_i32_0 : i32, i32
  }
  func.func @transform_10(%arg0: i32, %arg1: i32) -> (i32, i32) {
    %c0_i32 = arith.constant 0 : i32
    %c0_i32_0 = arith.constant 0 : i32
    %c0_i32_1 = arith.constant 0 : i32
    return %c0_i32, %c0_i32_0 : i32, i32
  }
  func.func @transform_11(%arg0: i32, %arg1: i32) -> (i32, i32) {
    %c0_i32 = arith.constant 0 : i32
    %c0_i32_0 = arith.constant 0 : i32
    %c0_i32_1 = arith.constant 0 : i32
    return %c0_i32, %c0_i32_0 : i32, i32
  }
  func.func @transform_12(%arg0: i32, %arg1: i32) -> (i32, i32) {
    %c0_i32 = arith.constant 0 : i32
    %c0_i32_0 = arith.constant 0 : i32
    %c0_i32_1 = arith.constant 0 : i32
    return %c0_i32, %c0_i32_0 : i32, i32
  }
  func.func @transform_13(%arg0: i32, %arg1: i32) -> (i32, i32) {
    %c0_i32 = arith.constant 0 : i32
    %c0_i32_0 = arith.constant 0 : i32
    %c0_i32_1 = arith.constant 0 : i32
    return %c0_i32, %c0_i32_0 : i32, i32
  }
  func.func @transform_14(%arg0: i32, %arg1: i32) -> (i32, i32) {
    %c0_i32 = arith.constant 0 : i32
    %c0_i32_0 = arith.constant 0 : i32
    %c0_i32_1 = arith.constant 0 : i32
    return %c0_i32, %c0_i32_0 : i32, i32
  }
  func.func @transform_15(%arg0: i32, %arg1: i32) -> (i32, i32) {
    %c0_i32 = arith.constant 0 : i32
    %c0_i32_0 = arith.constant 0 : i32
    %c0_i32_1 = arith.constant 0 : i32
    return %c0_i32, %c0_i32_0 : i32, i32
  }
  func.func @transform_16(%arg0: i32, %arg1: i32) -> (i32, i32) {
    %c0_i32 = arith.constant 0 : i32
    %c0_i32_0 = arith.constant 0 : i32
    %c0_i32_1 = arith.constant 0 : i32
    return %c0_i32, %c0_i32_0 : i32, i32
  }
  func.func @transform_17(%arg0: i32, %arg1: i32) -> (i32, i32) {
    %c0_i32 = arith.constant 0 : i32
    %c0_i32_0 = arith.constant 0 : i32
    %c0_i32_1 = arith.constant 0 : i32
    return %c0_i32, %c0_i32_0 : i32, i32
  }
  func.func @transform_18(%arg0: i32, %arg1: i32) -> (i32, i32) {
    %c0_i32 = arith.constant 0 : i32
    %c0_i32_0 = arith.constant 0 : i32
    %c0_i32_1 = arith.constant 0 : i32
    return %c0_i32, %c0_i32_0 : i32, i32
  }
  func.func @transform_19(%arg0: i32, %arg1: i32) -> (i32, i32) {
    %c0_i32 = arith.constant 0 : i32
    %c0_i32_0 = arith.constant 0 : i32
    %c0_i32_1 = arith.constant 0 : i32
    return %c0_i32, %c0_i32_0 : i32, i32
  }
  func.func @transform_20(%arg0: i32, %arg1: i32) -> (i32, i32, i32) {
    %c0_i32 = arith.constant 0 : i32
    %c0_i32_0 = arith.constant 0 : i32
    return %arg0, %c0_i32, %arg1 : i32, i32, i32
  }
}

</mosaic_0001>

<llo_original>
// kernel: mlp_mask_decoder_forward.2
$region0: #{mlp_mask_decoder_forward.2}
  #allocation0 [shape = 'u32[]', space=smem, size = 0x4, offset = 0x4, fixed_abs, tag = 'smem constant byte address 0x4 - core index']
  #allocation1 [shape = 'u32[144,128]{1,0:T(1,128)}', space=vmem, size = 0x12000, scoped, tag = 'internal scratch']
  %s0 = inlined_call_operand.vmem [shape: f32[2,8,32], index: 0, kind: input, shape index: {}]
  %s1 = inlined_call_operand.vmem [shape: f32[2,8,64], index: 1, kind: input, shape index: {}]
  %s2 = inlined_call_operand.vmem [shape: f32[2,8,64], index: 2, kind: input, shape index: {}]
  %s3 = inlined_call_operand.vmem [shape: bf16[32,64], index: 3, kind: input, shape index: {}]
  %s4 = inlined_call_operand.vmem [shape: f32[1,64], index: 4, kind: input, shape index: {}]
  %s5 = inlined_call_operand.vmem [shape: bf16[64,64], index: 5, kind: input, shape index: {}]
  %s6 = inlined_call_operand.vmem [shape: f32[1,64], index: 6, kind: input, shape index: {}]
  %s7 = inlined_call_operand.vmem [shape: bf16[64,64], index: 7, kind: input, shape index: {}]
  %s8 = inlined_call_operand.hbm [shape: f32[1,64], index: 8, kind: input, shape index: {}]
  %s9 = inlined_call_operand.hbm [shape: bf16[64,64], index: 9, kind: input, shape index: {}]
  %s10 = inlined_call_operand.hbm [shape: f32[1,64], index: 10, kind: input, shape index: {}]
  %s11 = inlined_call_operand.hbm [shape: bf16[64,64], index: 11, kind: input, shape index: {}]
  %s12 = inlined_call_operand.hbm [shape: f32[1,64], index: 12, kind: input, shape index: {}]
  %s13 = inlined_call_operand.hbm [shape: bf16[64,64], index: 13, kind: input, shape index: {}]
  %s14 = inlined_call_operand.hbm [shape: f32[1,64], index: 14, kind: input, shape index: {}]
  %s15 = inlined_call_operand.hbm [shape: bf16[64,64], index: 15, kind: input, shape index: {}]
  %s16 = inlined_call_operand.hbm [shape: f32[1,64], index: 16, kind: input, shape index: {}]
  %s17 = inlined_call_operand.vmem [shape: bf16[2,8,64], index: 17, kind: output, shape index: {0}]
  %s18 = inlined_call_operand.vmem [shape: bf16[2,8,64], index: 18, kind: output, shape index: {1}]
  %s19 = inlined_call_operand.vmem [shape: bf16[2,8,64], index: 19, kind: output, shape index: {2}]
  %s20 = inlined_call_operand.vmem [shape: bf16[2,8,64], index: 20, kind: output, shape index: {3}]
  %21 = xla_tuple %s17, %s18, %s19, %s20
  %s22 = sld [smem:[#allocation0]]
  $region161: #{mlp_mask_decoder_forward.2} parent=0
    _
  %s24 = ssub.s32 1, %s22
  %s25 = scalar_select 0, %s24, %s22
  $region1: #{mlp_mask_decoder_forward.2} parent=0
    #allocation2 [shape = 'u8[512]{0}', space=vmem, size = 0x400, scoped, tag = 'input window, operand 8, single buffered']
    #allocation3 [shape = 's32[2]{0}', space=sflag, size = 0x8, scoped, tag = 'scoped memory for mlp_mask_decoder_forward.2']
    #allocation4 [shape = 'u8[16384]{0}', space=vmem, size = 0x4000, scoped, tag = 'input window, operand 9, single buffered']
    #allocation5 [shape = 's32[1]{0}', space=sflag, size = 0x4, scoped, tag = 'scoped memory for mlp_mask_decoder_forward.2']
    #allocation6 [shape = 'u8[512]{0}', space=vmem, size = 0x400, scoped, tag = 'input window, operand 10, single buffered']
    #allocation7 [shape = 'u8[16384]{0}', space=vmem, size = 0x4000, scoped, tag = 'input window, operand 11, single buffered']
    #allocation8 [shape = 's32[1]{0}', space=sflag, size = 0x4, scoped, tag = 'scoped memory for mlp_mask_decoder_forward.2']
    #allocation9 [shape = 'u8[512]{0}', space=vmem, size = 0x400, scoped, tag = 'input window, operand 12, single buffered']
    #allocation10 [shape = 'u8[16384]{0}', space=vmem, size = 0x4000, scoped, tag = 'input window, operand 13, single buffered']
    #allocation11 [shape = 's32[1]{0}', space=sflag, size = 0x4, scoped, tag = 'scoped memory for mlp_mask_decoder_forward.2']
    #allocation12 [shape = 'u8[512]{0}', space=vmem, size = 0x400, scoped, tag = 'input window, operand 14, single buffered']
    #allocation13 [shape = 'u8[16384]{0}', space=vmem, size = 0x4000, scoped, tag = 'input window, operand 15, single buffered']
    #allocation14 [shape = 's32[1]{0}', space=sflag, size = 0x4, scoped, tag = 'scoped memory for mlp_mask_decoder_forward.2']
    #allocation15 [shape = 'u8[512]{0}', space=vmem, size = 0x400, scoped, tag = 'input window, operand 16, single buffered']
    %26 = vsyncpa [#allocation3], 0
    %27 = vsyncpa [#allocation5], 0
    %28 = vsyncpa [#allocation8], 0
    %29 = vsyncpa [#allocation11], 0
    %30 = vsyncpa [#allocation14], 0
    loop: start=0, step=1, limit=4
    $region2: #{mlp_mask_decoder_forward.2} parent=1 // loop_pre_header
      _
    $region3: #{mlp_mask_decoder_forward.2} parent=1 // loop_header
      %s32 = sphi 0, %s36
      %p33 = scmp.ge.s32.totalorder %s32, 4
      %s42 = sphi 0, %s44
      %s45 = sphi 0, %s42
      %s46 = sphi 0, %s45
      %s62 = sphi 0, %s46
      %s68 = sphi 0, %s70
      %s71 = sphi 0, %s68
      %s72 = sphi 0, %s71
      %s88 = sphi 0, %s72
      %s94 = sphi 0, %s96
      %s97 = sphi 0, %s94
      %s98 = sphi 0, %s97
      %s114 = sphi 0, %s98
      %s118 = sphi 0, %s118
      %s120 = sphi 0, %s118
      %s121 = sphi 0, %s120
      %s135 = sphi 0, %s121
      %s139 = sphi 0, %s139
      %s141 = sphi 0, %s139
      %s142 = sphi 0, %s141
      %s156 = sphi 0, %s142
      %s160 = sphi 0, %s160
      %s162 = sphi 0, %s160
      %s163 = sphi 0, %s162
      %s177 = sphi 0, %s163
      %s181 = sphi 0, %s181
      %s183 = sphi 0, %s181
      %s184 = sphi 0, %s183
      %s198 = sphi 0, %s184
      %s202 = sphi 0, %s202
      %s204 = sphi 0, %s202
      %s205 = sphi 0, %s204
      %s219 = sphi 0, %s205
      %s223 = sphi 0, %s223
      %s225 = sphi 0, %s223
      %s226 = sphi 0, %s225
      %s240 = sphi 0, %s226
      %s244 = sphi 0, %s244
      %s246 = sphi 0, %s244
      %s247 = sphi 0, %s246
      %s261 = sphi 0, %s247
      %s265 = sphi 0, %s265
      %s267 = sphi 0, %s265
      %s268 = sphi 0, %s267
      %s282 = sphi 0, %s268
      %s286 = sphi 0, %s286
      %s288 = sphi 0, %s286
      %s289 = sphi 0, %s288
      %s303 = sphi 0, %s289
      %s307 = sphi 0, %s307
      %s309 = sphi 0, %s307
      %s310 = sphi 0, %s309
      %s324 = sphi 0, %s310
      %s328 = sphi 0, %s328
      %s330 = sphi 0, %s328
      %s331 = sphi 0, %s330
      %s345 = sphi 0, %s331
      %s349 = sphi 0, %s349
      %s351 = sphi 0, %s349
      %s352 = sphi 0, %s351
      %s366 = sphi 0, %s352
      %s370 = sphi 0, %s370
      %s372 = sphi 0, %s370
      %s373 = sphi 0, %s372
      %s387 = sphi 0, %s373
      %s391 = sphi 0, %s391
      %s393 = sphi 0, %s391
      %s394 = sphi 0, %s393
      %s408 = sphi 0, %s394
      %s414 = sphi 0, %s416
      %s417 = sphi 0, %s414
      %s418 = sphi 0, %s417
      %s434 = sphi 0, %s418
      %s440 = sphi 0, %s442
      %s443 = sphi 0, %s440
      %s444 = sphi 0, %s443
      %s460 = sphi 0, %s444
      %s466 = sphi 0, %s468
      %s469 = sphi 0, %s466
      %s470 = sphi 0, %s469
      %s486 = sphi 0, %s470
      %s492 = sphi 0, %s494
      %s495 = sphi 0, %s492
      %s496 = sphi 0, %s495
      %s512 = sphi 0, %s496
    $region4: #{mlp_mask_decoder_forward.2} parent=1 // loop_header_branch
      %35 = sbr.rel (%p33) target = $region8
    $region5: #{mlp_mask_decoder_forward.2} parent=1 // loop_body
      %s37 = ssub.s32 %s32, 1
      %s38 = ssub.s32 %s32, 2
      %s39 = sadd.s32 %s32, 1
      %s40 = ssub.s32 %s32, %s39
      %p41 = scmp.eq.s32.totalorder %s40, 0
      %s43 = sadd.s32 %s42, 1
      %s44 = scalar_select %p41, %s42, %s43
      %p47 = pneg %p41
      %p48 = scmp.eq.s32.totalorder %s32, 1
      %p49 = por %p47, %p48
      %p50 = scmp.ne.s32.totalorder %s42, %s45
      %p51 = scmp.eq.s32.totalorder %s32, 0
      %p52 = por %p50, %p51
      %p53 = scmp.ne.s32.totalorder %s42, %s45
      %p54 = scmp.eq.s32.totalorder %s37, 1
      %p55 = por %p53, %p54
      %p56 = scmp.ne.s32.totalorder %s45, %s46
      %p57 = scmp.eq.s32.totalorder %s37, 0
      %p58 = por %p56, %p57
      %p59 = scmp.ne.s32.totalorder %s45, %s46
      %p60 = scmp.eq.s32.totalorder %s38, 1
      %p61 = por %p59, %p60
      %p63 = scmp.ne.s32.totalorder %s46, %s62
      %p64 = scmp.eq.s32.totalorder %s38, 0
      %p65 = por %p63, %p64
      %s66 = ssub.s32 %s32, %s39
      %p67 = scmp.eq.s32.totalorder %s66, 0
      %s69 = sadd.s32 %s68, 1
      %s70 = scalar_select %p67, %s68, %s69
      %p73 = pneg %p67
      %p74 = scmp.eq.s32.totalorder %s32, 1
      %p75 = por %p73, %p74
      %p76 = scmp.ne.s32.totalorder %s68, %s71
      %p77 = scmp.eq.s32.totalorder %s32, 0
      %p78 = por %p76, %p77
      %p79 = scmp.ne.s32.totalorder %s68, %s71
      %p80 = scmp.eq.s32.totalorder %s37, 1
      %p81 = por %p79, %p80
      %p82 = scmp.ne.s32.totalorder %s71, %s72
      %p83 = scmp.eq.s32.totalorder %s37, 0
      %p84 = por %p82, %p83
      %p85 = scmp.ne.s32.totalorder %s71, %s72
      %p86 = scmp.eq.s32.totalorder %s38, 1
      %p87 = por %p85, %p86
      %p89 = scmp.ne.s32.totalorder %s72, %s88
      %p90 = scmp.eq.s32.totalorder %s38, 0
      %p91 = por %p89, %p90
      %s92 = ssub.s32 %s32, %s39
      %p93 = scmp.eq.s32.totalorder %s92, 0
      %s95 = sadd.s32 %s94, 1
      %s96 = scalar_select %p93, %s94, %s95
      %p99 = pneg %p93
      %p100 = scmp.eq.s32.totalorder %s32, 1
      %p101 = por %p99, %p100
      %p102 = scmp.ne.s32.totalorder %s94, %s97
      %p103 = scmp.eq.s32.totalorder %s32, 0
      %p104 = por %p102, %p103
      %p105 = scmp.ne.s32.totalorder %s94, %s97
      %p106 = scmp.eq.s32.totalorder %s37, 1
      %p107 = por %p105, %p106
      %p108 = scmp.ne.s32.totalorder %s97, %s98
      %p109 = scmp.eq.s32.totalorder %s37, 0
      %p110 = por %p108, %p109
      %p111 = scmp.ne.s32.totalorder %s97, %s98
      %p112 = scmp.eq.s32.totalorder %s38, 1
      %p113 = por %p111, %p112
      %p115 = scmp.ne.s32.totalorder %s98, %s114
      %p116 = scmp.eq.s32.totalorder %s38, 0
      %p117 = por %p115, %p116
      %s119 = sadd.s32 %s118, 1
      %p122 = scmp.eq.s32.totalorder %s32, 1
      %p123 = scmp.ne.s32.totalorder %s118, %s120
      %p124 = scmp.eq.s32.totalorder %s32, 0
      %p125 = por %p123, %p124
      %p126 = scmp.ne.s32.totalorder %s118, %s120
      %p127 = scmp.eq.s32.totalorder %s37, 1
      %p128 = por %p126, %p127
      %p129 = scmp.ne.s32.totalorder %s120, %s121
      %p130 = scmp.eq.s32.totalorder %s37, 0
      %p131 = por %p129, %p130
      %p132 = scmp.ne.s32.totalorder %s120, %s121
      %p133 = scmp.eq.s32.totalorder %s38, 1
      %p134 = por %p132, %p133
      %p136 = scmp.ne.s32.totalorder %s121, %s135
      %p137 = scmp.eq.s32.totalorder %s38, 0
      %p138 = por %p136, %p137
      %s140 = sadd.s32 %s139, 1
      %p143 = scmp.eq.s32.totalorder %s32, 1
      %p144 = scmp.ne.s32.totalorder %s139, %s141
      %p145 = scmp.eq.s32.totalorder %s32, 0
      %p146 = por %p144, %p145
      %p147 = scmp.ne.s32.totalorder %s139, %s141
      %p148 = scmp.eq.s32.totalorder %s37, 1
      %p149 = por %p147, %p148
      %p150 = scmp.ne.s32.totalorder %s141, %s142
      %p151 = scmp.eq.s32.totalorder %s37, 0
      %p152 = por %p150, %p151
      %p153 = scmp.ne.s32.totalorder %s141, %s142
      %p154 = scmp.eq.s32.totalorder %s38, 1
      %p155 = por %p153, %p154
      %p157 = scmp.ne.s32.totalorder %s142, %s156
      %p158 = scmp.eq.s32.totalorder %s38, 0
      %p159 = por %p157, %p158
      %s161 = sadd.s32 %s160, 1
      %p164 = scmp.eq.s32.totalorder %s32, 1
      %p165 = scmp.ne.s32.totalorder %s160, %s162
      %p166 = scmp.eq.s32.totalorder %s32, 0
      %p167 = por %p165, %p166
      %p168 = scmp.ne.s32.totalorder %s160, %s162
      %p169 = scmp.eq.s32.totalorder %s37, 1
      %p170 = por %p168, %p169
      %p171 = scmp.ne.s32.totalorder %s162, %s163
      %p172 = scmp.eq.s32.totalorder %s37, 0
      %p173 = por %p171, %p172
      %p174 = scmp.ne.s32.totalorder %s162, %s163
      %p175 = scmp.eq.s32.totalorder %s38, 1
      %p176 = por %p174, %p175
      %p178 = scmp.ne.s32.totalorder %s163, %s177
      %p179 = scmp.eq.s32.totalorder %s38, 0
      %p180 = por %p178, %p179
      %s182 = sadd.s32 %s181, 1
      %p185 = scmp.eq.s32.totalorder %s32, 1
      %p186 = scmp.ne.s32.totalorder %s181, %s183
      %p187 = scmp.eq.s32.totalorder %s32, 0
      %p188 = por %p186, %p187
      %p189 = scmp.ne.s32.totalorder %s181, %s183
      %p190 = scmp.eq.s32.totalorder %s37, 1
      %p191 = por %p189, %p190
      %p192 = scmp.ne.s32.totalorder %s183, %s184
      %p193 = scmp.eq.s32.totalorder %s37, 0
      %p194 = por %p192, %p193
      %p195 = scmp.ne.s32.totalorder %s183, %s184
      %p196 = scmp.eq.s32.totalorder %s38, 1
      %p197 = por %p195, %p196
      %p199 = scmp.ne.s32.totalorder %s184, %s198
      %p200 = scmp.eq.s32.totalorder %s38, 0
      %p201 = por %p199, %p200
      %s203 = sadd.s32 %s202, 1
      %p206 = scmp.eq.s32.totalorder %s32, 1
      %p207 = scmp.ne.s32.totalorder %s202, %s204
      %p208 = scmp.eq.s32.totalorder %s32, 0
      %p209 = por %p207, %p208
      %p210 = scmp.ne.s32.totalorder %s202, %s204
      %p211 = scmp.eq.s32.totalorder %s37, 1
      %p212 = por %p210, %p211
      %p213 = scmp.ne.s32.totalorder %s204, %s205
      %p214 = scmp.eq.s32.totalorder %s37, 0
      %p215 = por %p213, %p214
      %p216 = scmp.ne.s32.totalorder %s204, %s205
      %p217 = scmp.eq.s32.totalorder %s38, 1
      %p218 = por %p216, %p217
      %p220 = scmp.ne.s32.totalorder %s205, %s219
      %p221 = scmp.eq.s32.totalorder %s38, 0
      %p222 = por %p220, %p221
      %s224 = sadd.s32 %s223, 1
      %p227 = scmp.eq.s32.totalorder %s32, 1
      %p228 = scmp.ne.s32.totalorder %s223, %s225
      %p229 = scmp.eq.s32.totalorder %s32, 0
      %p230 = por %p228, %p229
      %p231 = scmp.ne.s32.totalorder %s223, %s225
      %p232 = scmp.eq.s32.totalorder %s37, 1
      %p233 = por %p231, %p232
      %p234 = scmp.ne.s32.totalorder %s225, %s226
      %p235 = scmp.eq.s32.totalorder %s37, 0
      %p236 = por %p234, %p235
      %p237 = scmp.ne.s32.totalorder %s225, %s226
      %p238 = scmp.eq.s32.totalorder %s38, 1
      %p239 = por %p237, %p238
      %p241 = scmp.ne.s32.totalorder %s226, %s240
      %p242 = scmp.eq.s32.totalorder %s38, 0
      %p243 = por %p241, %p242
      %s245 = sadd.s32 %s244, 1
      %p248 = scmp.eq.s32.totalorder %s32, 1
      %p249 = scmp.ne.s32.totalorder %s244, %s246
      %p250 = scmp.eq.s32.totalorder %s32, 0
      %p251 = por %p249, %p250
      %p252 = scmp.ne.s32.totalorder %s244, %s246
      %p253 = scmp.eq.s32.totalorder %s37, 1
      %p254 = por %p252, %p253
      %p255 = scmp.ne.s32.totalorder %s246, %s247
      %p256 = scmp.eq.s32.totalorder %s37, 0
      %p257 = por %p255, %p256
      %p258 = scmp.ne.s32.totalorder %s246, %s247
      %p259 = scmp.eq.s32.totalorder %s38, 1
      %p260 = por %p258, %p259
      %p262 = scmp.ne.s32.totalorder %s247, %s261
      %p263 = scmp.eq.s32.totalorder %s38, 0
      %p264 = por %p262, %p263
      %s266 = sadd.s32 %s265, 1
      %p269 = scmp.eq.s32.totalorder %s32, 1
      %p270 = scmp.ne.s32.totalorder %s265, %s267
      %p271 = scmp.eq.s32.totalorder %s32, 0
      %p272 = por %p270, %p271
      %p273 = scmp.ne.s32.totalorder %s265, %s267
      %p274 = scmp.eq.s32.totalorder %s37, 1
      %p275 = por %p273, %p274
      %p276 = scmp.ne.s32.totalorder %s267, %s268
      %p277 = scmp.eq.s32.totalorder %s37, 0
      %p278 = por %p276, %p277
      %p279 = scmp.ne.s32.totalorder %s267, %s268
      %p280 = scmp.eq.s32.totalorder %s38, 1
      %p281 = por %p279, %p280
      %p283 = scmp.ne.s32.totalorder %s268, %s282
      %p284 = scmp.eq.s32.totalorder %s38, 0
      %p285 = por %p283, %p284
      %s287 = sadd.s32 %s286, 1
      %p290 = scmp.eq.s32.totalorder %s32, 1
      %p291 = scmp.ne.s32.totalorder %s286, %s288
      %p292 = scmp.eq.s32.totalorder %s32, 0
      %p293 = por %p291, %p292
      %p294 = scmp.ne.s32.totalorder %s286, %s288
      %p295 = scmp.eq.s32.totalorder %s37, 1
      %p296 = por %p294, %p295
      %p297 = scmp.ne.s32.totalorder %s288, %s289
      %p298 = scmp.eq.s32.totalorder %s37, 0
      %p299 = por %p297, %p298
      %p300 = scmp.ne.s32.totalorder %s288, %s289
      %p301 = scmp.eq.s32.totalorder %s38, 1
      %p302 = por %p300, %p301
      %p304 = scmp.ne.s32.totalorder %s289, %s303
      %p305 = scmp.eq.s32.totalorder %s38, 0
      %p306 = por %p304, %p305
      %s308 = sadd.s32 %s307, 1
      %p311 = scmp.eq.s32.totalorder %s32, 1
      %p312 = scmp.ne.s32.totalorder %s307, %s309
      %p313 = scmp.eq.s32.totalorder %s32, 0
      %p314 = por %p312, %p313
      %p315 = scmp.ne.s32.totalorder %s307, %s309
      %p316 = scmp.eq.s32.totalorder %s37, 1
      %p317 = por %p315, %p316
      %p318 = scmp.ne.s32.totalorder %s309, %s310
      %p319 = scmp.eq.s32.totalorder %s37, 0
      %p320 = por %p318, %p319
      %p321 = scmp.ne.s32.totalorder %s309, %s310
      %p322 = scmp.eq.s32.totalorder %s38, 1
      %p323 = por %p321, %p322
      %p325 = scmp.ne.s32.totalorder %s310, %s324
      %p326 = scmp.eq.s32.totalorder %s38, 0
      %p327 = por %p325, %p326
      %s329 = sadd.s32 %s328, 1
      %p332 = scmp.eq.s32.totalorder %s32, 1
      %p333 = scmp.ne.s32.totalorder %s328, %s330
      %p334 = scmp.eq.s32.totalorder %s32, 0
      %p335 = por %p333, %p334
      %p336 = scmp.ne.s32.totalorder %s328, %s330
      %p337 = scmp.eq.s32.totalorder %s37, 1
      %p338 = por %p336, %p337
      %p339 = scmp.ne.s32.totalorder %s330, %s331
      %p340 = scmp.eq.s32.totalorder %s37, 0
      %p341 = por %p339, %p340
      %p342 = scmp.ne.s32.totalorder %s330, %s331
      %p343 = scmp.eq.s32.totalorder %s38, 1
      %p344 = por %p342, %p343
      %p346 = scmp.ne.s32.totalorder %s331, %s345
      %p347 = scmp.eq.s32.totalorder %s38, 0
      %p348 = por %p346, %p347
      %s350 = sadd.s32 %s349, 1
      %p353 = scmp.eq.s32.totalorder %s32, 1
      %p354 = scmp.ne.s32.totalorder %s349, %s351
      %p355 = scmp.eq.s32.totalorder %s32, 0
      %p356 = por %p354, %p355
      %p357 = scmp.ne.s32.totalorder %s349, %s351
      %p358 = scmp.eq.s32.totalorder %s37, 1
      %p359 = por %p357, %p358
      %p360 = scmp.ne.s32.totalorder %s351, %s352
      %p361 = scmp.eq.s32.totalorder %s37, 0
      %p362 = por %p360, %p361
      %p363 = scmp.ne.s32.totalorder %s351, %s352
      %p364 = scmp.eq.s32.totalorder %s38, 1
      %p365 = por %p363, %p364
      %p367 = scmp.ne.s32.totalorder %s352, %s366
      %p368 = scmp.eq.s32.totalorder %s38, 0
      %p369 = por %p367, %p368
      %s371 = sadd.s32 %s370, 1
      %p374 = scmp.eq.s32.totalorder %s32, 1
      %p375 = scmp.ne.s32.totalorder %s370, %s372
      %p376 = scmp.eq.s32.totalorder %s32, 0
      %p377 = por %p375, %p376
      %p378 = scmp.ne.s32.totalorder %s370, %s372
      %p379 = scmp.eq.s32.totalorder %s37, 1
      %p380 = por %p378, %p379
      %p381 = scmp.ne.s32.totalorder %s372, %s373
      %p382 = scmp.eq.s32.totalorder %s37, 0
      %p383 = por %p381, %p382
      %p384 = scmp.ne.s32.totalorder %s372, %s373
      %p385 = scmp.eq.s32.totalorder %s38, 1
      %p386 = por %p384, %p385
      %p388 = scmp.ne.s32.totalorder %s373, %s387
      %p389 = scmp.eq.s32.totalorder %s38, 0
      %p390 = por %p388, %p389
      %s392 = sadd.s32 %s391, 1
      %p395 = scmp.eq.s32.totalorder %s32, 1
      %p396 = scmp.ne.s32.totalorder %s391, %s393
      %p397 = scmp.eq.s32.totalorder %s32, 0
      %p398 = por %p396, %p397
      %p399 = scmp.ne.s32.totalorder %s391, %s393
      %p400 = scmp.eq.s32.totalorder %s37, 1
      %p401 = por %p399, %p400
      %p402 = scmp.ne.s32.totalorder %s393, %s394
      %p403 = scmp.eq.s32.totalorder %s37, 0
      %p404 = por %p402, %p403
      %p405 = scmp.ne.s32.totalorder %s393, %s394
      %p406 = scmp.eq.s32.totalorder %s38, 1
      %p407 = por %p405, %p406
      %p409 = scmp.ne.s32.totalorder %s394, %s408
      %p410 = scmp.eq.s32.totalorder %s38, 0
      %p411 = por %p409, %p410
      %s412 = ssub.s32 %s32, %s39
      %p413 = scmp.eq.s32.totalorder %s412, 0
      %s415 = sadd.s32 %s414, 1
      %s416 = scalar_select %p413, %s414, %s415
      %p419 = pneg %p413
      %p420 = scmp.eq.s32.totalorder %s32, 1
      %p421 = por %p419, %p420
      %p422 = scmp.ne.s32.totalorder %s414, %s417
      %p423 = scmp.eq.s32.totalorder %s32, 0
      %p424 = por %p422, %p423
      %p425 = scmp.ne.s32.totalorder %s414, %s417
      %p426 = scmp.eq.s32.totalorder %s37, 1
      %p427 = por %p425, %p426
      %p428 = scmp.ne.s32.totalorder %s417, %s418
      %p429 = scmp.eq.s32.totalorder %s37, 0
      %p430 = por %p428, %p429
      %p431 = scmp.ne.s32.totalorder %s417, %s418
      %p432 = scmp.eq.s32.totalorder %s38, 1
      %p433 = por %p431, %p432
      %p435 = scmp.ne.s32.totalorder %s418, %s434
      %p436 = scmp.eq.s32.totalorder %s38, 0
      %p437 = por %p435, %p436
      %s438 = ssub.s32 %s32, %s39
      %p439 = scmp.eq.s32.totalorder %s438, 0
      %s441 = sadd.s32 %s440, 1
      %s442 = scalar_select %p439, %s440, %s441
      %p445 = pneg %p439
      %p446 = scmp.eq.s32.totalorder %s32, 1
      %p447 = por %p445, %p446
      %p448 = scmp.ne.s32.totalorder %s440, %s443
      %p449 = scmp.eq.s32.totalorder %s32, 0
      %p450 = por %p448, %p449
      %p451 = scmp.ne.s32.totalorder %s440, %s443
      %p452 = scmp.eq.s32.totalorder %s37, 1
      %p453 = por %p451, %p452
      %p454 = scmp.ne.s32.totalorder %s443, %s444
      %p455 = scmp.eq.s32.totalorder %s37, 0
      %p456 = por %p454, %p455
      %p457 = scmp.ne.s32.totalorder %s443, %s444
      %p458 = scmp.eq.s32.totalorder %s38, 1
      %p459 = por %p457, %p458
      %p461 = scmp.ne.s32.totalorder %s444, %s460
      %p462 = scmp.eq.s32.totalorder %s38, 0
      %p463 = por %p461, %p462
      %s464 = ssub.s32 %s32, %s39
      %p465 = scmp.eq.s32.totalorder %s464, 0
      %s467 = sadd.s32 %s466, 1
      %s468 = scalar_select %p465, %s466, %s467
      %p471 = pneg %p465
      %p472 = scmp.eq.s32.totalorder %s32, 1
      %p473 = por %p471, %p472
      %p474 = scmp.ne.s32.totalorder %s466, %s469
      %p475 = scmp.eq.s32.totalorder %s32, 0
      %p476 = por %p474, %p475
      %p477 = scmp.ne.s32.totalorder %s466, %s469
      %p478 = scmp.eq.s32.totalorder %s37, 1
      %p479 = por %p477, %p478
      %p480 = scmp.ne.s32.totalorder %s469, %s470
      %p481 = scmp.eq.s32.totalorder %s37, 0
      %p482 = por %p480, %p481
      %p483 = scmp.ne.s32.totalorder %s469, %s470
      %p484 = scmp.eq.s32.totalorder %s38, 1
      %p485 = por %p483, %p484
      %p487 = scmp.ne.s32.totalorder %s470, %s486
      %p488 = scmp.eq.s32.totalorder %s38, 0
      %p489 = por %p487, %p488
      %s490 = ssub.s32 %s32, %s39
      %p491 = scmp.eq.s32.totalorder %s490, 0
      %s493 = sadd.s32 %s492, 1
      %s494 = scalar_select %p491, %s492, %s493
      %p497 = pneg %p491
      %p498 = scmp.eq.s32.totalorder %s32, 1
      %p499 = por %p497, %p498
      %p500 = scmp.ne.s32.totalorder %s492, %s495
      %p501 = scmp.eq.s32.totalorder %s32, 0
      %p502 = por %p500, %p501
      %p503 = scmp.ne.s32.totalorder %s492, %s495
      %p504 = scmp.eq.s32.totalorder %s37, 1
      %p505 = por %p503, %p504
      %p506 = scmp.ne.s32.totalorder %s495, %s496
      %p507 = scmp.eq.s32.totalorder %s37, 0
      %p508 = por %p506, %p507
      %p509 = scmp.ne.s32.totalorder %s495, %s496
      %p510 = scmp.eq.s32.totalorder %s38, 1
      %p511 = por %p509, %p510
      %p513 = scmp.ne.s32.totalorder %s496, %s512
      %p514 = scmp.eq.s32.totalorder %s38, 0
      %p515 = por %p513, %p514
      %p516 = scmp.le.s32.totalorder 1, %s32
      %p517 = scmp.lt.s32.totalorder %s32, 3
      %p518 = pnand %p516, %p517
      %p519 = pneg %p518
      // Predicated region
      $region9: #{mlp_mask_decoder_forward.2} parent=5 // pred_check
        _
      $region10: #{mlp_mask_decoder_forward.2} parent=5 // pred_check_branch
        %521 = sbr.rel (%p518) target = $region12
      $region11: #{mlp_mask_decoder_forward.2} parent=5 // pred_region
        %s522 = ssub.s32 %s32, 1
        // Predicated region
        $region13: #{mlp_mask_decoder_forward.2} parent=11 // pred_check
          %p523 = pneg %p131
        $region14: #{mlp_mask_decoder_forward.2} parent=11 // pred_check_branch
          %525 = sbr.rel (%p523) target = $region16
        $region15: #{mlp_mask_decoder_forward.2} parent=11 // pred_region
          _
        $region16: #{mlp_mask_decoder_forward.2} parent=11 // pred_fallthru
          _
        // Predicated region
        $region17: #{mlp_mask_decoder_forward.2} parent=11 // pred_check
          %p526 = pneg %p152
        $region18: #{mlp_mask_decoder_forward.2} parent=11 // pred_check_branch
          %528 = sbr.rel (%p526) target = $region20
        $region19: #{mlp_mask_decoder_forward.2} parent=11 // pred_region
          _
        $region20: #{mlp_mask_decoder_forward.2} parent=11 // pred_fallthru
          _
        // Predicated region
        $region21: #{mlp_mask_decoder_forward.2} parent=11 // pred_check
          %p529 = pneg %p173
        $region22: #{mlp_mask_decoder_forward.2} parent=11 // pred_check_branch
          %531 = sbr.rel (%p529) target = $region24
        $region23: #{mlp_mask_decoder_forward.2} parent=11 // pred_region
          _
        $region24: #{mlp_mask_decoder_forward.2} parent=11 // pred_fallthru
          _
        // Predicated region
        $region25: #{mlp_mask_decoder_forward.2} parent=11 // pred_check
          %p532 = pneg %p194
        $region26: #{mlp_mask_decoder_forward.2} parent=11 // pred_check_branch
          %534 = sbr.rel (%p532) target = $region28
        $region27: #{mlp_mask_decoder_forward.2} parent=11 // pred_region
          _
        $region28: #{mlp_mask_decoder_forward.2} parent=11 // pred_fallthru
          _
        // Predicated region
        $region29: #{mlp_mask_decoder_forward.2} parent=11 // pred_check
          %p535 = pneg %p215
        $region30: #{mlp_mask_decoder_forward.2} parent=11 // pred_check_branch
          %537 = sbr.rel (%p535) target = $region32
        $region31: #{mlp_mask_decoder_forward.2} parent=11 // pred_region
          _
        $region32: #{mlp_mask_decoder_forward.2} parent=11 // pred_fallthru
          _
        // Predicated region
        $region33: #{mlp_mask_decoder_forward.2} parent=11 // pred_check
          %p538 = pneg %p236
        $region34: #{mlp_mask_decoder_forward.2} parent=11 // pred_check_branch
          %540 = sbr.rel (%p538) target = $region36
        $region35: #{mlp_mask_decoder_forward.2} parent=11 // pred_region
          %s542 = ssub.s32 16, 16
          %543 = vsyncadd [#allocation3], %s542
          %s545 = sshll.u32 [#allocation2], 4
          %s546 = int_to_ptr.vmem [resolvable:$true] %s545
          %548 = dma.hbm_to_vmem [thread:$0]  %s8, 16, %s546, [#allocation3]
        $region36: #{mlp_mask_decoder_forward.2} parent=11 // pred_fallthru
          _
        // Predicated region
        $region37: #{mlp_mask_decoder_forward.2} parent=11 // pred_check
          %p549 = pneg %p257
        $region38: #{mlp_mask_decoder_forward.2} parent=11 // pred_check_branch
          %551 = sbr.rel (%p549) target = $region40
        $region39: #{mlp_mask_decoder_forward.2} parent=11 // pred_region
          %s553 = ssub.s32 512, 512
          %554 = vsyncadd [#allocation5], %s553
          %s555 = sshll.u32 [#allocation4], 4
          %s556 = int_to_ptr.vmem [resolvable:$true] %s555
          %561 = dma.hbm_to_vmem [thread:$0]  %s9, 512, %s556, [#allocation5], 64, 64, 4
        $region40: #{mlp_mask_decoder_forward.2} parent=11 // pred_fallthru
          _
        // Predicated region
        $region41: #{mlp_mask_decoder_forward.2} parent=11 // pred_check
          %p562 = pneg %p278
        $region42: #{mlp_mask_decoder_forward.2} parent=11 // pred_check_branch
          %564 = sbr.rel (%p562) target = $region44
        $region43: #{mlp_mask_decoder_forward.2} parent=11 // pred_region
          %s566 = ssub.s32 16, 16
          %567 = vsyncadd [#allocation5], %s566
          %s569 = sshll.u32 [#allocation6], 4
          %s570 = int_to_ptr.vmem [resolvable:$true] %s569
          %572 = dma.hbm_to_vmem [thread:$0]  %s10, 16, %s570, [#allocation5]
        $region44: #{mlp_mask_decoder_forward.2} parent=11 // pred_fallthru
          _
        // Predicated region
        $region45: #{mlp_mask_decoder_forward.2} parent=11 // pred_check
          %p573 = pneg %p299
        $region46: #{mlp_mask_decoder_forward.2} parent=11 // pred_check_branch
          %575 = sbr.rel (%p573) target = $region48
        $region47: #{mlp_mask_decoder_forward.2} parent=11 // pred_region
          %s577 = ssub.s32 512, 512
          %578 = vsyncadd [#allocation8], %s577
          %s579 = sshll.u32 [#allocation7], 4
          %s580 = int_to_ptr.vmem [resolvable:$true] %s579
          %585 = dma.hbm_to_vmem [thread:$0]  %s11, 512, %s580, [#allocation8], 64, 64, 4
        $region48: #{mlp_mask_decoder_forward.2} parent=11 // pred_fallthru
          _
        // Predicated region
        $region49: #{mlp_mask_decoder_forward.2} parent=11 // pred_check
          %p586 = pneg %p320
        $region50: #{mlp_mask_decoder_forward.2} parent=11 // pred_check_branch
          %588 = sbr.rel (%p586) target = $region52
        $region51: #{mlp_mask_decoder_forward.2} parent=11 // pred_region
          %s590 = ssub.s32 16, 16
          %591 = vsyncadd [#allocation8], %s590
          %s593 = sshll.u32 [#allocation9], 4
          %s594 = int_to_ptr.vmem [resolvable:$true] %s593
          %596 = dma.hbm_to_vmem [thread:$0]  %s12, 16, %s594, [#allocation8]
        $region52: #{mlp_mask_decoder_forward.2} parent=11 // pred_fallthru
          _
        // Predicated region
        $region53: #{mlp_mask_decoder_forward.2} parent=11 // pred_check
          %p597 = pneg %p341
        $region54: #{mlp_mask_decoder_forward.2} parent=11 // pred_check_branch
          %599 = sbr.rel (%p597) target = $region56
        $region55: #{mlp_mask_decoder_forward.2} parent=11 // pred_region
          %s601 = ssub.s32 512, 512
          %602 = vsyncadd [#allocation11], %s601
          %s603 = sshll.u32 [#allocation10], 4
          %s604 = int_to_ptr.vmem [resolvable:$true] %s603
          %609 = dma.hbm_to_vmem [thread:$0]  %s13, 512, %s604, [#allocation11], 64, 64, 4
        $region56: #{mlp_mask_decoder_forward.2} parent=11 // pred_fallthru
          _
        // Predicated region
        $region57: #{mlp_mask_decoder_forward.2} parent=11 // pred_check
          %p610 = pneg %p362
        $region58: #{mlp_mask_decoder_forward.2} parent=11 // pred_check_branch
          %612 = sbr.rel (%p610) target = $region60
        $region59: #{mlp_mask_decoder_forward.2} parent=11 // pred_region
          %s614 = ssub.s32 16, 16
          %615 = vsyncadd [#allocation11], %s614
          %s617 = sshll.u32 [#allocation12], 4
          %s618 = int_to_ptr.vmem [resolvable:$true] %s617
          %620 = dma.hbm_to_vmem [thread:$0]  %s14, 16, %s618, [#allocation11]
        $region60: #{mlp_mask_decoder_forward.2} parent=11 // pred_fallthru
          _
        // Predicated region
        $region61: #{mlp_mask_decoder_forward.2} parent=11 // pred_check
          %p621 = pneg %p383
        $region62: #{mlp_mask_decoder_forward.2} parent=11 // pred_check_branch
          %623 = sbr.rel (%p621) target = $region64
        $region63: #{mlp_mask_decoder_forward.2} parent=11 // pred_region
          %s625 = ssub.s32 512, 512
          %626 = vsyncadd [#allocation14], %s625
          %s627 = sshll.u32 [#allocation13], 4
          %s628 = int_to_ptr.vmem [resolvable:$true] %s627
          %633 = dma.hbm_to_vmem [thread:$0]  %s15, 512, %s628, [#allocation14], 64, 64, 4
        $region64: #{mlp_mask_decoder_forward.2} parent=11 // pred_fallthru
          _
        // Predicated region
        $region65: #{mlp_mask_decoder_forward.2} parent=11 // pred_check
          %p634 = pneg %p404
        $region66: #{mlp_mask_decoder_forward.2} parent=11 // pred_check_branch
          %636 = sbr.rel (%p634) target = $region68
        $region67: #{mlp_mask_decoder_forward.2} parent=11 // pred_region
          %s638 = ssub.s32 16, 16
          %639 = vsyncadd [#allocation14], %s638
          %s641 = sshll.u32 [#allocation15], 4
          %s642 = int_to_ptr.vmem [resolvable:$true] %s641
          %644 = dma.hbm_to_vmem [thread:$0]  %s16, 16, %s642, [#allocation14]
        $region68: #{mlp_mask_decoder_forward.2} parent=11 // pred_fallthru
          _
      $region12: #{mlp_mask_decoder_forward.2} parent=5 // pred_fallthru
        _
      %p645 = scmp.lt.s32.totalorder %s32, 2
      // Predicated region
      $region69: #{mlp_mask_decoder_forward.2} parent=5 // pred_check
        %p646 = pneg %p645
      $region70: #{mlp_mask_decoder_forward.2} parent=5 // pred_check_branch
        %648 = sbr.rel (%p646) target = $region72
      $region71: #{mlp_mask_decoder_forward.2} parent=5 // pred_region
        // Predicated region
        $region73: #{mlp_mask_decoder_forward.2} parent=71 // pred_check
          %p649 = pneg %p52
        $region74: #{mlp_mask_decoder_forward.2} parent=71 // pred_check_branch
          %651 = sbr.rel (%p649) target = $region76
        $region75: #{mlp_mask_decoder_forward.2} parent=71 // pred_region
          %p652 = scmp.lt.s32.totalorder %s32, 1
          %s653 = scalar_select %p652, %s32, 1
          %s654 = smul.addr %s653, 8
          %s655 = scalar_lea.vmem %s0, %s654
        $region76: #{mlp_mask_decoder_forward.2} parent=71 // pred_fallthru
          _
        // Predicated region
        $region77: #{mlp_mask_decoder_forward.2} parent=71 // pred_check
          %p656 = pneg %p78
        $region78: #{mlp_mask_decoder_forward.2} parent=71 // pred_check_branch
          %658 = sbr.rel (%p656) target = $region80
        $region79: #{mlp_mask_decoder_forward.2} parent=71 // pred_region
          %p659 = scmp.lt.s32.totalorder %s32, 1
          %s660 = scalar_select %p659, %s32, 1
          %s661 = smul.addr %s660, 8
          %s662 = scalar_lea.vmem %s1, %s661
        $region80: #{mlp_mask_decoder_forward.2} parent=71 // pred_fallthru
          _
        // Predicated region
        $region81: #{mlp_mask_decoder_forward.2} parent=71 // pred_check
          %p663 = pneg %p104
        $region82: #{mlp_mask_decoder_forward.2} parent=71 // pred_check_branch
          %665 = sbr.rel (%p663) target = $region84
        $region83: #{mlp_mask_decoder_forward.2} parent=71 // pred_region
          %p666 = scmp.lt.s32.totalorder %s32, 1
          %s667 = scalar_select %p666, %s32, 1
          %s668 = smul.addr %s667, 8
          %s669 = scalar_lea.vmem %s2, %s668
        $region84: #{mlp_mask_decoder_forward.2} parent=71 // pred_fallthru
          _
      $region72: #{mlp_mask_decoder_forward.2} parent=5 // pred_fallthru
        _
      %p670 = scmp.le.s32.totalorder 1, %s32
      %p671 = scmp.lt.s32.totalorder %s32, 3
      %p672 = pnand %p670, %p671
      %p673 = pneg %p672
      // Predicated region
      $region85: #{mlp_mask_decoder_forward.2} parent=5 // pred_check
        _
      $region86: #{mlp_mask_decoder_forward.2} parent=5 // pred_check_branch
        %675 = sbr.rel (%p672) target = $region88
      $region87: #{mlp_mask_decoder_forward.2} parent=5 // pred_region
        %s676 = ssub.s32 %s32, 1
        // Predicated region
        $region89: #{mlp_mask_decoder_forward.2} parent=87 // pred_check
          %p677 = pneg %p236
        $region90: #{mlp_mask_decoder_forward.2} parent=87 // pred_check_branch
          %679 = sbr.rel (%p677) target = $region92
        $region91: #{mlp_mask_decoder_forward.2} parent=87 // pred_region
          %680 = dma.done [#allocation3], 16
        $region92: #{mlp_mask_decoder_forward.2} parent=87 // pred_fallthru
          _
        // Predicated region
        $region93: #{mlp_mask_decoder_forward.2} parent=87 // pred_check
          %p681 = pneg %p257
        $region94: #{mlp_mask_decoder_forward.2} parent=87 // pred_check_branch
          %683 = sbr.rel (%p681) target = $region96
        $region95: #{mlp_mask_decoder_forward.2} parent=87 // pred_region
          %684 = dma.done [#allocation5], 512
        $region96: #{mlp_mask_decoder_forward.2} parent=87 // pred_fallthru
          _
        // Predicated region
        $region97: #{mlp_mask_decoder_forward.2} parent=87 // pred_check
          %p685 = pneg %p278
        $region98: #{mlp_mask_decoder_forward.2} parent=87 // pred_check_branch
          %687 = sbr.rel (%p685) target = $region100
        $region99: #{mlp_mask_decoder_forward.2} parent=87 // pred_region
          %688 = dma.done [#allocation5], 16
        $region100: #{mlp_mask_decoder_forward.2} parent=87 // pred_fallthru
          _
        // Predicated region
        $region101: #{mlp_mask_decoder_forward.2} parent=87 // pred_check
          %p689 = pneg %p299
        $region102: #{mlp_mask_decoder_forward.2} parent=87 // pred_check_branch
          %691 = sbr.rel (%p689) target = $region104
        $region103: #{mlp_mask_decoder_forward.2} parent=87 // pred_region
          %692 = dma.done [#allocation8], 512
        $region104: #{mlp_mask_decoder_forward.2} parent=87 // pred_fallthru
          _
        // Predicated region
        $region105: #{mlp_mask_decoder_forward.2} parent=87 // pred_check
          %p693 = pneg %p320
        $region106: #{mlp_mask_decoder_forward.2} parent=87 // pred_check_branch
          %695 = sbr.rel (%p693) target = $region108
        $region107: #{mlp_mask_decoder_forward.2} parent=87 // pred_region
          %696 = dma.done [#allocation8], 16
        $region108: #{mlp_mask_decoder_forward.2} parent=87 // pred_fallthru
          _
        // Predicated region
        $region109: #{mlp_mask_decoder_forward.2} parent=87 // pred_check
          %p697 = pneg %p341
        $region110: #{mlp_mask_decoder_forward.2} parent=87 // pred_check_branch
          %699 = sbr.rel (%p697) target = $region112
        $region111: #{mlp_mask_decoder_forward.2} parent=87 // pred_region
          %700 = dma.done [#allocation11], 512
        $region112: #{mlp_mask_decoder_forward.2} parent=87 // pred_fallthru
          _
        // Predicated region
        $region113: #{mlp_mask_decoder_forward.2} parent=87 // pred_check
          %p701 = pneg %p362
        $region114: #{mlp_mask_decoder_forward.2} parent=87 // pred_check_branch
          %703 = sbr.rel (%p701) target = $region116
        $region115: #{mlp_mask_decoder_forward.2} parent=87 // pred_region
          %704 = dma.done [#allocation11], 16
        $region116: #{mlp_mask_decoder_forward.2} parent=87 // pred_fallthru
          _
        // Predicated region
        $region117: #{mlp_mask_decoder_forward.2} parent=87 // pred_check
          %p705 = pneg %p383
        $region118: #{mlp_mask_decoder_forward.2} parent=87 // pred_check_branch
          %707 = sbr.rel (%p705) target = $region120
        $region119: #{mlp_mask_decoder_forward.2} parent=87 // pred_region
          %708 = dma.done [#allocation14], 512
        $region120: #{mlp_mask_decoder_forward.2} parent=87 // pred_fallthru
          _
        // Predicated region
        $region121: #{mlp_mask_decoder_forward.2} parent=87 // pred_check
          %p709 = pneg %p404
        $region122: #{mlp_mask_decoder_forward.2} parent=87 // pred_check_branch
          %711 = sbr.rel (%p709) target = $region124
        $region123: #{mlp_mask_decoder_forward.2} parent=87 // pred_region
          %712 = dma.done [#allocation14], 16
        $region124: #{mlp_mask_decoder_forward.2} parent=87 // pred_fallthru
          _
        %p713 = scmp.lt.s32.totalorder %s37, 1
        %s714 = scalar_select %p713, %s37, 1
        %s715 = smul.addr %s714, 8
        %s716 = scalar_lea.vmem %s0, %s715
        %p717 = pneg %p58
        %p718 = pneg %p55
        %p719 = scmp.lt.s32.totalorder %s37, 1
        %s720 = scalar_select %p719, %s37, 1
        %s721 = smul.addr %s720, 8
        %s722 = scalar_lea.vmem %s1, %s721
        %p723 = pneg %p84
        %p724 = pneg %p81
        %p725 = scmp.lt.s32.totalorder %s37, 1
        %s726 = scalar_select %p725, %s37, 1
        %s727 = smul.addr %s726, 8
        %s728 = scalar_lea.vmem %s2, %s727
        %p729 = pneg %p110
        %p730 = pneg %p107
        %p731 = pneg %p131
        %p732 = pneg %p128
        %p733 = pneg %p152
        %p734 = pneg %p149
        %p735 = pneg %p173
        %p736 = pneg %p170
        %p737 = pneg %p194
        %p738 = pneg %p191
        %p739 = pneg %p215
        %p740 = pneg %p212
        %p741 = pneg %p236
        %p742 = pneg %p233
        %p743 = pneg %p257
        %p744 = pneg %p254
        %p745 = pneg %p278
        %p746 = pneg %p275
        %p747 = pneg %p299
        %p748 = pneg %p296
        %p749 = pneg %p320
        %p750 = pneg %p317
        %p751 = pneg %p341
        %p752 = pneg %p338
        %p753 = pneg %p362
        %p754 = pneg %p359
        %p755 = pneg %p383
        %p756 = pneg %p380
        %p757 = pneg %p404
        %p758 = pneg %p401
        %p759 = pneg %p430
        %p760 = pneg %p427
        %p761 = scmp.lt.s32.totalorder %s37, 1
        %s762 = scalar_select %p761, %s37, 1
        %s763 = smul.addr %s762, 4
        %s764 = scalar_lea.vmem %s17, %s763
        %p765 = pneg %p456
        %p766 = pneg %p453
        %p767 = scmp.lt.s32.totalorder %s37, 1
        %s768 = scalar_select %p767, %s37, 1
        %s769 = smul.addr %s768, 4
        %s770 = scalar_lea.vmem %s18, %s769
        %p771 = pneg %p482
        %p772 = pneg %p479
        %p773 = scmp.lt.s32.totalorder %s37, 1
        %s774 = scalar_select %p773, %s37, 1
        %s775 = smul.addr %s774, 4
        %s776 = scalar_lea.vmem %s19, %s775
        %p777 = pneg %p508
        %p778 = pneg %p505
        %p779 = scmp.lt.s32.totalorder %s37, 1
        %s780 = scalar_select %p779, %s37, 1
        %s781 = smul.addr %s780, 4
        %s782 = scalar_lea.vmem %s20, %s781
        %p783 = scmp.lt.s32.totalorder %s37, 1
        %s784 = scalar_select %p783, %s37, 1
        %s785 = smul.addr %s784, 8
        %s786 = scalar_lea.vmem %s0, %s785
        %p787 = scmp.lt.s32.totalorder %s37, 1
        %s788 = scalar_select %p787, %s37, 1
        %s789 = smul.addr %s788, 8
        %s790 = scalar_lea.vmem %s1, %s789
        %p791 = scmp.lt.s32.totalorder %s37, 1
        %s792 = scalar_select %p791, %s37, 1
        %s793 = smul.addr %s792, 8
        %s794 = scalar_lea.vmem %s2, %s793
        %p795 = scmp.lt.s32.totalorder %s37, 1
        %s796 = scalar_select %p795, %s37, 1
        %s797 = smul.addr %s796, 4
        %s798 = scalar_lea.vmem %s17, %s797
        %p799 = scmp.lt.s32.totalorder %s37, 1
        %s800 = scalar_select %p799, %s37, 1
        %s801 = smul.addr %s800, 4
        %s802 = scalar_lea.vmem %s18, %s801
        %p803 = scmp.lt.s32.totalorder %s37, 1
        %s804 = scalar_select %p803, %s37, 1
        %s805 = smul.addr %s804, 4
        %s806 = scalar_lea.vmem %s19, %s805
        %p807 = scmp.lt.s32.totalorder %s37, 1
        %s808 = scalar_select %p807, %s37, 1
        %s809 = smul.addr %s808, 4
        %s810 = scalar_lea.vmem %s20, %s809
        %v812 = vld [vmem:[%s786] sm:$0xff]
        %v813 = vpack.c.bf16 %v812, %v812
        %v814 = vld [vmem:[%s3] sm:$0xf]
        %v815 = vld [vmem:[%s3 + $0x4] sm:$0xf]
        %v816 = vld [vmem:[%s3 + $0x8] sm:$0xf]
        %v817 = vld [vmem:[%s3 + $0xc] sm:$0xf]
        %v818 = vld [vmem:[%s4] sm:$0x1]
        %v820 = vlaneseq
        %v821 = vshrl.u32 %v820, 7
        %v822 = vsub.s32 0, %v821
        %v823 = vrot.slane %v818, %v822
        %v829 = vunpack.c.l.b16 %v814
        %v830 = vunpack.c.l.b16 %v815
        %v831 = vunpack.c.l.b16 %v816
        %v832 = vunpack.c.l.b16 %v817
        %v833 = vpack.c.b16 %v830, %v829
        %v834 = vpack.c.b16 %v832, %v831
        %vm837 = vcmask 261120
        %v839 = vsel %vm837, %v813, 0
        %841 = vmatprep.subr.bf16.mxu0 0
        %842 = vmatpush1.bf16.msra.mxu0 %v833
        %843 = vmatprep.subr.bf16.mxu0 0
        %844 = vmatpush1.bf16.msra.mxu0 %v834
        %845 = vmatprep.subr.bf16.mxu0 0
        %846 = vmatpush1.bf16.msra.mxu0 0
        %847 = vmatprep.subr.bf16.mxu0 0
        %848 = vmatpush1.bf16.msra.mxu0 0
        %849 = vmatprep.subr.bf16.mxu0 0
        %850 = vmatpush1.bf16.msra.mxu0 0
        %851 = vmatprep.subr.bf16.mxu0 0
        %852 = vmatpush1.bf16.msra.mxu0 0
        %853 = vmatprep.subr.bf16.mxu0 0
        %854 = vmatpush1.bf16.msra.mxu0 0
        %855 = vmatprep.subr.bf16.mxu0 0
        %856 = vmatpush1.bf16.msra.mxu0 0
        %857 = vmatprep.subr.bf16.mxu0 0
        %858 = vmatpush1.bf16.msra.mxu0 0
        %859 = vmatprep.subr.bf16.mxu0 0
        %860 = vmatpush1.bf16.msra.mxu0 0
        %861 = vmatprep.subr.bf16.mxu0 0
        %862 = vmatpush1.bf16.msra.mxu0 0
        %863 = vmatprep.subr.bf16.mxu0 0
        %864 = vmatpush1.bf16.msra.mxu0 0
        %865 = vmatprep.subr.bf16.mxu0 0
        %866 = vmatpush1.bf16.msra.mxu0 0
        %867 = vmatprep.subr.bf16.mxu0 0
        %868 = vmatpush1.bf16.msra.mxu0 0
        %869 = vmatprep.subr.bf16.mxu0 0
        %870 = vmatpush1.bf16.msra.mxu0 0
        %871 = vmatprep.subr.bf16.mxu0 0
        %872 = vmatpush1.bf16.msra.mxu0 0
        %873 = vmatprep.mubr.bf16.mxu0 0
        %874 = vmatmul.mubr.bf16.gmra.mrb[0].mxu0 %v839
        %v875 = vpop.f32.mrb[0].mxu0
        %v876 = vadd.f32 %v823, %v875
        %v877 = vpop.f32.mrb[0].mxu0
        %v878 = vpop.f32.mrb[0].mxu0
        %v879 = vpop.f32.mrb[0].mxu0
        %880 = vdwg.mxu0
        %v881 = vmax.f32 %v876, 0.0
        %v882 = vpack.c.bf16 %v881, %v881
        %v883 = vld [vmem:[%s5] sm:$0xf]
        %v884 = vld [vmem:[%s5 + $0x4] sm:$0xf]
        %v885 = vld [vmem:[%s5 + $0x8] sm:$0xf]
        %v886 = vld [vmem:[%s5 + $0xc] sm:$0xf]
        %v887 = vld [vmem:[%s5 + $0x10] sm:$0xf]
        %v888 = vld [vmem:[%s5 + $0x14] sm:$0xf]
        %v889 = vld [vmem:[%s5 + $0x18] sm:$0xf]
        %v890 = vld [vmem:[%s5 + $0x1c] sm:$0xf]
        %v891 = vld [vmem:[%s6] sm:$0x1]
        %v893 = vlaneseq
        %v894 = vshrl.u32 %v893, 7
        %v895 = vsub.s32 0, %v894
        %v896 = vrot.slane %v891, %v895
        %v906 = vunpack.c.l.b16 %v883
        %v907 = vunpack.c.l.b16 %v884
        %v908 = vunpack.c.l.b16 %v885
        %v909 = vunpack.c.l.b16 %v886
        %v910 = vunpack.c.l.b16 %v887
        %v911 = vunpack.c.l.b16 %v888
        %v912 = vunpack.c.l.b16 %v889
        %v913 = vunpack.c.l.b16 %v890
        %v914 = vpack.c.b16 %v907, %v906
        %v915 = vpack.c.b16 %v909, %v908
        %v916 = vpack.c.b16 %v911, %v910
        %v917 = vpack.c.b16 %v913, %v912
        %vm922 = vcmask 523264
        %v924 = vsel %vm922, %v882, 0
        %926 = vmatprep.subr.bf16.mxu0 0
        %927 = vmatpush1.bf16.msra.mxu0 %v914
        %928 = vmatprep.subr.bf16.mxu0 0
        %929 = vmatpush1.bf16.msra.mxu0 %v915
        %930 = vmatprep.subr.bf16.mxu0 0
        %931 = vmatpush1.bf16.msra.mxu0 %v916
        %932 = vmatprep.subr.bf16.mxu0 0
        %933 = vmatpush1.bf16.msra.mxu0 %v917
        %934 = vmatprep.subr.bf16.mxu0 0
        %935 = vmatpush1.bf16.msra.mxu0 0
        %936 = vmatprep.subr.bf16.mxu0 0
        %937 = vmatpush1.bf16.msra.mxu0 0
        %938 = vmatprep.subr.bf16.mxu0 0
        %939 = vmatpush1.bf16.msra.mxu0 0
        %940 = vmatprep.subr.bf16.mxu0 0
        %941 = vmatpush1.bf16.msra.mxu0 0
        %942 = vmatprep.subr.bf16.mxu0 0
        %943 = vmatpush1.bf16.msra.mxu0 0
        %944 = vmatprep.subr.bf16.mxu0 0
        %945 = vmatpush1.bf16.msra.mxu0 0
        %946 = vmatprep.subr.bf16.mxu0 0
        %947 = vmatpush1.bf16.msra.mxu0 0
        %948 = vmatprep.subr.bf16.mxu0 0
        %949 = vmatpush1.bf16.msra.mxu0 0
        %950 = vmatprep.subr.bf16.mxu0 0
        %951 = vmatpush1.bf16.msra.mxu0 0
        %952 = vmatprep.subr.bf16.mxu0 0
        %953 = vmatpush1.bf16.msra.mxu0 0
        %954 = vmatprep.subr.bf16.mxu0 0
        %955 = vmatpush1.bf16.msra.mxu0 0
        %956 = vmatprep.subr.bf16.mxu0 0
        %957 = vmatpush1.bf16.msra.mxu0 0
        %958 = vmatprep.mubr.bf16.mxu0 0
        %959 = vmatmul.mubr.bf16.gmra.mrb[0].mxu0 %v924
        %v960 = vpop.f32.mrb[0].mxu0
        %v961 = vadd.f32 %v896, %v960
        %v962 = vpop.f32.mrb[0].mxu0
        %v963 = vpop.f32.mrb[0].mxu0
        %v964 = vpop.f32.mrb[0].mxu0
        %965 = vdwg.mxu0
        %v966 = vmax.f32 %v961, 0.0
        %v967 = vpack.c.bf16 %v966, %v966
        %v968 = vld [vmem:[%s7] sm:$0xf]
        %v969 = vld [vmem:[%s7 + $0x4] sm:$0xf]
        %v970 = vld [vmem:[%s7 + $0x8] sm:$0xf]
        %v971 = vld [vmem:[%s7 + $0xc] sm:$0xf]
        %v972 = vld [vmem:[%s7 + $0x10] sm:$0xf]
        %v973 = vld [vmem:[%s7 + $0x14] sm:$0xf]
        %v974 = vld [vmem:[%s7 + $0x18] sm:$0xf]
        %v975 = vld [vmem:[%s7 + $0x1c] sm:$0xf]
        %v976 = vld [vmem:[#allocation2] sm:$0x1]
        %v978 = vlaneseq
        %v979 = vshrl.u32 %v978, 7
        %v980 = vsub.s32 0, %v979
        %v981 = vrot.slane %v976, %v980
        %v991 = vunpack.c.l.b16 %v968
        %v992 = vunpack.c.l.b16 %v969
        %v993 = vunpack.c.l.b16 %v970
        %v994 = vunpack.c.l.b16 %v971
        %v995 = vunpack.c.l.b16 %v972
        %v996 = vunpack.c.l.b16 %v973
        %v997 = vunpack.c.l.b16 %v974
        %v998 = vunpack.c.l.b16 %v975
        %v999 = vpack.c.b16 %v992, %v991
        %v1000 = vpack.c.b16 %v994, %v993
        %v1001 = vpack.c.b16 %v996, %v995
        %v1002 = vpack.c.b16 %v998, %v997
        %v1008 = vsel %vm922, %v967, 0
        %1010 = vmatprep.subr.bf16.mxu0 0
        %1011 = vmatpush1.bf16.msra.mxu0 %v999
        %1012 = vmatprep.subr.bf16.mxu0 0
        %1013 = vmatpush1.bf16.msra.mxu0 %v1000
        %1014 = vmatprep.subr.bf16.mxu0 0
        %1015 = vmatpush1.bf16.msra.mxu0 %v1001
        %1016 = vmatprep.subr.bf16.mxu0 0
        %1017 = vmatpush1.bf16.msra.mxu0 %v1002
        %1018 = vmatprep.subr.bf16.mxu0 0
        %1019 = vmatpush1.bf16.msra.mxu0 0
        %1020 = vmatprep.subr.bf16.mxu0 0
        %1021 = vmatpush1.bf16.msra.mxu0 0
        %1022 = vmatprep.subr.bf16.mxu0 0
        %1023 = vmatpush1.bf16.msra.mxu0 0
        %1024 = vmatprep.subr.bf16.mxu0 0
        %1025 = vmatpush1.bf16.msra.mxu0 0
        %1026 = vmatprep.subr.bf16.mxu0 0
        %1027 = vmatpush1.bf16.msra.mxu0 0
        %1028 = vmatprep.subr.bf16.mxu0 0
        %1029 = vmatpush1.bf16.msra.mxu0 0
        %1030 = vmatprep.subr.bf16.mxu0 0
        %1031 = vmatpush1.bf16.msra.mxu0 0
        %1032 = vmatprep.subr.bf16.mxu0 0
        %1033 = vmatpush1.bf16.msra.mxu0 0
        %1034 = vmatprep.subr.bf16.mxu0 0
        %1035 = vmatpush1.bf16.msra.mxu0 0
        %1036 = vmatprep.subr.bf16.mxu0 0
        %1037 = vmatpush1.bf16.msra.mxu0 0
        %1038 = vmatprep.subr.bf16.mxu0 0
        %1039 = vmatpush1.bf16.msra.mxu0 0
        %1040 = vmatprep.subr.bf16.mxu0 0
        %1041 = vmatpush1.bf16.msra.mxu0 0
        %1042 = vmatprep.mubr.bf16.mxu0 0
        %1043 = vmatmul.mubr.bf16.gmra.mrb[0].mxu0 %v1008
        %v1044 = vpop.f32.mrb[0].mxu0
        %v1045 = vadd.f32 %v981, %v1044
        %v1046 = vpop.f32.mrb[0].mxu0
        %v1047 = vpop.f32.mrb[0].mxu0
        %v1048 = vpop.f32.mrb[0].mxu0
        %1049 = vdwg.mxu0
        %v1050 = vpack.c.bf16 %v1045, %v1045
        %v1051 = vld [vmem:[#allocation4] sm:$0xf]
        %v1052 = vld [vmem:[#allocation4 + $0x4] sm:$0xf]
        %v1053 = vld [vmem:[#allocation4 + $0x8] sm:$0xf]
        %v1054 = vld [vmem:[#allocation4 + $0xc] sm:$0xf]
        %v1055 = vld [vmem:[#allocation4 + $0x10] sm:$0xf]
        %v1056 = vld [vmem:[#allocation4 + $0x14] sm:$0xf]
        %v1057 = vld [vmem:[#allocation4 + $0x18] sm:$0xf]
        %v1058 = vld [vmem:[#allocation4 + $0x1c] sm:$0xf]
        %v1059 = vld [vmem:[#allocation6] sm:$0x1]
        %v1061 = vlaneseq
        %v1062 = vshrl.u32 %v1061, 7
        %v1063 = vsub.s32 0, %v1062
        %v1064 = vrot.slane %v1059, %v1063
        %v1074 = vunpack.c.l.b16 %v1051
        %v1075 = vunpack.c.l.b16 %v1052
        %v1076 = vunpack.c.l.b16 %v1053
        %v1077 = vunpack.c.l.b16 %v1054
        %v1078 = vunpack.c.l.b16 %v1055
        %v1079 = vunpack.c.l.b16 %v1056
        %v1080 = vunpack.c.l.b16 %v1057
        %v1081 = vunpack.c.l.b16 %v1058
        %v1082 = vpack.c.b16 %v1075, %v1074
        %v1083 = vpack.c.b16 %v1077, %v1076
        %v1084 = vpack.c.b16 %v1079, %v1078
        %v1085 = vpack.c.b16 %v1081, %v1080
        %v1091 = vsel %vm922, %v1050, 0
        %1093 = vmatprep.subr.bf16.mxu0 0
        %1094 = vmatpush1.bf16.msra.mxu0 %v1082
        %1095 = vmatprep.subr.bf16.mxu0 0
        %1096 = vmatpush1.bf16.msra.mxu0 %v1083
        %1097 = vmatprep.subr.bf16.mxu0 0
        %1098 = vmatpush1.bf16.msra.mxu0 %v1084
        %1099 = vmatprep.subr.bf16.mxu0 0
        %1100 = vmatpush1.bf16.msra.mxu0 %v1085
        %1101 = vmatprep.subr.bf16.mxu0 0
        %1102 = vmatpush1.bf16.msra.mxu0 0
        %1103 = vmatprep.subr.bf16.mxu0 0
        %1104 = vmatpush1.bf16.msra.mxu0 0
        %1105 = vmatprep.subr.bf16.mxu0 0
        %1106 = vmatpush1.bf16.msra.mxu0 0
        %1107 = vmatprep.subr.bf16.mxu0 0
        %1108 = vmatpush1.bf16.msra.mxu0 0
        %1109 = vmatprep.subr.bf16.mxu0 0
        %1110 = vmatpush1.bf16.msra.mxu0 0
        %1111 = vmatprep.subr.bf16.mxu0 0
        %1112 = vmatpush1.bf16.msra.mxu0 0
        %1113 = vmatprep.subr.bf16.mxu0 0
        %1114 = vmatpush1.bf16.msra.mxu0 0
        %1115 = vmatprep.subr.bf16.mxu0 0
        %1116 = vmatpush1.bf16.msra.mxu0 0
        %1117 = vmatprep.subr.bf16.mxu0 0
        %1118 = vmatpush1.bf16.msra.mxu0 0
        %1119 = vmatprep.subr.bf16.mxu0 0
        %1120 = vmatpush1.bf16.msra.mxu0 0
        %1121 = vmatprep.subr.bf16.mxu0 0
        %1122 = vmatpush1.bf16.msra.mxu0 0
        %1123 = vmatprep.subr.bf16.mxu0 0
        %1124 = vmatpush1.bf16.msra.mxu0 0
        %1125 = vmatprep.mubr.bf16.mxu0 0
        %1126 = vmatmul.mubr.bf16.gmra.mrb[0].mxu0 %v1091
        %v1127 = vpop.f32.mrb[0].mxu0
        %v1128 = vadd.f32 %v1064, %v1127
        %v1129 = vpop.f32.mrb[0].mxu0
        %v1130 = vpop.f32.mrb[0].mxu0
        %v1131 = vpop.f32.mrb[0].mxu0
        %1132 = vdwg.mxu0
        %v1133 = vpack.c.bf16 %v1128, %v1128
        %vm1134 = vcmask 519168
        %1135 = vst.msk [vmem:[%s798] sm:$0xf] %vm1134, %v1133
        %v1136 = vld [vmem:[#allocation7] sm:$0xf]
        %v1137 = vld [vmem:[#allocation7 + $0x4] sm:$0xf]
        %v1138 = vld [vmem:[#allocation7 + $0x8] sm:$0xf]
        %v1139 = vld [vmem:[#allocation7 + $0xc] sm:$0xf]
        %v1140 = vld [vmem:[#allocation7 + $0x10] sm:$0xf]
        %v1141 = vld [vmem:[#allocation7 + $0x14] sm:$0xf]
        %v1142 = vld [vmem:[#allocation7 + $0x18] sm:$0xf]
        %v1143 = vld [vmem:[#allocation7 + $0x1c] sm:$0xf]
        %v1144 = vld [vmem:[#allocation9] sm:$0x1]
        %v1146 = vlaneseq
        %v1147 = vshrl.u32 %v1146, 7
        %v1148 = vsub.s32 0, %v1147
        %v1149 = vrot.slane %v1144, %v1148
        %v1159 = vunpack.c.l.b16 %v1136
        %v1160 = vunpack.c.l.b16 %v1137
        %v1161 = vunpack.c.l.b16 %v1138
        %v1162 = vunpack.c.l.b16 %v1139
        %v1163 = vunpack.c.l.b16 %v1140
        %v1164 = vunpack.c.l.b16 %v1141
        %v1165 = vunpack.c.l.b16 %v1142
        %v1166 = vunpack.c.l.b16 %v1143
        %v1167 = vpack.c.b16 %v1160, %v1159
        %v1168 = vpack.c.b16 %v1162, %v1161
        %v1169 = vpack.c.b16 %v1164, %v1163
        %v1170 = vpack.c.b16 %v1166, %v1165
        %1175 = vmatprep.subr.bf16.mxu0 0
        %1176 = vmatpush1.bf16.msra.mxu0 %v1167
        %1177 = vmatprep.subr.bf16.mxu0 0
        %1178 = vmatpush1.bf16.msra.mxu0 %v1168
        %1179 = vmatprep.subr.bf16.mxu0 0
        %1180 = vmatpush1.bf16.msra.mxu0 %v1169
        %1181 = vmatprep.subr.bf16.mxu0 0
        %1182 = vmatpush1.bf16.msra.mxu0 %v1170
        %1183 = vmatprep.subr.bf16.mxu0 0
        %1184 = vmatpush1.bf16.msra.mxu0 0
        %1185 = vmatprep.subr.bf16.mxu0 0
        %1186 = vmatpush1.bf16.msra.mxu0 0
        %1187 = vmatprep.subr.bf16.mxu0 0
        %1188 = vmatpush1.bf16.msra.mxu0 0
        %1189 = vmatprep.subr.bf16.mxu0 0
        %1190 = vmatpush1.bf16.msra.mxu0 0
        %1191 = vmatprep.subr.bf16.mxu0 0
        %1192 = vmatpush1.bf16.msra.mxu0 0
        %1193 = vmatprep.subr.bf16.mxu0 0
        %1194 = vmatpush1.bf16.msra.mxu0 0
        %1195 = vmatprep.subr.bf16.mxu0 0
        %1196 = vmatpush1.bf16.msra.mxu0 0
        %1197 = vmatprep.subr.bf16.mxu0 0
        %1198 = vmatpush1.bf16.msra.mxu0 0
        %1199 = vmatprep.subr.bf16.mxu0 0
        %1200 = vmatpush1.bf16.msra.mxu0 0
        %1201 = vmatprep.subr.bf16.mxu0 0
        %1202 = vmatpush1.bf16.msra.mxu0 0
        %1203 = vmatprep.subr.bf16.mxu0 0
        %1204 = vmatpush1.bf16.msra.mxu0 0
        %1205 = vmatprep.subr.bf16.mxu0 0
        %1206 = vmatpush1.bf16.msra.mxu0 0
        %1207 = vmatprep.mubr.bf16.mxu0 0
        %1208 = vmatmul.mubr.bf16.gmra.mrb[0].mxu0 %v1091
        %v1209 = vpop.f32.mrb[0].mxu0
        %v1210 = vadd.f32 %v1149, %v1209
        %v1211 = vpop.f32.mrb[0].mxu0
        %v1212 = vpop.f32.mrb[0].mxu0
        %v1213 = vpop.f32.mrb[0].mxu0
        %1214 = vdwg.mxu0
        %v1215 = vpack.c.bf16 %v1210, %v1210
        %1216 = vst.msk [vmem:[%s802] sm:$0xf] %vm1134, %v1215
        %v1217 = vld [vmem:[%s790] sm:$0xff]
        %v1218 = vld [vmem:[%s794] sm:$0xff]
        %v1219 = vadd.f32 %v1217, %v1218
        %v1220 = vpack.c.bf16 %v1219, %v1219
        %v1221 = vld [vmem:[#allocation10] sm:$0xf]
        %v1222 = vld [vmem:[#allocation10 + $0x4] sm:$0xf]
        %v1223 = vld [vmem:[#allocation10 + $0x8] sm:$0xf]
        %v1224 = vld [vmem:[#allocation10 + $0xc] sm:$0xf]
        %v1225 = vld [vmem:[#allocation10 + $0x10] sm:$0xf]
        %v1226 = vld [vmem:[#allocation10 + $0x14] sm:$0xf]
        %v1227 = vld [vmem:[#allocation10 + $0x18] sm:$0xf]
        %v1228 = vld [vmem:[#allocation10 + $0x1c] sm:$0xf]
        %v1229 = vld [vmem:[#allocation12] sm:$0x1]
        %v1231 = vlaneseq
        %v1232 = vshrl.u32 %v1231, 7
        %v1233 = vsub.s32 0, %v1232
        %v1234 = vrot.slane %v1229, %v1233
        %v1244 = vunpack.c.l.b16 %v1221
        %v1245 = vunpack.c.l.b16 %v1222
        %v1246 = vunpack.c.l.b16 %v1223
        %v1247 = vunpack.c.l.b16 %v1224
        %v1248 = vunpack.c.l.b16 %v1225
        %v1249 = vunpack.c.l.b16 %v1226
        %v1250 = vunpack.c.l.b16 %v1227
        %v1251 = vunpack.c.l.b16 %v1228
        %v1252 = vpack.c.b16 %v1245, %v1244
        %v1253 = vpack.c.b16 %v1247, %v1246
        %v1254 = vpack.c.b16 %v1249, %v1248
        %v1255 = vpack.c.b16 %v1251, %v1250
        %v1261 = vsel %vm922, %v1220, 0
        %1263 = vmatprep.subr.bf16.mxu0 0
        %1264 = vmatpush1.bf16.msra.mxu0 %v1252
        %1265 = vmatprep.subr.bf16.mxu0 0
        %1266 = vmatpush1.bf16.msra.mxu0 %v1253
        %1267 = vmatprep.subr.bf16.mxu0 0
        %1268 = vmatpush1.bf16.msra.mxu0 %v1254
        %1269 = vmatprep.subr.bf16.mxu0 0
        %1270 = vmatpush1.bf16.msra.mxu0 %v1255
        %1271 = vmatprep.subr.bf16.mxu0 0
        %1272 = vmatpush1.bf16.msra.mxu0 0
        %1273 = vmatprep.subr.bf16.mxu0 0
        %1274 = vmatpush1.bf16.msra.mxu0 0
        %1275 = vmatprep.subr.bf16.mxu0 0
        %1276 = vmatpush1.bf16.msra.mxu0 0
        %1277 = vmatprep.subr.bf16.mxu0 0
        %1278 = vmatpush1.bf16.msra.mxu0 0
        %1279 = vmatprep.subr.bf16.mxu0 0
        %1280 = vmatpush1.bf16.msra.mxu0 0
        %1281 = vmatprep.subr.bf16.mxu0 0
        %1282 = vmatpush1.bf16.msra.mxu0 0
        %1283 = vmatprep.subr.bf16.mxu0 0
        %1284 = vmatpush1.bf16.msra.mxu0 0
        %1285 = vmatprep.subr.bf16.mxu0 0
        %1286 = vmatpush1.bf16.msra.mxu0 0
        %1287 = vmatprep.subr.bf16.mxu0 0
        %1288 = vmatpush1.bf16.msra.mxu0 0
        %1289 = vmatprep.subr.bf16.mxu0 0
        %1290 = vmatpush1.bf16.msra.mxu0 0
        %1291 = vmatprep.subr.bf16.mxu0 0
        %1292 = vmatpush1.bf16.msra.mxu0 0
        %1293 = vmatprep.subr.bf16.mxu0 0
        %1294 = vmatpush1.bf16.msra.mxu0 0
        %1295 = vmatprep.mubr.bf16.mxu0 0
        %1296 = vmatmul.mubr.bf16.gmra.mrb[0].mxu0 %v1261
        %v1297 = vpop.f32.mrb[0].mxu0
        %v1298 = vadd.f32 %v1234, %v1297
        %v1299 = vpop.f32.mrb[0].mxu0
        %v1300 = vpop.f32.mrb[0].mxu0
        %v1301 = vpop.f32.mrb[0].mxu0
        %1302 = vdwg.mxu0
        %v1303 = vpack.c.bf16 %v1298, %v1298
        %1304 = vst.msk [vmem:[%s806] sm:$0xf] %vm1134, %v1303
        %v1305 = vpack.c.bf16 %v1217, %v1217
        %v1306 = vld [vmem:[#allocation13] sm:$0xf]
        %v1307 = vld [vmem:[#allocation13 + $0x4] sm:$0xf]
        %v1308 = vld [vmem:[#allocation13 + $0x8] sm:$0xf]
        %v1309 = vld [vmem:[#allocation13 + $0xc] sm:$0xf]
        %v1310 = vld [vmem:[#allocation13 + $0x10] sm:$0xf]
        %v1311 = vld [vmem:[#allocation13 + $0x14] sm:$0xf]
        %v1312 = vld [vmem:[#allocation13 + $0x18] sm:$0xf]
        %v1313 = vld [vmem:[#allocation13 + $0x1c] sm:$0xf]
        %v1314 = vld [vmem:[#allocation15] sm:$0x1]
        %v1316 = vlaneseq
        %v1317 = vshrl.u32 %v1316, 7
        %v1318 = vsub.s32 0, %v1317
        %v1319 = vrot.slane %v1314, %v1318
        %v1329 = vunpack.c.l.b16 %v1306
        %v1330 = vunpack.c.l.b16 %v1307
        %v1331 = vunpack.c.l.b16 %v1308
        %v1332 = vunpack.c.l.b16 %v1309
        %v1333 = vunpack.c.l.b16 %v1310
        %v1334 = vunpack.c.l.b16 %v1311
        %v1335 = vunpack.c.l.b16 %v1312
        %v1336 = vunpack.c.l.b16 %v1313
        %v1337 = vpack.c.b16 %v1330, %v1329
        %v1338 = vpack.c.b16 %v1332, %v1331
        %v1339 = vpack.c.b16 %v1334, %v1333
        %v1340 = vpack.c.b16 %v1336, %v1335
        %v1346 = vsel %vm922, %v1305, 0
        %1348 = vmatprep.subr.bf16.mxu0 0
        %1349 = vmatpush1.bf16.msra.mxu0 %v1337
        %1350 = vmatprep.subr.bf16.mxu0 0
        %1351 = vmatpush1.bf16.msra.mxu0 %v1338
        %1352 = vmatprep.subr.bf16.mxu0 0
        %1353 = vmatpush1.bf16.msra.mxu0 %v1339
        %1354 = vmatprep.subr.bf16.mxu0 0
        %1355 = vmatpush1.bf16.msra.mxu0 %v1340
        %1356 = vmatprep.subr.bf16.mxu0 0
        %1357 = vmatpush1.bf16.msra.mxu0 0
        %1358 = vmatprep.subr.bf16.mxu0 0
        %1359 = vmatpush1.bf16.msra.mxu0 0
        %1360 = vmatprep.subr.bf16.mxu0 0
        %1361 = vmatpush1.bf16.msra.mxu0 0
        %1362 = vmatprep.subr.bf16.mxu0 0
        %1363 = vmatpush1.bf16.msra.mxu0 0
        %1364 = vmatprep.subr.bf16.mxu0 0
        %1365 = vmatpush1.bf16.msra.mxu0 0
        %1366 = vmatprep.subr.bf16.mxu0 0
        %1367 = vmatpush1.bf16.msra.mxu0 0
        %1368 = vmatprep.subr.bf16.mxu0 0
        %1369 = vmatpush1.bf16.msra.mxu0 0
        %1370 = vmatprep.subr.bf16.mxu0 0
        %1371 = vmatpush1.bf16.msra.mxu0 0
        %1372 = vmatprep.subr.bf16.mxu0 0
        %1373 = vmatpush1.bf16.msra.mxu0 0
        %1374 = vmatprep.subr.bf16.mxu0 0
        %1375 = vmatpush1.bf16.msra.mxu0 0
        %1376 = vmatprep.subr.bf16.mxu0 0
        %1377 = vmatpush1.bf16.msra.mxu0 0
        %1378 = vmatprep.subr.bf16.mxu0 0
        %1379 = vmatpush1.bf16.msra.mxu0 0
        %1380 = vmatprep.mubr.bf16.mxu0 0
        %1381 = vmatmul.mubr.bf16.gmra.mrb[0].mxu0 %v1346
        %v1382 = vpop.f32.mrb[0].mxu0
        %v1383 = vadd.f32 %v1319, %v1382
        %v1384 = vpop.f32.mrb[0].mxu0
        %v1385 = vpop.f32.mrb[0].mxu0
        %v1386 = vpop.f32.mrb[0].mxu0
        %1387 = vdwg.mxu0
        %v1388 = vpack.c.bf16 %v1383, %v1383
        %1389 = vst.msk [vmem:[%s810] sm:$0xf] %vm1134, %v1388
        %p1390 = scmp.lt.s32.totalorder %s37, 1
        %s1391 = scalar_select %p1390, %s37, 1
        %s1392 = smul.addr %s1391, 4
        %s1393 = scalar_lea.vmem %s17, %s1392
        %p1394 = scmp.lt.s32.totalorder %s37, 1
        %s1395 = scalar_select %p1394, %s37, 1
        %s1396 = smul.addr %s1395, 4
        %s1397 = scalar_lea.vmem %s18, %s1396
        %p1398 = scmp.lt.s32.totalorder %s37, 1
        %s1399 = scalar_select %p1398, %s37, 1
        %s1400 = smul.addr %s1399, 4
        %s1401 = scalar_lea.vmem %s19, %s1400
        %p1402 = scmp.lt.s32.totalorder %s37, 1
        %s1403 = scalar_select %p1402, %s37, 1
        %s1404 = smul.addr %s1403, 4
        %s1405 = scalar_lea.vmem %s20, %s1404
        // Predicated region
        $region125: #{mlp_mask_decoder_forward.2} parent=87 // pred_check
          %p1406 = pneg %p427
        $region126: #{mlp_mask_decoder_forward.2} parent=87 // pred_check_branch
          %1408 = sbr.rel (%p1406) target = $region128
        $region127: #{mlp_mask_decoder_forward.2} parent=87 // pred_region
          _
        $region128: #{mlp_mask_decoder_forward.2} parent=87 // pred_fallthru
          _
        // Predicated region
        $region129: #{mlp_mask_decoder_forward.2} parent=87 // pred_check
          %p1409 = pneg %p453
        $region130: #{mlp_mask_decoder_forward.2} parent=87 // pred_check_branch
          %1411 = sbr.rel (%p1409) target = $region132
        $region131: #{mlp_mask_decoder_forward.2} parent=87 // pred_region
          _
        $region132: #{mlp_mask_decoder_forward.2} parent=87 // pred_fallthru
          _
        // Predicated region
        $region133: #{mlp_mask_decoder_forward.2} parent=87 // pred_check
          %p1412 = pneg %p479
        $region134: #{mlp_mask_decoder_forward.2} parent=87 // pred_check_branch
          %1414 = sbr.rel (%p1412) target = $region136
        $region135: #{mlp_mask_decoder_forward.2} parent=87 // pred_region
          _
        $region136: #{mlp_mask_decoder_forward.2} parent=87 // pred_fallthru
          _
        // Predicated region
        $region137: #{mlp_mask_decoder_forward.2} parent=87 // pred_check
          %p1415 = pneg %p505
        $region138: #{mlp_mask_decoder_forward.2} parent=87 // pred_check_branch
          %1417 = sbr.rel (%p1415) target = $region140
        $region139: #{mlp_mask_decoder_forward.2} parent=87 // pred_region
          _
        $region140: #{mlp_mask_decoder_forward.2} parent=87 // pred_fallthru
          _
      $region88: #{mlp_mask_decoder_forward.2} parent=5 // pred_fallthru
        _
      %p1418 = scmp.le.s32.totalorder 2, %s32
      // Predicated region
      $region141: #{mlp_mask_decoder_forward.2} parent=5 // pred_check
        %p1419 = pneg %p1418
      $region142: #{mlp_mask_decoder_forward.2} parent=5 // pred_check_branch
        %1421 = sbr.rel (%p1419) target = $region144
      $region143: #{mlp_mask_decoder_forward.2} parent=5 // pred_region
        %s1422 = ssub.s32 %s32, 2
        // Predicated region
        $region145: #{mlp_mask_decoder_forward.2} parent=143 // pred_check
          %p1423 = pneg %p433
        $region146: #{mlp_mask_decoder_forward.2} parent=143 // pred_check_branch
          %1425 = sbr.rel (%p1423) target = $region148
        $region147: #{mlp_mask_decoder_forward.2} parent=143 // pred_region
          %p1426 = scmp.lt.s32.totalorder %s38, 1
          %s1427 = scalar_select %p1426, %s38, 1
          %s1428 = smul.addr %s1427, 4
          %s1429 = scalar_lea.vmem %s17, %s1428
        $region148: #{mlp_mask_decoder_forward.2} parent=143 // pred_fallthru
          _
        // Predicated region
        $region149: #{mlp_mask_decoder_forward.2} parent=143 // pred_check
          %p1430 = pneg %p459
        $region150: #{mlp_mask_decoder_forward.2} parent=143 // pred_check_branch
          %1432 = sbr.rel (%p1430) target = $region152
        $region151: #{mlp_mask_decoder_forward.2} parent=143 // pred_region
          %p1433 = scmp.lt.s32.totalorder %s38, 1
          %s1434 = scalar_select %p1433, %s38, 1
          %s1435 = smul.addr %s1434, 4
          %s1436 = scalar_lea.vmem %s18, %s1435
        $region152: #{mlp_mask_decoder_forward.2} parent=143 // pred_fallthru
          _
        // Predicated region
        $region153: #{mlp_mask_decoder_forward.2} parent=143 // pred_check
          %p1437 = pneg %p485
        $region154: #{mlp_mask_decoder_forward.2} parent=143 // pred_check_branch
          %1439 = sbr.rel (%p1437) target = $region156
        $region155: #{mlp_mask_decoder_forward.2} parent=143 // pred_region
          %p1440 = scmp.lt.s32.totalorder %s38, 1
          %s1441 = scalar_select %p1440, %s38, 1
          %s1442 = smul.addr %s1441, 4
          %s1443 = scalar_lea.vmem %s19, %s1442
        $region156: #{mlp_mask_decoder_forward.2} parent=143 // pred_fallthru
          _
        // Predicated region
        $region157: #{mlp_mask_decoder_forward.2} parent=143 // pred_check
          %p1444 = pneg %p511
        $region158: #{mlp_mask_decoder_forward.2} parent=143 // pred_check_branch
          %1446 = sbr.rel (%p1444) target = $region160
        $region159: #{mlp_mask_decoder_forward.2} parent=143 // pred_region
          %p1447 = scmp.lt.s32.totalorder %s38, 1
          %s1448 = scalar_select %p1447, %s38, 1
          %s1449 = smul.addr %s1448, 4
          %s1450 = scalar_lea.vmem %s20, %s1449
        $region160: #{mlp_mask_decoder_forward.2} parent=143 // pred_fallthru
          _
      $region144: #{mlp_mask_decoder_forward.2} parent=5 // pred_fallthru
        _
    $region6: #{mlp_mask_decoder_forward.2} parent=1 // loop_footer
      %s36 = sadd.s32 1, %s32
    $region7: #{mlp_mask_decoder_forward.2} parent=1 // loop_footer_branch
      %31 = sbr.rel target = $region3
    $region8: #{mlp_mask_decoder_forward.2} parent=1 // loop_exit
      _
    %1451 = vsyncpa [#allocation3], 1
    %s1452 = scalar_lea.sflag [#allocation3], 1
    %1453 = vsyncpa %s1452, 1
    %1454 = vsyncpa [#allocation5], 1
    %1455 = vsyncpa [#allocation8], 1
    %1456 = vsyncpa [#allocation11], 1
    %1457 = vsyncpa [#allocation14], 1

// kernel: mlp_mask_decoder_forward.3
$region0: #{mlp_mask_decoder_forward.3}
  #allocation0 [shape = 'u32[]', space=smem, size = 0x4, offset = 0x4, fixed_abs, tag = 'smem constant byte address 0x4 - core index']
  #allocation1 [shape = 'u32[144,128]{1,0:T(1,128)}', space=vmem, size = 0x12000, scoped, tag = 'internal scratch']
  %s0 = inlined_call_operand.vmem [shape: f32[2,32,256], index: 0, kind: input, shape index: {}]
  %s1 = inlined_call_operand.vmem [shape: f32[2,256,64], index: 1, kind: input, shape index: {}]
  %s2 = inlined_call_operand.vmem [shape: bf16[2,8,64], index: 2, kind: input, shape index: {}]
  %s3 = inlined_call_operand.vmem [shape: bf16[2,8,64], index: 3, kind: input, shape index: {}]
  %s4 = inlined_call_operand.vmem [shape: bf16[2,8,64], index: 4, kind: input, shape index: {}]
  %s5 = inlined_call_operand.vmem [shape: bf16[2,8,64], index: 5, kind: input, shape index: {}]
  %s6 = inlined_call_operand.vmem [shape: bf16[32,64], index: 6, kind: input, shape index: {}]
  %s7 = inlined_call_operand.vmem [shape: f32[1,64], index: 7, kind: input, shape index: {}]
  %s8 = inlined_call_operand.vmem [shape: bf16[64,64], index: 8, kind: input, shape index: {}]
  %s9 = inlined_call_operand.vmem [shape: f32[1,64], index: 9, kind: input, shape index: {}]
  %s10 = inlined_call_operand.vmem [shape: bf16[64,64], index: 10, kind: input, shape index: {}]
  %s11 = inlined_call_operand.vmem [shape: f32[1,64], index: 11, kind: input, shape index: {}]
  %s12 = inlined_call_operand.vmem [shape: bf16[64,64], index: 12, kind: input, shape index: {}]
  %s13 = inlined_call_operand.vmem [shape: f32[1,64], index: 13, kind: input, shape index: {}]
  %s14 = inlined_call_operand.vmem [shape: bf16[64,64], index: 14, kind: input, shape index: {}]
  %s15 = inlined_call_operand.vmem [shape: f32[1,64], index: 15, kind: input, shape index: {}]
  %s16 = inlined_call_operand.vmem [shape: bf16[64,64], index: 16, kind: input, shape index: {}]
  %s17 = inlined_call_operand.vmem [shape: f32[1,64], index: 17, kind: input, shape index: {}]
  %s18 = inlined_call_operand.vmem [shape: bf16[64,64], index: 18, kind: input, shape index: {}]
  %s19 = inlined_call_operand.vmem [shape: f32[1,64], index: 19, kind: input, shape index: {}]
  %s20 = inlined_call_operand.hbm [shape: f32[2,64,256], index: 20, kind: output, shape index: {}]
  %s21 = sld [smem:[#allocation0]]
  $region113: #{mlp_mask_decoder_forward.3} parent=0
    _
  %s23 = ssub.s32 1, %s21
  %s24 = scalar_select 0, %s23, %s21
  $region1: #{mlp_mask_decoder_forward.3} parent=0
    #allocation2 [shape = 'u8[131072]{0}', space=vmem, size = 0x20000, scoped, tag = 'output window, operand 0']
    #allocation3 [shape = 's32[2]{0}', space=sflag, size = 0x8, scoped, tag = 'scoped memory for mlp_mask_decoder_forward.3']
    %25 = vsyncpa [#allocation3], 0
    %s26 = scalar_lea.sflag [#allocation3], 1
    %27 = vsyncpa %s26, 0
    loop: start=0, step=1, limit=4
    $region2: #{mlp_mask_decoder_forward.3} parent=1 // loop_pre_header
      _
    $region3: #{mlp_mask_decoder_forward.3} parent=1 // loop_header
      %s29 = sphi 0, %s33
      %p30 = scmp.ge.s32.totalorder %s29, 4
      %s36 = sphi 0, %s48
      %s37 = sphi 0, %s44
      %s38 = sphi 0, %s36
      %s39 = sphi 0, %s37
      %s40 = sphi 0, %s38
      %s41 = sphi 0, %s39
      %s53 = sphi 0, %s55
      %s56 = sphi 0, %s53
      %s57 = sphi 0, %s56
      %s73 = sphi 0, %s57
      %s81 = sphi 0, %s83
      %s84 = sphi 0, %s81
      %s85 = sphi 0, %s84
      %s101 = sphi 0, %s85
      %s107 = sphi 0, %s109
      %s110 = sphi 0, %s107
      %s111 = sphi 0, %s110
      %s127 = sphi 0, %s111
      %s133 = sphi 0, %s135
      %s136 = sphi 0, %s133
      %s137 = sphi 0, %s136
      %s153 = sphi 0, %s137
      %s159 = sphi 0, %s161
      %s162 = sphi 0, %s159
      %s163 = sphi 0, %s162
      %s179 = sphi 0, %s163
      %s185 = sphi 0, %s187
      %s188 = sphi 0, %s185
      %s189 = sphi 0, %s188
      %s205 = sphi 0, %s189
      %s209 = sphi 0, %s209
      %s211 = sphi 0, %s209
      %s212 = sphi 0, %s211
      %s226 = sphi 0, %s212
      %s230 = sphi 0, %s230
      %s232 = sphi 0, %s230
      %s233 = sphi 0, %s232
      %s247 = sphi 0, %s233
      %s251 = sphi 0, %s251
      %s253 = sphi 0, %s251
      %s254 = sphi 0, %s253
      %s268 = sphi 0, %s254
      %s272 = sphi 0, %s272
      %s274 = sphi 0, %s272
      %s275 = sphi 0, %s274
      %s289 = sphi 0, %s275
      %s293 = sphi 0, %s293
      %s295 = sphi 0, %s293
      %s296 = sphi 0, %s295
      %s310 = sphi 0, %s296
      %s314 = sphi 0, %s314
      %s316 = sphi 0, %s314
      %s317 = sphi 0, %s316
      %s331 = sphi 0, %s317
      %s335 = sphi 0, %s335
      %s337 = sphi 0, %s335
      %s338 = sphi 0, %s337
      %s352 = sphi 0, %s338
      %s356 = sphi 0, %s356
      %s358 = sphi 0, %s356
      %s359 = sphi 0, %s358
      %s373 = sphi 0, %s359
      %s377 = sphi 0, %s377
      %s379 = sphi 0, %s377
      %s380 = sphi 0, %s379
      %s394 = sphi 0, %s380
      %s398 = sphi 0, %s398
      %s400 = sphi 0, %s398
      %s401 = sphi 0, %s400
      %s415 = sphi 0, %s401
      %s419 = sphi 0, %s419
      %s421 = sphi 0, %s419
      %s422 = sphi 0, %s421
      %s436 = sphi 0, %s422
      %s440 = sphi 0, %s440
      %s442 = sphi 0, %s440
      %s443 = sphi 0, %s442
      %s457 = sphi 0, %s443
      %s461 = sphi 0, %s461
      %s463 = sphi 0, %s461
      %s464 = sphi 0, %s463
      %s478 = sphi 0, %s464
      %s482 = sphi 0, %s482
      %s484 = sphi 0, %s482
      %s485 = sphi 0, %s484
      %s499 = sphi 0, %s485
      %s507 = sphi 0, %s509
      %s510 = sphi 0, %s507
      %s511 = sphi 0, %s510
      %s527 = sphi 0, %s511
    $region4: #{mlp_mask_decoder_forward.3} parent=1 // loop_header_branch
      %32 = sbr.rel (%p30) target = $region8
    $region5: #{mlp_mask_decoder_forward.3} parent=1 // loop_body
      %s34 = ssub.s32 %s29, 1
      %s35 = ssub.s32 %s29, 2
      %s42 = sadd.s32 1, %s37
      %p43 = scmp.ge.s32.totalorder %s42, 1
      %s44 = scalar_select %p43, 0, %s42
      %s45 = sadd.s32 1, %s36
      %s46 = scalar_select %p43, %s45, %s36
      %p47 = scmp.ge.s32.totalorder %s46, 2
      %s48 = scalar_select %p47, 0, %s46
      %s49 = ssub.s32 %s36, %s48
      %s50 = ssub.s32 %s37, %s44
      %s51 = sor.u32 %s49, %s50
      %p52 = scmp.eq.s32.totalorder %s51, 0
      %s54 = sadd.s32 %s53, 1
      %s55 = scalar_select %p52, %s53, %s54
      %p58 = pneg %p52
      %p59 = scmp.eq.s32.totalorder %s29, 1
      %p60 = por %p58, %p59
      %p61 = scmp.ne.s32.totalorder %s53, %s56
      %p62 = scmp.eq.s32.totalorder %s29, 0
      %p63 = por %p61, %p62
      %p64 = scmp.ne.s32.totalorder %s53, %s56
      %p65 = scmp.eq.s32.totalorder %s34, 1
      %p66 = por %p64, %p65
      %p67 = scmp.ne.s32.totalorder %s56, %s57
      %p68 = scmp.eq.s32.totalorder %s34, 0
      %p69 = por %p67, %p68
      %p70 = scmp.ne.s32.totalorder %s56, %s57
      %p71 = scmp.eq.s32.totalorder %s35, 1
      %p72 = por %p70, %p71
      %p74 = scmp.ne.s32.totalorder %s57, %s73
      %p75 = scmp.eq.s32.totalorder %s35, 0
      %p76 = por %p74, %p75
      %s77 = ssub.s32 %s36, %s48
      %s78 = ssub.s32 %s37, %s44
      %s79 = sor.u32 %s77, %s78
      %p80 = scmp.eq.s32.totalorder %s79, 0
      %s82 = sadd.s32 %s81, 1
      %s83 = scalar_select %p80, %s81, %s82
      %p86 = pneg %p80
      %p87 = scmp.eq.s32.totalorder %s29, 1
      %p88 = por %p86, %p87
      %p89 = scmp.ne.s32.totalorder %s81, %s84
      %p90 = scmp.eq.s32.totalorder %s29, 0
      %p91 = por %p89, %p90
      %p92 = scmp.ne.s32.totalorder %s81, %s84
      %p93 = scmp.eq.s32.totalorder %s34, 1
      %p94 = por %p92, %p93
      %p95 = scmp.ne.s32.totalorder %s84, %s85
      %p96 = scmp.eq.s32.totalorder %s34, 0
      %p97 = por %p95, %p96
      %p98 = scmp.ne.s32.totalorder %s84, %s85
      %p99 = scmp.eq.s32.totalorder %s35, 1
      %p100 = por %p98, %p99
      %p102 = scmp.ne.s32.totalorder %s85, %s101
      %p103 = scmp.eq.s32.totalorder %s35, 0
      %p104 = por %p102, %p103
      %s105 = ssub.s32 %s36, %s48
      %p106 = scmp.eq.s32.totalorder %s105, 0
      %s108 = sadd.s32 %s107, 1
      %s109 = scalar_select %p106, %s107, %s108
      %p112 = pneg %p106
      %p113 = scmp.eq.s32.totalorder %s29, 1
      %p114 = por %p112, %p113
      %p115 = scmp.ne.s32.totalorder %s107, %s110
      %p116 = scmp.eq.s32.totalorder %s29, 0
      %p117 = por %p115, %p116
      %p118 = scmp.ne.s32.totalorder %s107, %s110
      %p119 = scmp.eq.s32.totalorder %s34, 1
      %p120 = por %p118, %p119
      %p121 = scmp.ne.s32.totalorder %s110, %s111
      %p122 = scmp.eq.s32.totalorder %s34, 0
      %p123 = por %p121, %p122
      %p124 = scmp.ne.s32.totalorder %s110, %s111
      %p125 = scmp.eq.s32.totalorder %s35, 1
      %p126 = por %p124, %p125
      %p128 = scmp.ne.s32.totalorder %s111, %s127
      %p129 = scmp.eq.s32.totalorder %s35, 0
      %p130 = por %p128, %p129
      %s131 = ssub.s32 %s36, %s48
      %p132 = scmp.eq.s32.totalorder %s131, 0
      %s134 = sadd.s32 %s133, 1
      %s135 = scalar_select %p132, %s133, %s134
      %p138 = pneg %p132
      %p139 = scmp.eq.s32.totalorder %s29, 1
      %p140 = por %p138, %p139
      %p141 = scmp.ne.s32.totalorder %s133, %s136
      %p142 = scmp.eq.s32.totalorder %s29, 0
      %p143 = por %p141, %p142
      %p144 = scmp.ne.s32.totalorder %s133, %s136
      %p145 = scmp.eq.s32.totalorder %s34, 1
      %p146 = por %p144, %p145
      %p147 = scmp.ne.s32.totalorder %s136, %s137
      %p148 = scmp.eq.s32.totalorder %s34, 0
      %p149 = por %p147, %p148
      %p150 = scmp.ne.s32.totalorder %s136, %s137
      %p151 = scmp.eq.s32.totalorder %s35, 1
      %p152 = por %p150, %p151
      %p154 = scmp.ne.s32.totalorder %s137, %s153
      %p155 = scmp.eq.s32.totalorder %s35, 0
      %p156 = por %p154, %p155
      %s157 = ssub.s32 %s36, %s48
      %p158 = scmp.eq.s32.totalorder %s157, 0
      %s160 = sadd.s32 %s159, 1
      %s161 = scalar_select %p158, %s159, %s160
      %p164 = pneg %p158
      %p165 = scmp.eq.s32.totalorder %s29, 1
      %p166 = por %p164, %p165
      %p167 = scmp.ne.s32.totalorder %s159, %s162
      %p168 = scmp.eq.s32.totalorder %s29, 0
      %p169 = por %p167, %p168
      %p170 = scmp.ne.s32.totalorder %s159, %s162
      %p171 = scmp.eq.s32.totalorder %s34, 1
      %p172 = por %p170, %p171
      %p173 = scmp.ne.s32.totalorder %s162, %s163
      %p174 = scmp.eq.s32.totalorder %s34, 0
      %p175 = por %p173, %p174
      %p176 = scmp.ne.s32.totalorder %s162, %s163
      %p177 = scmp.eq.s32.totalorder %s35, 1
      %p178 = por %p176, %p177
      %p180 = scmp.ne.s32.totalorder %s163, %s179
      %p181 = scmp.eq.s32.totalorder %s35, 0
      %p182 = por %p180, %p181
      %s183 = ssub.s32 %s36, %s48
      %p184 = scmp.eq.s32.totalorder %s183, 0
      %s186 = sadd.s32 %s185, 1
      %s187 = scalar_select %p184, %s185, %s186
      %p190 = pneg %p184
      %p191 = scmp.eq.s32.totalorder %s29, 1
      %p192 = por %p190, %p191
      %p193 = scmp.ne.s32.totalorder %s185, %s188
      %p194 = scmp.eq.s32.totalorder %s29, 0
      %p195 = por %p193, %p194
      %p196 = scmp.ne.s32.totalorder %s185, %s188
      %p197 = scmp.eq.s32.totalorder %s34, 1
      %p198 = por %p196, %p197
      %p199 = scmp.ne.s32.totalorder %s188, %s189
      %p200 = scmp.eq.s32.totalorder %s34, 0
      %p201 = por %p199, %p200
      %p202 = scmp.ne.s32.totalorder %s188, %s189
      %p203 = scmp.eq.s32.totalorder %s35, 1
      %p204 = por %p202, %p203
      %p206 = scmp.ne.s32.totalorder %s189, %s205
      %p207 = scmp.eq.s32.totalorder %s35, 0
      %p208 = por %p206, %p207
      %s210 = sadd.s32 %s209, 1
      %p213 = scmp.eq.s32.totalorder %s29, 1
      %p214 = scmp.ne.s32.totalorder %s209, %s211
      %p215 = scmp.eq.s32.totalorder %s29, 0
      %p216 = por %p214, %p215
      %p217 = scmp.ne.s32.totalorder %s209, %s211
      %p218 = scmp.eq.s32.totalorder %s34, 1
      %p219 = por %p217, %p218
      %p220 = scmp.ne.s32.totalorder %s211, %s212
      %p221 = scmp.eq.s32.totalorder %s34, 0
      %p222 = por %p220, %p221
      %p223 = scmp.ne.s32.totalorder %s211, %s212
      %p224 = scmp.eq.s32.totalorder %s35, 1
      %p225 = por %p223, %p224
      %p227 = scmp.ne.s32.totalorder %s212, %s226
      %p228 = scmp.eq.s32.totalorder %s35, 0
      %p229 = por %p227, %p228
      %s231 = sadd.s32 %s230, 1
      %p234 = scmp.eq.s32.totalorder %s29, 1
      %p235 = scmp.ne.s32.totalorder %s230, %s232
      %p236 = scmp.eq.s32.totalorder %s29, 0
      %p237 = por %p235, %p236
      %p238 = scmp.ne.s32.totalorder %s230, %s232
      %p239 = scmp.eq.s32.totalorder %s34, 1
      %p240 = por %p238, %p239
      %p241 = scmp.ne.s32.totalorder %s232, %s233
      %p242 = scmp.eq.s32.totalorder %s34, 0
      %p243 = por %p241, %p242
      %p244 = scmp.ne.s32.totalorder %s232, %s233
      %p245 = scmp.eq.s32.totalorder %s35, 1
      %p246 = por %p244, %p245
      %p248 = scmp.ne.s32.totalorder %s233, %s247
      %p249 = scmp.eq.s32.totalorder %s35, 0
      %p250 = por %p248, %p249
      %s252 = sadd.s32 %s251, 1
      %p255 = scmp.eq.s32.totalorder %s29, 1
      %p256 = scmp.ne.s32.totalorder %s251, %s253
      %p257 = scmp.eq.s32.totalorder %s29, 0
      %p258 = por %p256, %p257
      %p259 = scmp.ne.s32.totalorder %s251, %s253
      %p260 = scmp.eq.s32.totalorder %s34, 1
      %p261 = por %p259, %p260
      %p262 = scmp.ne.s32.totalorder %s253, %s254
      %p263 = scmp.eq.s32.totalorder %s34, 0
      %p264 = por %p262, %p263
      %p265 = scmp.ne.s32.totalorder %s253, %s254
      %p266 = scmp.eq.s32.totalorder %s35, 1
      %p267 = por %p265, %p266
      %p269 = scmp.ne.s32.totalorder %s254, %s268
      %p270 = scmp.eq.s32.totalorder %s35, 0
      %p271 = por %p269, %p270
      %s273 = sadd.s32 %s272, 1
      %p276 = scmp.eq.s32.totalorder %s29, 1
      %p277 = scmp.ne.s32.totalorder %s272, %s274
      %p278 = scmp.eq.s32.totalorder %s29, 0
      %p279 = por %p277, %p278
      %p280 = scmp.ne.s32.totalorder %s272, %s274
      %p281 = scmp.eq.s32.totalorder %s34, 1
      %p282 = por %p280, %p281
      %p283 = scmp.ne.s32.totalorder %s274, %s275
      %p284 = scmp.eq.s32.totalorder %s34, 0
      %p285 = por %p283, %p284
      %p286 = scmp.ne.s32.totalorder %s274, %s275
      %p287 = scmp.eq.s32.totalorder %s35, 1
      %p288 = por %p286, %p287
      %p290 = scmp.ne.s32.totalorder %s275, %s289
      %p291 = scmp.eq.s32.totalorder %s35, 0
      %p292 = por %p290, %p291
      %s294 = sadd.s32 %s293, 1
      %p297 = scmp.eq.s32.totalorder %s29, 1
      %p298 = scmp.ne.s32.totalorder %s293, %s295
      %p299 = scmp.eq.s32.totalorder %s29, 0
      %p300 = por %p298, %p299
      %p301 = scmp.ne.s32.totalorder %s293, %s295
      %p302 = scmp.eq.s32.totalorder %s34, 1
      %p303 = por %p301, %p302
      %p304 = scmp.ne.s32.totalorder %s295, %s296
      %p305 = scmp.eq.s32.totalorder %s34, 0
      %p306 = por %p304, %p305
      %p307 = scmp.ne.s32.totalorder %s295, %s296
      %p308 = scmp.eq.s32.totalorder %s35, 1
      %p309 = por %p307, %p308
      %p311 = scmp.ne.s32.totalorder %s296, %s310
      %p312 = scmp.eq.s32.totalorder %s35, 0
      %p313 = por %p311, %p312
      %s315 = sadd.s32 %s314, 1
      %p318 = scmp.eq.s32.totalorder %s29, 1
      %p319 = scmp.ne.s32.totalorder %s314, %s316
      %p320 = scmp.eq.s32.totalorder %s29, 0
      %p321 = por %p319, %p320
      %p322 = scmp.ne.s32.totalorder %s314, %s316
      %p323 = scmp.eq.s32.totalorder %s34, 1
      %p324 = por %p322, %p323
      %p325 = scmp.ne.s32.totalorder %s316, %s317
      %p326 = scmp.eq.s32.totalorder %s34, 0
      %p327 = por %p325, %p326
      %p328 = scmp.ne.s32.totalorder %s316, %s317
      %p329 = scmp.eq.s32.totalorder %s35, 1
      %p330 = por %p328, %p329
      %p332 = scmp.ne.s32.totalorder %s317, %s331
      %p333 = scmp.eq.s32.totalorder %s35, 0
      %p334 = por %p332, %p333
      %s336 = sadd.s32 %s335, 1
      %p339 = scmp.eq.s32.totalorder %s29, 1
      %p340 = scmp.ne.s32.totalorder %s335, %s337
      %p341 = scmp.eq.s32.totalorder %s29, 0
      %p342 = por %p340, %p341
      %p343 = scmp.ne.s32.totalorder %s335, %s337
      %p344 = scmp.eq.s32.totalorder %s34, 1
      %p345 = por %p343, %p344
      %p346 = scmp.ne.s32.totalorder %s337, %s338
      %p347 = scmp.eq.s32.totalorder %s34, 0
      %p348 = por %p346, %p347
      %p349 = scmp.ne.s32.totalorder %s337, %s338
      %p350 = scmp.eq.s32.totalorder %s35, 1
      %p351 = por %p349, %p350
      %p353 = scmp.ne.s32.totalorder %s338, %s352
      %p354 = scmp.eq.s32.totalorder %s35, 0
      %p355 = por %p353, %p354
      %s357 = sadd.s32 %s356, 1
      %p360 = scmp.eq.s32.totalorder %s29, 1
      %p361 = scmp.ne.s32.totalorder %s356, %s358
      %p362 = scmp.eq.s32.totalorder %s29, 0
      %p363 = por %p361, %p362
      %p364 = scmp.ne.s32.totalorder %s356, %s358
      %p365 = scmp.eq.s32.totalorder %s34, 1
      %p366 = por %p364, %p365
      %p367 = scmp.ne.s32.totalorder %s358, %s359
      %p368 = scmp.eq.s32.totalorder %s34, 0
      %p369 = por %p367, %p368
      %p370 = scmp.ne.s32.totalorder %s358, %s359
      %p371 = scmp.eq.s32.totalorder %s35, 1
      %p372 = por %p370, %p371
      %p374 = scmp.ne.s32.totalorder %s359, %s373
      %p375 = scmp.eq.s32.totalorder %s35, 0
      %p376 = por %p374, %p375
      %s378 = sadd.s32 %s377, 1
      %p381 = scmp.eq.s32.totalorder %s29, 1
      %p382 = scmp.ne.s32.totalorder %s377, %s379
      %p383 = scmp.eq.s32.totalorder %s29, 0
      %p384 = por %p382, %p383
      %p385 = scmp.ne.s32.totalorder %s377, %s379
      %p386 = scmp.eq.s32.totalorder %s34, 1
      %p387 = por %p385, %p386
      %p388 = scmp.ne.s32.totalorder %s379, %s380
      %p389 = scmp.eq.s32.totalorder %s34, 0
      %p390 = por %p388, %p389
      %p391 = scmp.ne.s32.totalorder %s379, %s380
      %p392 = scmp.eq.s32.totalorder %s35, 1
      %p393 = por %p391, %p392
      %p395 = scmp.ne.s32.totalorder %s380, %s394
      %p396 = scmp.eq.s32.totalorder %s35, 0
      %p397 = por %p395, %p396
      %s399 = sadd.s32 %s398, 1
      %p402 = scmp.eq.s32.totalorder %s29, 1
      %p403 = scmp.ne.s32.totalorder %s398, %s400
      %p404 = scmp.eq.s32.totalorder %s29, 0
      %p405 = por %p403, %p404
      %p406 = scmp.ne.s32.totalorder %s398, %s400
      %p407 = scmp.eq.s32.totalorder %s34, 1
      %p408 = por %p406, %p407
      %p409 = scmp.ne.s32.totalorder %s400, %s401
      %p410 = scmp.eq.s32.totalorder %s34, 0
      %p411 = por %p409, %p410
      %p412 = scmp.ne.s32.totalorder %s400, %s401
      %p413 = scmp.eq.s32.totalorder %s35, 1
      %p414 = por %p412, %p413
      %p416 = scmp.ne.s32.totalorder %s401, %s415
      %p417 = scmp.eq.s32.totalorder %s35, 0
      %p418 = por %p416, %p417
      %s420 = sadd.s32 %s419, 1
      %p423 = scmp.eq.s32.totalorder %s29, 1
      %p424 = scmp.ne.s32.totalorder %s419, %s421
      %p425 = scmp.eq.s32.totalorder %s29, 0
      %p426 = por %p424, %p425
      %p427 = scmp.ne.s32.totalorder %s419, %s421
      %p428 = scmp.eq.s32.totalorder %s34, 1
      %p429 = por %p427, %p428
      %p430 = scmp.ne.s32.totalorder %s421, %s422
      %p431 = scmp.eq.s32.totalorder %s34, 0
      %p432 = por %p430, %p431
      %p433 = scmp.ne.s32.totalorder %s421, %s422
      %p434 = scmp.eq.s32.totalorder %s35, 1
      %p435 = por %p433, %p434
      %p437 = scmp.ne.s32.totalorder %s422, %s436
      %p438 = scmp.eq.s32.totalorder %s35, 0
      %p439 = por %p437, %p438
      %s441 = sadd.s32 %s440, 1
      %p444 = scmp.eq.s32.totalorder %s29, 1
      %p445 = scmp.ne.s32.totalorder %s440, %s442
      %p446 = scmp.eq.s32.totalorder %s29, 0
      %p447 = por %p445, %p446
      %p448 = scmp.ne.s32.totalorder %s440, %s442
      %p449 = scmp.eq.s32.totalorder %s34, 1
      %p450 = por %p448, %p449
      %p451 = scmp.ne.s32.totalorder %s442, %s443
      %p452 = scmp.eq.s32.totalorder %s34, 0
      %p453 = por %p451, %p452
      %p454 = scmp.ne.s32.totalorder %s442, %s443
      %p455 = scmp.eq.s32.totalorder %s35, 1
      %p456 = por %p454, %p455
      %p458 = scmp.ne.s32.totalorder %s443, %s457
      %p459 = scmp.eq.s32.totalorder %s35, 0
      %p460 = por %p458, %p459
      %s462 = sadd.s32 %s461, 1
      %p465 = scmp.eq.s32.totalorder %s29, 1
      %p466 = scmp.ne.s32.totalorder %s461, %s463
      %p467 = scmp.eq.s32.totalorder %s29, 0
      %p468 = por %p466, %p467
      %p469 = scmp.ne.s32.totalorder %s461, %s463
      %p470 = scmp.eq.s32.totalorder %s34, 1
      %p471 = por %p469, %p470
      %p472 = scmp.ne.s32.totalorder %s463, %s464
      %p473 = scmp.eq.s32.totalorder %s34, 0
      %p474 = por %p472, %p473
      %p475 = scmp.ne.s32.totalorder %s463, %s464
      %p476 = scmp.eq.s32.totalorder %s35, 1
      %p477 = por %p475, %p476
      %p479 = scmp.ne.s32.totalorder %s464, %s478
      %p480 = scmp.eq.s32.totalorder %s35, 0
      %p481 = por %p479, %p480
      %s483 = sadd.s32 %s482, 1
      %p486 = scmp.eq.s32.totalorder %s29, 1
      %p487 = scmp.ne.s32.totalorder %s482, %s484
      %p488 = scmp.eq.s32.totalorder %s29, 0
      %p489 = por %p487, %p488
      %p490 = scmp.ne.s32.totalorder %s482, %s484
      %p491 = scmp.eq.s32.totalorder %s34, 1
      %p492 = por %p490, %p491
      %p493 = scmp.ne.s32.totalorder %s484, %s485
      %p494 = scmp.eq.s32.totalorder %s34, 0
      %p495 = por %p493, %p494
      %p496 = scmp.ne.s32.totalorder %s484, %s485
      %p497 = scmp.eq.s32.totalorder %s35, 1
      %p498 = por %p496, %p497
      %p500 = scmp.ne.s32.totalorder %s485, %s499
      %p501 = scmp.eq.s32.totalorder %s35, 0
      %p502 = por %p500, %p501
      %s503 = ssub.s32 %s36, %s48
      %s504 = ssub.s32 %s37, %s44
      %s505 = sor.u32 %s503, %s504
      %p506 = scmp.eq.s32.totalorder %s505, 0
      %s508 = sadd.s32 %s507, 1
      %s509 = scalar_select %p506, %s507, %s508
      %p512 = pneg %p506
      %p513 = scmp.eq.s32.totalorder %s29, 1
      %p514 = por %p512, %p513
      %p515 = scmp.ne.s32.totalorder %s507, %s510
      %p516 = scmp.eq.s32.totalorder %s29, 0
      %p517 = por %p515, %p516
      %p518 = scmp.ne.s32.totalorder %s507, %s510
      %p519 = scmp.eq.s32.totalorder %s34, 1
      %p520 = por %p518, %p519
      %p521 = scmp.ne.s32.totalorder %s510, %s511
      %p522 = scmp.eq.s32.totalorder %s34, 0
      %p523 = por %p521, %p522
      %p524 = scmp.ne.s32.totalorder %s510, %s511
      %p525 = scmp.eq.s32.totalorder %s35, 1
      %p526 = por %p524, %p525
      %p528 = scmp.ne.s32.totalorder %s511, %s527
      %p529 = scmp.eq.s32.totalorder %s35, 0
      %p530 = por %p528, %p529
      %p531 = scmp.le.s32.totalorder 1, %s29
      %p532 = scmp.lt.s32.totalorder %s29, 3
      %p533 = pnand %p531, %p532
      %p534 = pneg %p533
      // Predicated region
      $region9: #{mlp_mask_decoder_forward.3} parent=5 // pred_check
        _
      $region10: #{mlp_mask_decoder_forward.3} parent=5 // pred_check_branch
        %536 = sbr.rel (%p533) target = $region12
      $region11: #{mlp_mask_decoder_forward.3} parent=5 // pred_region
        %s537 = ssub.s32 %s29, 1
        // Predicated region
        $region13: #{mlp_mask_decoder_forward.3} parent=11 // pred_check
          %p538 = pneg %p222
        $region14: #{mlp_mask_decoder_forward.3} parent=11 // pred_check_branch
          %540 = sbr.rel (%p538) target = $region16
        $region15: #{mlp_mask_decoder_forward.3} parent=11 // pred_region
          _
        $region16: #{mlp_mask_decoder_forward.3} parent=11 // pred_fallthru
          _
        // Predicated region
        $region17: #{mlp_mask_decoder_forward.3} parent=11 // pred_check
          %p541 = pneg %p243
        $region18: #{mlp_mask_decoder_forward.3} parent=11 // pred_check_branch
          %543 = sbr.rel (%p541) target = $region20
        $region19: #{mlp_mask_decoder_forward.3} parent=11 // pred_region
          _
        $region20: #{mlp_mask_decoder_forward.3} parent=11 // pred_fallthru
          _
        // Predicated region
        $region21: #{mlp_mask_decoder_forward.3} parent=11 // pred_check
          %p544 = pneg %p264
        $region22: #{mlp_mask_decoder_forward.3} parent=11 // pred_check_branch
          %546 = sbr.rel (%p544) target = $region24
        $region23: #{mlp_mask_decoder_forward.3} parent=11 // pred_region
          _
        $region24: #{mlp_mask_decoder_forward.3} parent=11 // pred_fallthru
          _
        // Predicated region
        $region25: #{mlp_mask_decoder_forward.3} parent=11 // pred_check
          %p547 = pneg %p285
        $region26: #{mlp_mask_decoder_forward.3} parent=11 // pred_check_branch
          %549 = sbr.rel (%p547) target = $region28
        $region27: #{mlp_mask_decoder_forward.3} parent=11 // pred_region
          _
        $region28: #{mlp_mask_decoder_forward.3} parent=11 // pred_fallthru
          _
        // Predicated region
        $region29: #{mlp_mask_decoder_forward.3} parent=11 // pred_check
          %p550 = pneg %p306
        $region30: #{mlp_mask_decoder_forward.3} parent=11 // pred_check_branch
          %552 = sbr.rel (%p550) target = $region32
        $region31: #{mlp_mask_decoder_forward.3} parent=11 // pred_region
          _
        $region32: #{mlp_mask_decoder_forward.3} parent=11 // pred_fallthru
          _
        // Predicated region
        $region33: #{mlp_mask_decoder_forward.3} parent=11 // pred_check
          %p553 = pneg %p327
        $region34: #{mlp_mask_decoder_forward.3} parent=11 // pred_check_branch
          %555 = sbr.rel (%p553) target = $region36
        $region35: #{mlp_mask_decoder_forward.3} parent=11 // pred_region
          _
        $region36: #{mlp_mask_decoder_forward.3} parent=11 // pred_fallthru
          _
        // Predicated region
        $region37: #{mlp_mask_decoder_forward.3} parent=11 // pred_check
          %p556 = pneg %p348
        $region38: #{mlp_mask_decoder_forward.3} parent=11 // pred_check_branch
          %558 = sbr.rel (%p556) target = $region40
        $region39: #{mlp_mask_decoder_forward.3} parent=11 // pred_region
          _
        $region40: #{mlp_mask_decoder_forward.3} parent=11 // pred_fallthru
          _
        // Predicated region
        $region41: #{mlp_mask_decoder_forward.3} parent=11 // pred_check
          %p559 = pneg %p369
        $region42: #{mlp_mask_decoder_forward.3} parent=11 // pred_check_branch
          %561 = sbr.rel (%p559) target = $region44
        $region43: #{mlp_mask_decoder_forward.3} parent=11 // pred_region
          _
        $region44: #{mlp_mask_decoder_forward.3} parent=11 // pred_fallthru
          _
        // Predicated region
        $region45: #{mlp_mask_decoder_forward.3} parent=11 // pred_check
          %p562 = pneg %p390
        $region46: #{mlp_mask_decoder_forward.3} parent=11 // pred_check_branch
          %564 = sbr.rel (%p562) target = $region48
        $region47: #{mlp_mask_decoder_forward.3} parent=11 // pred_region
          _
        $region48: #{mlp_mask_decoder_forward.3} parent=11 // pred_fallthru
          _
        // Predicated region
        $region49: #{mlp_mask_decoder_forward.3} parent=11 // pred_check
          %p565 = pneg %p411
        $region50: #{mlp_mask_decoder_forward.3} parent=11 // pred_check_branch
          %567 = sbr.rel (%p565) target = $region52
        $region51: #{mlp_mask_decoder_forward.3} parent=11 // pred_region
          _
        $region52: #{mlp_mask_decoder_forward.3} parent=11 // pred_fallthru
          _
        // Predicated region
        $region53: #{mlp_mask_decoder_forward.3} parent=11 // pred_check
          %p568 = pneg %p432
        $region54: #{mlp_mask_decoder_forward.3} parent=11 // pred_check_branch
          %570 = sbr.rel (%p568) target = $region56
        $region55: #{mlp_mask_decoder_forward.3} parent=11 // pred_region
          _
        $region56: #{mlp_mask_decoder_forward.3} parent=11 // pred_fallthru
          _
        // Predicated region
        $region57: #{mlp_mask_decoder_forward.3} parent=11 // pred_check
          %p571 = pneg %p453
        $region58: #{mlp_mask_decoder_forward.3} parent=11 // pred_check_branch
          %573 = sbr.rel (%p571) target = $region60
        $region59: #{mlp_mask_decoder_forward.3} parent=11 // pred_region
          _
        $region60: #{mlp_mask_decoder_forward.3} parent=11 // pred_fallthru
          _
        // Predicated region
        $region61: #{mlp_mask_decoder_forward.3} parent=11 // pred_check
          %p574 = pneg %p474
        $region62: #{mlp_mask_decoder_forward.3} parent=11 // pred_check_branch
          %576 = sbr.rel (%p574) target = $region64
        $region63: #{mlp_mask_decoder_forward.3} parent=11 // pred_region
          _
        $region64: #{mlp_mask_decoder_forward.3} parent=11 // pred_fallthru
          _
        // Predicated region
        $region65: #{mlp_mask_decoder_forward.3} parent=11 // pred_check
          %p577 = pneg %p495
        $region66: #{mlp_mask_decoder_forward.3} parent=11 // pred_check_branch
          %579 = sbr.rel (%p577) target = $region68
        $region67: #{mlp_mask_decoder_forward.3} parent=11 // pred_region
          _
        $region68: #{mlp_mask_decoder_forward.3} parent=11 // pred_fallthru
          _
      $region12: #{mlp_mask_decoder_forward.3} parent=5 // pred_fallthru
        _
      %p580 = scmp.lt.s32.totalorder %s29, 2
      // Predicated region
      $region69: #{mlp_mask_decoder_forward.3} parent=5 // pred_check
        %p581 = pneg %p580
      $region70: #{mlp_mask_decoder_forward.3} parent=5 // pred_check_branch
        %583 = sbr.rel (%p581) target = $region72
      $region71: #{mlp_mask_decoder_forward.3} parent=5 // pred_region
        // Predicated region
        $region73: #{mlp_mask_decoder_forward.3} parent=71 // pred_check
          %p584 = pneg %p63
        $region74: #{mlp_mask_decoder_forward.3} parent=71 // pred_check_branch
          %586 = sbr.rel (%p584) target = $region76
        $region75: #{mlp_mask_decoder_forward.3} parent=71 // pred_region
          %s587 = smul.u32 2, %s37
          %p588 = scmp.lt.s32.totalorder %s36, 1
          %s589 = scalar_select %p588, %s36, 1
          %p590 = scmp.lt.s32.totalorder %s587, 1
          %s591 = scalar_select %p590, %s587, 1
          %s592 = smul.addr %s589, 8
          %s593 = sadd.s32 %s591, %s592
          %s594 = smul.addr %s593, 8
          %s595 = scalar_lea.vmem %s0, %s594
          %s596 = smul.u32 2, %s37
        $region76: #{mlp_mask_decoder_forward.3} parent=71 // pred_fallthru
          _
        // Predicated region
        $region77: #{mlp_mask_decoder_forward.3} parent=71 // pred_check
          %p597 = pneg %p91
        $region78: #{mlp_mask_decoder_forward.3} parent=71 // pred_check_branch
          %599 = sbr.rel (%p597) target = $region80
        $region79: #{mlp_mask_decoder_forward.3} parent=71 // pred_region
          %s600 = smul.u32 32, %s37
          %p601 = scmp.lt.s32.totalorder %s36, 1
          %s602 = scalar_select %p601, %s36, 1
          %p603 = scmp.lt.s32.totalorder %s600, 31
          %s604 = scalar_select %p603, %s600, 31
          %s605 = smul.addr %s602, 32
          %s606 = sadd.s32 %s604, %s605
          %s607 = smul.addr %s606, 8
          %s608 = scalar_lea.vmem %s1, %s607
          %s609 = smul.u32 32, %s37
        $region80: #{mlp_mask_decoder_forward.3} parent=71 // pred_fallthru
          _
        // Predicated region
        $region81: #{mlp_mask_decoder_forward.3} parent=71 // pred_check
          %p610 = pneg %p117
        $region82: #{mlp_mask_decoder_forward.3} parent=71 // pred_check_branch
          %612 = sbr.rel (%p610) target = $region84
        $region83: #{mlp_mask_decoder_forward.3} parent=71 // pred_region
          %p613 = scmp.lt.s32.totalorder %s36, 1
          %s614 = scalar_select %p613, %s36, 1
          %s615 = smul.addr %s614, 4
          %s616 = scalar_lea.vmem %s2, %s615
        $region84: #{mlp_mask_decoder_forward.3} parent=71 // pred_fallthru
          _
        // Predicated region
        $region85: #{mlp_mask_decoder_forward.3} parent=71 // pred_check
          %p617 = pneg %p143
        $region86: #{mlp_mask_decoder_forward.3} parent=71 // pred_check_branch
          %619 = sbr.rel (%p617) target = $region88
        $region87: #{mlp_mask_decoder_forward.3} parent=71 // pred_region
          %p620 = scmp.lt.s32.totalorder %s36, 1
          %s621 = scalar_select %p620, %s36, 1
          %s622 = smul.addr %s621, 4
          %s623 = scalar_lea.vmem %s3, %s622
        $region88: #{mlp_mask_decoder_forward.3} parent=71 // pred_fallthru
          _
        // Predicated region
        $region89: #{mlp_mask_decoder_forward.3} parent=71 // pred_check
          %p624 = pneg %p169
        $region90: #{mlp_mask_decoder_forward.3} parent=71 // pred_check_branch
          %626 = sbr.rel (%p624) target = $region92
        $region91: #{mlp_mask_decoder_forward.3} parent=71 // pred_region
          %p627 = scmp.lt.s32.totalorder %s36, 1
          %s628 = scalar_select %p627, %s36, 1
          %s629 = smul.addr %s628, 4
          %s630 = scalar_lea.vmem %s4, %s629
        $region92: #{mlp_mask_decoder_forward.3} parent=71 // pred_fallthru
          _
        // Predicated region
        $region93: #{mlp_mask_decoder_forward.3} parent=71 // pred_check
          %p631 = pneg %p195
        $region94: #{mlp_mask_decoder_forward.3} parent=71 // pred_check_branch
          %633 = sbr.rel (%p631) target = $region96
        $region95: #{mlp_mask_decoder_forward.3} parent=71 // pred_region
          %p634 = scmp.lt.s32.totalorder %s36, 1
          %s635 = scalar_select %p634, %s36, 1
          %s636 = smul.addr %s635, 4
          %s637 = scalar_lea.vmem %s5, %s636
        $region96: #{mlp_mask_decoder_forward.3} parent=71 // pred_fallthru
          _
      $region72: #{mlp_mask_decoder_forward.3} parent=5 // pred_fallthru
        _
      %p638 = scmp.le.s32.totalorder 1, %s29
      %p639 = scmp.lt.s32.totalorder %s29, 3
      %p640 = pnand %p638, %p639
      %p641 = pneg %p640
      // Predicated region
      $region97: #{mlp_mask_decoder_forward.3} parent=5 // pred_check
        _
      $region98: #{mlp_mask_decoder_forward.3} parent=5 // pred_check_branch
        %643 = sbr.rel (%p640) target = $region100
      $region99: #{mlp_mask_decoder_forward.3} parent=5 // pred_region
        %s644 = ssub.s32 %s29, 1
        %s645 = smul.u32 2, %s39
        %p646 = scmp.lt.s32.totalorder %s38, 1
        %s647 = scalar_select %p646, %s38, 1
        %p648 = scmp.lt.s32.totalorder %s645, 1
        %s649 = scalar_select %p648, %s645, 1
        %s650 = smul.addr %s647, 8
        %s651 = sadd.s32 %s649, %s650
        %s652 = smul.addr %s651, 8
        %s653 = scalar_lea.vmem %s0, %s652
        %p654 = pneg %p69
        %p655 = pneg %p66
        %s656 = smul.u32 32, %s39
        %p657 = scmp.lt.s32.totalorder %s38, 1
        %s658 = scalar_select %p657, %s38, 1
        %p659 = scmp.lt.s32.totalorder %s656, 31
        %s660 = scalar_select %p659, %s656, 31
        %s661 = smul.addr %s658, 32
        %s662 = sadd.s32 %s660, %s661
        %s663 = smul.addr %s662, 8
        %s664 = scalar_lea.vmem %s1, %s663
        %p665 = pneg %p97
        %p666 = pneg %p94
        %p667 = scmp.lt.s32.totalorder %s38, 1
        %s668 = scalar_select %p667, %s38, 1
        %s669 = smul.addr %s668, 4
        %s670 = scalar_lea.vmem %s2, %s669
        %p671 = pneg %p123
        %p672 = pneg %p120
        %p673 = scmp.lt.s32.totalorder %s38, 1
        %s674 = scalar_select %p673, %s38, 1
        %s675 = smul.addr %s674, 4
        %s676 = scalar_lea.vmem %s3, %s675
        %p677 = pneg %p149
        %p678 = pneg %p146
        %p679 = scmp.lt.s32.totalorder %s38, 1
        %s680 = scalar_select %p679, %s38, 1
        %s681 = smul.addr %s680, 4
        %s682 = scalar_lea.vmem %s4, %s681
        %p683 = pneg %p175
        %p684 = pneg %p172
        %p685 = scmp.lt.s32.totalorder %s38, 1
        %s686 = scalar_select %p685, %s38, 1
        %s687 = smul.addr %s686, 4
        %s688 = scalar_lea.vmem %s5, %s687
        %p689 = pneg %p201
        %p690 = pneg %p198
        %p691 = pneg %p222
        %p692 = pneg %p219
        %p693 = pneg %p243
        %p694 = pneg %p240
        %p695 = pneg %p264
        %p696 = pneg %p261
        %p697 = pneg %p285
        %p698 = pneg %p282
        %p699 = pneg %p306
        %p700 = pneg %p303
        %p701 = pneg %p327
        %p702 = pneg %p324
        %p703 = pneg %p348
        %p704 = pneg %p345
        %p705 = pneg %p369
        %p706 = pneg %p366
        %p707 = pneg %p390
        %p708 = pneg %p387
        %p709 = pneg %p411
        %p710 = pneg %p408
        %p711 = pneg %p432
        %p712 = pneg %p429
        %p713 = pneg %p453
        %p714 = pneg %p450
        %p715 = pneg %p474
        %p716 = pneg %p471
        %p717 = pneg %p495
        %p718 = pneg %p492
        %p719 = pneg %p523
        %p720 = pneg %p520
        %s721 = sand.u32 %s510, 1
        %s722 = scalar_lea.sflag [#allocation3], %s721
        %s723 = sand.u32 %s510, 1
        %s724 = smul.addr %s723, 128
        %s725 = scalar_lea.vmem [#allocation2], %s724
        %s726 = smul.u32 2, %s39
        %p727 = scmp.lt.s32.totalorder %s38, 1
        %s728 = scalar_select %p727, %s38, 1
        %p729 = scmp.lt.s32.totalorder %s726, 1
        %s730 = scalar_select %p729, %s726, 1
        %s731 = smul.addr %s728, 8
        %s732 = sadd.s32 %s730, %s731
        %s733 = smul.addr %s732, 8
        %s734 = scalar_lea.vmem %s0, %s733
        %s735 = smul.u32 2, %s39
        %s736 = smul.u32 32, %s39
        %p737 = scmp.lt.s32.totalorder %s38, 1
        %s738 = scalar_select %p737, %s38, 1
        %p739 = scmp.lt.s32.totalorder %s736, 31
        %s740 = scalar_select %p739, %s736, 31
        %s741 = smul.addr %s738, 32
        %s742 = sadd.s32 %s740, %s741
        %s743 = smul.addr %s742, 8
        %s744 = scalar_lea.vmem %s1, %s743
        %s745 = smul.u32 32, %s39
        %p746 = scmp.lt.s32.totalorder %s38, 1
        %s747 = scalar_select %p746, %s38, 1
        %s748 = smul.addr %s747, 4
        %s749 = scalar_lea.vmem %s2, %s748
        %p750 = scmp.lt.s32.totalorder %s38, 1
        %s751 = scalar_select %p750, %s38, 1
        %s752 = smul.addr %s751, 4
        %s753 = scalar_lea.vmem %s3, %s752
        %p754 = scmp.lt.s32.totalorder %s38, 1
        %s755 = scalar_select %p754, %s38, 1
        %s756 = smul.addr %s755, 4
        %s757 = scalar_lea.vmem %s4, %s756
        %p758 = scmp.lt.s32.totalorder %s38, 1
        %s759 = scalar_select %p758, %s38, 1
        %s760 = smul.addr %s759, 4
        %s761 = scalar_lea.vmem %s5, %s760
        %s762 = smul.u32 2, %s39
        %v764 = vld [vmem:[%s734] sm:$0xff]
        %v765 = vld [vmem:[%s734 + $0x8] sm:$0xff]
        %v766 = vld [vmem:[%s734 + $0x10] sm:$0xff]
        %v767 = vld [vmem:[%s734 + $0x18] sm:$0xff]
        %v768 = vld [vmem:[%s734 + $0x20] sm:$0xff]
        %v769 = vld [vmem:[%s734 + $0x28] sm:$0xff]
        %v770 = vld [vmem:[%s734 + $0x30] sm:$0xff]
        %v771 = vld [vmem:[%s734 + $0x38] sm:$0xff]
        %v772 = vpack.c.bf16 %v766, %v764
        %v773 = vpack.c.bf16 %v767, %v765
        %v774 = vpack.c.bf16 %v770, %v768
        %v775 = vpack.c.bf16 %v771, %v769
        %v776 = vld [vmem:[%s6] sm:$0xf]
        %v777 = vld [vmem:[%s6 + $0x4] sm:$0xf]
        %v778 = vld [vmem:[%s6 + $0x8] sm:$0xf]
        %v779 = vld [vmem:[%s6 + $0xc] sm:$0xf]
        %v780 = vld [vmem:[%s7] sm:$0x1]
        %v782 = vlaneseq
        %v783 = vshrl.u32 %v782, 7
        %v784 = vsub.s32 0, %v783
        %v785 = vrot.slane %v780, %v784
        %787 = vxpose.xlu0.c.b16.start [1/8] %v772, 128
        %788 = vxpose.xlu0.c.b16.cont [2/8] %v774, 128
        %789 = vxpose.xlu0.c.b16.cont [3/8] 0, 128
        %790 = vxpose.xlu0.c.b16.cont [4/8] 0, 128
        %791 = vxpose.xlu0.c.b16.cont [5/8] 0, 128
        %792 = vxpose.xlu0.c.b16.cont [6/8] 0, 128
        %793 = vxpose.xlu0.c.b16.cont [7/8] 0, 128
        %794 = vxpose.xlu0.c.b16.end [8/8] 0, 128
        %v795 = vpop.trf.xlu0
        %v796 = vpop.trf.xlu0
        %v797 = vpop.trf.xlu0
        %v798 = vpop.trf.xlu0
        %v799 = vpop.trf.xlu0
        %v800 = vpop.trf.xlu0
        %v801 = vpop.trf.xlu0
        %v802 = vpop.trf.xlu0
        %803 = vxpose.xlu0.c.b16.start [1/8] %v773, 128
        %804 = vxpose.xlu0.c.b16.cont [2/8] %v775, 128
        %805 = vxpose.xlu0.c.b16.cont [3/8] 0, 128
        %806 = vxpose.xlu0.c.b16.cont [4/8] 0, 128
        %807 = vxpose.xlu0.c.b16.cont [5/8] 0, 128
        %808 = vxpose.xlu0.c.b16.cont [6/8] 0, 128
        %809 = vxpose.xlu0.c.b16.cont [7/8] 0, 128
        %810 = vxpose.xlu0.c.b16.end [8/8] 0, 128
        %v811 = vpop.trf.xlu0
        %v812 = vpop.trf.xlu0
        %v813 = vpop.trf.xlu0
        %v814 = vpop.trf.xlu0
        %v815 = vpop.trf.xlu0
        %v816 = vpop.trf.xlu0
        %v817 = vpop.trf.xlu0
        %v818 = vpop.trf.xlu0
        %v823 = vunpack.c.l.b16 %v776
        %v824 = vunpack.c.l.b16 %v777
        %v825 = vunpack.c.l.b16 %v778
        %v826 = vunpack.c.l.b16 %v779
        %v827 = vpack.c.b16 %v824, %v823
        %v828 = vpack.c.b16 %v826, %v825
        %vm831 = vcmask 261120
        %v833 = vsel %vm831, %v795, 0
        %v836 = vsel %vm831, %v796, 0
        %v839 = vsel %vm831, %v797, 0
        %v842 = vsel %vm831, %v798, 0
        %v845 = vsel %vm831, %v799, 0
        %v848 = vsel %vm831, %v800, 0
        %v851 = vsel %vm831, %v801, 0
        %v854 = vsel %vm831, %v802, 0
        %v857 = vsel %vm831, %v811, 0
        %v860 = vsel %vm831, %v812, 0
        %v863 = vsel %vm831, %v813, 0
        %v866 = vsel %vm831, %v814, 0
        %v869 = vsel %vm831, %v815, 0
        %v872 = vsel %vm831, %v816, 0
        %v875 = vsel %vm831, %v817, 0
        %v878 = vsel %vm831, %v818, 0
        %880 = vmatprep.subr.bf16.mxu0 0
        %881 = vmatpush1.bf16.msra.mxu0 %v827
        %882 = vmatprep.subr.bf16.mxu0 0
        %883 = vmatpush1.bf16.msra.mxu0 %v828
        %884 = vmatprep.subr.bf16.mxu0 0
        %885 = vmatpush1.bf16.msra.mxu0 0
        %886 = vmatprep.subr.bf16.mxu0 0
        %887 = vmatpush1.bf16.msra.mxu0 0
        %888 = vmatprep.subr.bf16.mxu0 0
        %889 = vmatpush1.bf16.msra.mxu0 0
        %890 = vmatprep.subr.bf16.mxu0 0
        %891 = vmatpush1.bf16.msra.mxu0 0
        %892 = vmatprep.subr.bf16.mxu0 0
        %893 = vmatpush1.bf16.msra.mxu0 0
        %894 = vmatprep.subr.bf16.mxu0 0
        %895 = vmatpush1.bf16.msra.mxu0 0
        %896 = vmatprep.subr.bf16.mxu0 0
        %897 = vmatpush1.bf16.msra.mxu0 0
        %898 = vmatprep.subr.bf16.mxu0 0
        %899 = vmatpush1.bf16.msra.mxu0 0
        %900 = vmatprep.subr.bf16.mxu0 0
        %901 = vmatpush1.bf16.msra.mxu0 0
        %902 = vmatprep.subr.bf16.mxu0 0
        %903 = vmatpush1.bf16.msra.mxu0 0
        %904 = vmatprep.subr.bf16.mxu0 0
        %905 = vmatpush1.bf16.msra.mxu0 0
        %906 = vmatprep.subr.bf16.mxu0 0
        %907 = vmatpush1.bf16.msra.mxu0 0
        %908 = vmatprep.subr.bf16.mxu0 0
        %909 = vmatpush1.bf16.msra.mxu0 0
        %910 = vmatprep.subr.bf16.mxu0 0
        %911 = vmatpush1.bf16.msra.mxu0 0
        %912 = vmatprep.mubr.bf16.mxu0 0
        %913 = vmatmul.mubr.bf16.gmra.mrb[0].mxu0 %v833
        %v914 = vpop.f32.mrb[0].mxu0
        %v915 = vadd.f32 %v785, %v914
        %v916 = vpop.f32.mrb[0].mxu0
        %v917 = vpop.f32.mrb[0].mxu0
        %v918 = vadd.f32 %v785, %v917
        %v919 = vpop.f32.mrb[0].mxu0
        %920 = vmatprep.mubr.bf16.mxu0 0
        %921 = vmatmul.mubr.bf16.gmra.mrb[0].mxu0 %v836
        %v922 = vpop.f32.mrb[0].mxu0
        %v923 = vadd.f32 %v785, %v922
        %v924 = vpop.f32.mrb[0].mxu0
        %v925 = vpop.f32.mrb[0].mxu0
        %v926 = vadd.f32 %v785, %v925
        %v927 = vpop.f32.mrb[0].mxu0
        %928 = vmatprep.mubr.bf16.mxu0 0
        %929 = vmatmul.mubr.bf16.gmra.mrb[0].mxu0 %v839
        %v930 = vpop.f32.mrb[0].mxu0
        %v931 = vadd.f32 %v785, %v930
        %v932 = vpop.f32.mrb[0].mxu0
        %v933 = vpop.f32.mrb[0].mxu0
        %v934 = vadd.f32 %v785, %v933
        %v935 = vpop.f32.mrb[0].mxu0
        %936 = vmatprep.mubr.bf16.mxu0 0
        %937 = vmatmul.mubr.bf16.gmra.mrb[0].mxu0 %v842
        %v938 = vpop.f32.mrb[0].mxu0
        %v939 = vadd.f32 %v785, %v938
        %v940 = vpop.f32.mrb[0].mxu0
        %v941 = vpop.f32.mrb[0].mxu0
        %v942 = vadd.f32 %v785, %v941
        %v943 = vpop.f32.mrb[0].mxu0
        %944 = vmatprep.mubr.bf16.mxu0 0
        %945 = vmatmul.mubr.bf16.gmra.mrb[0].mxu0 %v845
        %v946 = vpop.f32.mrb[0].mxu0
        %v947 = vadd.f32 %v785, %v946
        %v948 = vpop.f32.mrb[0].mxu0
        %v949 = vpop.f32.mrb[0].mxu0
        %v950 = vadd.f32 %v785, %v949
        %v951 = vpop.f32.mrb[0].mxu0
        %952 = vmatprep.mubr.bf16.mxu0 0
        %953 = vmatmul.mubr.bf16.gmra.mrb[0].mxu0 %v848
        %v954 = vpop.f32.mrb[0].mxu0
        %v955 = vadd.f32 %v785, %v954
        %v956 = vpop.f32.mrb[0].mxu0
        %v957 = vpop.f32.mrb[0].mxu0
        %v958 = vadd.f32 %v785, %v957
        %v959 = vpop.f32.mrb[0].mxu0
        %960 = vmatprep.mubr.bf16.mxu0 0
        %961 = vmatmul.mubr.bf16.gmra.mrb[0].mxu0 %v851
        %v962 = vpop.f32.mrb[0].mxu0
        %v963 = vadd.f32 %v785, %v962
        %v964 = vpop.f32.mrb[0].mxu0
        %v965 = vpop.f32.mrb[0].mxu0
        %v966 = vadd.f32 %v785, %v965
        %v967 = vpop.f32.mrb[0].mxu0
        %968 = vmatprep.mubr.bf16.mxu0 0
        %969 = vmatmul.mubr.bf16.gmra.mrb[0].mxu0 %v854
        %v970 = vpop.f32.mrb[0].mxu0
        %v971 = vadd.f32 %v785, %v970
        %v972 = vpop.f32.mrb[0].mxu0
        %v973 = vpop.f32.mrb[0].mxu0
        %v974 = vadd.f32 %v785, %v973
        %v975 = vpop.f32.mrb[0].mxu0
        %976 = vmatprep.mubr.bf16.mxu0 0
        %977 = vmatmul.mubr.bf16.gmra.mrb[0].mxu0 %v857
        %v978 = vpop.f32.mrb[0].mxu0
        %v979 = vadd.f32 %v785, %v978
        %v980 = vpop.f32.mrb[0].mxu0
        %v981 = vpop.f32.mrb[0].mxu0
        %v982 = vadd.f32 %v785, %v981
        %v983 = vpop.f32.mrb[0].mxu0
        %984 = vmatprep.mubr.bf16.mxu0 0
        %985 = vmatmul.mubr.bf16.gmra.mrb[0].mxu0 %v860
        %v986 = vpop.f32.mrb[0].mxu0
        %v987 = vadd.f32 %v785, %v986
        %v988 = vpop.f32.mrb[0].mxu0
        %v989 = vpop.f32.mrb[0].mxu0
        %v990 = vadd.f32 %v785, %v989
        %v991 = vpop.f32.mrb[0].mxu0
        %992 = vmatprep.mubr.bf16.mxu0 0
        %993 = vmatmul.mubr.bf16.gmra.mrb[0].mxu0 %v863
        %v994 = vpop.f32.mrb[0].mxu0
        %v995 = vadd.f32 %v785, %v994
        %v996 = vpop.f32.mrb[0].mxu0
        %v997 = vpop.f32.mrb[0].mxu0
        %v998 = vadd.f32 %v785, %v997
        %v999 = vpop.f32.mrb[0].mxu0
        %1000 = vmatprep.mubr.bf16.mxu0 0
        %1001 = vmatmul.mubr.bf16.gmra.mrb[0].mxu0 %v866
        %v1002 = vpop.f32.mrb[0].mxu0
        %v1003 = vadd.f32 %v785, %v1002
        %v1004 = vpop.f32.mrb[0].mxu0
        %v1005 = vpop.f32.mrb[0].mxu0
        %v1006 = vadd.f32 %v785, %v1005
        %v1007 = vpop.f32.mrb[0].mxu0
        %1008 = vmatprep.mubr.bf16.mxu0 0
        %1009 = vmatmul.mubr.bf16.gmra.mrb[0].mxu0 %v869
        %v1010 = vpop.f32.mrb[0].mxu0
        %v1011 = vadd.f32 %v785, %v1010
        %v1012 = vpop.f32.mrb[0].mxu0
        %v1013 = vpop.f32.mrb[0].mxu0
        %v1014 = vadd.f32 %v785, %v1013
        %v1015 = vpop.f32.mrb[0].mxu0
        %1016 = vmatprep.mubr.bf16.mxu0 0
        %1017 = vmatmul.mubr.bf16.gmra.mrb[0].mxu0 %v872
        %v1018 = vpop.f32.mrb[0].mxu0
        %v1019 = vadd.f32 %v785, %v1018
        %v1020 = vpop.f32.mrb[0].mxu0
        %v1021 = vpop.f32.mrb[0].mxu0
        %v1022 = vadd.f32 %v785, %v1021
        %v1023 = vpop.f32.mrb[0].mxu0
        %1024 = vmatprep.mubr.bf16.mxu0 0
        %1025 = vmatmul.mubr.bf16.gmra.mrb[0].mxu0 %v875
        %v1026 = vpop.f32.mrb[0].mxu0
        %v1027 = vadd.f32 %v785, %v1026
        %v1028 = vpop.f32.mrb[0].mxu0
        %v1029 = vpop.f32.mrb[0].mxu0
        %v1030 = vadd.f32 %v785, %v1029
        %v1031 = vpop.f32.mrb[0].mxu0
        %1032 = vmatprep.mubr.bf16.mxu0 0
        %1033 = vmatmul.mubr.bf16.gmra.mrb[0].mxu0 %v878
        %v1034 = vpop.f32.mrb[0].mxu0
        %v1035 = vadd.f32 %v785, %v1034
        %v1036 = vpop.f32.mrb[0].mxu0
        %v1037 = vpop.f32.mrb[0].mxu0
        %v1038 = vadd.f32 %v785, %v1037
        %v1039 = vpop.f32.mrb[0].mxu0
        %1040 = vdwg.mxu0
        %v1041 = vmax.f32 %v915, 0.0
        %v1042 = vmax.f32 %v918, 0.0
        %v1043 = vmax.f32 %v923, 0.0
        %v1044 = vmax.f32 %v926, 0.0
        %v1045 = vmax.f32 %v931, 0.0
        %v1046 = vmax.f32 %v934, 0.0
        %v1047 = vmax.f32 %v939, 0.0
        %v1048 = vmax.f32 %v942, 0.0
        %v1049 = vmax.f32 %v947, 0.0
        %v1050 = vmax.f32 %v950, 0.0
        %v1051 = vmax.f32 %v955, 0.0
        %v1052 = vmax.f32 %v958, 0.0
        %v1053 = vmax.f32 %v963, 0.0
        %v1054 = vmax.f32 %v966, 0.0
        %v1055 = vmax.f32 %v971, 0.0
        %v1056 = vmax.f32 %v974, 0.0
        %v1057 = vmax.f32 %v979, 0.0
        %v1058 = vmax.f32 %v982, 0.0
        %v1059 = vmax.f32 %v987, 0.0
        %v1060 = vmax.f32 %v990, 0.0
        %v1061 = vmax.f32 %v995, 0.0
        %v1062 = vmax.f32 %v998, 0.0
        %v1063 = vmax.f32 %v1003, 0.0
        %v1064 = vmax.f32 %v1006, 0.0
        %v1065 = vmax.f32 %v1011, 0.0
        %v1066 = vmax.f32 %v1014, 0.0
        %v1067 = vmax.f32 %v1019, 0.0
        %v1068 = vmax.f32 %v1022, 0.0
        %v1069 = vmax.f32 %v1027, 0.0
        %v1070 = vmax.f32 %v1030, 0.0
        %v1071 = vmax.f32 %v1035, 0.0
        %v1072 = vmax.f32 %v1038, 0.0
        %v1073 = vpack.c.bf16 %v1042, %v1041
        %v1074 = vpack.c.bf16 %v1044, %v1043
        %v1075 = vpack.c.bf16 %v1046, %v1045
        %v1076 = vpack.c.bf16 %v1048, %v1047
        %v1077 = vpack.c.bf16 %v1050, %v1049
        %v1078 = vpack.c.bf16 %v1052, %v1051
        %v1079 = vpack.c.bf16 %v1054, %v1053
        %v1080 = vpack.c.bf16 %v1056, %v1055
        %v1081 = vpack.c.bf16 %v1058, %v1057
        %v1082 = vpack.c.bf16 %v1060, %v1059
        %v1083 = vpack.c.bf16 %v1062, %v1061
        %v1084 = vpack.c.bf16 %v1064, %v1063
        %v1085 = vpack.c.bf16 %v1066, %v1065
        %v1086 = vpack.c.bf16 %v1068, %v1067
        %v1087 = vpack.c.bf16 %v1070, %v1069
        %v1088 = vpack.c.bf16 %v1072, %v1071
        %v1089 = vld [vmem:[%s8] sm:$0xf]
        %v1090 = vld [vmem:[%s8 + $0x4] sm:$0xf]
        %v1091 = vld [vmem:[%s8 + $0x8] sm:$0xf]
        %v1092 = vld [vmem:[%s8 + $0xc] sm:$0xf]
        %v1093 = vld [vmem:[%s8 + $0x10] sm:$0xf]
        %v1094 = vld [vmem:[%s8 + $0x14] sm:$0xf]
        %v1095 = vld [vmem:[%s8 + $0x18] sm:$0xf]
        %v1096 = vld [vmem:[%s8 + $0x1c] sm:$0xf]
        %v1097 = vld [vmem:[%s9] sm:$0x1]
        %v1099 = vlaneseq
        %v1100 = vshrl.u32 %v1099, 7
        %v1101 = vsub.s32 0, %v1100
        %v1102 = vrot.slane %v1097, %v1101
        %v1112 = vunpack.c.l.b16 %v1089
        %v1113 = vunpack.c.l.b16 %v1090
        %v1114 = vunpack.c.l.b16 %v1091
        %v1115 = vunpack.c.l.b16 %v1092
        %v1116 = vunpack.c.l.b16 %v1093
        %v1117 = vunpack.c.l.b16 %v1094
        %v1118 = vunpack.c.l.b16 %v1095
        %v1119 = vunpack.c.l.b16 %v1096
        %v1120 = vpack.c.b16 %v1113, %v1112
        %v1121 = vpack.c.b16 %v1115, %v1114
        %v1122 = vpack.c.b16 %v1117, %v1116
        %v1123 = vpack.c.b16 %v1119, %v1118
        %vm1128 = vcmask 523264
        %v1130 = vsel %vm1128, %v1073, 0
        %v1133 = vsel %vm1128, %v1074, 0
        %v1136 = vsel %vm1128, %v1075, 0
        %v1139 = vsel %vm1128, %v1076, 0
        %v1142 = vsel %vm1128, %v1077, 0
        %v1145 = vsel %vm1128, %v1078, 0
        %v1148 = vsel %vm1128, %v1079, 0
        %v1151 = vsel %vm1128, %v1080, 0
        %v1154 = vsel %vm1128, %v1081, 0
        %v1157 = vsel %vm1128, %v1082, 0
        %v1160 = vsel %vm1128, %v1083, 0
        %v1163 = vsel %vm1128, %v1084, 0
        %v1166 = vsel %vm1128, %v1085, 0
        %v1169 = vsel %vm1128, %v1086, 0
        %v1172 = vsel %vm1128, %v1087, 0
        %v1175 = vsel %vm1128, %v1088, 0
        %1177 = vmatprep.subr.bf16.mxu0 0
        %1178 = vmatpush1.bf16.msra.mxu0 %v1120
        %1179 = vmatprep.subr.bf16.mxu0 0
        %1180 = vmatpush1.bf16.msra.mxu0 %v1121
        %1181 = vmatprep.subr.bf16.mxu0 0
        %1182 = vmatpush1.bf16.msra.mxu0 %v1122
        %1183 = vmatprep.subr.bf16.mxu0 0
        %1184 = vmatpush1.bf16.msra.mxu0 %v1123
        %1185 = vmatprep.subr.bf16.mxu0 0
        %1186 = vmatpush1.bf16.msra.mxu0 0
        %1187 = vmatprep.subr.bf16.mxu0 0
        %1188 = vmatpush1.bf16.msra.mxu0 0
        %1189 = vmatprep.subr.bf16.mxu0 0
        %1190 = vmatpush1.bf16.msra.mxu0 0
        %1191 = vmatprep.subr.bf16.mxu0 0
        %1192 = vmatpush1.bf16.msra.mxu0 0
        %1193 = vmatprep.subr.bf16.mxu0 0
        %1194 = vmatpush1.bf16.msra.mxu0 0
        %1195 = vmatprep.subr.bf16.mxu0 0
        %1196 = vmatpush1.bf16.msra.mxu0 0
        %1197 = vmatprep.subr.bf16.mxu0 0
        %1198 = vmatpush1.bf16.msra.mxu0 0
        %1199 = vmatprep.subr.bf16.mxu0 0
        %1200 = vmatpush1.bf16.msra.mxu0 0
        %1201 = vmatprep.subr.bf16.mxu0 0
        %1202 = vmatpush1.bf16.msra.mxu0 0
        %1203 = vmatprep.subr.bf16.mxu0 0
        %1204 = vmatpush1.bf16.msra.mxu0 0
        %1205 = vmatprep.subr.bf16.mxu0 0
        %1206 = vmatpush1.bf16.msra.mxu0 0
        %1207 = vmatprep.subr.bf16.mxu0 0
        %1208 = vmatpush1.bf16.msra.mxu0 0
        %1209 = vmatprep.mubr.bf16.mxu0 0
        %1210 = vmatmul.mubr.bf16.gmra.mrb[0].mxu0 %v1130
        %v1211 = vpop.f32.mrb[0].mxu0
        %v1212 = vadd.f32 %v1102, %v1211
        %v1213 = vpop.f32.mrb[0].mxu0
        %v1214 = vpop.f32.mrb[0].mxu0
        %v1215 = vadd.f32 %v1102, %v1214
        %v1216 = vpop.f32.mrb[0].mxu0
        %1217 = vmatprep.mubr.bf16.mxu0 0
        %1218 = vmatmul.mubr.bf16.gmra.mrb[0].mxu0 %v1133
        %v1219 = vpop.f32.mrb[0].mxu0
        %v1220 = vadd.f32 %v1102, %v1219
        %v1221 = vpop.f32.mrb[0].mxu0
        %v1222 = vpop.f32.mrb[0].mxu0
        %v1223 = vadd.f32 %v1102, %v1222
        %v1224 = vpop.f32.mrb[0].mxu0
        %1225 = vmatprep.mubr.bf16.mxu0 0
        %1226 = vmatmul.mubr.bf16.gmra.mrb[0].mxu0 %v1136
        %v1227 = vpop.f32.mrb[0].mxu0
        %v1228 = vadd.f32 %v1102, %v1227
        %v1229 = vpop.f32.mrb[0].mxu0
        %v1230 = vpop.f32.mrb[0].mxu0
        %v1231 = vadd.f32 %v1102, %v1230
        %v1232 = vpop.f32.mrb[0].mxu0
        %1233 = vmatprep.mubr.bf16.mxu0 0
        %1234 = vmatmul.mubr.bf16.gmra.mrb[0].mxu0 %v1139
        %v1235 = vpop.f32.mrb[0].mxu0
        %v1236 = vadd.f32 %v1102, %v1235
        %v1237 = vpop.f32.mrb[0].mxu0
        %v1238 = vpop.f32.mrb[0].mxu0
        %v1239 = vadd.f32 %v1102, %v1238
        %v1240 = vpop.f32.mrb[0].mxu0
        %1241 = vmatprep.mubr.bf16.mxu0 0
        %1242 = vmatmul.mubr.bf16.gmra.mrb[0].mxu0 %v1142
        %v1243 = vpop.f32.mrb[0].mxu0
        %v1244 = vadd.f32 %v1102, %v1243
        %v1245 = vpop.f32.mrb[0].mxu0
        %v1246 = vpop.f32.mrb[0].mxu0
        %v1247 = vadd.f32 %v1102, %v1246
        %v1248 = vpop.f32.mrb[0].mxu0
        %1249 = vmatprep.mubr.bf16.mxu0 0
        %1250 = vmatmul.mubr.bf16.gmra.mrb[0].mxu0 %v1145
        %v1251 = vpop.f32.mrb[0].mxu0
        %v1252 = vadd.f32 %v1102, %v1251
        %v1253 = vpop.f32.mrb[0].mxu0
        %v1254 = vpop.f32.mrb[0].mxu0
        %v1255 = vadd.f32 %v1102, %v1254
        %v1256 = vpop.f32.mrb[0].mxu0
        %1257 = vmatprep.mubr.bf16.mxu0 0
        %1258 = vmatmul.mubr.bf16.gmra.mrb[0].mxu0 %v1148
        %v1259 = vpop.f32.mrb[0].mxu0
        %v1260 = vadd.f32 %v1102, %v1259
        %v1261 = vpop.f32.mrb[0].mxu0
        %v1262 = vpop.f32.mrb[0].mxu0
        %v1263 = vadd.f32 %v1102, %v1262
        %v1264 = vpop.f32.mrb[0].mxu0
        %1265 = vmatprep.mubr.bf16.mxu0 0
        %1266 = vmatmul.mubr.bf16.gmra.mrb[0].mxu0 %v1151
        %v1267 = vpop.f32.mrb[0].mxu0
        %v1268 = vadd.f32 %v1102, %v1267
        %v1269 = vpop.f32.mrb[0].mxu0
        %v1270 = vpop.f32.mrb[0].mxu0
        %v1271 = vadd.f32 %v1102, %v1270
        %v1272 = vpop.f32.mrb[0].mxu0
        %1273 = vmatprep.mubr.bf16.mxu0 0
        %1274 = vmatmul.mubr.bf16.gmra.mrb[0].mxu0 %v1154
        %v1275 = vpop.f32.mrb[0].mxu0
        %v1276 = vadd.f32 %v1102, %v1275
        %v1277 = vpop.f32.mrb[0].mxu0
        %v1278 = vpop.f32.mrb[0].mxu0
        %v1279 = vadd.f32 %v1102, %v1278
        %v1280 = vpop.f32.mrb[0].mxu0
        %1281 = vmatprep.mubr.bf16.mxu0 0
        %1282 = vmatmul.mubr.bf16.gmra.mrb[0].mxu0 %v1157
        %v1283 = vpop.f32.mrb[0].mxu0
        %v1284 = vadd.f32 %v1102, %v1283
        %v1285 = vpop.f32.mrb[0].mxu0
        %v1286 = vpop.f32.mrb[0].mxu0
        %v1287 = vadd.f32 %v1102, %v1286
        %v1288 = vpop.f32.mrb[0].mxu0
        %1289 = vmatprep.mubr.bf16.mxu0 0
        %1290 = vmatmul.mubr.bf16.gmra.mrb[0].mxu0 %v1160
        %v1291 = vpop.f32.mrb[0].mxu0
        %v1292 = vadd.f32 %v1102, %v1291
        %v1293 = vpop.f32.mrb[0].mxu0
        %v1294 = vpop.f32.mrb[0].mxu0
        %v1295 = vadd.f32 %v1102, %v1294
        %v1296 = vpop.f32.mrb[0].mxu0
        %1297 = vmatprep.mubr.bf16.mxu0 0
        %1298 = vmatmul.mubr.bf16.gmra.mrb[0].mxu0 %v1163
        %v1299 = vpop.f32.mrb[0].mxu0
        %v1300 = vadd.f32 %v1102, %v1299
        %v1301 = vpop.f32.mrb[0].mxu0
        %v1302 = vpop.f32.mrb[0].mxu0
        %v1303 = vadd.f32 %v1102, %v1302
        %v1304 = vpop.f32.mrb[0].mxu0
        %1305 = vmatprep.mubr.bf16.mxu0 0
        %1306 = vmatmul.mubr.bf16.gmra.mrb[0].mxu0 %v1166
        %v1307 = vpop.f32.mrb[0].mxu0
        %v1308 = vadd.f32 %v1102, %v1307
        %v1309 = vpop.f32.mrb[0].mxu0
        %v1310 = vpop.f32.mrb[0].mxu0
        %v1311 = vadd.f32 %v1102, %v1310
        %v1312 = vpop.f32.mrb[0].mxu0
        %1313 = vmatprep.mubr.bf16.mxu0 0
        %1314 = vmatmul.mubr.bf16.gmra.mrb[0].mxu0 %v1169
        %v1315 = vpop.f32.mrb[0].mxu0
        %v1316 = vadd.f32 %v1102, %v1315
        %v1317 = vpop.f32.mrb[0].mxu0
        %v1318 = vpop.f32.mrb[0].mxu0
        %v1319 = vadd.f32 %v1102, %v1318
        %v1320 = vpop.f32.mrb[0].mxu0
        %1321 = vmatprep.mubr.bf16.mxu0 0
        %1322 = vmatmul.mubr.bf16.gmra.mrb[0].mxu0 %v1172
        %v1323 = vpop.f32.mrb[0].mxu0
        %v1324 = vadd.f32 %v1102, %v1323
        %v1325 = vpop.f32.mrb[0].mxu0
        %v1326 = vpop.f32.mrb[0].mxu0
        %v1327 = vadd.f32 %v1102, %v1326
        %v1328 = vpop.f32.mrb[0].mxu0
        %1329 = vmatprep.mubr.bf16.mxu0 0
        %1330 = vmatmul.mubr.bf16.gmra.mrb[0].mxu0 %v1175
        %v1331 = vpop.f32.mrb[0].mxu0
        %v1332 = vadd.f32 %v1102, %v1331
        %v1333 = vpop.f32.mrb[0].mxu0
        %v1334 = vpop.f32.mrb[0].mxu0
        %v1335 = vadd.f32 %v1102, %v1334
        %v1336 = vpop.f32.mrb[0].mxu0
        %1337 = vdwg.mxu0
        %v1338 = vmax.f32 %v1212, 0.0
        %v1339 = vmax.f32 %v1215, 0.0
        %v1340 = vmax.f32 %v1220, 0.0
        %v1341 = vmax.f32 %v1223, 0.0
        %v1342 = vmax.f32 %v1228, 0.0
        %v1343 = vmax.f32 %v1231, 0.0
        %v1344 = vmax.f32 %v1236, 0.0
        %v1345 = vmax.f32 %v1239, 0.0
        %v1346 = vmax.f32 %v1244, 0.0
        %v1347 = vmax.f32 %v1247, 0.0
        %v1348 = vmax.f32 %v1252, 0.0
        %v1349 = vmax.f32 %v1255, 0.0
        %v1350 = vmax.f32 %v1260, 0.0
        %v1351 = vmax.f32 %v1263, 0.0
        %v1352 = vmax.f32 %v1268, 0.0
        %v1353 = vmax.f32 %v1271, 0.0
        %v1354 = vmax.f32 %v1276, 0.0
        %v1355 = vmax.f32 %v1279, 0.0
        %v1356 = vmax.f32 %v1284, 0.0
        %v1357 = vmax.f32 %v1287, 0.0
        %v1358 = vmax.f32 %v1292, 0.0
        %v1359 = vmax.f32 %v1295, 0.0
        %v1360 = vmax.f32 %v1300, 0.0
        %v1361 = vmax.f32 %v1303, 0.0
        %v1362 = vmax.f32 %v1308, 0.0
        %v1363 = vmax.f32 %v1311, 0.0
        %v1364 = vmax.f32 %v1316, 0.0
        %v1365 = vmax.f32 %v1319, 0.0
        %v1366 = vmax.f32 %v1324, 0.0
        %v1367 = vmax.f32 %v1327, 0.0
        %v1368 = vmax.f32 %v1332, 0.0
        %v1369 = vmax.f32 %v1335, 0.0
        %v1370 = vpack.c.bf16 %v1339, %v1338
        %v1371 = vpack.c.bf16 %v1341, %v1340
        %v1372 = vpack.c.bf16 %v1343, %v1342
        %v1373 = vpack.c.bf16 %v1345, %v1344
        %v1374 = vpack.c.bf16 %v1347, %v1346
        %v1375 = vpack.c.bf16 %v1349, %v1348
        %v1376 = vpack.c.bf16 %v1351, %v1350
        %v1377 = vpack.c.bf16 %v1353, %v1352
        %v1378 = vpack.c.bf16 %v1355, %v1354
        %v1379 = vpack.c.bf16 %v1357, %v1356
        %v1380 = vpack.c.bf16 %v1359, %v1358
        %v1381 = vpack.c.bf16 %v1361, %v1360
        %v1382 = vpack.c.bf16 %v1363, %v1362
        %v1383 = vpack.c.bf16 %v1365, %v1364
        %v1384 = vpack.c.bf16 %v1367, %v1366
        %v1385 = vpack.c.bf16 %v1369, %v1368
        %v1386 = vld [vmem:[%s10] sm:$0xf]
        %v1387 = vld [vmem:[%s10 + $0x4] sm:$0xf]
        %v1388 = vld [vmem:[%s10 + $0x8] sm:$0xf]
        %v1389 = vld [vmem:[%s10 + $0xc] sm:$0xf]
        %v1390 = vld [vmem:[%s10 + $0x10] sm:$0xf]
        %v1391 = vld [vmem:[%s10 + $0x14] sm:$0xf]
        %v1392 = vld [vmem:[%s10 + $0x18] sm:$0xf]
        %v1393 = vld [vmem:[%s10 + $0x1c] sm:$0xf]
        %v1394 = vld [vmem:[%s11] sm:$0x1]
        %v1396 = vlaneseq
        %v1397 = vshrl.u32 %v1396, 7
        %v1398 = vsub.s32 0, %v1397
        %v1399 = vrot.slane %v1394, %v1398
        %v1409 = vunpack.c.l.b16 %v1386
        %v1410 = vunpack.c.l.b16 %v1387
        %v1411 = vunpack.c.l.b16 %v1388
        %v1412 = vunpack.c.l.b16 %v1389
        %v1413 = vunpack.c.l.b16 %v1390
        %v1414 = vunpack.c.l.b16 %v1391
        %v1415 = vunpack.c.l.b16 %v1392
        %v1416 = vunpack.c.l.b16 %v1393
        %v1417 = vpack.c.b16 %v1410, %v1409
        %v1418 = vpack.c.b16 %v1412, %v1411
        %v1419 = vpack.c.b16 %v1414, %v1413
        %v1420 = vpack.c.b16 %v1416, %v1415
        %v1426 = vsel %vm1128, %v1370, 0
        %v1429 = vsel %vm1128, %v1371, 0
        %v1432 = vsel %vm1128, %v1372, 0
        %v1435 = vsel %vm1128, %v1373, 0
        %v1438 = vsel %vm1128, %v1374, 0
        %v1441 = vsel %vm1128, %v1375, 0
        %v1444 = vsel %vm1128, %v1376, 0
        %v1447 = vsel %vm1128, %v1377, 0
        %v1450 = vsel %vm1128, %v1378, 0
        %v1453 = vsel %vm1128, %v1379, 0
        %v1456 = vsel %vm1128, %v1380, 0
        %v1459 = vsel %vm1128, %v1381, 0
        %v1462 = vsel %vm1128, %v1382, 0
        %v1465 = vsel %vm1128, %v1383, 0
        %v1468 = vsel %vm1128, %v1384, 0
        %v1471 = vsel %vm1128, %v1385, 0
        %1473 = vmatprep.subr.bf16.mxu0 0
        %1474 = vmatpush1.bf16.msra.mxu0 %v1417
        %1475 = vmatprep.subr.bf16.mxu0 0
        %1476 = vmatpush1.bf16.msra.mxu0 %v1418
        %1477 = vmatprep.subr.bf16.mxu0 0
        %1478 = vmatpush1.bf16.msra.mxu0 %v1419
        %1479 = vmatprep.subr.bf16.mxu0 0
        %1480 = vmatpush1.bf16.msra.mxu0 %v1420
        %1481 = vmatprep.subr.bf16.mxu0 0
        %1482 = vmatpush1.bf16.msra.mxu0 0
        %1483 = vmatprep.subr.bf16.mxu0 0
        %1484 = vmatpush1.bf16.msra.mxu0 0
        %1485 = vmatprep.subr.bf16.mxu0 0
        %1486 = vmatpush1.bf16.msra.mxu0 0
        %1487 = vmatprep.subr.bf16.mxu0 0
        %1488 = vmatpush1.bf16.msra.mxu0 0
        %1489 = vmatprep.subr.bf16.mxu0 0
        %1490 = vmatpush1.bf16.msra.mxu0 0
        %1491 = vmatprep.subr.bf16.mxu0 0
        %1492 = vmatpush1.bf16.msra.mxu0 0
        %1493 = vmatprep.subr.bf16.mxu0 0
        %1494 = vmatpush1.bf16.msra.mxu0 0
        %1495 = vmatprep.subr.bf16.mxu0 0
        %1496 = vmatpush1.bf16.msra.mxu0 0
        %1497 = vmatprep.subr.bf16.mxu0 0
        %1498 = vmatpush1.bf16.msra.mxu0 0
        %1499 = vmatprep.subr.bf16.mxu0 0
        %1500 = vmatpush1.bf16.msra.mxu0 0
        %1501 = vmatprep.subr.bf16.mxu0 0
        %1502 = vmatpush1.bf16.msra.mxu0 0
        %1503 = vmatprep.subr.bf16.mxu0 0
        %1504 = vmatpush1.bf16.msra.mxu0 0
        %1505 = vmatprep.mubr.bf16.mxu0 0
        %1506 = vmatmul.mubr.bf16.gmra.mrb[0].mxu0 %v1426
        %v1507 = vpop.f32.mrb[0].mxu0
        %v1508 = vadd.f32 %v1399, %v1507
        %v1509 = vpop.f32.mrb[0].mxu0
        %v1510 = vpop.f32.mrb[0].mxu0
        %v1511 = vadd.f32 %v1399, %v1510
        %v1512 = vpop.f32.mrb[0].mxu0
        %1513 = vmatprep.mubr.bf16.mxu0 0
        %1514 = vmatmul.mubr.bf16.gmra.mrb[0].mxu0 %v1429
        %v1515 = vpop.f32.mrb[0].mxu0
        %v1516 = vadd.f32 %v1399, %v1515
        %v1517 = vpop.f32.mrb[0].mxu0
        %v1518 = vpop.f32.mrb[0].mxu0
        %v1519 = vadd.f32 %v1399, %v1518
        %v1520 = vpop.f32.mrb[0].mxu0
        %1521 = vmatprep.mubr.bf16.mxu0 0
        %1522 = vmatmul.mubr.bf16.gmra.mrb[0].mxu0 %v1432
        %v1523 = vpop.f32.mrb[0].mxu0
        %v1524 = vadd.f32 %v1399, %v1523
        %v1525 = vpop.f32.mrb[0].mxu0
        %v1526 = vpop.f32.mrb[0].mxu0
        %v1527 = vadd.f32 %v1399, %v1526
        %v1528 = vpop.f32.mrb[0].mxu0
        %1529 = vmatprep.mubr.bf16.mxu0 0
        %1530 = vmatmul.mubr.bf16.gmra.mrb[0].mxu0 %v1435
        %v1531 = vpop.f32.mrb[0].mxu0
        %v1532 = vadd.f32 %v1399, %v1531
        %v1533 = vpop.f32.mrb[0].mxu0
        %v1534 = vpop.f32.mrb[0].mxu0
        %v1535 = vadd.f32 %v1399, %v1534
        %v1536 = vpop.f32.mrb[0].mxu0
        %1537 = vmatprep.mubr.bf16.mxu0 0
        %1538 = vmatmul.mubr.bf16.gmra.mrb[0].mxu0 %v1438
        %v1539 = vpop.f32.mrb[0].mxu0
        %v1540 = vadd.f32 %v1399, %v1539
        %v1541 = vpop.f32.mrb[0].mxu0
        %v1542 = vpop.f32.mrb[0].mxu0
        %v1543 = vadd.f32 %v1399, %v1542
        %v1544 = vpop.f32.mrb[0].mxu0
        %1545 = vmatprep.mubr.bf16.mxu0 0
        %1546 = vmatmul.mubr.bf16.gmra.mrb[0].mxu0 %v1441
        %v1547 = vpop.f32.mrb[0].mxu0
        %v1548 = vadd.f32 %v1399, %v1547
        %v1549 = vpop.f32.mrb[0].mxu0
        %v1550 = vpop.f32.mrb[0].mxu0
        %v1551 = vadd.f32 %v1399, %v1550
        %v1552 = vpop.f32.mrb[0].mxu0
        %1553 = vmatprep.mubr.bf16.mxu0 0
        %1554 = vmatmul.mubr.bf16.gmra.mrb[0].mxu0 %v1444
        %v1555 = vpop.f32.mrb[0].mxu0
        %v1556 = vadd.f32 %v1399, %v1555
        %v1557 = vpop.f32.mrb[0].mxu0
        %v1558 = vpop.f32.mrb[0].mxu0
        %v1559 = vadd.f32 %v1399, %v1558
        %v1560 = vpop.f32.mrb[0].mxu0
        %1561 = vmatprep.mubr.bf16.mxu0 0
        %1562 = vmatmul.mubr.bf16.gmra.mrb[0].mxu0 %v1447
        %v1563 = vpop.f32.mrb[0].mxu0
        %v1564 = vadd.f32 %v1399, %v1563
        %v1565 = vpop.f32.mrb[0].mxu0
        %v1566 = vpop.f32.mrb[0].mxu0
        %v1567 = vadd.f32 %v1399, %v1566
        %v1568 = vpop.f32.mrb[0].mxu0
        %1569 = vmatprep.mubr.bf16.mxu0 0
        %1570 = vmatmul.mubr.bf16.gmra.mrb[0].mxu0 %v1450
        %v1571 = vpop.f32.mrb[0].mxu0
        %v1572 = vadd.f32 %v1399, %v1571
        %v1573 = vpop.f32.mrb[0].mxu0
        %v1574 = vpop.f32.mrb[0].mxu0
        %v1575 = vadd.f32 %v1399, %v1574
        %v1576 = vpop.f32.mrb[0].mxu0
        %1577 = vmatprep.mubr.bf16.mxu0 0
        %1578 = vmatmul.mubr.bf16.gmra.mrb[0].mxu0 %v1453
        %v1579 = vpop.f32.mrb[0].mxu0
        %v1580 = vadd.f32 %v1399, %v1579
        %v1581 = vpop.f32.mrb[0].mxu0
        %v1582 = vpop.f32.mrb[0].mxu0
        %v1583 = vadd.f32 %v1399, %v1582
        %v1584 = vpop.f32.mrb[0].mxu0
        %1585 = vmatprep.mubr.bf16.mxu0 0
        %1586 = vmatmul.mubr.bf16.gmra.mrb[0].mxu0 %v1456
        %v1587 = vpop.f32.mrb[0].mxu0
        %v1588 = vadd.f32 %v1399, %v1587
        %v1589 = vpop.f32.mrb[0].mxu0
        %v1590 = vpop.f32.mrb[0].mxu0
        %v1591 = vadd.f32 %v1399, %v1590
        %v1592 = vpop.f32.mrb[0].mxu0
        %1593 = vmatprep.mubr.bf16.mxu0 0
        %1594 = vmatmul.mubr.bf16.gmra.mrb[0].mxu0 %v1459
        %v1595 = vpop.f32.mrb[0].mxu0
        %v1596 = vadd.f32 %v1399, %v1595
        %v1597 = vpop.f32.mrb[0].mxu0
        %v1598 = vpop.f32.mrb[0].mxu0
        %v1599 = vadd.f32 %v1399, %v1598
        %v1600 = vpop.f32.mrb[0].mxu0
        %1601 = vmatprep.mubr.bf16.mxu0 0
        %1602 = vmatmul.mubr.bf16.gmra.mrb[0].mxu0 %v1462
        %v1603 = vpop.f32.mrb[0].mxu0
        %v1604 = vadd.f32 %v1399, %v1603
        %v1605 = vpop.f32.mrb[0].mxu0
        %v1606 = vpop.f32.mrb[0].mxu0
        %v1607 = vadd.f32 %v1399, %v1606
        %v1608 = vpop.f32.mrb[0].mxu0
        %1609 = vmatprep.mubr.bf16.mxu0 0
        %1610 = vmatmul.mubr.bf16.gmra.mrb[0].mxu0 %v1465
        %v1611 = vpop.f32.mrb[0].mxu0
        %v1612 = vadd.f32 %v1399, %v1611
        %v1613 = vpop.f32.mrb[0].mxu0
        %v1614 = vpop.f32.mrb[0].mxu0
        %v1615 = vadd.f32 %v1399, %v1614
        %v1616 = vpop.f32.mrb[0].mxu0
        %1617 = vmatprep.mubr.bf16.mxu0 0
        %1618 = vmatmul.mubr.bf16.gmra.mrb[0].mxu0 %v1468
        %v1619 = vpop.f32.mrb[0].mxu0
        %v1620 = vadd.f32 %v1399, %v1619
        %v1621 = vpop.f32.mrb[0].mxu0
        %v1622 = vpop.f32.mrb[0].mxu0
        %v1623 = vadd.f32 %v1399, %v1622
        %v1624 = vpop.f32.mrb[0].mxu0
        %1625 = vmatprep.mubr.bf16.mxu0 0
        %1626 = vmatmul.mubr.bf16.gmra.mrb[0].mxu0 %v1471
        %v1627 = vpop.f32.mrb[0].mxu0
        %v1628 = vadd.f32 %v1399, %v1627
        %v1629 = vpop.f32.mrb[0].mxu0
        %v1630 = vpop.f32.mrb[0].mxu0
        %v1631 = vadd.f32 %v1399, %v1630
        %v1632 = vpop.f32.mrb[0].mxu0
        %1633 = vdwg.mxu0
        %v1634 = vld [vmem:[%s744] sm:$0xff]
        %v1635 = vld [vmem:[%s744 + $0x8] sm:$0xff]
        %v1636 = vld [vmem:[%s744 + $0x10] sm:$0xff]
        %v1637 = vld [vmem:[%s744 + $0x18] sm:$0xff]
        %v1638 = vld [vmem:[%s744 + $0x20] sm:$0xff]
        %v1639 = vld [vmem:[%s744 + $0x28] sm:$0xff]
        %v1640 = vld [vmem:[%s744 + $0x30] sm:$0xff]
        %v1641 = vld [vmem:[%s744 + $0x38] sm:$0xff]
        %v1642 = vld [vmem:[%s744 + $0x40] sm:$0xff]
        %v1643 = vld [vmem:[%s744 + $0x48] sm:$0xff]
        %v1644 = vld [vmem:[%s744 + $0x50] sm:$0xff]
        %v1645 = vld [vmem:[%s744 + $0x58] sm:$0xff]
        %v1646 = vld [vmem:[%s744 + $0x60] sm:$0xff]
        %v1647 = vld [vmem:[%s744 + $0x68] sm:$0xff]
        %v1648 = vld [vmem:[%s744 + $0x70] sm:$0xff]
        %v1649 = vld [vmem:[%s744 + $0x78] sm:$0xff]
        %v1650 = vld [vmem:[%s744 + $0x80] sm:$0xff]
        %v1651 = vld [vmem:[%s744 + $0x88] sm:$0xff]
        %v1652 = vld [vmem:[%s744 + $0x90] sm:$0xff]
        %v1653 = vld [vmem:[%s744 + $0x98] sm:$0xff]
        %v1654 = vld [vmem:[%s744 + $0xa0] sm:$0xff]
        %v1655 = vld [vmem:[%s744 + $0xa8] sm:$0xff]
        %v1656 = vld [vmem:[%s744 + $0xb0] sm:$0xff]
        %v1657 = vld [vmem:[%s744 + $0xb8] sm:$0xff]
        %v1658 = vld [vmem:[%s744 + $0xc0] sm:$0xff]
        %v1659 = vld [vmem:[%s744 + $0xc8] sm:$0xff]
        %v1660 = vld [vmem:[%s744 + $0xd0] sm:$0xff]
        %v1661 = vld [vmem:[%s744 + $0xd8] sm:$0xff]
        %v1662 = vld [vmem:[%s744 + $0xe0] sm:$0xff]
        %v1663 = vld [vmem:[%s744 + $0xe8] sm:$0xff]
        %v1664 = vld [vmem:[%s744 + $0xf0] sm:$0xff]
        %v1665 = vld [vmem:[%s744 + $0xf8] sm:$0xff]
        %v1666 = vadd.f32 %v1508, %v1634
        %v1667 = vadd.f32 %v1511, %v1635
        %v1668 = vadd.f32 %v1516, %v1636
        %v1669 = vadd.f32 %v1519, %v1637
        %v1670 = vadd.f32 %v1524, %v1638
        %v1671 = vadd.f32 %v1527, %v1639
        %v1672 = vadd.f32 %v1532, %v1640
        %v1673 = vadd.f32 %v1535, %v1641
        %v1674 = vadd.f32 %v1540, %v1642
        %v1675 = vadd.f32 %v1543, %v1643
        %v1676 = vadd.f32 %v1548, %v1644
        %v1677 = vadd.f32 %v1551, %v1645
        %v1678 = vadd.f32 %v1556, %v1646
        %v1679 = vadd.f32 %v1559, %v1647
        %v1680 = vadd.f32 %v1564, %v1648
        %v1681 = vadd.f32 %v1567, %v1649
        %v1682 = vadd.f32 %v1572, %v1650
        %v1683 = vadd.f32 %v1575, %v1651
        %v1684 = vadd.f32 %v1580, %v1652
        %v1685 = vadd.f32 %v1583, %v1653
        %v1686 = vadd.f32 %v1588, %v1654
        %v1687 = vadd.f32 %v1591, %v1655
        %v1688 = vadd.f32 %v1596, %v1656
        %v1689 = vadd.f32 %v1599, %v1657
        %v1690 = vadd.f32 %v1604, %v1658
        %v1691 = vadd.f32 %v1607, %v1659
        %v1692 = vadd.f32 %v1612, %v1660
        %v1693 = vadd.f32 %v1615, %v1661
        %v1694 = vadd.f32 %v1620, %v1662
        %v1695 = vadd.f32 %v1623, %v1663
        %v1696 = vadd.f32 %v1628, %v1664
        %v1697 = vadd.f32 %v1631, %v1665
        %v1698 = vpack.c.bf16 %v1667, %v1666
        %v1699 = vpack.c.bf16 %v1669, %v1668
        %v1700 = vpack.c.bf16 %v1671, %v1670
        %v1701 = vpack.c.bf16 %v1673, %v1672
        %v1702 = vpack.c.bf16 %v1675, %v1674
        %v1703 = vpack.c.bf16 %v1677, %v1676
        %v1704 = vpack.c.bf16 %v1679, %v1678
        %v1705 = vpack.c.bf16 %v1681, %v1680
        %v1706 = vpack.c.bf16 %v1683, %v1682
        %v1707 = vpack.c.bf16 %v1685, %v1684
        %v1708 = vpack.c.bf16 %v1687, %v1686
        %v1709 = vpack.c.bf16 %v1689, %v1688
        %v1710 = vpack.c.bf16 %v1691, %v1690
        %v1711 = vpack.c.bf16 %v1693, %v1692
        %v1712 = vpack.c.bf16 %v1695, %v1694
        %v1713 = vpack.c.bf16 %v1697, %v1696
        %v1714 = vld [vmem:[%s12] sm:$0xf]
        %v1715 = vld [vmem:[%s12 + $0x4] sm:$0xf]
        %v1716 = vld [vmem:[%s12 + $0x8] sm:$0xf]
        %v1717 = vld [vmem:[%s12 + $0xc] sm:$0xf]
        %v1718 = vld [vmem:[%s12 + $0x10] sm:$0xf]
        %v1719 = vld [vmem:[%s12 + $0x14] sm:$0xf]
        %v1720 = vld [vmem:[%s12 + $0x18] sm:$0xf]
        %v1721 = vld [vmem:[%s12 + $0x1c] sm:$0xf]
        %v1722 = vld [vmem:[%s13] sm:$0x1]
        %v1724 = vlaneseq
        %v1725 = vshrl.u32 %v1724, 7
        %v1726 = vsub.s32 0, %v1725
        %v1727 = vrot.slane %v1722, %v1726
        %v1737 = vunpack.c.l.b16 %v1714
        %v1738 = vunpack.c.l.b16 %v1715
        %v1739 = vunpack.c.l.b16 %v1716
        %v1740 = vunpack.c.l.b16 %v1717
        %v1741 = vunpack.c.l.b16 %v1718
        %v1742 = vunpack.c.l.b16 %v1719
        %v1743 = vunpack.c.l.b16 %v1720
        %v1744 = vunpack.c.l.b16 %v1721
        %v1745 = vpack.c.b16 %v1738, %v1737
        %v1746 = vpack.c.b16 %v1740, %v1739
        %v1747 = vpack.c.b16 %v1742, %v1741
        %v1748 = vpack.c.b16 %v1744, %v1743
        %v1754 = vsel %vm1128, %v1698, 0
        %v1757 = vsel %vm1128, %v1699, 0
        %v1760 = vsel %vm1128, %v1700, 0
        %v1763 = vsel %vm1128, %v1701, 0
        %v1766 = vsel %vm1128, %v1702, 0
        %v1769 = vsel %vm1128, %v1703, 0
        %v1772 = vsel %vm1128, %v1704, 0
        %v1775 = vsel %vm1128, %v1705, 0
        %v1778 = vsel %vm1128, %v1706, 0
        %v1781 = vsel %vm1128, %v1707, 0
        %v1784 = vsel %vm1128, %v1708, 0
        %v1787 = vsel %vm1128, %v1709, 0
        %v1790 = vsel %vm1128, %v1710, 0
        %v1793 = vsel %vm1128, %v1711, 0
        %v1796 = vsel %vm1128, %v1712, 0
        %v1799 = vsel %vm1128, %v1713, 0
        %1801 = vmatprep.subr.bf16.mxu0 0
        %1802 = vmatpush1.bf16.msra.mxu0 %v1745
        %1803 = vmatprep.subr.bf16.mxu0 0
        %1804 = vmatpush1.bf16.msra.mxu0 %v1746
        %1805 = vmatprep.subr.bf16.mxu0 0
        %1806 = vmatpush1.bf16.msra.mxu0 %v1747
        %1807 = vmatprep.subr.bf16.mxu0 0
        %1808 = vmatpush1.bf16.msra.mxu0 %v1748
        %1809 = vmatprep.subr.bf16.mxu0 0
        %1810 = vmatpush1.bf16.msra.mxu0 0
        %1811 = vmatprep.subr.bf16.mxu0 0
        %1812 = vmatpush1.bf16.msra.mxu0 0
        %1813 = vmatprep.subr.bf16.mxu0 0
        %1814 = vmatpush1.bf16.msra.mxu0 0
        %1815 = vmatprep.subr.bf16.mxu0 0
        %1816 = vmatpush1.bf16.msra.mxu0 0
        %1817 = vmatprep.subr.bf16.mxu0 0
        %1818 = vmatpush1.bf16.msra.mxu0 0
        %1819 = vmatprep.subr.bf16.mxu0 0
        %1820 = vmatpush1.bf16.msra.mxu0 0
        %1821 = vmatprep.subr.bf16.mxu0 0
        %1822 = vmatpush1.bf16.msra.mxu0 0
        %1823 = vmatprep.subr.bf16.mxu0 0
        %1824 = vmatpush1.bf16.msra.mxu0 0
        %1825 = vmatprep.subr.bf16.mxu0 0
        %1826 = vmatpush1.bf16.msra.mxu0 0
        %1827 = vmatprep.subr.bf16.mxu0 0
        %1828 = vmatpush1.bf16.msra.mxu0 0
        %1829 = vmatprep.subr.bf16.mxu0 0
        %1830 = vmatpush1.bf16.msra.mxu0 0
        %1831 = vmatprep.subr.bf16.mxu0 0
        %1832 = vmatpush1.bf16.msra.mxu0 0
        %1833 = vmatprep.mubr.bf16.mxu0 0
        %1834 = vmatmul.mubr.bf16.gmra.mrb[0].mxu0 %v1754
        %v1835 = vpop.f32.mrb[0].mxu0
        %v1836 = vadd.f32 %v1727, %v1835
        %v1837 = vpop.f32.mrb[0].mxu0
        %v1838 = vpop.f32.mrb[0].mxu0
        %v1839 = vadd.f32 %v1727, %v1838
        %v1840 = vpop.f32.mrb[0].mxu0
        %1841 = vmatprep.mubr.bf16.mxu0 0
        %1842 = vmatmul.mubr.bf16.gmra.mrb[0].mxu0 %v1757
        %v1843 = vpop.f32.mrb[0].mxu0
        %v1844 = vadd.f32 %v1727, %v1843
        %v1845 = vpop.f32.mrb[0].mxu0
        %v1846 = vpop.f32.mrb[0].mxu0
        %v1847 = vadd.f32 %v1727, %v1846
        %v1848 = vpop.f32.mrb[0].mxu0
        %1849 = vmatprep.mubr.bf16.mxu0 0
        %1850 = vmatmul.mubr.bf16.gmra.mrb[0].mxu0 %v1760
        %v1851 = vpop.f32.mrb[0].mxu0
        %v1852 = vadd.f32 %v1727, %v1851
        %v1853 = vpop.f32.mrb[0].mxu0
        %v1854 = vpop.f32.mrb[0].mxu0
        %v1855 = vadd.f32 %v1727, %v1854
        %v1856 = vpop.f32.mrb[0].mxu0
        %1857 = vmatprep.mubr.bf16.mxu0 0
        %1858 = vmatmul.mubr.bf16.gmra.mrb[0].mxu0 %v1763
        %v1859 = vpop.f32.mrb[0].mxu0
        %v1860 = vadd.f32 %v1727, %v1859
        %v1861 = vpop.f32.mrb[0].mxu0
        %v1862 = vpop.f32.mrb[0].mxu0
        %v1863 = vadd.f32 %v1727, %v1862
        %v1864 = vpop.f32.mrb[0].mxu0
        %1865 = vmatprep.mubr.bf16.mxu0 0
        %1866 = vmatmul.mubr.bf16.gmra.mrb[0].mxu0 %v1766
        %v1867 = vpop.f32.mrb[0].mxu0
        %v1868 = vadd.f32 %v1727, %v1867
        %v1869 = vpop.f32.mrb[0].mxu0
        %v1870 = vpop.f32.mrb[0].mxu0
        %v1871 = vadd.f32 %v1727, %v1870
        %v1872 = vpop.f32.mrb[0].mxu0
        %1873 = vmatprep.mubr.bf16.mxu0 0
        %1874 = vmatmul.mubr.bf16.gmra.mrb[0].mxu0 %v1769
        %v1875 = vpop.f32.mrb[0].mxu0
        %v1876 = vadd.f32 %v1727, %v1875
        %v1877 = vpop.f32.mrb[0].mxu0
        %v1878 = vpop.f32.mrb[0].mxu0
        %v1879 = vadd.f32 %v1727, %v1878
        %v1880 = vpop.f32.mrb[0].mxu0
        %1881 = vmatprep.mubr.bf16.mxu0 0
        %1882 = vmatmul.mubr.bf16.gmra.mrb[0].mxu0 %v1772
        %v1883 = vpop.f32.mrb[0].mxu0
        %v1884 = vadd.f32 %v1727, %v1883
        %v1885 = vpop.f32.mrb[0].mxu0
        %v1886 = vpop.f32.mrb[0].mxu0
        %v1887 = vadd.f32 %v1727, %v1886
        %v1888 = vpop.f32.mrb[0].mxu0
        %1889 = vmatprep.mubr.bf16.mxu0 0
        %1890 = vmatmul.mubr.bf16.gmra.mrb[0].mxu0 %v1775
        %v1891 = vpop.f32.mrb[0].mxu0
        %v1892 = vadd.f32 %v1727, %v1891
        %v1893 = vpop.f32.mrb[0].mxu0
        %v1894 = vpop.f32.mrb[0].mxu0
        %v1895 = vadd.f32 %v1727, %v1894
        %v1896 = vpop.f32.mrb[0].mxu0
        %1897 = vmatprep.mubr.bf16.mxu0 0
        %1898 = vmatmul.mubr.bf16.gmra.mrb[0].mxu0 %v1778
        %v1899 = vpop.f32.mrb[0].mxu0
        %v1900 = vadd.f32 %v1727, %v1899
        %v1901 = vpop.f32.mrb[0].mxu0
        %v1902 = vpop.f32.mrb[0].mxu0
        %v1903 = vadd.f32 %v1727, %v1902
        %v1904 = vpop.f32.mrb[0].mxu0
        %1905 = vmatprep.mubr.bf16.mxu0 0
        %1906 = vmatmul.mubr.bf16.gmra.mrb[0].mxu0 %v1781
        %v1907 = vpop.f32.mrb[0].mxu0
        %v1908 = vadd.f32 %v1727, %v1907
        %v1909 = vpop.f32.mrb[0].mxu0
        %v1910 = vpop.f32.mrb[0].mxu0
        %v1911 = vadd.f32 %v1727, %v1910
        %v1912 = vpop.f32.mrb[0].mxu0
        %1913 = vmatprep.mubr.bf16.mxu0 0
        %1914 = vmatmul.mubr.bf16.gmra.mrb[0].mxu0 %v1784
        %v1915 = vpop.f32.mrb[0].mxu0
        %v1916 = vadd.f32 %v1727, %v1915
        %v1917 = vpop.f32.mrb[0].mxu0
        %v1918 = vpop.f32.mrb[0].mxu0
        %v1919 = vadd.f32 %v1727, %v1918
        %v1920 = vpop.f32.mrb[0].mxu0
        %1921 = vmatprep.mubr.bf16.mxu0 0
        %1922 = vmatmul.mubr.bf16.gmra.mrb[0].mxu0 %v1787
        %v1923 = vpop.f32.mrb[0].mxu0
        %v1924 = vadd.f32 %v1727, %v1923
        %v1925 = vpop.f32.mrb[0].mxu0
        %v1926 = vpop.f32.mrb[0].mxu0
        %v1927 = vadd.f32 %v1727, %v1926
        %v1928 = vpop.f32.mrb[0].mxu0
        %1929 = vmatprep.mubr.bf16.mxu0 0
        %1930 = vmatmul.mubr.bf16.gmra.mrb[0].mxu0 %v1790
        %v1931 = vpop.f32.mrb[0].mxu0
        %v1932 = vadd.f32 %v1727, %v1931
        %v1933 = vpop.f32.mrb[0].mxu0
        %v1934 = vpop.f32.mrb[0].mxu0
        %v1935 = vadd.f32 %v1727, %v1934
        %v1936 = vpop.f32.mrb[0].mxu0
        %1937 = vmatprep.mubr.bf16.mxu0 0
        %1938 = vmatmul.mubr.bf16.gmra.mrb[0].mxu0 %v1793
        %v1939 = vpop.f32.mrb[0].mxu0
        %v1940 = vadd.f32 %v1727, %v1939
        %v1941 = vpop.f32.mrb[0].mxu0
        %v1942 = vpop.f32.mrb[0].mxu0
        %v1943 = vadd.f32 %v1727, %v1942
        %v1944 = vpop.f32.mrb[0].mxu0
        %1945 = vmatprep.mubr.bf16.mxu0 0
        %1946 = vmatmul.mubr.bf16.gmra.mrb[0].mxu0 %v1796
        %v1947 = vpop.f32.mrb[0].mxu0
        %v1948 = vadd.f32 %v1727, %v1947
        %v1949 = vpop.f32.mrb[0].mxu0
        %v1950 = vpop.f32.mrb[0].mxu0
        %v1951 = vadd.f32 %v1727, %v1950
        %v1952 = vpop.f32.mrb[0].mxu0
        %1953 = vmatprep.mubr.bf16.mxu0 0
        %1954 = vmatmul.mubr.bf16.gmra.mrb[0].mxu0 %v1799
        %v1955 = vpop.f32.mrb[0].mxu0
        %v1956 = vadd.f32 %v1727, %v1955
        %v1957 = vpop.f32.mrb[0].mxu0
        %v1958 = vpop.f32.mrb[0].mxu0
        %v1959 = vadd.f32 %v1727, %v1958
        %v1960 = vpop.f32.mrb[0].mxu0
        %1961 = vdwg.mxu0
        %v1962 = vld [vmem:[%s749] sm:$0xf]
        %v1963 = vld [vmem:[%s753] sm:$0xf]
        %v1964 = vpack.c.bf16 %v1839, %v1836
        %v1965 = vpack.c.bf16 %v1847, %v1844
        %v1966 = vpack.c.bf16 %v1855, %v1852
        %v1967 = vpack.c.bf16 %v1863, %v1860
        %v1968 = vpack.c.bf16 %v1871, %v1868
        %v1969 = vpack.c.bf16 %v1879, %v1876
        %v1970 = vpack.c.bf16 %v1887, %v1884
        %v1971 = vpack.c.bf16 %v1895, %v1892
        %v1972 = vpack.c.bf16 %v1903, %v1900
        %v1973 = vpack.c.bf16 %v1911, %v1908
        %v1974 = vpack.c.bf16 %v1919, %v1916
        %v1975 = vpack.c.bf16 %v1927, %v1924
        %v1976 = vpack.c.bf16 %v1935, %v1932
        %v1977 = vpack.c.bf16 %v1943, %v1940
        %v1978 = vpack.c.bf16 %v1951, %v1948
        %v1979 = vpack.c.bf16 %v1959, %v1956
        %vm1980 = vcmask 130048
        %v1982 = vsel %vm1980, %v1962, 0
        %v1985 = vsel %vm1980, %v1964, 0
        %v1988 = vsel %vm1980, %v1965, 0
        %v1991 = vsel %vm1980, %v1966, 0
        %v1994 = vsel %vm1980, %v1967, 0
        %v1997 = vsel %vm1980, %v1968, 0
        %v2000 = vsel %vm1980, %v1969, 0
        %v2003 = vsel %vm1980, %v1970, 0
        %v2006 = vsel %vm1980, %v1971, 0
        %v2009 = vsel %vm1980, %v1972, 0
        %v2012 = vsel %vm1980, %v1973, 0
        %v2015 = vsel %vm1980, %v1974, 0
        %v2018 = vsel %vm1980, %v1975, 0
        %v2021 = vsel %vm1980, %v1976, 0
        %v2024 = vsel %vm1980, %v1977, 0
        %v2027 = vsel %vm1980, %v1978, 0
        %v2030 = vsel %vm1980, %v1979, 0
        %2032 = vmatprep.subr.bf16.mxu0 0
        %2033 = vmatpush1.bf16.xpose.msra.mxu0 %v1985
        %2034 = vmatprep.subr.bf16.mxu0 0
        %2035 = vmatpush1.bf16.xpose.msra.mxu0 %v1988
        %2036 = vmatprep.subr.bf16.mxu0 0
        %2037 = vmatpush1.bf16.xpose.msra.mxu0 %v1991
        %2038 = vmatprep.subr.bf16.mxu0 0
        %2039 = vmatpush1.bf16.xpose.msra.mxu0 %v1994
        %2040 = vmatprep.subr.bf16.mxu0 0
        %2041 = vmatpush1.bf16.xpose.msra.mxu0 %v1997
        %2042 = vmatprep.subr.bf16.mxu0 0
        %2043 = vmatpush1.bf16.xpose.msra.mxu0 %v2000
        %2044 = vmatprep.subr.bf16.mxu0 0
        %2045 = vmatpush1.bf16.xpose.msra.mxu0 %v2003
        %2046 = vmatprep.subr.bf16.mxu0 0
        %2047 = vmatpush1.bf16.xpose.msra.mxu0 %v2006
        %2048 = vmatprep.subr.bf16.mxu0 0
        %2049 = vmatpush1.bf16.xpose.msra.mxu0 %v2009
        %2050 = vmatprep.subr.bf16.mxu0 0
        %2051 = vmatpush1.bf16.xpose.msra.mxu0 %v2012
        %2052 = vmatprep.subr.bf16.mxu0 0
        %2053 = vmatpush1.bf16.xpose.msra.mxu0 %v2015
        %2054 = vmatprep.subr.bf16.mxu0 0
        %2055 = vmatpush1.bf16.xpose.msra.mxu0 %v2018
        %2056 = vmatprep.subr.bf16.mxu0 0
        %2057 = vmatpush1.bf16.xpose.msra.mxu0 %v2021
        %2058 = vmatprep.subr.bf16.mxu0 0
        %2059 = vmatpush1.bf16.xpose.msra.mxu0 %v2024
        %2060 = vmatprep.subr.bf16.mxu0 0
        %2061 = vmatpush1.bf16.xpose.msra.mxu0 %v2027
        %2062 = vmatprep.subr.bf16.mxu0 0
        %2063 = vmatpush1.bf16.xpose.msra.mxu0 %v2030
        %2064 = vmatprep.mubr.bf16.mxu0 0
        %2065 = vmatmul.mubr.bf16.gmra.mrb[0].mxu0 %v1982
        %v2066 = vpop.f32.mrb[0].mxu0
        %v2067 = vadd.f32 0.0, %v2066
        %v2068 = vpop.f32.mrb[0].mxu0
        %v2069 = vadd.f32 0.0, %v2068
        %v2070 = vpop.f32.mrb[0].mxu0
        %v2071 = vpop.f32.mrb[0].mxu0
        %2072 = vdwg.mxu0
        %v2073 = vrot.slane %v2067, 4
        %v2074 = vmax.f32 %v2067, %v2073
        %v2075 = vrot.slane %v2074, 2
        %v2076 = vmax.f32 %v2074, %v2075
        %v2077 = vrot.slane %v2076, 1
        %v2078 = vmax.f32 %v2076, %v2077
        %v2079 = vrot.slane %v2069, 4
        %v2080 = vmax.f32 %v2069, %v2079
        %v2081 = vrot.slane %v2080, 2
        %v2082 = vmax.f32 %v2080, %v2081
        %v2083 = vrot.slane %v2082, 1
        %v2084 = vmax.f32 %v2082, %v2083
        %v2085 = vsub.f32 %v2067, %v2078
        %v2086 = vsub.f32 %v2069, %v2084
        %v2087 = vmul.f32 %v2085, 1.442695
        %v2088 = vpow.pop %v2087
        %v2089 = vmul.f32 %v2086, 1.442695
        %v2090 = vpow.pop %v2089
        %v2091 = vrot.slane %v2088, 4
        %v2092 = vadd.f32 %v2088, %v2091
        %v2093 = vrot.slane %v2092, 2
        %v2094 = vadd.f32 %v2092, %v2093
        %v2095 = vrot.slane %v2094, 1
        %v2096 = vadd.f32 %v2094, %v2095
        %v2097 = vrot.slane %v2090, 4
        %v2098 = vadd.f32 %v2090, %v2097
        %v2099 = vrot.slane %v2098, 2
        %v2100 = vadd.f32 %v2098, %v2099
        %v2101 = vrot.slane %v2100, 1
        %v2102 = vadd.f32 %v2100, %v2101
        %v2103 = vrcp.pop %v2096
        %v2104 = vrcp.pop %v2102
        %v2105 = vmul.f32 %v2088, %v2103
        %v2106 = vmul.f32 %v2090, %v2104
        %v2107 = vpack.c.bf16 %v2105, %v2105
        %v2108 = vpack.c.bf16 %v2106, %v2106
        %2109 = vxpose.xlu0.c.b16.start [1/8] %v2107, 128
        %2110 = vxpose.xlu0.c.b16.cont [2/8] 0, 128
        %2111 = vxpose.xlu0.c.b16.cont [3/8] 0, 128
        %2112 = vxpose.xlu0.c.b16.cont [4/8] 0, 128
        %2113 = vxpose.xlu0.c.b16.cont [5/8] 0, 128
        %2114 = vxpose.xlu0.c.b16.cont [6/8] 0, 128
        %2115 = vxpose.xlu0.c.b16.cont [7/8] 0, 128
        %2116 = vxpose.xlu0.c.b16.end [8/8] 0, 128
        %v2117 = vpop.trf.xlu0
        %v2118 = vpop.trf.xlu0
        %v2119 = vpop.trf.xlu0
        %v2120 = vpop.trf.xlu0
        %v2121 = vpop.trf.xlu0
        %v2122 = vpop.trf.xlu0
        %v2123 = vpop.trf.xlu0
        %v2124 = vpop.trf.xlu0
        %2125 = vxpose.xlu0.c.b16.start [1/8] %v2108, 128
        %2126 = vxpose.xlu0.c.b16.cont [2/8] 0, 128
        %2127 = vxpose.xlu0.c.b16.cont [3/8] 0, 128
        %2128 = vxpose.xlu0.c.b16.cont [4/8] 0, 128
        %2129 = vxpose.xlu0.c.b16.cont [5/8] 0, 128
        %2130 = vxpose.xlu0.c.b16.cont [6/8] 0, 128
        %2131 = vxpose.xlu0.c.b16.cont [7/8] 0, 128
        %2132 = vxpose.xlu0.c.b16.end [8/8] 0, 128
        %v2133 = vpop.trf.xlu0
        %v2134 = vpop.trf.xlu0
        %v2135 = vpop.trf.xlu0
        %v2136 = vpop.trf.xlu0
        %v2137 = vpop.trf.xlu0
        %v2138 = vpop.trf.xlu0
        %v2139 = vpop.trf.xlu0
        %v2140 = vpop.trf.xlu0
        %vm2141 = vcmask 64512
        %v2143 = vsel %vm2141, %v2117, 0
        %v2146 = vsel %vm2141, %v2118, 0
        %v2149 = vsel %vm2141, %v2119, 0
        %v2152 = vsel %vm2141, %v2120, 0
        %v2155 = vsel %vm2141, %v2121, 0
        %v2158 = vsel %vm2141, %v2122, 0
        %v2161 = vsel %vm2141, %v2123, 0
        %v2164 = vsel %vm2141, %v2124, 0
        %v2167 = vsel %vm2141, %v2133, 0
        %v2170 = vsel %vm2141, %v2134, 0
        %v2173 = vsel %vm2141, %v2135, 0
        %v2176 = vsel %vm2141, %v2136, 0
        %v2179 = vsel %vm2141, %v2137, 0
        %v2182 = vsel %vm2141, %v2138, 0
        %v2185 = vsel %vm2141, %v2139, 0
        %v2188 = vsel %vm2141, %v2140, 0
        %vm2190 = vcmask 1043456
        %v2192 = vsel %vm2190, %v1963, 0
        %2194 = vmatprep.subr.bf16.mxu0 0
        %2195 = vmatpush1.bf16.msra.mxu0 %v2192
        %2196 = vmatprep.subr.bf16.mxu0 0
        %2197 = vmatpush1.bf16.msra.mxu0 0
        %2198 = vmatprep.subr.bf16.mxu0 0
        %2199 = vmatpush1.bf16.msra.mxu0 0
        %2200 = vmatprep.subr.bf16.mxu0 0
        %2201 = vmatpush1.bf16.msra.mxu0 0
        %2202 = vmatprep.subr.bf16.mxu0 0
        %2203 = vmatpush1.bf16.msra.mxu0 0
        %2204 = vmatprep.subr.bf16.mxu0 0
        %2205 = vmatpush1.bf16.msra.mxu0 0
        %2206 = vmatprep.subr.bf16.mxu0 0
        %2207 = vmatpush1.bf16.msra.mxu0 0
        %2208 = vmatprep.subr.bf16.mxu0 0
        %2209 = vmatpush1.bf16.msra.mxu0 0
        %2210 = vmatprep.subr.bf16.mxu0 0
        %2211 = vmatpush1.bf16.msra.mxu0 0
        %2212 = vmatprep.subr.bf16.mxu0 0
        %2213 = vmatpush1.bf16.msra.mxu0 0
        %2214 = vmatprep.subr.bf16.mxu0 0
        %2215 = vmatpush1.bf16.msra.mxu0 0
        %2216 = vmatprep.subr.bf16.mxu0 0
        %2217 = vmatpush1.bf16.msra.mxu0 0
        %2218 = vmatprep.subr.bf16.mxu0 0
        %2219 = vmatpush1.bf16.msra.mxu0 0
        %2220 = vmatprep.subr.bf16.mxu0 0
        %2221 = vmatpush1.bf16.msra.mxu0 0
        %2222 = vmatprep.subr.bf16.mxu0 0
        %2223 = vmatpush1.bf16.msra.mxu0 0
        %2224 = vmatprep.subr.bf16.mxu0 0
        %2225 = vmatpush1.bf16.msra.mxu0 0
        %2226 = vmatprep.mubr.bf16.mxu0 0
        %2227 = vmatmul.mubr.bf16.gmra.mrb[0].mxu0 %v2143
        %v2228 = vpop.f32.mrb[0].mxu0
        %v2229 = vadd.f32 0.0, %v2228
        %v2230 = vpop.f32.mrb[0].mxu0
        %v2231 = vpop.f32.mrb[0].mxu0
        %v2232 = vadd.f32 0.0, %v2231
        %v2233 = vpop.f32.mrb[0].mxu0
        %2234 = vmatprep.mubr.bf16.mxu0 0
        %2235 = vmatmul.mubr.bf16.gmra.mrb[0].mxu0 %v2146
        %v2236 = vpop.f32.mrb[0].mxu0
        %v2237 = vadd.f32 0.0, %v2236
        %v2238 = vpop.f32.mrb[0].mxu0
        %v2239 = vpop.f32.mrb[0].mxu0
        %v2240 = vadd.f32 0.0, %v2239
        %v2241 = vpop.f32.mrb[0].mxu0
        %2242 = vmatprep.mubr.bf16.mxu0 0
        %2243 = vmatmul.mubr.bf16.gmra.mrb[0].mxu0 %v2149
        %v2244 = vpop.f32.mrb[0].mxu0
        %v2245 = vadd.f32 0.0, %v2244
        %v2246 = vpop.f32.mrb[0].mxu0
        %v2247 = vpop.f32.mrb[0].mxu0
        %v2248 = vadd.f32 0.0, %v2247
        %v2249 = vpop.f32.mrb[0].mxu0
        %2250 = vmatprep.mubr.bf16.mxu0 0
        %2251 = vmatmul.mubr.bf16.gmra.mrb[0].mxu0 %v2152
        %v2252 = vpop.f32.mrb[0].mxu0
        %v2253 = vadd.f32 0.0, %v2252
        %v2254 = vpop.f32.mrb[0].mxu0
        %v2255 = vpop.f32.mrb[0].mxu0
        %v2256 = vadd.f32 0.0, %v2255
        %v2257 = vpop.f32.mrb[0].mxu0
        %2258 = vmatprep.mubr.bf16.mxu0 0
        %2259 = vmatmul.mubr.bf16.gmra.mrb[0].mxu0 %v2155
        %v2260 = vpop.f32.mrb[0].mxu0
        %v2261 = vadd.f32 0.0, %v2260
        %v2262 = vpop.f32.mrb[0].mxu0
        %v2263 = vpop.f32.mrb[0].mxu0
        %v2264 = vadd.f32 0.0, %v2263
        %v2265 = vpop.f32.mrb[0].mxu0
        %2266 = vmatprep.mubr.bf16.mxu0 0
        %2267 = vmatmul.mubr.bf16.gmra.mrb[0].mxu0 %v2158
        %v2268 = vpop.f32.mrb[0].mxu0
        %v2269 = vadd.f32 0.0, %v2268
        %v2270 = vpop.f32.mrb[0].mxu0
        %v2271 = vpop.f32.mrb[0].mxu0
        %v2272 = vadd.f32 0.0, %v2271
        %v2273 = vpop.f32.mrb[0].mxu0
        %2274 = vmatprep.mubr.bf16.mxu0 0
        %2275 = vmatmul.mubr.bf16.gmra.mrb[0].mxu0 %v2161
        %v2276 = vpop.f32.mrb[0].mxu0
        %v2277 = vadd.f32 0.0, %v2276
        %v2278 = vpop.f32.mrb[0].mxu0
        %v2279 = vpop.f32.mrb[0].mxu0
        %v2280 = vadd.f32 0.0, %v2279
        %v2281 = vpop.f32.mrb[0].mxu0
        %2282 = vmatprep.mubr.bf16.mxu0 0
        %2283 = vmatmul.mubr.bf16.gmra.mrb[0].mxu0 %v2164
        %v2284 = vpop.f32.mrb[0].mxu0
        %v2285 = vadd.f32 0.0, %v2284
        %v2286 = vpop.f32.mrb[0].mxu0
        %v2287 = vpop.f32.mrb[0].mxu0
        %v2288 = vadd.f32 0.0, %v2287
        %v2289 = vpop.f32.mrb[0].mxu0
        %2290 = vmatprep.mubr.bf16.mxu0 0
        %2291 = vmatmul.mubr.bf16.gmra.mrb[0].mxu0 %v2167
        %v2292 = vpop.f32.mrb[0].mxu0
        %v2293 = vadd.f32 0.0, %v2292
        %v2294 = vpop.f32.mrb[0].mxu0
        %v2295 = vpop.f32.mrb[0].mxu0
        %v2296 = vadd.f32 0.0, %v2295
        %v2297 = vpop.f32.mrb[0].mxu0
        %2298 = vmatprep.mubr.bf16.mxu0 0
        %2299 = vmatmul.mubr.bf16.gmra.mrb[0].mxu0 %v2170
        %v2300 = vpop.f32.mrb[0].mxu0
        %v2301 = vadd.f32 0.0, %v2300
        %v2302 = vpop.f32.mrb[0].mxu0
        %v2303 = vpop.f32.mrb[0].mxu0
        %v2304 = vadd.f32 0.0, %v2303
        %v2305 = vpop.f32.mrb[0].mxu0
        %2306 = vmatprep.mubr.bf16.mxu0 0
        %2307 = vmatmul.mubr.bf16.gmra.mrb[0].mxu0 %v2173
        %v2308 = vpop.f32.mrb[0].mxu0
        %v2309 = vadd.f32 0.0, %v2308
        %v2310 = vpop.f32.mrb[0].mxu0
        %v2311 = vpop.f32.mrb[0].mxu0
        %v2312 = vadd.f32 0.0, %v2311
        %v2313 = vpop.f32.mrb[0].mxu0
        %2314 = vmatprep.mubr.bf16.mxu0 0
        %2315 = vmatmul.mubr.bf16.gmra.mrb[0].mxu0 %v2176
        %v2316 = vpop.f32.mrb[0].mxu0
        %v2317 = vadd.f32 0.0, %v2316
        %v2318 = vpop.f32.mrb[0].mxu0
        %v2319 = vpop.f32.mrb[0].mxu0
        %v2320 = vadd.f32 0.0, %v2319
        %v2321 = vpop.f32.mrb[0].mxu0
        %2322 = vmatprep.mubr.bf16.mxu0 0
        %2323 = vmatmul.mubr.bf16.gmra.mrb[0].mxu0 %v2179
        %v2324 = vpop.f32.mrb[0].mxu0
        %v2325 = vadd.f32 0.0, %v2324
        %v2326 = vpop.f32.mrb[0].mxu0
        %v2327 = vpop.f32.mrb[0].mxu0
        %v2328 = vadd.f32 0.0, %v2327
        %v2329 = vpop.f32.mrb[0].mxu0
        %2330 = vmatprep.mubr.bf16.mxu0 0
        %2331 = vmatmul.mubr.bf16.gmra.mrb[0].mxu0 %v2182
        %v2332 = vpop.f32.mrb[0].mxu0
        %v2333 = vadd.f32 0.0, %v2332
        %v2334 = vpop.f32.mrb[0].mxu0
        %v2335 = vpop.f32.mrb[0].mxu0
        %v2336 = vadd.f32 0.0, %v2335
        %v2337 = vpop.f32.mrb[0].mxu0
        %2338 = vmatprep.mubr.bf16.mxu0 0
        %2339 = vmatmul.mubr.bf16.gmra.mrb[0].mxu0 %v2185
        %v2340 = vpop.f32.mrb[0].mxu0
        %v2341 = vadd.f32 0.0, %v2340
        %v2342 = vpop.f32.mrb[0].mxu0
        %v2343 = vpop.f32.mrb[0].mxu0
        %v2344 = vadd.f32 0.0, %v2343
        %v2345 = vpop.f32.mrb[0].mxu0
        %2346 = vmatprep.mubr.bf16.mxu0 0
        %2347 = vmatmul.mubr.bf16.gmra.mrb[0].mxu0 %v2188
        %v2348 = vpop.f32.mrb[0].mxu0
        %v2349 = vadd.f32 0.0, %v2348
        %v2350 = vpop.f32.mrb[0].mxu0
        %v2351 = vpop.f32.mrb[0].mxu0
        %v2352 = vadd.f32 0.0, %v2351
        %v2353 = vpop.f32.mrb[0].mxu0
        %2354 = vdwg.mxu0
        %v2355 = vpack.c.bf16 %v2232, %v2229
        %v2356 = vpack.c.bf16 %v2240, %v2237
        %v2357 = vpack.c.bf16 %v2248, %v2245
        %v2358 = vpack.c.bf16 %v2256, %v2253
        %v2359 = vpack.c.bf16 %v2264, %v2261
        %v2360 = vpack.c.bf16 %v2272, %v2269
        %v2361 = vpack.c.bf16 %v2280, %v2277
        %v2362 = vpack.c.bf16 %v2288, %v2285
        %v2363 = vpack.c.bf16 %v2296, %v2293
        %v2364 = vpack.c.bf16 %v2304, %v2301
        %v2365 = vpack.c.bf16 %v2312, %v2309
        %v2366 = vpack.c.bf16 %v2320, %v2317
        %v2367 = vpack.c.bf16 %v2328, %v2325
        %v2368 = vpack.c.bf16 %v2336, %v2333
        %v2369 = vpack.c.bf16 %v2344, %v2341
        %v2370 = vpack.c.bf16 %v2352, %v2349
        %v2371 = vld [vmem:[%s14] sm:$0xf]
        %v2372 = vld [vmem:[%s14 + $0x4] sm:$0xf]
        %v2374 = vunpack.c.l.b16 %v1962
        %v2375 = vpack.c.b16 %v2374, %v2374
        %2376 = vrot.lane.b32.xlu0 %v2375, 112
        %v2377 = vpop.permute.xlu0 %2376
        %2394 = vrot.lane.b32.xlu0 %v1964, 112
        %v2395 = vpop.permute.xlu0 %2394
        %2396 = vrot.lane.b32.xlu0 %v1965, 112
        %v2397 = vpop.permute.xlu0 %2396
        %2398 = vrot.lane.b32.xlu0 %v1966, 112
        %v2399 = vpop.permute.xlu0 %2398
        %2400 = vrot.lane.b32.xlu0 %v1967, 112
        %v2401 = vpop.permute.xlu0 %2400
        %2402 = vrot.lane.b32.xlu0 %v1968, 112
        %v2403 = vpop.permute.xlu0 %2402
        %2404 = vrot.lane.b32.xlu0 %v1969, 112
        %v2405 = vpop.permute.xlu0 %2404
        %2406 = vrot.lane.b32.xlu0 %v1970, 112
        %v2407 = vpop.permute.xlu0 %2406
        %2408 = vrot.lane.b32.xlu0 %v1971, 112
        %v2409 = vpop.permute.xlu0 %2408
        %2410 = vrot.lane.b32.xlu0 %v1972, 112
        %v2411 = vpop.permute.xlu0 %2410
        %2412 = vrot.lane.b32.xlu0 %v1973, 112
        %v2413 = vpop.permute.xlu0 %2412
        %2414 = vrot.lane.b32.xlu0 %v1974, 112
        %v2415 = vpop.permute.xlu0 %2414
        %2416 = vrot.lane.b32.xlu0 %v1975, 112
        %v2417 = vpop.permute.xlu0 %2416
        %2418 = vrot.lane.b32.xlu0 %v1976, 112
        %v2419 = vpop.permute.xlu0 %2418
        %2420 = vrot.lane.b32.xlu0 %v1977, 112
        %v2421 = vpop.permute.xlu0 %2420
        %2422 = vrot.lane.b32.xlu0 %v1978, 112
        %v2423 = vpop.permute.xlu0 %2422
        %2424 = vrot.lane.b32.xlu0 %v1979, 112
        %v2425 = vpop.permute.xlu0 %2424
        %v2427 = vsel %vm1980, %v2377, 0
        %v2430 = vsel %vm1980, %v2395, 0
        %v2433 = vsel %vm1980, %v2397, 0
        %v2436 = vsel %vm1980, %v2399, 0
        %v2439 = vsel %vm1980, %v2401, 0
        %v2442 = vsel %vm1980, %v2403, 0
        %v2445 = vsel %vm1980, %v2405, 0
        %v2448 = vsel %vm1980, %v2407, 0
        %v2451 = vsel %vm1980, %v2409, 0
        %v2454 = vsel %vm1980, %v2411, 0
        %v2457 = vsel %vm1980, %v2413, 0
        %v2460 = vsel %vm1980, %v2415, 0
        %v2463 = vsel %vm1980, %v2417, 0
        %v2466 = vsel %vm1980, %v2419, 0
        %v2469 = vsel %vm1980, %v2421, 0
        %v2472 = vsel %vm1980, %v2423, 0
        %v2475 = vsel %vm1980, %v2425, 0
        %2477 = vmatprep.subr.bf16.mxu0 0
        %2478 = vmatpush1.bf16.xpose.msra.mxu0 %v2430
        %2479 = vmatprep.subr.bf16.mxu0 0
        %2480 = vmatpush1.bf16.xpose.msra.mxu0 %v2433
        %2481 = vmatprep.subr.bf16.mxu0 0
        %2482 = vmatpush1.bf16.xpose.msra.mxu0 %v2436
        %2483 = vmatprep.subr.bf16.mxu0 0
        %2484 = vmatpush1.bf16.xpose.msra.mxu0 %v2439
        %2485 = vmatprep.subr.bf16.mxu0 0
        %2486 = vmatpush1.bf16.xpose.msra.mxu0 %v2442
        %2487 = vmatprep.subr.bf16.mxu0 0
        %2488 = vmatpush1.bf16.xpose.msra.mxu0 %v2445
        %2489 = vmatprep.subr.bf16.mxu0 0
        %2490 = vmatpush1.bf16.xpose.msra.mxu0 %v2448
        %2491 = vmatprep.subr.bf16.mxu0 0
        %2492 = vmatpush1.bf16.xpose.msra.mxu0 %v2451
        %2493 = vmatprep.subr.bf16.mxu0 0
        %2494 = vmatpush1.bf16.xpose.msra.mxu0 %v2454
        %2495 = vmatprep.subr.bf16.mxu0 0
        %2496 = vmatpush1.bf16.xpose.msra.mxu0 %v2457
        %2497 = vmatprep.subr.bf16.mxu0 0
        %2498 = vmatpush1.bf16.xpose.msra.mxu0 %v2460
        %2499 = vmatprep.subr.bf16.mxu0 0
        %2500 = vmatpush1.bf16.xpose.msra.mxu0 %v2463
        %2501 = vmatprep.subr.bf16.mxu0 0
        %2502 = vmatpush1.bf16.xpose.msra.mxu0 %v2466
        %2503 = vmatprep.subr.bf16.mxu0 0
        %2504 = vmatpush1.bf16.xpose.msra.mxu0 %v2469
        %2505 = vmatprep.subr.bf16.mxu0 0
        %2506 = vmatpush1.bf16.xpose.msra.mxu0 %v2472
        %2507 = vmatprep.subr.bf16.mxu0 0
        %2508 = vmatpush1.bf16.xpose.msra.mxu0 %v2475
        %2509 = vmatprep.mubr.bf16.mxu0 0
        %2510 = vmatmul.mubr.bf16.gmra.mrb[0].mxu0 %v2427
        %v2511 = vpop.f32.mrb[0].mxu0
        %v2512 = vadd.f32 0.0, %v2511
        %v2513 = vpop.f32.mrb[0].mxu0
        %v2514 = vadd.f32 0.0, %v2513
        %v2515 = vpop.f32.mrb[0].mxu0
        %v2516 = vpop.f32.mrb[0].mxu0
        %2517 = vdwg.mxu0
        %v2518 = vrot.slane %v2512, 4
        %v2519 = vmax.f32 %v2512, %v2518
        %v2520 = vrot.slane %v2519, 2
        %v2521 = vmax.f32 %v2519, %v2520
        %v2522 = vrot.slane %v2521, 1
        %v2523 = vmax.f32 %v2521, %v2522
        %v2524 = vrot.slane %v2514, 4
        %v2525 = vmax.f32 %v2514, %v2524
        %v2526 = vrot.slane %v2525, 2
        %v2527 = vmax.f32 %v2525, %v2526
        %v2528 = vrot.slane %v2527, 1
        %v2529 = vmax.f32 %v2527, %v2528
        %v2530 = vsub.f32 %v2512, %v2523
        %v2531 = vsub.f32 %v2514, %v2529
        %v2532 = vmul.f32 %v2530, 1.442695
        %v2533 = vpow.pop %v2532
        %v2534 = vmul.f32 %v2531, 1.442695
        %v2535 = vpow.pop %v2534
        %v2536 = vrot.slane %v2533, 4
        %v2537 = vadd.f32 %v2533, %v2536
        %v2538 = vrot.slane %v2537, 2
        %v2539 = vadd.f32 %v2537, %v2538
        %v2540 = vrot.slane %v2539, 1
        %v2541 = vadd.f32 %v2539, %v2540
        %v2542 = vrot.slane %v2535, 4
        %v2543 = vadd.f32 %v2535, %v2542
        %v2544 = vrot.slane %v2543, 2
        %v2545 = vadd.f32 %v2543, %v2544
        %v2546 = vrot.slane %v2545, 1
        %v2547 = vadd.f32 %v2545, %v2546
        %v2548 = vrcp.pop %v2541
        %v2549 = vrcp.pop %v2547
        %v2550 = vmul.f32 %v2533, %v2548
        %v2551 = vmul.f32 %v2535, %v2549
        %v2552 = vpack.c.bf16 %v2550, %v2550
        %v2553 = vpack.c.bf16 %v2551, %v2551
        %2554 = vxpose.xlu0.c.b16.start [1/8] %v2552, 128
        %2555 = vxpose.xlu0.c.b16.cont [2/8] 0, 128
        %2556 = vxpose.xlu0.c.b16.cont [3/8] 0, 128
        %2557 = vxpose.xlu0.c.b16.cont [4/8] 0, 128
        %2558 = vxpose.xlu0.c.b16.cont [5/8] 0, 128
        %2559 = vxpose.xlu0.c.b16.cont [6/8] 0, 128
        %2560 = vxpose.xlu0.c.b16.cont [7/8] 0, 128
        %2561 = vxpose.xlu0.c.b16.end [8/8] 0, 128
        %v2562 = vpop.trf.xlu0
        %v2563 = vpop.trf.xlu0
        %v2564 = vpop.trf.xlu0
        %v2565 = vpop.trf.xlu0
        %v2566 = vpop.trf.xlu0
        %v2567 = vpop.trf.xlu0
        %v2568 = vpop.trf.xlu0
        %v2569 = vpop.trf.xlu0
        %2570 = vxpose.xlu0.c.b16.start [1/8] %v2553, 128
        %2571 = vxpose.xlu0.c.b16.cont [2/8] 0, 128
        %2572 = vxpose.xlu0.c.b16.cont [3/8] 0, 128
        %2573 = vxpose.xlu0.c.b16.cont [4/8] 0, 128
        %2574 = vxpose.xlu0.c.b16.cont [5/8] 0, 128
        %2575 = vxpose.xlu0.c.b16.cont [6/8] 0, 128
        %2576 = vxpose.xlu0.c.b16.cont [7/8] 0, 128
        %2577 = vxpose.xlu0.c.b16.end [8/8] 0, 128
        %v2578 = vpop.trf.xlu0
        %v2579 = vpop.trf.xlu0
        %v2580 = vpop.trf.xlu0
        %v2581 = vpop.trf.xlu0
        %v2582 = vpop.trf.xlu0
        %v2583 = vpop.trf.xlu0
        %v2584 = vpop.trf.xlu0
        %v2585 = vpop.trf.xlu0
        %v2587 = vunpack.c.l.b16 %v1963
        %v2588 = vpack.c.b16 %v2587, %v2587
        %2589 = vrot.lane.b32.xlu0 %v2588, 112
        %v2590 = vpop.permute.xlu0 %2589
        %v2592 = vsel %vm2141, %v2562, 0
        %v2595 = vsel %vm2141, %v2563, 0
        %v2598 = vsel %vm2141, %v2564, 0
        %v2601 = vsel %vm2141, %v2565, 0
        %v2604 = vsel %vm2141, %v2566, 0
        %v2607 = vsel %vm2141, %v2567, 0
        %v2610 = vsel %vm2141, %v2568, 0
        %v2613 = vsel %vm2141, %v2569, 0
        %v2616 = vsel %vm2141, %v2578, 0
        %v2619 = vsel %vm2141, %v2579, 0
        %v2622 = vsel %vm2141, %v2580, 0
        %v2625 = vsel %vm2141, %v2581, 0
        %v2628 = vsel %vm2141, %v2582, 0
        %v2631 = vsel %vm2141, %v2583, 0
        %v2634 = vsel %vm2141, %v2584, 0
        %v2637 = vsel %vm2141, %v2585, 0
        %v2640 = vsel %vm2190, %v2590, 0
        %2642 = vmatprep.subr.bf16.mxu0 0
        %2643 = vmatpush1.bf16.msra.mxu0 %v2640
        %2644 = vmatprep.subr.bf16.mxu0 0
        %2645 = vmatpush1.bf16.msra.mxu0 0
        %2646 = vmatprep.subr.bf16.mxu0 0
        %2647 = vmatpush1.bf16.msra.mxu0 0
        %2648 = vmatprep.subr.bf16.mxu0 0
        %2649 = vmatpush1.bf16.msra.mxu0 0
        %2650 = vmatprep.subr.bf16.mxu0 0
        %2651 = vmatpush1.bf16.msra.mxu0 0
        %2652 = vmatprep.subr.bf16.mxu0 0
        %2653 = vmatpush1.bf16.msra.mxu0 0
        %2654 = vmatprep.subr.bf16.mxu0 0
        %2655 = vmatpush1.bf16.msra.mxu0 0
        %2656 = vmatprep.subr.bf16.mxu0 0
        %2657 = vmatpush1.bf16.msra.mxu0 0
        %2658 = vmatprep.subr.bf16.mxu0 0
        %2659 = vmatpush1.bf16.msra.mxu0 0
        %2660 = vmatprep.subr.bf16.mxu0 0
        %2661 = vmatpush1.bf16.msra.mxu0 0
        %2662 = vmatprep.subr.bf16.mxu0 0
        %2663 = vmatpush1.bf16.msra.mxu0 0
        %2664 = vmatprep.subr.bf16.mxu0 0
        %2665 = vmatpush1.bf16.msra.mxu0 0
        %2666 = vmatprep.subr.bf16.mxu0 0
        %2667 = vmatpush1.bf16.msra.mxu0 0
        %2668 = vmatprep.subr.bf16.mxu0 0
        %2669 = vmatpush1.bf16.msra.mxu0 0
        %2670 = vmatprep.subr.bf16.mxu0 0
        %2671 = vmatpush1.bf16.msra.mxu0 0
        %2672 = vmatprep.subr.bf16.mxu0 0
        %2673 = vmatpush1.bf16.msra.mxu0 0
        %2674 = vmatprep.mubr.bf16.mxu0 0
        %2675 = vmatmul.mubr.bf16.gmra.mrb[0].mxu0 %v2592
        %v2676 = vpop.f32.mrb[0].mxu0
        %v2677 = vadd.f32 0.0, %v2676
        %v2678 = vpop.f32.mrb[0].mxu0
        %v2679 = vpop.f32.mrb[0].mxu0
        %v2680 = vadd.f32 0.0, %v2679
        %v2681 = vpop.f32.mrb[0].mxu0
        %2682 = vmatprep.mubr.bf16.mxu0 0
        %2683 = vmatmul.mubr.bf16.gmra.mrb[0].mxu0 %v2595
        %v2684 = vpop.f32.mrb[0].mxu0
        %v2685 = vadd.f32 0.0, %v2684
        %v2686 = vpop.f32.mrb[0].mxu0
        %v2687 = vpop.f32.mrb[0].mxu0
        %v2688 = vadd.f32 0.0, %v2687
        %v2689 = vpop.f32.mrb[0].mxu0
        %2690 = vmatprep.mubr.bf16.mxu0 0
        %2691 = vmatmul.mubr.bf16.gmra.mrb[0].mxu0 %v2598
        %v2692 = vpop.f32.mrb[0].mxu0
        %v2693 = vadd.f32 0.0, %v2692
        %v2694 = vpop.f32.mrb[0].mxu0
        %v2695 = vpop.f32.mrb[0].mxu0
        %v2696 = vadd.f32 0.0, %v2695
        %v2697 = vpop.f32.mrb[0].mxu0
        %2698 = vmatprep.mubr.bf16.mxu0 0
        %2699 = vmatmul.mubr.bf16.gmra.mrb[0].mxu0 %v2601
        %v2700 = vpop.f32.mrb[0].mxu0
        %v2701 = vadd.f32 0.0, %v2700
        %v2702 = vpop.f32.mrb[0].mxu0
        %v2703 = vpop.f32.mrb[0].mxu0
        %v2704 = vadd.f32 0.0, %v2703
        %v2705 = vpop.f32.mrb[0].mxu0
        %2706 = vmatprep.mubr.bf16.mxu0 0
        %2707 = vmatmul.mubr.bf16.gmra.mrb[0].mxu0 %v2604
        %v2708 = vpop.f32.mrb[0].mxu0
        %v2709 = vadd.f32 0.0, %v2708
        %v2710 = vpop.f32.mrb[0].mxu0
        %v2711 = vpop.f32.mrb[0].mxu0
        %v2712 = vadd.f32 0.0, %v2711
        %v2713 = vpop.f32.mrb[0].mxu0
        %2714 = vmatprep.mubr.bf16.mxu0 0
        %2715 = vmatmul.mubr.bf16.gmra.mrb[0].mxu0 %v2607
        %v2716 = vpop.f32.mrb[0].mxu0
        %v2717 = vadd.f32 0.0, %v2716
        %v2718 = vpop.f32.mrb[0].mxu0
        %v2719 = vpop.f32.mrb[0].mxu0
        %v2720 = vadd.f32 0.0, %v2719
        %v2721 = vpop.f32.mrb[0].mxu0
        %2722 = vmatprep.mubr.bf16.mxu0 0
        %2723 = vmatmul.mubr.bf16.gmra.mrb[0].mxu0 %v2610
        %v2724 = vpop.f32.mrb[0].mxu0
        %v2725 = vadd.f32 0.0, %v2724
        %v2726 = vpop.f32.mrb[0].mxu0
        %v2727 = vpop.f32.mrb[0].mxu0
        %v2728 = vadd.f32 0.0, %v2727
        %v2729 = vpop.f32.mrb[0].mxu0
        %2730 = vmatprep.mubr.bf16.mxu0 0
        %2731 = vmatmul.mubr.bf16.gmra.mrb[0].mxu0 %v2613
        %v2732 = vpop.f32.mrb[0].mxu0
        %v2733 = vadd.f32 0.0, %v2732
        %v2734 = vpop.f32.mrb[0].mxu0
        %v2735 = vpop.f32.mrb[0].mxu0
        %v2736 = vadd.f32 0.0, %v2735
        %v2737 = vpop.f32.mrb[0].mxu0
        %2738 = vmatprep.mubr.bf16.mxu0 0
        %2739 = vmatmul.mubr.bf16.gmra.mrb[0].mxu0 %v2616
        %v2740 = vpop.f32.mrb[0].mxu0
        %v2741 = vadd.f32 0.0, %v2740
        %v2742 = vpop.f32.mrb[0].mxu0
        %v2743 = vpop.f32.mrb[0].mxu0
        %v2744 = vadd.f32 0.0, %v2743
        %v2745 = vpop.f32.mrb[0].mxu0
        %2746 = vmatprep.mubr.bf16.mxu0 0
        %2747 = vmatmul.mubr.bf16.gmra.mrb[0].mxu0 %v2619
        %v2748 = vpop.f32.mrb[0].mxu0
        %v2749 = vadd.f32 0.0, %v2748
        %v2750 = vpop.f32.mrb[0].mxu0
        %v2751 = vpop.f32.mrb[0].mxu0
        %v2752 = vadd.f32 0.0, %v2751
        %v2753 = vpop.f32.mrb[0].mxu0
        %2754 = vmatprep.mubr.bf16.mxu0 0
        %2755 = vmatmul.mubr.bf16.gmra.mrb[0].mxu0 %v2622
        %v2756 = vpop.f32.mrb[0].mxu0
        %v2757 = vadd.f32 0.0, %v2756
        %v2758 = vpop.f32.mrb[0].mxu0
        %v2759 = vpop.f32.mrb[0].mxu0
        %v2760 = vadd.f32 0.0, %v2759
        %v2761 = vpop.f32.mrb[0].mxu0
        %2762 = vmatprep.mubr.bf16.mxu0 0
        %2763 = vmatmul.mubr.bf16.gmra.mrb[0].mxu0 %v2625
        %v2764 = vpop.f32.mrb[0].mxu0
        %v2765 = vadd.f32 0.0, %v2764
        %v2766 = vpop.f32.mrb[0].mxu0
        %v2767 = vpop.f32.mrb[0].mxu0
        %v2768 = vadd.f32 0.0, %v2767
        %v2769 = vpop.f32.mrb[0].mxu0
        %2770 = vmatprep.mubr.bf16.mxu0 0
        %2771 = vmatmul.mubr.bf16.gmra.mrb[0].mxu0 %v2628
        %v2772 = vpop.f32.mrb[0].mxu0
        %v2773 = vadd.f32 0.0, %v2772
        %v2774 = vpop.f32.mrb[0].mxu0
        %v2775 = vpop.f32.mrb[0].mxu0
        %v2776 = vadd.f32 0.0, %v2775
        %v2777 = vpop.f32.mrb[0].mxu0
        %2778 = vmatprep.mubr.bf16.mxu0 0
        %2779 = vmatmul.mubr.bf16.gmra.mrb[0].mxu0 %v2631
        %v2780 = vpop.f32.mrb[0].mxu0
        %v2781 = vadd.f32 0.0, %v2780
        %v2782 = vpop.f32.mrb[0].mxu0
        %v2783 = vpop.f32.mrb[0].mxu0
        %v2784 = vadd.f32 0.0, %v2783
        %v2785 = vpop.f32.mrb[0].mxu0
        %2786 = vmatprep.mubr.bf16.mxu0 0
        %2787 = vmatmul.mubr.bf16.gmra.mrb[0].mxu0 %v2634
        %v2788 = vpop.f32.mrb[0].mxu0
        %v2789 = vadd.f32 0.0, %v2788
        %v2790 = vpop.f32.mrb[0].mxu0
        %v2791 = vpop.f32.mrb[0].mxu0
        %v2792 = vadd.f32 0.0, %v2791
        %v2793 = vpop.f32.mrb[0].mxu0
        %2794 = vmatprep.mubr.bf16.mxu0 0
        %2795 = vmatmul.mubr.bf16.gmra.mrb[0].mxu0 %v2637
        %v2796 = vpop.f32.mrb[0].mxu0
        %v2797 = vadd.f32 0.0, %v2796
        %v2798 = vpop.f32.mrb[0].mxu0
        %v2799 = vpop.f32.mrb[0].mxu0
        %v2800 = vadd.f32 0.0, %v2799
        %v2801 = vpop.f32.mrb[0].mxu0
        %2802 = vdwg.mxu0
        %v2803 = vpack.c.bf16 %v2680, %v2677
        %v2804 = vpack.c.bf16 %v2688, %v2685
        %v2805 = vpack.c.bf16 %v2696, %v2693
        %v2806 = vpack.c.bf16 %v2704, %v2701
        %v2807 = vpack.c.bf16 %v2712, %v2709
        %v2808 = vpack.c.bf16 %v2720, %v2717
        %v2809 = vpack.c.bf16 %v2728, %v2725
        %v2810 = vpack.c.bf16 %v2736, %v2733
        %v2811 = vpack.c.bf16 %v2744, %v2741
        %v2812 = vpack.c.bf16 %v2752, %v2749
        %v2813 = vpack.c.bf16 %v2760, %v2757
        %v2814 = vpack.c.bf16 %v2768, %v2765
        %v2815 = vpack.c.bf16 %v2776, %v2773
        %v2816 = vpack.c.bf16 %v2784, %v2781
        %v2817 = vpack.c.bf16 %v2792, %v2789
        %v2818 = vpack.c.bf16 %v2800, %v2797
        %v2819 = vld [vmem:[%s14 + $0x8] sm:$0xf]
        %v2820 = vld [vmem:[%s14 + $0xc] sm:$0xf]
        %v2823 = vunpack.c.l.b16 %v2819
        %v2824 = vunpack.c.l.b16 %v2820
        %v2825 = vpack.c.b16 %v2824, %v2823
        %v2828 = vsel %vm1980, %v2803, 0
        %v2831 = vsel %vm1980, %v2804, 0
        %v2834 = vsel %vm1980, %v2805, 0
        %v2837 = vsel %vm1980, %v2806, 0
        %v2840 = vsel %vm1980, %v2807, 0
        %v2843 = vsel %vm1980, %v2808, 0
        %v2846 = vsel %vm1980, %v2809, 0
        %v2849 = vsel %vm1980, %v2810, 0
        %v2852 = vsel %vm1980, %v2811, 0
        %v2855 = vsel %vm1980, %v2812, 0
        %v2858 = vsel %vm1980, %v2813, 0
        %v2861 = vsel %vm1980, %v2814, 0
        %v2864 = vsel %vm1980, %v2815, 0
        %v2867 = vsel %vm1980, %v2816, 0
        %v2870 = vsel %vm1980, %v2817, 0
        %v2873 = vsel %vm1980, %v2818, 0
        %2875 = vmatprep.subr.bf16.mxu0 0
        %2876 = vmatpush1.bf16.msra.mxu0 %v2825
        %2877 = vmatprep.subr.bf16.mxu0 0
        %2878 = vmatpush1.bf16.msra.mxu0 0
        %2879 = vmatprep.subr.bf16.mxu0 0
        %2880 = vmatpush1.bf16.msra.mxu0 0
        %2881 = vmatprep.subr.bf16.mxu0 0
        %2882 = vmatpush1.bf16.msra.mxu0 0
        %2883 = vmatprep.subr.bf16.mxu0 0
        %2884 = vmatpush1.bf16.msra.mxu0 0
        %2885 = vmatprep.subr.bf16.mxu0 0
        %2886 = vmatpush1.bf16.msra.mxu0 0
        %2887 = vmatprep.subr.bf16.mxu0 0
        %2888 = vmatpush1.bf16.msra.mxu0 0
        %2889 = vmatprep.subr.bf16.mxu0 0
        %2890 = vmatpush1.bf16.msra.mxu0 0
        %2891 = vmatprep.subr.bf16.mxu0 0
        %2892 = vmatpush1.bf16.msra.mxu0 0
        %2893 = vmatprep.subr.bf16.mxu0 0
        %2894 = vmatpush1.bf16.msra.mxu0 0
        %2895 = vmatprep.subr.bf16.mxu0 0
        %2896 = vmatpush1.bf16.msra.mxu0 0
        %2897 = vmatprep.subr.bf16.mxu0 0
        %2898 = vmatpush1.bf16.msra.mxu0 0
        %2899 = vmatprep.subr.bf16.mxu0 0
        %2900 = vmatpush1.bf16.msra.mxu0 0
        %2901 = vmatprep.subr.bf16.mxu0 0
        %2902 = vmatpush1.bf16.msra.mxu0 0
        %2903 = vmatprep.subr.bf16.mxu0 0
        %2904 = vmatpush1.bf16.msra.mxu0 0
        %2905 = vmatprep.subr.bf16.mxu0 0
        %2906 = vmatpush1.bf16.msra.mxu0 0
        %2907 = vmatprep.mubr.bf16.mxu0 0
        %2908 = vmatmul.mubr.bf16.gmra.mrb[0].mxu0 %v2828
        %v2909 = vpop.f32.mrb[0].mxu0
        %v2910 = vadd.f32 0.0, %v2909
        %v2911 = vpop.f32.mrb[0].mxu0
        %v2912 = vpop.f32.mrb[0].mxu0
        %v2913 = vadd.f32 0.0, %v2912
        %v2914 = vpop.f32.mrb[0].mxu0
        %2915 = vmatprep.mubr.bf16.mxu0 0
        %2916 = vmatmul.mubr.bf16.gmra.mrb[0].mxu0 %v2831
        %v2917 = vpop.f32.mrb[0].mxu0
        %v2918 = vadd.f32 0.0, %v2917
        %v2919 = vpop.f32.mrb[0].mxu0
        %v2920 = vpop.f32.mrb[0].mxu0
        %v2921 = vadd.f32 0.0, %v2920
        %v2922 = vpop.f32.mrb[0].mxu0
        %2923 = vmatprep.mubr.bf16.mxu0 0
        %2924 = vmatmul.mubr.bf16.gmra.mrb[0].mxu0 %v2834
        %v2925 = vpop.f32.mrb[0].mxu0
        %v2926 = vadd.f32 0.0, %v2925
        %v2927 = vpop.f32.mrb[0].mxu0
        %v2928 = vpop.f32.mrb[0].mxu0
        %v2929 = vadd.f32 0.0, %v2928
        %v2930 = vpop.f32.mrb[0].mxu0
        %2931 = vmatprep.mubr.bf16.mxu0 0
        %2932 = vmatmul.mubr.bf16.gmra.mrb[0].mxu0 %v2837
        %v2933 = vpop.f32.mrb[0].mxu0
        %v2934 = vadd.f32 0.0, %v2933
        %v2935 = vpop.f32.mrb[0].mxu0
        %v2936 = vpop.f32.mrb[0].mxu0
        %v2937 = vadd.f32 0.0, %v2936
        %v2938 = vpop.f32.mrb[0].mxu0
        %2939 = vmatprep.mubr.bf16.mxu0 0
        %2940 = vmatmul.mubr.bf16.gmra.mrb[0].mxu0 %v2840
        %v2941 = vpop.f32.mrb[0].mxu0
        %v2942 = vadd.f32 0.0, %v2941
        %v2943 = vpop.f32.mrb[0].mxu0
        %v2944 = vpop.f32.mrb[0].mxu0
        %v2945 = vadd.f32 0.0, %v2944
        %v2946 = vpop.f32.mrb[0].mxu0
        %2947 = vmatprep.mubr.bf16.mxu0 0
        %2948 = vmatmul.mubr.bf16.gmra.mrb[0].mxu0 %v2843
        %v2949 = vpop.f32.mrb[0].mxu0
        %v2950 = vadd.f32 0.0, %v2949
        %v2951 = vpop.f32.mrb[0].mxu0
        %v2952 = vpop.f32.mrb[0].mxu0
        %v2953 = vadd.f32 0.0, %v2952
        %v2954 = vpop.f32.mrb[0].mxu0
        %2955 = vmatprep.mubr.bf16.mxu0 0
        %2956 = vmatmul.mubr.bf16.gmra.mrb[0].mxu0 %v2846
        %v2957 = vpop.f32.mrb[0].mxu0
        %v2958 = vadd.f32 0.0, %v2957
        %v2959 = vpop.f32.mrb[0].mxu0
        %v2960 = vpop.f32.mrb[0].mxu0
        %v2961 = vadd.f32 0.0, %v2960
        %v2962 = vpop.f32.mrb[0].mxu0
        %2963 = vmatprep.mubr.bf16.mxu0 0
        %2964 = vmatmul.mubr.bf16.gmra.mrb[0].mxu0 %v2849
        %v2965 = vpop.f32.mrb[0].mxu0
        %v2966 = vadd.f32 0.0, %v2965
        %v2967 = vpop.f32.mrb[0].mxu0
        %v2968 = vpop.f32.mrb[0].mxu0
        %v2969 = vadd.f32 0.0, %v2968
        %v2970 = vpop.f32.mrb[0].mxu0
        %2971 = vmatprep.mubr.bf16.mxu0 0
        %2972 = vmatmul.mubr.bf16.gmra.mrb[0].mxu0 %v2852
        %v2973 = vpop.f32.mrb[0].mxu0
        %v2974 = vadd.f32 0.0, %v2973
        %v2975 = vpop.f32.mrb[0].mxu0
        %v2976 = vpop.f32.mrb[0].mxu0
        %v2977 = vadd.f32 0.0, %v2976
        %v2978 = vpop.f32.mrb[0].mxu0
        %2979 = vmatprep.mubr.bf16.mxu0 0
        %2980 = vmatmul.mubr.bf16.gmra.mrb[0].mxu0 %v2855
        %v2981 = vpop.f32.mrb[0].mxu0
        %v2982 = vadd.f32 0.0, %v2981
        %v2983 = vpop.f32.mrb[0].mxu0
        %v2984 = vpop.f32.mrb[0].mxu0
        %v2985 = vadd.f32 0.0, %v2984
        %v2986 = vpop.f32.mrb[0].mxu0
        %2987 = vmatprep.mubr.bf16.mxu0 0
        %2988 = vmatmul.mubr.bf16.gmra.mrb[0].mxu0 %v2858
        %v2989 = vpop.f32.mrb[0].mxu0
        %v2990 = vadd.f32 0.0, %v2989
        %v2991 = vpop.f32.mrb[0].mxu0
        %v2992 = vpop.f32.mrb[0].mxu0
        %v2993 = vadd.f32 0.0, %v2992
        %v2994 = vpop.f32.mrb[0].mxu0
        %2995 = vmatprep.mubr.bf16.mxu0 0
        %2996 = vmatmul.mubr.bf16.gmra.mrb[0].mxu0 %v2861
        %v2997 = vpop.f32.mrb[0].mxu0
        %v2998 = vadd.f32 0.0, %v2997
        %v2999 = vpop.f32.mrb[0].mxu0
        %v3000 = vpop.f32.mrb[0].mxu0
        %v3001 = vadd.f32 0.0, %v3000
        %v3002 = vpop.f32.mrb[0].mxu0
        %3003 = vmatprep.mubr.bf16.mxu0 0
        %3004 = vmatmul.mubr.bf16.gmra.mrb[0].mxu0 %v2864
        %v3005 = vpop.f32.mrb[0].mxu0
        %v3006 = vadd.f32 0.0, %v3005
        %v3007 = vpop.f32.mrb[0].mxu0
        %v3008 = vpop.f32.mrb[0].mxu0
        %v3009 = vadd.f32 0.0, %v3008
        %v3010 = vpop.f32.mrb[0].mxu0
        %3011 = vmatprep.mubr.bf16.mxu0 0
        %3012 = vmatmul.mubr.bf16.gmra.mrb[0].mxu0 %v2867
        %v3013 = vpop.f32.mrb[0].mxu0
        %v3014 = vadd.f32 0.0, %v3013
        %v3015 = vpop.f32.mrb[0].mxu0
        %v3016 = vpop.f32.mrb[0].mxu0
        %v3017 = vadd.f32 0.0, %v3016
        %v3018 = vpop.f32.mrb[0].mxu0
        %3019 = vmatprep.mubr.bf16.mxu0 0
        %3020 = vmatmul.mubr.bf16.gmra.mrb[0].mxu0 %v2870
        %v3021 = vpop.f32.mrb[0].mxu0
        %v3022 = vadd.f32 0.0, %v3021
        %v3023 = vpop.f32.mrb[0].mxu0
        %v3024 = vpop.f32.mrb[0].mxu0
        %v3025 = vadd.f32 0.0, %v3024
        %v3026 = vpop.f32.mrb[0].mxu0
        %3027 = vmatprep.mubr.bf16.mxu0 0
        %3028 = vmatmul.mubr.bf16.gmra.mrb[0].mxu0 %v2873
        %v3029 = vpop.f32.mrb[0].mxu0
        %v3030 = vadd.f32 0.0, %v3029
        %v3031 = vpop.f32.mrb[0].mxu0
        %v3032 = vpop.f32.mrb[0].mxu0
        %v3033 = vadd.f32 0.0, %v3032
        %v3034 = vpop.f32.mrb[0].mxu0
        %3035 = vdwg.mxu0
        %v3038 = vunpack.c.l.b16 %v2371
        %v3039 = vunpack.c.l.b16 %v2372
        %v3040 = vpack.c.b16 %v3039, %v3038
        %v3043 = vsel %vm1980, %v2355, 0
        %v3046 = vsel %vm1980, %v2356, 0
        %v3049 = vsel %vm1980, %v2357, 0
        %v3052 = vsel %vm1980, %v2358, 0
        %v3055 = vsel %vm1980, %v2359, 0
        %v3058 = vsel %vm1980, %v2360, 0
        %v3061 = vsel %vm1980, %v2361, 0
        %v3064 = vsel %vm1980, %v2362, 0
        %v3067 = vsel %vm1980, %v2363, 0
        %v3070 = vsel %vm1980, %v2364, 0
        %v3073 = vsel %vm1980, %v2365, 0
        %v3076 = vsel %vm1980, %v2366, 0
        %v3079 = vsel %vm1980, %v2367, 0
        %v3082 = vsel %vm1980, %v2368, 0
        %v3085 = vsel %vm1980, %v2369, 0
        %v3088 = vsel %vm1980, %v2370, 0
        %3090 = vmatprep.subr.bf16.mxu0 0
        %3091 = vmatpush1.bf16.msra.mxu0 %v3040
        %3092 = vmatprep.subr.bf16.mxu0 0
        %3093 = vmatpush1.bf16.msra.mxu0 0
        %3094 = vmatprep.subr.bf16.mxu0 0
        %3095 = vmatpush1.bf16.msra.mxu0 0
        %3096 = vmatprep.subr.bf16.mxu0 0
        %3097 = vmatpush1.bf16.msra.mxu0 0
        %3098 = vmatprep.subr.bf16.mxu0 0
        %3099 = vmatpush1.bf16.msra.mxu0 0
        %3100 = vmatprep.subr.bf16.mxu0 0
        %3101 = vmatpush1.bf16.msra.mxu0 0
        %3102 = vmatprep.subr.bf16.mxu0 0
        %3103 = vmatpush1.bf16.msra.mxu0 0
        %3104 = vmatprep.subr.bf16.mxu0 0
        %3105 = vmatpush1.bf16.msra.mxu0 0
        %3106 = vmatprep.subr.bf16.mxu0 0
        %3107 = vmatpush1.bf16.msra.mxu0 0
        %3108 = vmatprep.subr.bf16.mxu0 0
        %3109 = vmatpush1.bf16.msra.mxu0 0
        %3110 = vmatprep.subr.bf16.mxu0 0
        %3111 = vmatpush1.bf16.msra.mxu0 0
        %3112 = vmatprep.subr.bf16.mxu0 0
        %3113 = vmatpush1.bf16.msra.mxu0 0
        %3114 = vmatprep.subr.bf16.mxu0 0
        %3115 = vmatpush1.bf16.msra.mxu0 0
        %3116 = vmatprep.subr.bf16.mxu0 0
        %3117 = vmatpush1.bf16.msra.mxu0 0
        %3118 = vmatprep.subr.bf16.mxu0 0
        %3119 = vmatpush1.bf16.msra.mxu0 0
        %3120 = vmatprep.subr.bf16.mxu0 0
        %3121 = vmatpush1.bf16.msra.mxu0 0
        %3122 = vmatprep.mubr.bf16.mxu0 0
        %3123 = vmatmul.mubr.bf16.gmra.mrb[0].mxu0 %v3043
        %v3124 = vpop.f32.mrb[0].mxu0
        %v3125 = vadd.f32 %v2910, %v3124
        %v3126 = vpop.f32.mrb[0].mxu0
        %v3127 = vpop.f32.mrb[0].mxu0
        %v3128 = vadd.f32 %v2913, %v3127
        %v3129 = vpop.f32.mrb[0].mxu0
        %3130 = vmatprep.mubr.bf16.mxu0 0
        %3131 = vmatmul.mubr.bf16.gmra.mrb[0].mxu0 %v3046
        %v3132 = vpop.f32.mrb[0].mxu0
        %v3133 = vadd.f32 %v2918, %v3132
        %v3134 = vpop.f32.mrb[0].mxu0
        %v3135 = vpop.f32.mrb[0].mxu0
        %v3136 = vadd.f32 %v2921, %v3135
        %v3137 = vpop.f32.mrb[0].mxu0
        %3138 = vmatprep.mubr.bf16.mxu0 0
        %3139 = vmatmul.mubr.bf16.gmra.mrb[0].mxu0 %v3049
        %v3140 = vpop.f32.mrb[0].mxu0
        %v3141 = vadd.f32 %v2926, %v3140
        %v3142 = vpop.f32.mrb[0].mxu0
        %v3143 = vpop.f32.mrb[0].mxu0
        %v3144 = vadd.f32 %v2929, %v3143
        %v3145 = vpop.f32.mrb[0].mxu0
        %3146 = vmatprep.mubr.bf16.mxu0 0
        %3147 = vmatmul.mubr.bf16.gmra.mrb[0].mxu0 %v3052
        %v3148 = vpop.f32.mrb[0].mxu0
        %v3149 = vadd.f32 %v2934, %v3148
        %v3150 = vpop.f32.mrb[0].mxu0
        %v3151 = vpop.f32.mrb[0].mxu0
        %v3152 = vadd.f32 %v2937, %v3151
        %v3153 = vpop.f32.mrb[0].mxu0
        %3154 = vmatprep.mubr.bf16.mxu0 0
        %3155 = vmatmul.mubr.bf16.gmra.mrb[0].mxu0 %v3055
        %v3156 = vpop.f32.mrb[0].mxu0
        %v3157 = vadd.f32 %v2942, %v3156
        %v3158 = vpop.f32.mrb[0].mxu0
        %v3159 = vpop.f32.mrb[0].mxu0
        %v3160 = vadd.f32 %v2945, %v3159
        %v3161 = vpop.f32.mrb[0].mxu0
        %3162 = vmatprep.mubr.bf16.mxu0 0
        %3163 = vmatmul.mubr.bf16.gmra.mrb[0].mxu0 %v3058
        %v3164 = vpop.f32.mrb[0].mxu0
        %v3165 = vadd.f32 %v2950, %v3164
        %v3166 = vpop.f32.mrb[0].mxu0
        %v3167 = vpop.f32.mrb[0].mxu0
        %v3168 = vadd.f32 %v2953, %v3167
        %v3169 = vpop.f32.mrb[0].mxu0
        %3170 = vmatprep.mubr.bf16.mxu0 0
        %3171 = vmatmul.mubr.bf16.gmra.mrb[0].mxu0 %v3061
        %v3172 = vpop.f32.mrb[0].mxu0
        %v3173 = vadd.f32 %v2958, %v3172
        %v3174 = vpop.f32.mrb[0].mxu0
        %v3175 = vpop.f32.mrb[0].mxu0
        %v3176 = vadd.f32 %v2961, %v3175
        %v3177 = vpop.f32.mrb[0].mxu0
        %3178 = vmatprep.mubr.bf16.mxu0 0
        %3179 = vmatmul.mubr.bf16.gmra.mrb[0].mxu0 %v3064
        %v3180 = vpop.f32.mrb[0].mxu0
        %v3181 = vadd.f32 %v2966, %v3180
        %v3182 = vpop.f32.mrb[0].mxu0
        %v3183 = vpop.f32.mrb[0].mxu0
        %v3184 = vadd.f32 %v2969, %v3183
        %v3185 = vpop.f32.mrb[0].mxu0
        %3186 = vmatprep.mubr.bf16.mxu0 0
        %3187 = vmatmul.mubr.bf16.gmra.mrb[0].mxu0 %v3067
        %v3188 = vpop.f32.mrb[0].mxu0
        %v3189 = vadd.f32 %v2974, %v3188
        %v3190 = vpop.f32.mrb[0].mxu0
        %v3191 = vpop.f32.mrb[0].mxu0
        %v3192 = vadd.f32 %v2977, %v3191
        %v3193 = vpop.f32.mrb[0].mxu0
        %3194 = vmatprep.mubr.bf16.mxu0 0
        %3195 = vmatmul.mubr.bf16.gmra.mrb[0].mxu0 %v3070
        %v3196 = vpop.f32.mrb[0].mxu0
        %v3197 = vadd.f32 %v2982, %v3196
        %v3198 = vpop.f32.mrb[0].mxu0
        %v3199 = vpop.f32.mrb[0].mxu0
        %v3200 = vadd.f32 %v2985, %v3199
        %v3201 = vpop.f32.mrb[0].mxu0
        %3202 = vmatprep.mubr.bf16.mxu0 0
        %3203 = vmatmul.mubr.bf16.gmra.mrb[0].mxu0 %v3073
        %v3204 = vpop.f32.mrb[0].mxu0
        %v3205 = vadd.f32 %v2990, %v3204
        %v3206 = vpop.f32.mrb[0].mxu0
        %v3207 = vpop.f32.mrb[0].mxu0
        %v3208 = vadd.f32 %v2993, %v3207
        %v3209 = vpop.f32.mrb[0].mxu0
        %3210 = vmatprep.mubr.bf16.mxu0 0
        %3211 = vmatmul.mubr.bf16.gmra.mrb[0].mxu0 %v3076
        %v3212 = vpop.f32.mrb[0].mxu0
        %v3213 = vadd.f32 %v2998, %v3212
        %v3214 = vpop.f32.mrb[0].mxu0
        %v3215 = vpop.f32.mrb[0].mxu0
        %v3216 = vadd.f32 %v3001, %v3215
        %v3217 = vpop.f32.mrb[0].mxu0
        %3218 = vmatprep.mubr.bf16.mxu0 0
        %3219 = vmatmul.mubr.bf16.gmra.mrb[0].mxu0 %v3079
        %v3220 = vpop.f32.mrb[0].mxu0
        %v3221 = vadd.f32 %v3006, %v3220
        %v3222 = vpop.f32.mrb[0].mxu0
        %v3223 = vpop.f32.mrb[0].mxu0
        %v3224 = vadd.f32 %v3009, %v3223
        %v3225 = vpop.f32.mrb[0].mxu0
        %3226 = vmatprep.mubr.bf16.mxu0 0
        %3227 = vmatmul.mubr.bf16.gmra.mrb[0].mxu0 %v3082
        %v3228 = vpop.f32.mrb[0].mxu0
        %v3229 = vadd.f32 %v3014, %v3228
        %v3230 = vpop.f32.mrb[0].mxu0
        %v3231 = vpop.f32.mrb[0].mxu0
        %v3232 = vadd.f32 %v3017, %v3231
        %v3233 = vpop.f32.mrb[0].mxu0
        %3234 = vmatprep.mubr.bf16.mxu0 0
        %3235 = vmatmul.mubr.bf16.gmra.mrb[0].mxu0 %v3085
        %v3236 = vpop.f32.mrb[0].mxu0
        %v3237 = vadd.f32 %v3022, %v3236
        %v3238 = vpop.f32.mrb[0].mxu0
        %v3239 = vpop.f32.mrb[0].mxu0
        %v3240 = vadd.f32 %v3025, %v3239
        %v3241 = vpop.f32.mrb[0].mxu0
        %3242 = vmatprep.mubr.bf16.mxu0 0
        %3243 = vmatmul.mubr.bf16.gmra.mrb[0].mxu0 %v3088
        %v3244 = vpop.f32.mrb[0].mxu0
        %v3245 = vadd.f32 %v3030, %v3244
        %v3246 = vpop.f32.mrb[0].mxu0
        %v3247 = vpop.f32.mrb[0].mxu0
        %v3248 = vadd.f32 %v3033, %v3247
        %v3249 = vpop.f32.mrb[0].mxu0
        %3250 = vdwg.mxu0
        %3251 = vrot.lane.b32.xlu0 %v2375, 96
        %v3252 = vpop.permute.xlu0 %3251
        %3253 = vrot.lane.b32.xlu0 %v1964, 96
        %v3254 = vpop.permute.xlu0 %3253
        %3255 = vrot.lane.b32.xlu0 %v1965, 96
        %v3256 = vpop.permute.xlu0 %3255
        %3257 = vrot.lane.b32.xlu0 %v1966, 96
        %v3258 = vpop.permute.xlu0 %3257
        %3259 = vrot.lane.b32.xlu0 %v1967, 96
        %v3260 = vpop.permute.xlu0 %3259
        %3261 = vrot.lane.b32.xlu0 %v1968, 96
        %v3262 = vpop.permute.xlu0 %3261
        %3263 = vrot.lane.b32.xlu0 %v1969, 96
        %v3264 = vpop.permute.xlu0 %3263
        %3265 = vrot.lane.b32.xlu0 %v1970, 96
        %v3266 = vpop.permute.xlu0 %3265
        %3267 = vrot.lane.b32.xlu0 %v1971, 96
        %v3268 = vpop.permute.xlu0 %3267
        %3269 = vrot.lane.b32.xlu0 %v1972, 96
        %v3270 = vpop.permute.xlu0 %3269
        %3271 = vrot.lane.b32.xlu0 %v1973, 96
        %v3272 = vpop.permute.xlu0 %3271
        %3273 = vrot.lane.b32.xlu0 %v1974, 96
        %v3274 = vpop.permute.xlu0 %3273
        %3275 = vrot.lane.b32.xlu0 %v1975, 96
        %v3276 = vpop.permute.xlu0 %3275
        %3277 = vrot.lane.b32.xlu0 %v1976, 96
        %v3278 = vpop.permute.xlu0 %3277
        %3279 = vrot.lane.b32.xlu0 %v1977, 96
        %v3280 = vpop.permute.xlu0 %3279
        %3281 = vrot.lane.b32.xlu0 %v1978, 96
        %v3282 = vpop.permute.xlu0 %3281
        %3283 = vrot.lane.b32.xlu0 %v1979, 96
        %v3284 = vpop.permute.xlu0 %3283
        %v3286 = vsel %vm1980, %v3252, 0
        %v3289 = vsel %vm1980, %v3254, 0
        %v3292 = vsel %vm1980, %v3256, 0
        %v3295 = vsel %vm1980, %v3258, 0
        %v3298 = vsel %vm1980, %v3260, 0
        %v3301 = vsel %vm1980, %v3262, 0
        %v3304 = vsel %vm1980, %v3264, 0
        %v3307 = vsel %vm1980, %v3266, 0
        %v3310 = vsel %vm1980, %v3268, 0
        %v3313 = vsel %vm1980, %v3270, 0
        %v3316 = vsel %vm1980, %v3272, 0
        %v3319 = vsel %vm1980, %v3274, 0
        %v3322 = vsel %vm1980, %v3276, 0
        %v3325 = vsel %vm1980, %v3278, 0
        %v3328 = vsel %vm1980, %v3280, 0
        %v3331 = vsel %vm1980, %v3282, 0
        %v3334 = vsel %vm1980, %v3284, 0
        %3336 = vmatprep.subr.bf16.mxu0 0
        %3337 = vmatpush1.bf16.xpose.msra.mxu0 %v3289
        %3338 = vmatprep.subr.bf16.mxu0 0
        %3339 = vmatpush1.bf16.xpose.msra.mxu0 %v3292
        %3340 = vmatprep.subr.bf16.mxu0 0
        %3341 = vmatpush1.bf16.xpose.msra.mxu0 %v3295
        %3342 = vmatprep.subr.bf16.mxu0 0
        %3343 = vmatpush1.bf16.xpose.msra.mxu0 %v3298
        %3344 = vmatprep.subr.bf16.mxu0 0
        %3345 = vmatpush1.bf16.xpose.msra.mxu0 %v3301
        %3346 = vmatprep.subr.bf16.mxu0 0
        %3347 = vmatpush1.bf16.xpose.msra.mxu0 %v3304
        %3348 = vmatprep.subr.bf16.mxu0 0
        %3349 = vmatpush1.bf16.xpose.msra.mxu0 %v3307
        %3350 = vmatprep.subr.bf16.mxu0 0
        %3351 = vmatpush1.bf16.xpose.msra.mxu0 %v3310
        %3352 = vmatprep.subr.bf16.mxu0 0
        %3353 = vmatpush1.bf16.xpose.msra.mxu0 %v3313
        %3354 = vmatprep.subr.bf16.mxu0 0
        %3355 = vmatpush1.bf16.xpose.msra.mxu0 %v3316
        %3356 = vmatprep.subr.bf16.mxu0 0
        %3357 = vmatpush1.bf16.xpose.msra.mxu0 %v3319
        %3358 = vmatprep.subr.bf16.mxu0 0
        %3359 = vmatpush1.bf16.xpose.msra.mxu0 %v3322
        %3360 = vmatprep.subr.bf16.mxu0 0
        %3361 = vmatpush1.bf16.xpose.msra.mxu0 %v3325
        %3362 = vmatprep.subr.bf16.mxu0 0
        %3363 = vmatpush1.bf16.xpose.msra.mxu0 %v3328
        %3364 = vmatprep.subr.bf16.mxu0 0
        %3365 = vmatpush1.bf16.xpose.msra.mxu0 %v3331
        %3366 = vmatprep.subr.bf16.mxu0 0
        %3367 = vmatpush1.bf16.xpose.msra.mxu0 %v3334
        %3368 = vmatprep.mubr.bf16.mxu0 0
        %3369 = vmatmul.mubr.bf16.gmra.mrb[0].mxu0 %v3286
        %v3370 = vpop.f32.mrb[0].mxu0
        %v3371 = vadd.f32 0.0, %v3370
        %v3372 = vpop.f32.mrb[0].mxu0
        %v3373 = vadd.f32 0.0, %v3372
        %v3374 = vpop.f32.mrb[0].mxu0
        %v3375 = vpop.f32.mrb[0].mxu0
        %3376 = vdwg.mxu0
        %v3377 = vrot.slane %v3371, 4
        %v3378 = vmax.f32 %v3371, %v3377
        %v3379 = vrot.slane %v3378, 2
        %v3380 = vmax.f32 %v3378, %v3379
        %v3381 = vrot.slane %v3380, 1
        %v3382 = vmax.f32 %v3380, %v3381
        %v3383 = vrot.slane %v3373, 4
        %v3384 = vmax.f32 %v3373, %v3383
        %v3385 = vrot.slane %v3384, 2
        %v3386 = vmax.f32 %v3384, %v3385
        %v3387 = vrot.slane %v3386, 1
        %v3388 = vmax.f32 %v3386, %v3387
        %v3389 = vsub.f32 %v3371, %v3382
        %v3390 = vsub.f32 %v3373, %v3388
        %v3391 = vmul.f32 %v3389, 1.442695
        %v3392 = vpow.pop %v3391
        %v3393 = vmul.f32 %v3390, 1.442695
        %v3394 = vpow.pop %v3393
        %v3395 = vrot.slane %v3392, 4
        %v3396 = vadd.f32 %v3392, %v3395
        %v3397 = vrot.slane %v3396, 2
        %v3398 = vadd.f32 %v3396, %v3397
        %v3399 = vrot.slane %v3398, 1
        %v3400 = vadd.f32 %v3398, %v3399
        %v3401 = vrot.slane %v3394, 4
        %v3402 = vadd.f32 %v3394, %v3401
        %v3403 = vrot.slane %v3402, 2
        %v3404 = vadd.f32 %v3402, %v3403
        %v3405 = vrot.slane %v3404, 1
        %v3406 = vadd.f32 %v3404, %v3405
        %v3407 = vrcp.pop %v3400
        %v3408 = vrcp.pop %v3406
        %v3409 = vmul.f32 %v3392, %v3407
        %v3410 = vmul.f32 %v3394, %v3408
        %v3411 = vpack.c.bf16 %v3409, %v3409
        %v3412 = vpack.c.bf16 %v3410, %v3410
        %3413 = vxpose.xlu0.c.b16.start [1/8] %v3411, 128
        %3414 = vxpose.xlu0.c.b16.cont [2/8] 0, 128
        %3415 = vxpose.xlu0.c.b16.cont [3/8] 0, 128
        %3416 = vxpose.xlu0.c.b16.cont [4/8] 0, 128
        %3417 = vxpose.xlu0.c.b16.cont [5/8] 0, 128
        %3418 = vxpose.xlu0.c.b16.cont [6/8] 0, 128
        %3419 = vxpose.xlu0.c.b16.cont [7/8] 0, 128
        %3420 = vxpose.xlu0.c.b16.end [8/8] 0, 128
        %v3421 = vpop.trf.xlu0
        %v3422 = vpop.trf.xlu0
        %v3423 = vpop.trf.xlu0
        %v3424 = vpop.trf.xlu0
        %v3425 = vpop.trf.xlu0
        %v3426 = vpop.trf.xlu0
        %v3427 = vpop.trf.xlu0
        %v3428 = vpop.trf.xlu0
        %3429 = vxpose.xlu0.c.b16.start [1/8] %v3412, 128
        %3430 = vxpose.xlu0.c.b16.cont [2/8] 0, 128
        %3431 = vxpose.xlu0.c.b16.cont [3/8] 0, 128
        %3432 = vxpose.xlu0.c.b16.cont [4/8] 0, 128
        %3433 = vxpose.xlu0.c.b16.cont [5/8] 0, 128
        %3434 = vxpose.xlu0.c.b16.cont [6/8] 0, 128
        %3435 = vxpose.xlu0.c.b16.cont [7/8] 0, 128
        %3436 = vxpose.xlu0.c.b16.end [8/8] 0, 128
        %v3437 = vpop.trf.xlu0
        %v3438 = vpop.trf.xlu0
        %v3439 = vpop.trf.xlu0
        %v3440 = vpop.trf.xlu0
        %v3441 = vpop.trf.xlu0
        %v3442 = vpop.trf.xlu0
        %v3443 = vpop.trf.xlu0
        %v3444 = vpop.trf.xlu0
        %3445 = vrot.lane.b32.xlu0 %v2588, 96
        %v3446 = vpop.permute.xlu0 %3445
        %v3448 = vsel %vm2141, %v3421, 0
        %v3451 = vsel %vm2141, %v3422, 0
        %v3454 = vsel %vm2141, %v3423, 0
        %v3457 = vsel %vm2141, %v3424, 0
        %v3460 = vsel %vm2141, %v3425, 0
        %v3463 = vsel %vm2141, %v3426, 0
        %v3466 = vsel %vm2141, %v3427, 0
        %v3469 = vsel %vm2141, %v3428, 0
        %v3472 = vsel %vm2141, %v3437, 0
        %v3475 = vsel %vm2141, %v3438, 0
        %v3478 = vsel %vm2141, %v3439, 0
        %v3481 = vsel %vm2141, %v3440, 0
        %v3484 = vsel %vm2141, %v3441, 0
        %v3487 = vsel %vm2141, %v3442, 0
        %v3490 = vsel %vm2141, %v3443, 0
        %v3493 = vsel %vm2141, %v3444, 0
        %v3496 = vsel %vm2190, %v3446, 0
        %3498 = vmatprep.subr.bf16.mxu0 0
        %3499 = vmatpush1.bf16.msra.mxu0 %v3496
        %3500 = vmatprep.subr.bf16.mxu0 0
        %3501 = vmatpush1.bf16.msra.mxu0 0
        %3502 = vmatprep.subr.bf16.mxu0 0
        %3503 = vmatpush1.bf16.msra.mxu0 0
        %3504 = vmatprep.subr.bf16.mxu0 0
        %3505 = vmatpush1.bf16.msra.mxu0 0
        %3506 = vmatprep.subr.bf16.mxu0 0
        %3507 = vmatpush1.bf16.msra.mxu0 0
        %3508 = vmatprep.subr.bf16.mxu0 0
        %3509 = vmatpush1.bf16.msra.mxu0 0
        %3510 = vmatprep.subr.bf16.mxu0 0
        %3511 = vmatpush1.bf16.msra.mxu0 0
        %3512 = vmatprep.subr.bf16.mxu0 0
        %3513 = vmatpush1.bf16.msra.mxu0 0
        %3514 = vmatprep.subr.bf16.mxu0 0
        %3515 = vmatpush1.bf16.msra.mxu0 0
        %3516 = vmatprep.subr.bf16.mxu0 0
        %3517 = vmatpush1.bf16.msra.mxu0 0
        %3518 = vmatprep.subr.bf16.mxu0 0
        %3519 = vmatpush1.bf16.msra.mxu0 0
        %3520 = vmatprep.subr.bf16.mxu0 0
        %3521 = vmatpush1.bf16.msra.mxu0 0
        %3522 = vmatprep.subr.bf16.mxu0 0
        %3523 = vmatpush1.bf16.msra.mxu0 0
        %3524 = vmatprep.subr.bf16.mxu0 0
        %3525 = vmatpush1.bf16.msra.mxu0 0
        %3526 = vmatprep.subr.bf16.mxu0 0
        %3527 = vmatpush1.bf16.msra.mxu0 0
        %3528 = vmatprep.subr.bf16.mxu0 0
        %3529 = vmatpush1.bf16.msra.mxu0 0
        %3530 = vmatprep.mubr.bf16.mxu0 0
        %3531 = vmatmul.mubr.bf16.gmra.mrb[0].mxu0 %v3448
        %v3532 = vpop.f32.mrb[0].mxu0
        %v3533 = vadd.f32 0.0, %v3532
        %v3534 = vpop.f32.mrb[0].mxu0
        %v3535 = vpop.f32.mrb[0].mxu0
        %v3536 = vadd.f32 0.0, %v3535
        %v3537 = vpop.f32.mrb[0].mxu0
        %3538 = vmatprep.mubr.bf16.mxu0 0
        %3539 = vmatmul.mubr.bf16.gmra.mrb[0].mxu0 %v3451
        %v3540 = vpop.f32.mrb[0].mxu0
        %v3541 = vadd.f32 0.0, %v3540
        %v3542 = vpop.f32.mrb[0].mxu0
        %v3543 = vpop.f32.mrb[0].mxu0
        %v3544 = vadd.f32 0.0, %v3543
        %v3545 = vpop.f32.mrb[0].mxu0
        %3546 = vmatprep.mubr.bf16.mxu0 0
        %3547 = vmatmul.mubr.bf16.gmra.mrb[0].mxu0 %v3454
        %v3548 = vpop.f32.mrb[0].mxu0
        %v3549 = vadd.f32 0.0, %v3548
        %v3550 = vpop.f32.mrb[0].mxu0
        %v3551 = vpop.f32.mrb[0].mxu0
        %v3552 = vadd.f32 0.0, %v3551
        %v3553 = vpop.f32.mrb[0].mxu0
        %3554 = vmatprep.mubr.bf16.mxu0 0
        %3555 = vmatmul.mubr.bf16.gmra.mrb[0].mxu0 %v3457
        %v3556 = vpop.f32.mrb[0].mxu0
        %v3557 = vadd.f32 0.0, %v3556
        %v3558 = vpop.f32.mrb[0].mxu0
        %v3559 = vpop.f32.mrb[0].mxu0
        %v3560 = vadd.f32 0.0, %v3559
        %v3561 = vpop.f32.mrb[0].mxu0
        %3562 = vmatprep.mubr.bf16.mxu0 0
        %3563 = vmatmul.mubr.bf16.gmra.mrb[0].mxu0 %v3460
        %v3564 = vpop.f32.mrb[0].mxu0
        %v3565 = vadd.f32 0.0, %v3564
        %v3566 = vpop.f32.mrb[0].mxu0
        %v3567 = vpop.f32.mrb[0].mxu0
        %v3568 = vadd.f32 0.0, %v3567
        %v3569 = vpop.f32.mrb[0].mxu0
        %3570 = vmatprep.mubr.bf16.mxu0 0
        %3571 = vmatmul.mubr.bf16.gmra.mrb[0].mxu0 %v3463
        %v3572 = vpop.f32.mrb[0].mxu0
        %v3573 = vadd.f32 0.0, %v3572
        %v3574 = vpop.f32.mrb[0].mxu0
        %v3575 = vpop.f32.mrb[0].mxu0
        %v3576 = vadd.f32 0.0, %v3575
        %v3577 = vpop.f32.mrb[0].mxu0
        %3578 = vmatprep.mubr.bf16.mxu0 0
        %3579 = vmatmul.mubr.bf16.gmra.mrb[0].mxu0 %v3466
        %v3580 = vpop.f32.mrb[0].mxu0
        %v3581 = vadd.f32 0.0, %v3580
        %v3582 = vpop.f32.mrb[0].mxu0
        %v3583 = vpop.f32.mrb[0].mxu0
        %v3584 = vadd.f32 0.0, %v3583
        %v3585 = vpop.f32.mrb[0].mxu0
        %3586 = vmatprep.mubr.bf16.mxu0 0
        %3587 = vmatmul.mubr.bf16.gmra.mrb[0].mxu0 %v3469
        %v3588 = vpop.f32.mrb[0].mxu0
        %v3589 = vadd.f32 0.0, %v3588
        %v3590 = vpop.f32.mrb[0].mxu0
        %v3591 = vpop.f32.mrb[0].mxu0
        %v3592 = vadd.f32 0.0, %v3591
        %v3593 = vpop.f32.mrb[0].mxu0
        %3594 = vmatprep.mubr.bf16.mxu0 0
        %3595 = vmatmul.mubr.bf16.gmra.mrb[0].mxu0 %v3472
        %v3596 = vpop.f32.mrb[0].mxu0
        %v3597 = vadd.f32 0.0, %v3596
        %v3598 = vpop.f32.mrb[0].mxu0
        %v3599 = vpop.f32.mrb[0].mxu0
        %v3600 = vadd.f32 0.0, %v3599
        %v3601 = vpop.f32.mrb[0].mxu0
        %3602 = vmatprep.mubr.bf16.mxu0 0
        %3603 = vmatmul.mubr.bf16.gmra.mrb[0].mxu0 %v3475
        %v3604 = vpop.f32.mrb[0].mxu0
        %v3605 = vadd.f32 0.0, %v3604
        %v3606 = vpop.f32.mrb[0].mxu0
        %v3607 = vpop.f32.mrb[0].mxu0
        %v3608 = vadd.f32 0.0, %v3607
        %v3609 = vpop.f32.mrb[0].mxu0
        %3610 = vmatprep.mubr.bf16.mxu0 0
        %3611 = vmatmul.mubr.bf16.gmra.mrb[0].mxu0 %v3478
        %v3612 = vpop.f32.mrb[0].mxu0
        %v3613 = vadd.f32 0.0, %v3612
        %v3614 = vpop.f32.mrb[0].mxu0
        %v3615 = vpop.f32.mrb[0].mxu0
        %v3616 = vadd.f32 0.0, %v3615
        %v3617 = vpop.f32.mrb[0].mxu0
        %3618 = vmatprep.mubr.bf16.mxu0 0
        %3619 = vmatmul.mubr.bf16.gmra.mrb[0].mxu0 %v3481
        %v3620 = vpop.f32.mrb[0].mxu0
        %v3621 = vadd.f32 0.0, %v3620
        %v3622 = vpop.f32.mrb[0].mxu0
        %v3623 = vpop.f32.mrb[0].mxu0
        %v3624 = vadd.f32 0.0, %v3623
        %v3625 = vpop.f32.mrb[0].mxu0
        %3626 = vmatprep.mubr.bf16.mxu0 0
        %3627 = vmatmul.mubr.bf16.gmra.mrb[0].mxu0 %v3484
        %v3628 = vpop.f32.mrb[0].mxu0
        %v3629 = vadd.f32 0.0, %v3628
        %v3630 = vpop.f32.mrb[0].mxu0
        %v3631 = vpop.f32.mrb[0].mxu0
        %v3632 = vadd.f32 0.0, %v3631
        %v3633 = vpop.f32.mrb[0].mxu0
        %3634 = vmatprep.mubr.bf16.mxu0 0
        %3635 = vmatmul.mubr.bf16.gmra.mrb[0].mxu0 %v3487
        %v3636 = vpop.f32.mrb[0].mxu0
        %v3637 = vadd.f32 0.0, %v3636
        %v3638 = vpop.f32.mrb[0].mxu0
        %v3639 = vpop.f32.mrb[0].mxu0
        %v3640 = vadd.f32 0.0, %v3639
        %v3641 = vpop.f32.mrb[0].mxu0
        %3642 = vmatprep.mubr.bf16.mxu0 0
        %3643 = vmatmul.mubr.bf16.gmra.mrb[0].mxu0 %v3490
        %v3644 = vpop.f32.mrb[0].mxu0
        %v3645 = vadd.f32 0.0, %v3644
        %v3646 = vpop.f32.mrb[0].mxu0
        %v3647 = vpop.f32.mrb[0].mxu0
        %v3648 = vadd.f32 0.0, %v3647
        %v3649 = vpop.f32.mrb[0].mxu0
        %3650 = vmatprep.mubr.bf16.mxu0 0
        %3651 = vmatmul.mubr.bf16.gmra.mrb[0].mxu0 %v3493
        %v3652 = vpop.f32.mrb[0].mxu0
        %v3653 = vadd.f32 0.0, %v3652
        %v3654 = vpop.f32.mrb[0].mxu0
        %v3655 = vpop.f32.mrb[0].mxu0
        %v3656 = vadd.f32 0.0, %v3655
        %v3657 = vpop.f32.mrb[0].mxu0
        %3658 = vdwg.mxu0
        %v3659 = vpack.c.bf16 %v3536, %v3533
        %v3660 = vpack.c.bf16 %v3544, %v3541
        %v3661 = vpack.c.bf16 %v3552, %v3549
        %v3662 = vpack.c.bf16 %v3560, %v3557
        %v3663 = vpack.c.bf16 %v3568, %v3565
        %v3664 = vpack.c.bf16 %v3576, %v3573
        %v3665 = vpack.c.bf16 %v3584, %v3581
        %v3666 = vpack.c.bf16 %v3592, %v3589
        %v3667 = vpack.c.bf16 %v3600, %v3597
        %v3668 = vpack.c.bf16 %v3608, %v3605
        %v3669 = vpack.c.bf16 %v3616, %v3613
        %v3670 = vpack.c.bf16 %v3624, %v3621
        %v3671 = vpack.c.bf16 %v3632, %v3629
        %v3672 = vpack.c.bf16 %v3640, %v3637
        %v3673 = vpack.c.bf16 %v3648, %v3645
        %v3674 = vpack.c.bf16 %v3656, %v3653
        %v3675 = vld [vmem:[%s14 + $0x10] sm:$0xf]
        %v3676 = vld [vmem:[%s14 + $0x14] sm:$0xf]
        %v3679 = vunpack.c.l.b16 %v3675
        %v3680 = vunpack.c.l.b16 %v3676
        %v3681 = vpack.c.b16 %v3680, %v3679
        %v3684 = vsel %vm1980, %v3659, 0
        %v3687 = vsel %vm1980, %v3660, 0
        %v3690 = vsel %vm1980, %v3661, 0
        %v3693 = vsel %vm1980, %v3662, 0
        %v3696 = vsel %vm1980, %v3663, 0
        %v3699 = vsel %vm1980, %v3664, 0
        %v3702 = vsel %vm1980, %v3665, 0
        %v3705 = vsel %vm1980, %v3666, 0
        %v3708 = vsel %vm1980, %v3667, 0
        %v3711 = vsel %vm1980, %v3668, 0
        %v3714 = vsel %vm1980, %v3669, 0
        %v3717 = vsel %vm1980, %v3670, 0
        %v3720 = vsel %vm1980, %v3671, 0
        %v3723 = vsel %vm1980, %v3672, 0
        %v3726 = vsel %vm1980, %v3673, 0
        %v3729 = vsel %vm1980, %v3674, 0
        %3731 = vmatprep.subr.bf16.mxu0 0
        %3732 = vmatpush1.bf16.msra.mxu0 %v3681
        %3733 = vmatprep.subr.bf16.mxu0 0
        %3734 = vmatpush1.bf16.msra.mxu0 0
        %3735 = vmatprep.subr.bf16.mxu0 0
        %3736 = vmatpush1.bf16.msra.mxu0 0
        %3737 = vmatprep.subr.bf16.mxu0 0
        %3738 = vmatpush1.bf16.msra.mxu0 0
        %3739 = vmatprep.subr.bf16.mxu0 0
        %3740 = vmatpush1.bf16.msra.mxu0 0
        %3741 = vmatprep.subr.bf16.mxu0 0
        %3742 = vmatpush1.bf16.msra.mxu0 0
        %3743 = vmatprep.subr.bf16.mxu0 0
        %3744 = vmatpush1.bf16.msra.mxu0 0
        %3745 = vmatprep.subr.bf16.mxu0 0
        %3746 = vmatpush1.bf16.msra.mxu0 0
        %3747 = vmatprep.subr.bf16.mxu0 0
        %3748 = vmatpush1.bf16.msra.mxu0 0
        %3749 = vmatprep.subr.bf16.mxu0 0
        %3750 = vmatpush1.bf16.msra.mxu0 0
        %3751 = vmatprep.subr.bf16.mxu0 0
        %3752 = vmatpush1.bf16.msra.mxu0 0
        %3753 = vmatprep.subr.bf16.mxu0 0
        %3754 = vmatpush1.bf16.msra.mxu0 0
        %3755 = vmatprep.subr.bf16.mxu0 0
        %3756 = vmatpush1.bf16.msra.mxu0 0
        %3757 = vmatprep.subr.bf16.mxu0 0
        %3758 = vmatpush1.bf16.msra.mxu0 0
        %3759 = vmatprep.subr.bf16.mxu0 0
        %3760 = vmatpush1.bf16.msra.mxu0 0
        %3761 = vmatprep.subr.bf16.mxu0 0
        %3762 = vmatpush1.bf16.msra.mxu0 0
        %3763 = vmatprep.mubr.bf16.mxu0 0
        %3764 = vmatmul.mubr.bf16.gmra.mrb[0].mxu0 %v3684
        %v3765 = vpop.f32.mrb[0].mxu0
        %v3766 = vadd.f32 0.0, %v3765
        %v3767 = vpop.f32.mrb[0].mxu0
        %v3768 = vpop.f32.mrb[0].mxu0
        %v3769 = vadd.f32 0.0, %v3768
        %v3770 = vpop.f32.mrb[0].mxu0
        %3771 = vmatprep.mubr.bf16.mxu0 0
        %3772 = vmatmul.mubr.bf16.gmra.mrb[0].mxu0 %v3687
        %v3773 = vpop.f32.mrb[0].mxu0
        %v3774 = vadd.f32 0.0, %v3773
        %v3775 = vpop.f32.mrb[0].mxu0
        %v3776 = vpop.f32.mrb[0].mxu0
        %v3777 = vadd.f32 0.0, %v3776
        %v3778 = vpop.f32.mrb[0].mxu0
        %3779 = vmatprep.mubr.bf16.mxu0 0
        %3780 = vmatmul.mubr.bf16.gmra.mrb[0].mxu0 %v3690
        %v3781 = vpop.f32.mrb[0].mxu0
        %v3782 = vadd.f32 0.0, %v3781
        %v3783 = vpop.f32.mrb[0].mxu0
        %v3784 = vpop.f32.mrb[0].mxu0
        %v3785 = vadd.f32 0.0, %v3784
        %v3786 = vpop.f32.mrb[0].mxu0
        %3787 = vmatprep.mubr.bf16.mxu0 0
        %3788 = vmatmul.mubr.bf16.gmra.mrb[0].mxu0 %v3693
        %v3789 = vpop.f32.mrb[0].mxu0
        %v3790 = vadd.f32 0.0, %v3789
        %v3791 = vpop.f32.mrb[0].mxu0
        %v3792 = vpop.f32.mrb[0].mxu0
        %v3793 = vadd.f32 0.0, %v3792
        %v3794 = vpop.f32.mrb[0].mxu0
        %3795 = vmatprep.mubr.bf16.mxu0 0
        %3796 = vmatmul.mubr.bf16.gmra.mrb[0].mxu0 %v3696
        %v3797 = vpop.f32.mrb[0].mxu0
        %v3798 = vadd.f32 0.0, %v3797
        %v3799 = vpop.f32.mrb[0].mxu0
        %v3800 = vpop.f32.mrb[0].mxu0
        %v3801 = vadd.f32 0.0, %v3800
        %v3802 = vpop.f32.mrb[0].mxu0
        %3803 = vmatprep.mubr.bf16.mxu0 0
        %3804 = vmatmul.mubr.bf16.gmra.mrb[0].mxu0 %v3699
        %v3805 = vpop.f32.mrb[0].mxu0
        %v3806 = vadd.f32 0.0, %v3805
        %v3807 = vpop.f32.mrb[0].mxu0
        %v3808 = vpop.f32.mrb[0].mxu0
        %v3809 = vadd.f32 0.0, %v3808
        %v3810 = vpop.f32.mrb[0].mxu0
        %3811 = vmatprep.mubr.bf16.mxu0 0
        %3812 = vmatmul.mubr.bf16.gmra.mrb[0].mxu0 %v3702
        %v3813 = vpop.f32.mrb[0].mxu0
        %v3814 = vadd.f32 0.0, %v3813
        %v3815 = vpop.f32.mrb[0].mxu0
        %v3816 = vpop.f32.mrb[0].mxu0
        %v3817 = vadd.f32 0.0, %v3816
        %v3818 = vpop.f32.mrb[0].mxu0
        %3819 = vmatprep.mubr.bf16.mxu0 0
        %3820 = vmatmul.mubr.bf16.gmra.mrb[0].mxu0 %v3705
        %v3821 = vpop.f32.mrb[0].mxu0
        %v3822 = vadd.f32 0.0, %v3821
        %v3823 = vpop.f32.mrb[0].mxu0
        %v3824 = vpop.f32.mrb[0].mxu0
        %v3825 = vadd.f32 0.0, %v3824
        %v3826 = vpop.f32.mrb[0].mxu0
        %3827 = vmatprep.mubr.bf16.mxu0 0
        %3828 = vmatmul.mubr.bf16.gmra.mrb[0].mxu0 %v3708
        %v3829 = vpop.f32.mrb[0].mxu0
        %v3830 = vadd.f32 0.0, %v3829
        %v3831 = vpop.f32.mrb[0].mxu0
        %v3832 = vpop.f32.mrb[0].mxu0
        %v3833 = vadd.f32 0.0, %v3832
        %v3834 = vpop.f32.mrb[0].mxu0
        %3835 = vmatprep.mubr.bf16.mxu0 0
        %3836 = vmatmul.mubr.bf16.gmra.mrb[0].mxu0 %v3711
        %v3837 = vpop.f32.mrb[0].mxu0
        %v3838 = vadd.f32 0.0, %v3837
        %v3839 = vpop.f32.mrb[0].mxu0
        %v3840 = vpop.f32.mrb[0].mxu0
        %v3841 = vadd.f32 0.0, %v3840
        %v3842 = vpop.f32.mrb[0].mxu0
        %3843 = vmatprep.mubr.bf16.mxu0 0
        %3844 = vmatmul.mubr.bf16.gmra.mrb[0].mxu0 %v3714
        %v3845 = vpop.f32.mrb[0].mxu0
        %v3846 = vadd.f32 0.0, %v3845
        %v3847 = vpop.f32.mrb[0].mxu0
        %v3848 = vpop.f32.mrb[0].mxu0
        %v3849 = vadd.f32 0.0, %v3848
        %v3850 = vpop.f32.mrb[0].mxu0
        %3851 = vmatprep.mubr.bf16.mxu0 0
        %3852 = vmatmul.mubr.bf16.gmra.mrb[0].mxu0 %v3717
        %v3853 = vpop.f32.mrb[0].mxu0
        %v3854 = vadd.f32 0.0, %v3853
        %v3855 = vpop.f32.mrb[0].mxu0
        %v3856 = vpop.f32.mrb[0].mxu0
        %v3857 = vadd.f32 0.0, %v3856
        %v3858 = vpop.f32.mrb[0].mxu0
        %3859 = vmatprep.mubr.bf16.mxu0 0
        %3860 = vmatmul.mubr.bf16.gmra.mrb[0].mxu0 %v3720
        %v3861 = vpop.f32.mrb[0].mxu0
        %v3862 = vadd.f32 0.0, %v3861
        %v3863 = vpop.f32.mrb[0].mxu0
        %v3864 = vpop.f32.mrb[0].mxu0
        %v3865 = vadd.f32 0.0, %v3864
        %v3866 = vpop.f32.mrb[0].mxu0
        %3867 = vmatprep.mubr.bf16.mxu0 0
        %3868 = vmatmul.mubr.bf16.gmra.mrb[0].mxu0 %v3723
        %v3869 = vpop.f32.mrb[0].mxu0
        %v3870 = vadd.f32 0.0, %v3869
        %v3871 = vpop.f32.mrb[0].mxu0
        %v3872 = vpop.f32.mrb[0].mxu0
        %v3873 = vadd.f32 0.0, %v3872
        %v3874 = vpop.f32.mrb[0].mxu0
        %3875 = vmatprep.mubr.bf16.mxu0 0
        %3876 = vmatmul.mubr.bf16.gmra.mrb[0].mxu0 %v3726
        %v3877 = vpop.f32.mrb[0].mxu0
        %v3878 = vadd.f32 0.0, %v3877
        %v3879 = vpop.f32.mrb[0].mxu0
        %v3880 = vpop.f32.mrb[0].mxu0
        %v3881 = vadd.f32 0.0, %v3880
        %v3882 = vpop.f32.mrb[0].mxu0
        %3883 = vmatprep.mubr.bf16.mxu0 0
        %3884 = vmatmul.mubr.bf16.gmra.mrb[0].mxu0 %v3729
        %v3885 = vpop.f32.mrb[0].mxu0
        %v3886 = vadd.f32 0.0, %v3885
        %v3887 = vpop.f32.mrb[0].mxu0
        %v3888 = vpop.f32.mrb[0].mxu0
        %v3889 = vadd.f32 0.0, %v3888
        %v3890 = vpop.f32.mrb[0].mxu0
        %3891 = vdwg.mxu0
        %v3892 = vadd.f32 %v3125, %v3766
        %v3893 = vadd.f32 %v3128, %v3769
        %v3894 = vadd.f32 %v3133, %v3774
        %v3895 = vadd.f32 %v3136, %v3777
        %v3896 = vadd.f32 %v3141, %v3782
        %v3897 = vadd.f32 %v3144, %v3785
        %v3898 = vadd.f32 %v3149, %v3790
        %v3899 = vadd.f32 %v3152, %v3793
        %v3900 = vadd.f32 %v3157, %v3798
        %v3901 = vadd.f32 %v3160, %v3801
        %v3902 = vadd.f32 %v3165, %v3806
        %v3903 = vadd.f32 %v3168, %v3809
        %v3904 = vadd.f32 %v3173, %v3814
        %v3905 = vadd.f32 %v3176, %v3817
        %v3906 = vadd.f32 %v3181, %v3822
        %v3907 = vadd.f32 %v3184, %v3825
        %v3908 = vadd.f32 %v3189, %v3830
        %v3909 = vadd.f32 %v3192, %v3833
        %v3910 = vadd.f32 %v3197, %v3838
        %v3911 = vadd.f32 %v3200, %v3841
        %v3912 = vadd.f32 %v3205, %v3846
        %v3913 = vadd.f32 %v3208, %v3849
        %v3914 = vadd.f32 %v3213, %v3854
        %v3915 = vadd.f32 %v3216, %v3857
        %v3916 = vadd.f32 %v3221, %v3862
        %v3917 = vadd.f32 %v3224, %v3865
        %v3918 = vadd.f32 %v3229, %v3870
        %v3919 = vadd.f32 %v3232, %v3873
        %v3920 = vadd.f32 %v3237, %v3878
        %v3921 = vadd.f32 %v3240, %v3881
        %v3922 = vadd.f32 %v3245, %v3886
        %v3923 = vadd.f32 %v3248, %v3889
        %3924 = vrot.lane.b32.xlu0 %v2375, 80
        %v3925 = vpop.permute.xlu0 %3924
        %3926 = vrot.lane.b32.xlu0 %v1964, 80
        %v3927 = vpop.permute.xlu0 %3926
        %3928 = vrot.lane.b32.xlu0 %v1965, 80
        %v3929 = vpop.permute.xlu0 %3928
        %3930 = vrot.lane.b32.xlu0 %v1966, 80
        %v3931 = vpop.permute.xlu0 %3930
        %3932 = vrot.lane.b32.xlu0 %v1967, 80
        %v3933 = vpop.permute.xlu0 %3932
        %3934 = vrot.lane.b32.xlu0 %v1968, 80
        %v3935 = vpop.permute.xlu0 %3934
        %3936 = vrot.lane.b32.xlu0 %v1969, 80
        %v3937 = vpop.permute.xlu0 %3936
        %3938 = vrot.lane.b32.xlu0 %v1970, 80
        %v3939 = vpop.permute.xlu0 %3938
        %3940 = vrot.lane.b32.xlu0 %v1971, 80
        %v3941 = vpop.permute.xlu0 %3940
        %3942 = vrot.lane.b32.xlu0 %v1972, 80
        %v3943 = vpop.permute.xlu0 %3942
        %3944 = vrot.lane.b32.xlu0 %v1973, 80
        %v3945 = vpop.permute.xlu0 %3944
        %3946 = vrot.lane.b32.xlu0 %v1974, 80
        %v3947 = vpop.permute.xlu0 %3946
        %3948 = vrot.lane.b32.xlu0 %v1975, 80
        %v3949 = vpop.permute.xlu0 %3948
        %3950 = vrot.lane.b32.xlu0 %v1976, 80
        %v3951 = vpop.permute.xlu0 %3950
        %3952 = vrot.lane.b32.xlu0 %v1977, 80
        %v3953 = vpop.permute.xlu0 %3952
        %3954 = vrot.lane.b32.xlu0 %v1978, 80
        %v3955 = vpop.permute.xlu0 %3954
        %3956 = vrot.lane.b32.xlu0 %v1979, 80
        %v3957 = vpop.permute.xlu0 %3956
        %v3959 = vsel %vm1980, %v3925, 0
        %v3962 = vsel %vm1980, %v3927, 0
        %v3965 = vsel %vm1980, %v3929, 0
        %v3968 = vsel %vm1980, %v3931, 0
        %v3971 = vsel %vm1980, %v3933, 0
        %v3974 = vsel %vm1980, %v3935, 0
        %v3977 = vsel %vm1980, %v3937, 0
        %v3980 = vsel %vm1980, %v3939, 0
        %v3983 = vsel %vm1980, %v3941, 0
        %v3986 = vsel %vm1980, %v3943, 0
        %v3989 = vsel %vm1980, %v3945, 0
        %v3992 = vsel %vm1980, %v3947, 0
        %v3995 = vsel %vm1980, %v3949, 0
        %v3998 = vsel %vm1980, %v3951, 0
        %v4001 = vsel %vm1980, %v3953, 0
        %v4004 = vsel %vm1980, %v3955, 0
        %v4007 = vsel %vm1980, %v3957, 0
        %4009 = vmatprep.subr.bf16.mxu0 0
        %4010 = vmatpush1.bf16.xpose.msra.mxu0 %v3962
        %4011 = vmatprep.subr.bf16.mxu0 0
        %4012 = vmatpush1.bf16.xpose.msra.mxu0 %v3965
        %4013 = vmatprep.subr.bf16.mxu0 0
        %4014 = vmatpush1.bf16.xpose.msra.mxu0 %v3968
        %4015 = vmatprep.subr.bf16.mxu0 0
        %4016 = vmatpush1.bf16.xpose.msra.mxu0 %v3971
        %4017 = vmatprep.subr.bf16.mxu0 0
        %4018 = vmatpush1.bf16.xpose.msra.mxu0 %v3974
        %4019 = vmatprep.subr.bf16.mxu0 0
        %4020 = vmatpush1.bf16.xpose.msra.mxu0 %v3977
        %4021 = vmatprep.subr.bf16.mxu0 0
        %4022 = vmatpush1.bf16.xpose.msra.mxu0 %v3980
        %4023 = vmatprep.subr.bf16.mxu0 0
        %4024 = vmatpush1.bf16.xpose.msra.mxu0 %v3983
        %4025 = vmatprep.subr.bf16.mxu0 0
        %4026 = vmatpush1.bf16.xpose.msra.mxu0 %v3986
        %4027 = vmatprep.subr.bf16.mxu0 0
        %4028 = vmatpush1.bf16.xpose.msra.mxu0 %v3989
        %4029 = vmatprep.subr.bf16.mxu0 0
        %4030 = vmatpush1.bf16.xpose.msra.mxu0 %v3992
        %4031 = vmatprep.subr.bf16.mxu0 0
        %4032 = vmatpush1.bf16.xpose.msra.mxu0 %v3995
        %4033 = vmatprep.subr.bf16.mxu0 0
        %4034 = vmatpush1.bf16.xpose.msra.mxu0 %v3998
        %4035 = vmatprep.subr.bf16.mxu0 0
        %4036 = vmatpush1.bf16.xpose.msra.mxu0 %v4001
        %4037 = vmatprep.subr.bf16.mxu0 0
        %4038 = vmatpush1.bf16.xpose.msra.mxu0 %v4004
        %4039 = vmatprep.subr.bf16.mxu0 0
        %4040 = vmatpush1.bf16.xpose.msra.mxu0 %v4007
        %4041 = vmatprep.mubr.bf16.mxu0 0
        %4042 = vmatmul.mubr.bf16.gmra.mrb[0].mxu0 %v3959
        %v4043 = vpop.f32.mrb[0].mxu0
        %v4044 = vadd.f32 0.0, %v4043
        %v4045 = vpop.f32.mrb[0].mxu0
        %v4046 = vadd.f32 0.0, %v4045
        %v4047 = vpop.f32.mrb[0].mxu0
        %v4048 = vpop.f32.mrb[0].mxu0
        %4049 = vdwg.mxu0
        %v4050 = vrot.slane %v4044, 4
        %v4051 = vmax.f32 %v4044, %v4050
        %v4052 = vrot.slane %v4051, 2
        %v4053 = vmax.f32 %v4051, %v4052
        %v4054 = vrot.slane %v4053, 1
        %v4055 = vmax.f32 %v4053, %v4054
        %v4056 = vrot.slane %v4046, 4
        %v4057 = vmax.f32 %v4046, %v4056
        %v4058 = vrot.slane %v4057, 2
        %v4059 = vmax.f32 %v4057, %v4058
        %v4060 = vrot.slane %v4059, 1
        %v4061 = vmax.f32 %v4059, %v4060
        %v4062 = vsub.f32 %v4044, %v4055
        %v4063 = vsub.f32 %v4046, %v4061
        %v4064 = vmul.f32 %v4062, 1.442695
        %v4065 = vpow.pop %v4064
        %v4066 = vmul.f32 %v4063, 1.442695
        %v4067 = vpow.pop %v4066
        %v4068 = vrot.slane %v4065, 4
        %v4069 = vadd.f32 %v4065, %v4068
        %v4070 = vrot.slane %v4069, 2
        %v4071 = vadd.f32 %v4069, %v4070
        %v4072 = vrot.slane %v4071, 1
        %v4073 = vadd.f32 %v4071, %v4072
        %v4074 = vrot.slane %v4067, 4
        %v4075 = vadd.f32 %v4067, %v4074
        %v4076 = vrot.slane %v4075, 2
        %v4077 = vadd.f32 %v4075, %v4076
        %v4078 = vrot.slane %v4077, 1
        %v4079 = vadd.f32 %v4077, %v4078
        %v4080 = vrcp.pop %v4073
        %v4081 = vrcp.pop %v4079
        %v4082 = vmul.f32 %v4065, %v4080
        %v4083 = vmul.f32 %v4067, %v4081
        %v4084 = vpack.c.bf16 %v4082, %v4082
        %v4085 = vpack.c.bf16 %v4083, %v4083
        %4086 = vxpose.xlu0.c.b16.start [1/8] %v4084, 128
        %4087 = vxpose.xlu0.c.b16.cont [2/8] 0, 128
        %4088 = vxpose.xlu0.c.b16.cont [3/8] 0, 128
        %4089 = vxpose.xlu0.c.b16.cont [4/8] 0, 128
        %4090 = vxpose.xlu0.c.b16.cont [5/8] 0, 128
        %4091 = vxpose.xlu0.c.b16.cont [6/8] 0, 128
        %4092 = vxpose.xlu0.c.b16.cont [7/8] 0, 128
        %4093 = vxpose.xlu0.c.b16.end [8/8] 0, 128
        %v4094 = vpop.trf.xlu0
        %v4095 = vpop.trf.xlu0
        %v4096 = vpop.trf.xlu0
        %v4097 = vpop.trf.xlu0
        %v4098 = vpop.trf.xlu0
        %v4099 = vpop.trf.xlu0
        %v4100 = vpop.trf.xlu0
        %v4101 = vpop.trf.xlu0
        %4102 = vxpose.xlu0.c.b16.start [1/8] %v4085, 128
        %4103 = vxpose.xlu0.c.b16.cont [2/8] 0, 128
        %4104 = vxpose.xlu0.c.b16.cont [3/8] 0, 128
        %4105 = vxpose.xlu0.c.b16.cont [4/8] 0, 128
        %4106 = vxpose.xlu0.c.b16.cont [5/8] 0, 128
        %4107 = vxpose.xlu0.c.b16.cont [6/8] 0, 128
        %4108 = vxpose.xlu0.c.b16.cont [7/8] 0, 128
        %4109 = vxpose.xlu0.c.b16.end [8/8] 0, 128
        %v4110 = vpop.trf.xlu0
        %v4111 = vpop.trf.xlu0
        %v4112 = vpop.trf.xlu0
        %v4113 = vpop.trf.xlu0
        %v4114 = vpop.trf.xlu0
        %v4115 = vpop.trf.xlu0
        %v4116 = vpop.trf.xlu0
        %v4117 = vpop.trf.xlu0
        %4118 = vrot.lane.b32.xlu0 %v2588, 80
        %v4119 = vpop.permute.xlu0 %4118
        %v4121 = vsel %vm2141, %v4094, 0
        %v4124 = vsel %vm2141, %v4095, 0
        %v4127 = vsel %vm2141, %v4096, 0
        %v4130 = vsel %vm2141, %v4097, 0
        %v4133 = vsel %vm2141, %v4098, 0
        %v4136 = vsel %vm2141, %v4099, 0
        %v4139 = vsel %vm2141, %v4100, 0
        %v4142 = vsel %vm2141, %v4101, 0
        %v4145 = vsel %vm2141, %v4110, 0
        %v4148 = vsel %vm2141, %v4111, 0
        %v4151 = vsel %vm2141, %v4112, 0
        %v4154 = vsel %vm2141, %v4113, 0
        %v4157 = vsel %vm2141, %v4114, 0
        %v4160 = vsel %vm2141, %v4115, 0
        %v4163 = vsel %vm2141, %v4116, 0
        %v4166 = vsel %vm2141, %v4117, 0
        %v4169 = vsel %vm2190, %v4119, 0
        %4171 = vmatprep.subr.bf16.mxu0 0
        %4172 = vmatpush1.bf16.msra.mxu0 %v4169
        %4173 = vmatprep.subr.bf16.mxu0 0
        %4174 = vmatpush1.bf16.msra.mxu0 0
        %4175 = vmatprep.subr.bf16.mxu0 0
        %4176 = vmatpush1.bf16.msra.mxu0 0
        %4177 = vmatprep.subr.bf16.mxu0 0
        %4178 = vmatpush1.bf16.msra.mxu0 0
        %4179 = vmatprep.subr.bf16.mxu0 0
        %4180 = vmatpush1.bf16.msra.mxu0 0
        %4181 = vmatprep.subr.bf16.mxu0 0
        %4182 = vmatpush1.bf16.msra.mxu0 0
        %4183 = vmatprep.subr.bf16.mxu0 0
        %4184 = vmatpush1.bf16.msra.mxu0 0
        %4185 = vmatprep.subr.bf16.mxu0 0
        %4186 = vmatpush1.bf16.msra.mxu0 0
        %4187 = vmatprep.subr.bf16.mxu0 0
        %4188 = vmatpush1.bf16.msra.mxu0 0
        %4189 = vmatprep.subr.bf16.mxu0 0
        %4190 = vmatpush1.bf16.msra.mxu0 0
        %4191 = vmatprep.subr.bf16.mxu0 0
        %4192 = vmatpush1.bf16.msra.mxu0 0
        %4193 = vmatprep.subr.bf16.mxu0 0
        %4194 = vmatpush1.bf16.msra.mxu0 0
        %4195 = vmatprep.subr.bf16.mxu0 0
        %4196 = vmatpush1.bf16.msra.mxu0 0
        %4197 = vmatprep.subr.bf16.mxu0 0
        %4198 = vmatpush1.bf16.msra.mxu0 0
        %4199 = vmatprep.subr.bf16.mxu0 0
        %4200 = vmatpush1.bf16.msra.mxu0 0
        %4201 = vmatprep.subr.bf16.mxu0 0
        %4202 = vmatpush1.bf16.msra.mxu0 0
        %4203 = vmatprep.mubr.bf16.mxu0 0
        %4204 = vmatmul.mubr.bf16.gmra.mrb[0].mxu0 %v4121
        %v4205 = vpop.f32.mrb[0].mxu0
        %v4206 = vadd.f32 0.0, %v4205
        %v4207 = vpop.f32.mrb[0].mxu0
        %v4208 = vpop.f32.mrb[0].mxu0
        %v4209 = vadd.f32 0.0, %v4208
        %v4210 = vpop.f32.mrb[0].mxu0
        %4211 = vmatprep.mubr.bf16.mxu0 0
        %4212 = vmatmul.mubr.bf16.gmra.mrb[0].mxu0 %v4124
        %v4213 = vpop.f32.mrb[0].mxu0
        %v4214 = vadd.f32 0.0, %v4213
        %v4215 = vpop.f32.mrb[0].mxu0
        %v4216 = vpop.f32.mrb[0].mxu0
        %v4217 = vadd.f32 0.0, %v4216
        %v4218 = vpop.f32.mrb[0].mxu0
        %4219 = vmatprep.mubr.bf16.mxu0 0
        %4220 = vmatmul.mubr.bf16.gmra.mrb[0].mxu0 %v4127
        %v4221 = vpop.f32.mrb[0].mxu0
        %v4222 = vadd.f32 0.0, %v4221
        %v4223 = vpop.f32.mrb[0].mxu0
        %v4224 = vpop.f32.mrb[0].mxu0
        %v4225 = vadd.f32 0.0, %v4224
        %v4226 = vpop.f32.mrb[0].mxu0
        %4227 = vmatprep.mubr.bf16.mxu0 0
        %4228 = vmatmul.mubr.bf16.gmra.mrb[0].mxu0 %v4130
        %v4229 = vpop.f32.mrb[0].mxu0
        %v4230 = vadd.f32 0.0, %v4229
        %v4231 = vpop.f32.mrb[0].mxu0
        %v4232 = vpop.f32.mrb[0].mxu0
        %v4233 = vadd.f32 0.0, %v4232
        %v4234 = vpop.f32.mrb[0].mxu0
        %4235 = vmatprep.mubr.bf16.mxu0 0
        %4236 = vmatmul.mubr.bf16.gmra.mrb[0].mxu0 %v4133
        %v4237 = vpop.f32.mrb[0].mxu0
        %v4238 = vadd.f32 0.0, %v4237
        %v4239 = vpop.f32.mrb[0].mxu0
        %v4240 = vpop.f32.mrb[0].mxu0
        %v4241 = vadd.f32 0.0, %v4240
        %v4242 = vpop.f32.mrb[0].mxu0
        %4243 = vmatprep.mubr.bf16.mxu0 0
        %4244 = vmatmul.mubr.bf16.gmra.mrb[0].mxu0 %v4136
        %v4245 = vpop.f32.mrb[0].mxu0
        %v4246 = vadd.f32 0.0, %v4245
        %v4247 = vpop.f32.mrb[0].mxu0
        %v4248 = vpop.f32.mrb[0].mxu0
        %v4249 = vadd.f32 0.0, %v4248
        %v4250 = vpop.f32.mrb[0].mxu0
        %4251 = vmatprep.mubr.bf16.mxu0 0
        %4252 = vmatmul.mubr.bf16.gmra.mrb[0].mxu0 %v4139
        %v4253 = vpop.f32.mrb[0].mxu0
        %v4254 = vadd.f32 0.0, %v4253
        %v4255 = vpop.f32.mrb[0].mxu0
        %v4256 = vpop.f32.mrb[0].mxu0
        %v4257 = vadd.f32 0.0, %v4256
        %v4258 = vpop.f32.mrb[0].mxu0
        %4259 = vmatprep.mubr.bf16.mxu0 0
        %4260 = vmatmul.mubr.bf16.gmra.mrb[0].mxu0 %v4142
        %v4261 = vpop.f32.mrb[0].mxu0
        %v4262 = vadd.f32 0.0, %v4261
        %v4263 = vpop.f32.mrb[0].mxu0
        %v4264 = vpop.f32.mrb[0].mxu0
        %v4265 = vadd.f32 0.0, %v4264
        %v4266 = vpop.f32.mrb[0].mxu0
        %4267 = vmatprep.mubr.bf16.mxu0 0
        %4268 = vmatmul.mubr.bf16.gmra.mrb[0].mxu0 %v4145
        %v4269 = vpop.f32.mrb[0].mxu0
        %v4270 = vadd.f32 0.0, %v4269
        %v4271 = vpop.f32.mrb[0].mxu0
        %v4272 = vpop.f32.mrb[0].mxu0
        %v4273 = vadd.f32 0.0, %v4272
        %v4274 = vpop.f32.mrb[0].mxu0
        %4275 = vmatprep.mubr.bf16.mxu0 0
        %4276 = vmatmul.mubr.bf16.gmra.mrb[0].mxu0 %v4148
        %v4277 = vpop.f32.mrb[0].mxu0
        %v4278 = vadd.f32 0.0, %v4277
        %v4279 = vpop.f32.mrb[0].mxu0
        %v4280 = vpop.f32.mrb[0].mxu0
        %v4281 = vadd.f32 0.0, %v4280
        %v4282 = vpop.f32.mrb[0].mxu0
        %4283 = vmatprep.mubr.bf16.mxu0 0
        %4284 = vmatmul.mubr.bf16.gmra.mrb[0].mxu0 %v4151
        %v4285 = vpop.f32.mrb[0].mxu0
        %v4286 = vadd.f32 0.0, %v4285
        %v4287 = vpop.f32.mrb[0].mxu0
        %v4288 = vpop.f32.mrb[0].mxu0
        %v4289 = vadd.f32 0.0, %v4288
        %v4290 = vpop.f32.mrb[0].mxu0
        %4291 = vmatprep.mubr.bf16.mxu0 0
        %4292 = vmatmul.mubr.bf16.gmra.mrb[0].mxu0 %v4154
        %v4293 = vpop.f32.mrb[0].mxu0
        %v4294 = vadd.f32 0.0, %v4293
        %v4295 = vpop.f32.mrb[0].mxu0
        %v4296 = vpop.f32.mrb[0].mxu0
        %v4297 = vadd.f32 0.0, %v4296
        %v4298 = vpop.f32.mrb[0].mxu0
        %4299 = vmatprep.mubr.bf16.mxu0 0
        %4300 = vmatmul.mubr.bf16.gmra.mrb[0].mxu0 %v4157
        %v4301 = vpop.f32.mrb[0].mxu0
        %v4302 = vadd.f32 0.0, %v4301
        %v4303 = vpop.f32.mrb[0].mxu0
        %v4304 = vpop.f32.mrb[0].mxu0
        %v4305 = vadd.f32 0.0, %v4304
        %v4306 = vpop.f32.mrb[0].mxu0
        %4307 = vmatprep.mubr.bf16.mxu0 0
        %4308 = vmatmul.mubr.bf16.gmra.mrb[0].mxu0 %v4160
        %v4309 = vpop.f32.mrb[0].mxu0
        %v4310 = vadd.f32 0.0, %v4309
        %v4311 = vpop.f32.mrb[0].mxu0
        %v4312 = vpop.f32.mrb[0].mxu0
        %v4313 = vadd.f32 0.0, %v4312
        %v4314 = vpop.f32.mrb[0].mxu0
        %4315 = vmatprep.mubr.bf16.mxu0 0
        %4316 = vmatmul.mubr.bf16.gmra.mrb[0].mxu0 %v4163
        %v4317 = vpop.f32.mrb[0].mxu0
        %v4318 = vadd.f32 0.0, %v4317
        %v4319 = vpop.f32.mrb[0].mxu0
        %v4320 = vpop.f32.mrb[0].mxu0
        %v4321 = vadd.f32 0.0, %v4320
        %v4322 = vpop.f32.mrb[0].mxu0
        %4323 = vmatprep.mubr.bf16.mxu0 0
        %4324 = vmatmul.mubr.bf16.gmra.mrb[0].mxu0 %v4166
        %v4325 = vpop.f32.mrb[0].mxu0
        %v4326 = vadd.f32 0.0, %v4325
        %v4327 = vpop.f32.mrb[0].mxu0
        %v4328 = vpop.f32.mrb[0].mxu0
        %v4329 = vadd.f32 0.0, %v4328
        %v4330 = vpop.f32.mrb[0].mxu0
        %4331 = vdwg.mxu0
        %v4332 = vpack.c.bf16 %v4209, %v4206
        %v4333 = vpack.c.bf16 %v4217, %v4214
        %v4334 = vpack.c.bf16 %v4225, %v4222
        %v4335 = vpack.c.bf16 %v4233, %v4230
        %v4336 = vpack.c.bf16 %v4241, %v4238
        %v4337 = vpack.c.bf16 %v4249, %v4246
        %v4338 = vpack.c.bf16 %v4257, %v4254
        %v4339 = vpack.c.bf16 %v4265, %v4262
        %v4340 = vpack.c.bf16 %v4273, %v4270
        %v4341 = vpack.c.bf16 %v4281, %v4278
        %v4342 = vpack.c.bf16 %v4289, %v4286
        %v4343 = vpack.c.bf16 %v4297, %v4294
        %v4344 = vpack.c.bf16 %v4305, %v4302
        %v4345 = vpack.c.bf16 %v4313, %v4310
        %v4346 = vpack.c.bf16 %v4321, %v4318
        %v4347 = vpack.c.bf16 %v4329, %v4326
        %v4348 = vld [vmem:[%s14 + $0x18] sm:$0xf]
        %v4349 = vld [vmem:[%s14 + $0x1c] sm:$0xf]
        %v4352 = vunpack.c.l.b16 %v4348
        %v4353 = vunpack.c.l.b16 %v4349
        %v4354 = vpack.c.b16 %v4353, %v4352
        %v4357 = vsel %vm1980, %v4332, 0
        %v4360 = vsel %vm1980, %v4333, 0
        %v4363 = vsel %vm1980, %v4334, 0
        %v4366 = vsel %vm1980, %v4335, 0
        %v4369 = vsel %vm1980, %v4336, 0
        %v4372 = vsel %vm1980, %v4337, 0
        %v4375 = vsel %vm1980, %v4338, 0
        %v4378 = vsel %vm1980, %v4339, 0
        %v4381 = vsel %vm1980, %v4340, 0
        %v4384 = vsel %vm1980, %v4341, 0
        %v4387 = vsel %vm1980, %v4342, 0
        %v4390 = vsel %vm1980, %v4343, 0
        %v4393 = vsel %vm1980, %v4344, 0
        %v4396 = vsel %vm1980, %v4345, 0
        %v4399 = vsel %vm1980, %v4346, 0
        %v4402 = vsel %vm1980, %v4347, 0
        %4404 = vmatprep.subr.bf16.mxu0 0
        %4405 = vmatpush1.bf16.msra.mxu0 %v4354
        %4406 = vmatprep.subr.bf16.mxu0 0
        %4407 = vmatpush1.bf16.msra.mxu0 0
        %4408 = vmatprep.subr.bf16.mxu0 0
        %4409 = vmatpush1.bf16.msra.mxu0 0
        %4410 = vmatprep.subr.bf16.mxu0 0
        %4411 = vmatpush1.bf16.msra.mxu0 0
        %4412 = vmatprep.subr.bf16.mxu0 0
        %4413 = vmatpush1.bf16.msra.mxu0 0
        %4414 = vmatprep.subr.bf16.mxu0 0
        %4415 = vmatpush1.bf16.msra.mxu0 0
        %4416 = vmatprep.subr.bf16.mxu0 0
        %4417 = vmatpush1.bf16.msra.mxu0 0
        %4418 = vmatprep.subr.bf16.mxu0 0
        %4419 = vmatpush1.bf16.msra.mxu0 0
        %4420 = vmatprep.subr.bf16.mxu0 0
        %4421 = vmatpush1.bf16.msra.mxu0 0
        %4422 = vmatprep.subr.bf16.mxu0 0
        %4423 = vmatpush1.bf16.msra.mxu0 0
        %4424 = vmatprep.subr.bf16.mxu0 0
        %4425 = vmatpush1.bf16.msra.mxu0 0
        %4426 = vmatprep.subr.bf16.mxu0 0
        %4427 = vmatpush1.bf16.msra.mxu0 0
        %4428 = vmatprep.subr.bf16.mxu0 0
        %4429 = vmatpush1.bf16.msra.mxu0 0
        %4430 = vmatprep.subr.bf16.mxu0 0
        %4431 = vmatpush1.bf16.msra.mxu0 0
        %4432 = vmatprep.subr.bf16.mxu0 0
        %4433 = vmatpush1.bf16.msra.mxu0 0
        %4434 = vmatprep.subr.bf16.mxu0 0
        %4435 = vmatpush1.bf16.msra.mxu0 0
        %4436 = vmatprep.mubr.bf16.mxu0 0
        %4437 = vmatmul.mubr.bf16.gmra.mrb[0].mxu0 %v4357
        %v4438 = vpop.f32.mrb[0].mxu0
        %v4439 = vadd.f32 0.0, %v4438
        %v4440 = vpop.f32.mrb[0].mxu0
        %v4441 = vpop.f32.mrb[0].mxu0
        %v4442 = vadd.f32 0.0, %v4441
        %v4443 = vpop.f32.mrb[0].mxu0
        %4444 = vmatprep.mubr.bf16.mxu0 0
        %4445 = vmatmul.mubr.bf16.gmra.mrb[0].mxu0 %v4360
        %v4446 = vpop.f32.mrb[0].mxu0
        %v4447 = vadd.f32 0.0, %v4446
        %v4448 = vpop.f32.mrb[0].mxu0
        %v4449 = vpop.f32.mrb[0].mxu0
        %v4450 = vadd.f32 0.0, %v4449
        %v4451 = vpop.f32.mrb[0].mxu0
        %4452 = vmatprep.mubr.bf16.mxu0 0
        %4453 = vmatmul.mubr.bf16.gmra.mrb[0].mxu0 %v4363
        %v4454 = vpop.f32.mrb[0].mxu0
        %v4455 = vadd.f32 0.0, %v4454
        %v4456 = vpop.f32.mrb[0].mxu0
        %v4457 = vpop.f32.mrb[0].mxu0
        %v4458 = vadd.f32 0.0, %v4457
        %v4459 = vpop.f32.mrb[0].mxu0
        %4460 = vmatprep.mubr.bf16.mxu0 0
        %4461 = vmatmul.mubr.bf16.gmra.mrb[0].mxu0 %v4366
        %v4462 = vpop.f32.mrb[0].mxu0
        %v4463 = vadd.f32 0.0, %v4462
        %v4464 = vpop.f32.mrb[0].mxu0
        %v4465 = vpop.f32.mrb[0].mxu0
        %v4466 = vadd.f32 0.0, %v4465
        %v4467 = vpop.f32.mrb[0].mxu0
        %4468 = vmatprep.mubr.bf16.mxu0 0
        %4469 = vmatmul.mubr.bf16.gmra.mrb[0].mxu0 %v4369
        %v4470 = vpop.f32.mrb[0].mxu0
        %v4471 = vadd.f32 0.0, %v4470
        %v4472 = vpop.f32.mrb[0].mxu0
        %v4473 = vpop.f32.mrb[0].mxu0
        %v4474 = vadd.f32 0.0, %v4473
        %v4475 = vpop.f32.mrb[0].mxu0
        %4476 = vmatprep.mubr.bf16.mxu0 0
        %4477 = vmatmul.mubr.bf16.gmra.mrb[0].mxu0 %v4372
        %v4478 = vpop.f32.mrb[0].mxu0
        %v4479 = vadd.f32 0.0, %v4478
        %v4480 = vpop.f32.mrb[0].mxu0
        %v4481 = vpop.f32.mrb[0].mxu0
        %v4482 = vadd.f32 0.0, %v4481
        %v4483 = vpop.f32.mrb[0].mxu0
        %4484 = vmatprep.mubr.bf16.mxu0 0
        %4485 = vmatmul.mubr.bf16.gmra.mrb[0].mxu0 %v4375
        %v4486 = vpop.f32.mrb[0].mxu0
        %v4487 = vadd.f32 0.0, %v4486
        %v4488 = vpop.f32.mrb[0].mxu0
        %v4489 = vpop.f32.mrb[0].mxu0
        %v4490 = vadd.f32 0.0, %v4489
        %v4491 = vpop.f32.mrb[0].mxu0
        %4492 = vmatprep.mubr.bf16.mxu0 0
        %4493 = vmatmul.mubr.bf16.gmra.mrb[0].mxu0 %v4378
        %v4494 = vpop.f32.mrb[0].mxu0
        %v4495 = vadd.f32 0.0, %v4494
        %v4496 = vpop.f32.mrb[0].mxu0
        %v4497 = vpop.f32.mrb[0].mxu0
        %v4498 = vadd.f32 0.0, %v4497
        %v4499 = vpop.f32.mrb[0].mxu0
        %4500 = vmatprep.mubr.bf16.mxu0 0
        %4501 = vmatmul.mubr.bf16.gmra.mrb[0].mxu0 %v4381
        %v4502 = vpop.f32.mrb[0].mxu0
        %v4503 = vadd.f32 0.0, %v4502
        %v4504 = vpop.f32.mrb[0].mxu0
        %v4505 = vpop.f32.mrb[0].mxu0
        %v4506 = vadd.f32 0.0, %v4505
        %v4507 = vpop.f32.mrb[0].mxu0
        %4508 = vmatprep.mubr.bf16.mxu0 0
        %4509 = vmatmul.mubr.bf16.gmra.mrb[0].mxu0 %v4384
        %v4510 = vpop.f32.mrb[0].mxu0
        %v4511 = vadd.f32 0.0, %v4510
        %v4512 = vpop.f32.mrb[0].mxu0
        %v4513 = vpop.f32.mrb[0].mxu0
        %v4514 = vadd.f32 0.0, %v4513
        %v4515 = vpop.f32.mrb[0].mxu0
        %4516 = vmatprep.mubr.bf16.mxu0 0
        %4517 = vmatmul.mubr.bf16.gmra.mrb[0].mxu0 %v4387
        %v4518 = vpop.f32.mrb[0].mxu0
        %v4519 = vadd.f32 0.0, %v4518
        %v4520 = vpop.f32.mrb[0].mxu0
        %v4521 = vpop.f32.mrb[0].mxu0
        %v4522 = vadd.f32 0.0, %v4521
        %v4523 = vpop.f32.mrb[0].mxu0
        %4524 = vmatprep.mubr.bf16.mxu0 0
        %4525 = vmatmul.mubr.bf16.gmra.mrb[0].mxu0 %v4390
        %v4526 = vpop.f32.mrb[0].mxu0
        %v4527 = vadd.f32 0.0, %v4526
        %v4528 = vpop.f32.mrb[0].mxu0
        %v4529 = vpop.f32.mrb[0].mxu0
        %v4530 = vadd.f32 0.0, %v4529
        %v4531 = vpop.f32.mrb[0].mxu0
        %4532 = vmatprep.mubr.bf16.mxu0 0
        %4533 = vmatmul.mubr.bf16.gmra.mrb[0].mxu0 %v4393
        %v4534 = vpop.f32.mrb[0].mxu0
        %v4535 = vadd.f32 0.0, %v4534
        %v4536 = vpop.f32.mrb[0].mxu0
        %v4537 = vpop.f32.mrb[0].mxu0
        %v4538 = vadd.f32 0.0, %v4537
        %v4539 = vpop.f32.mrb[0].mxu0
        %4540 = vmatprep.mubr.bf16.mxu0 0
        %4541 = vmatmul.mubr.bf16.gmra.mrb[0].mxu0 %v4396
        %v4542 = vpop.f32.mrb[0].mxu0
        %v4543 = vadd.f32 0.0, %v4542
        %v4544 = vpop.f32.mrb[0].mxu0
        %v4545 = vpop.f32.mrb[0].mxu0
        %v4546 = vadd.f32 0.0, %v4545
        %v4547 = vpop.f32.mrb[0].mxu0
        %4548 = vmatprep.mubr.bf16.mxu0 0
        %4549 = vmatmul.mubr.bf16.gmra.mrb[0].mxu0 %v4399
        %v4550 = vpop.f32.mrb[0].mxu0
        %v4551 = vadd.f32 0.0, %v4550
        %v4552 = vpop.f32.mrb[0].mxu0
        %v4553 = vpop.f32.mrb[0].mxu0
        %v4554 = vadd.f32 0.0, %v4553
        %v4555 = vpop.f32.mrb[0].mxu0
        %4556 = vmatprep.mubr.bf16.mxu0 0
        %4557 = vmatmul.mubr.bf16.gmra.mrb[0].mxu0 %v4402
        %v4558 = vpop.f32.mrb[0].mxu0
        %v4559 = vadd.f32 0.0, %v4558
        %v4560 = vpop.f32.mrb[0].mxu0
        %v4561 = vpop.f32.mrb[0].mxu0
        %v4562 = vadd.f32 0.0, %v4561
        %v4563 = vpop.f32.mrb[0].mxu0
        %4564 = vdwg.mxu0
        %v4565 = vadd.f32 %v3892, %v4439
        %v4566 = vadd.f32 %v3893, %v4442
        %v4567 = vadd.f32 %v3894, %v4447
        %v4568 = vadd.f32 %v3895, %v4450
        %v4569 = vadd.f32 %v3896, %v4455
        %v4570 = vadd.f32 %v3897, %v4458
        %v4571 = vadd.f32 %v3898, %v4463
        %v4572 = vadd.f32 %v3899, %v4466
        %v4573 = vadd.f32 %v3900, %v4471
        %v4574 = vadd.f32 %v3901, %v4474
        %v4575 = vadd.f32 %v3902, %v4479
        %v4576 = vadd.f32 %v3903, %v4482
        %v4577 = vadd.f32 %v3904, %v4487
        %v4578 = vadd.f32 %v3905, %v4490
        %v4579 = vadd.f32 %v3906, %v4495
        %v4580 = vadd.f32 %v3907, %v4498
        %v4581 = vadd.f32 %v3908, %v4503
        %v4582 = vadd.f32 %v3909, %v4506
        %v4583 = vadd.f32 %v3910, %v4511
        %v4584 = vadd.f32 %v3911, %v4514
        %v4585 = vadd.f32 %v3912, %v4519
        %v4586 = vadd.f32 %v3913, %v4522
        %v4587 = vadd.f32 %v3914, %v4527
        %v4588 = vadd.f32 %v3915, %v4530
        %v4589 = vadd.f32 %v3916, %v4535
        %v4590 = vadd.f32 %v3917, %v4538
        %v4591 = vadd.f32 %v3918, %v4543
        %v4592 = vadd.f32 %v3919, %v4546
        %v4593 = vadd.f32 %v3920, %v4551
        %v4594 = vadd.f32 %v3921, %v4554
        %v4595 = vadd.f32 %v3922, %v4559
        %v4596 = vadd.f32 %v3923, %v4562
        %v4597 = vld [vmem:[%s15] sm:$0x1]
        %v4599 = vlaneseq
        %v4600 = vshrl.u32 %v4599, 7
        %v4601 = vsub.s32 0, %v4600
        %v4602 = vrot.slane %v4597, %v4601
        %v4604 = vadd.f32 %v4565, %v4602
        %v4605 = vadd.f32 %v4566, %v4602
        %v4606 = vadd.f32 %v4567, %v4602
        %v4607 = vadd.f32 %v4568, %v4602
        %v4608 = vadd.f32 %v4569, %v4602
        %v4609 = vadd.f32 %v4570, %v4602
        %v4610 = vadd.f32 %v4571, %v4602
        %v4611 = vadd.f32 %v4572, %v4602
        %v4612 = vadd.f32 %v4573, %v4602
        %v4613 = vadd.f32 %v4574, %v4602
        %v4614 = vadd.f32 %v4575, %v4602
        %v4615 = vadd.f32 %v4576, %v4602
        %v4616 = vadd.f32 %v4577, %v4602
        %v4617 = vadd.f32 %v4578, %v4602
        %v4618 = vadd.f32 %v4579, %v4602
        %v4619 = vadd.f32 %v4580, %v4602
        %v4620 = vadd.f32 %v4581, %v4602
        %v4621 = vadd.f32 %v4582, %v4602
        %v4622 = vadd.f32 %v4583, %v4602
        %v4623 = vadd.f32 %v4584, %v4602
        %v4624 = vadd.f32 %v4585, %v4602
        %v4625 = vadd.f32 %v4586, %v4602
        %v4626 = vadd.f32 %v4587, %v4602
        %v4627 = vadd.f32 %v4588, %v4602
        %v4628 = vadd.f32 %v4589, %v4602
        %v4629 = vadd.f32 %v4590, %v4602
        %v4630 = vadd.f32 %v4591, %v4602
        %v4631 = vadd.f32 %v4592, %v4602
        %v4632 = vadd.f32 %v4593, %v4602
        %v4633 = vadd.f32 %v4594, %v4602
        %v4634 = vadd.f32 %v4595, %v4602
        %v4635 = vadd.f32 %v4596, %v4602
        %v4636 = vadd.f32 %v4604, %v1634
        %v4637 = vadd.f32 %v4605, %v1635
        %v4638 = vadd.f32 %v4606, %v1636
        %v4639 = vadd.f32 %v4607, %v1637
        %v4640 = vadd.f32 %v4608, %v1638
        %v4641 = vadd.f32 %v4609, %v1639
        %v4642 = vadd.f32 %v4610, %v1640
        %v4643 = vadd.f32 %v4611, %v1641
        %v4644 = vadd.f32 %v4612, %v1642
        %v4645 = vadd.f32 %v4613, %v1643
        %v4646 = vadd.f32 %v4614, %v1644
        %v4647 = vadd.f32 %v4615, %v1645
        %v4648 = vadd.f32 %v4616, %v1646
        %v4649 = vadd.f32 %v4617, %v1647
        %v4650 = vadd.f32 %v4618, %v1648
        %v4651 = vadd.f32 %v4619, %v1649
        %v4652 = vadd.f32 %v4620, %v1650
        %v4653 = vadd.f32 %v4621, %v1651
        %v4654 = vadd.f32 %v4622, %v1652
        %v4655 = vadd.f32 %v4623, %v1653
        %v4656 = vadd.f32 %v4624, %v1654
        %v4657 = vadd.f32 %v4625, %v1655
        %v4658 = vadd.f32 %v4626, %v1656
        %v4659 = vadd.f32 %v4627, %v1657
        %v4660 = vadd.f32 %v4628, %v1658
        %v4661 = vadd.f32 %v4629, %v1659
        %v4662 = vadd.f32 %v4630, %v1660
        %v4663 = vadd.f32 %v4631, %v1661
        %v4664 = vadd.f32 %v4632, %v1662
        %v4665 = vadd.f32 %v4633, %v1663
        %v4666 = vadd.f32 %v4634, %v1664
        %v4667 = vadd.f32 %v4635, %v1665
        %v4668 = vpack.c.bf16 %v4637, %v4636
        %v4669 = vpack.c.bf16 %v4639, %v4638
        %v4670 = vpack.c.bf16 %v4641, %v4640
        %v4671 = vpack.c.bf16 %v4643, %v4642
        %v4672 = vpack.c.bf16 %v4645, %v4644
        %v4673 = vpack.c.bf16 %v4647, %v4646
        %v4674 = vpack.c.bf16 %v4649, %v4648
        %v4675 = vpack.c.bf16 %v4651, %v4650
        %v4676 = vpack.c.bf16 %v4653, %v4652
        %v4677 = vpack.c.bf16 %v4655, %v4654
        %v4678 = vpack.c.bf16 %v4657, %v4656
        %v4679 = vpack.c.bf16 %v4659, %v4658
        %v4680 = vpack.c.bf16 %v4661, %v4660
        %v4681 = vpack.c.bf16 %v4663, %v4662
        %v4682 = vpack.c.bf16 %v4665, %v4664
        %v4683 = vpack.c.bf16 %v4667, %v4666
        %v4684 = vld [vmem:[%s16] sm:$0xf]
        %v4685 = vld [vmem:[%s16 + $0x4] sm:$0xf]
        %v4686 = vld [vmem:[%s16 + $0x8] sm:$0xf]
        %v4687 = vld [vmem:[%s16 + $0xc] sm:$0xf]
        %v4688 = vld [vmem:[%s16 + $0x10] sm:$0xf]
        %v4689 = vld [vmem:[%s16 + $0x14] sm:$0xf]
        %v4690 = vld [vmem:[%s16 + $0x18] sm:$0xf]
        %v4691 = vld [vmem:[%s16 + $0x1c] sm:$0xf]
        %v4692 = vld [vmem:[%s17] sm:$0x1]
        %v4694 = vlaneseq
        %v4695 = vshrl.u32 %v4694, 7
        %v4696 = vsub.s32 0, %v4695
        %v4697 = vrot.slane %v4692, %v4696
        %v4707 = vunpack.c.l.b16 %v4684
        %v4708 = vunpack.c.l.b16 %v4685
        %v4709 = vunpack.c.l.b16 %v4686
        %v4710 = vunpack.c.l.b16 %v4687
        %v4711 = vunpack.c.l.b16 %v4688
        %v4712 = vunpack.c.l.b16 %v4689
        %v4713 = vunpack.c.l.b16 %v4690
        %v4714 = vunpack.c.l.b16 %v4691
        %v4715 = vpack.c.b16 %v4708, %v4707
        %v4716 = vpack.c.b16 %v4710, %v4709
        %v4717 = vpack.c.b16 %v4712, %v4711
        %v4718 = vpack.c.b16 %v4714, %v4713
        %v4724 = vsel %vm1128, %v4668, 0
        %v4727 = vsel %vm1128, %v4669, 0
        %v4730 = vsel %vm1128, %v4670, 0
        %v4733 = vsel %vm1128, %v4671, 0
        %v4736 = vsel %vm1128, %v4672, 0
        %v4739 = vsel %vm1128, %v4673, 0
        %v4742 = vsel %vm1128, %v4674, 0
        %v4745 = vsel %vm1128, %v4675, 0
        %v4748 = vsel %vm1128, %v4676, 0
        %v4751 = vsel %vm1128, %v4677, 0
        %v4754 = vsel %vm1128, %v4678, 0
        %v4757 = vsel %vm1128, %v4679, 0
        %v4760 = vsel %vm1128, %v4680, 0
        %v4763 = vsel %vm1128, %v4681, 0
        %v4766 = vsel %vm1128, %v4682, 0
        %v4769 = vsel %vm1128, %v4683, 0
        %4771 = vmatprep.subr.bf16.mxu0 0
        %4772 = vmatpush1.bf16.msra.mxu0 %v4715
        %4773 = vmatprep.subr.bf16.mxu0 0
        %4774 = vmatpush1.bf16.msra.mxu0 %v4716
        %4775 = vmatprep.subr.bf16.mxu0 0
        %4776 = vmatpush1.bf16.msra.mxu0 %v4717
        %4777 = vmatprep.subr.bf16.mxu0 0
        %4778 = vmatpush1.bf16.msra.mxu0 %v4718
        %4779 = vmatprep.subr.bf16.mxu0 0
        %4780 = vmatpush1.bf16.msra.mxu0 0
        %4781 = vmatprep.subr.bf16.mxu0 0
        %4782 = vmatpush1.bf16.msra.mxu0 0
        %4783 = vmatprep.subr.bf16.mxu0 0
        %4784 = vmatpush1.bf16.msra.mxu0 0
        %4785 = vmatprep.subr.bf16.mxu0 0
        %4786 = vmatpush1.bf16.msra.mxu0 0
        %4787 = vmatprep.subr.bf16.mxu0 0
        %4788 = vmatpush1.bf16.msra.mxu0 0
        %4789 = vmatprep.subr.bf16.mxu0 0
        %4790 = vmatpush1.bf16.msra.mxu0 0
        %4791 = vmatprep.subr.bf16.mxu0 0
        %4792 = vmatpush1.bf16.msra.mxu0 0
        %4793 = vmatprep.subr.bf16.mxu0 0
        %4794 = vmatpush1.bf16.msra.mxu0 0
        %4795 = vmatprep.subr.bf16.mxu0 0
        %4796 = vmatpush1.bf16.msra.mxu0 0
        %4797 = vmatprep.subr.bf16.mxu0 0
        %4798 = vmatpush1.bf16.msra.mxu0 0
        %4799 = vmatprep.subr.bf16.mxu0 0
        %4800 = vmatpush1.bf16.msra.mxu0 0
        %4801 = vmatprep.subr.bf16.mxu0 0
        %4802 = vmatpush1.bf16.msra.mxu0 0
        %4803 = vmatprep.mubr.bf16.mxu0 0
        %4804 = vmatmul.mubr.bf16.gmra.mrb[0].mxu0 %v4724
        %v4805 = vpop.f32.mrb[0].mxu0
        %v4806 = vadd.f32 %v4697, %v4805
        %v4807 = vpop.f32.mrb[0].mxu0
        %v4808 = vpop.f32.mrb[0].mxu0
        %v4809 = vadd.f32 %v4697, %v4808
        %v4810 = vpop.f32.mrb[0].mxu0
        %4811 = vmatprep.mubr.bf16.mxu0 0
        %4812 = vmatmul.mubr.bf16.gmra.mrb[0].mxu0 %v4727
        %v4813 = vpop.f32.mrb[0].mxu0
        %v4814 = vadd.f32 %v4697, %v4813
        %v4815 = vpop.f32.mrb[0].mxu0
        %v4816 = vpop.f32.mrb[0].mxu0
        %v4817 = vadd.f32 %v4697, %v4816
        %v4818 = vpop.f32.mrb[0].mxu0
        %4819 = vmatprep.mubr.bf16.mxu0 0
        %4820 = vmatmul.mubr.bf16.gmra.mrb[0].mxu0 %v4730
        %v4821 = vpop.f32.mrb[0].mxu0
        %v4822 = vadd.f32 %v4697, %v4821
        %v4823 = vpop.f32.mrb[0].mxu0
        %v4824 = vpop.f32.mrb[0].mxu0
        %v4825 = vadd.f32 %v4697, %v4824
        %v4826 = vpop.f32.mrb[0].mxu0
        %4827 = vmatprep.mubr.bf16.mxu0 0
        %4828 = vmatmul.mubr.bf16.gmra.mrb[0].mxu0 %v4733
        %v4829 = vpop.f32.mrb[0].mxu0
        %v4830 = vadd.f32 %v4697, %v4829
        %v4831 = vpop.f32.mrb[0].mxu0
        %v4832 = vpop.f32.mrb[0].mxu0
        %v4833 = vadd.f32 %v4697, %v4832
        %v4834 = vpop.f32.mrb[0].mxu0
        %4835 = vmatprep.mubr.bf16.mxu0 0
        %4836 = vmatmul.mubr.bf16.gmra.mrb[0].mxu0 %v4736
        %v4837 = vpop.f32.mrb[0].mxu0
        %v4838 = vadd.f32 %v4697, %v4837
        %v4839 = vpop.f32.mrb[0].mxu0
        %v4840 = vpop.f32.mrb[0].mxu0
        %v4841 = vadd.f32 %v4697, %v4840
        %v4842 = vpop.f32.mrb[0].mxu0
        %4843 = vmatprep.mubr.bf16.mxu0 0
        %4844 = vmatmul.mubr.bf16.gmra.mrb[0].mxu0 %v4739
        %v4845 = vpop.f32.mrb[0].mxu0
        %v4846 = vadd.f32 %v4697, %v4845
        %v4847 = vpop.f32.mrb[0].mxu0
        %v4848 = vpop.f32.mrb[0].mxu0
        %v4849 = vadd.f32 %v4697, %v4848
        %v4850 = vpop.f32.mrb[0].mxu0
        %4851 = vmatprep.mubr.bf16.mxu0 0
        %4852 = vmatmul.mubr.bf16.gmra.mrb[0].mxu0 %v4742
        %v4853 = vpop.f32.mrb[0].mxu0
        %v4854 = vadd.f32 %v4697, %v4853
        %v4855 = vpop.f32.mrb[0].mxu0
        %v4856 = vpop.f32.mrb[0].mxu0
        %v4857 = vadd.f32 %v4697, %v4856
        %v4858 = vpop.f32.mrb[0].mxu0
        %4859 = vmatprep.mubr.bf16.mxu0 0
        %4860 = vmatmul.mubr.bf16.gmra.mrb[0].mxu0 %v4745
        %v4861 = vpop.f32.mrb[0].mxu0
        %v4862 = vadd.f32 %v4697, %v4861
        %v4863 = vpop.f32.mrb[0].mxu0
        %v4864 = vpop.f32.mrb[0].mxu0
        %v4865 = vadd.f32 %v4697, %v4864
        %v4866 = vpop.f32.mrb[0].mxu0
        %4867 = vmatprep.mubr.bf16.mxu0 0
        %4868 = vmatmul.mubr.bf16.gmra.mrb[0].mxu0 %v4748
        %v4869 = vpop.f32.mrb[0].mxu0
        %v4870 = vadd.f32 %v4697, %v4869
        %v4871 = vpop.f32.mrb[0].mxu0
        %v4872 = vpop.f32.mrb[0].mxu0
        %v4873 = vadd.f32 %v4697, %v4872
        %v4874 = vpop.f32.mrb[0].mxu0
        %4875 = vmatprep.mubr.bf16.mxu0 0
        %4876 = vmatmul.mubr.bf16.gmra.mrb[0].mxu0 %v4751
        %v4877 = vpop.f32.mrb[0].mxu0
        %v4878 = vadd.f32 %v4697, %v4877
        %v4879 = vpop.f32.mrb[0].mxu0
        %v4880 = vpop.f32.mrb[0].mxu0
        %v4881 = vadd.f32 %v4697, %v4880
        %v4882 = vpop.f32.mrb[0].mxu0
        %4883 = vmatprep.mubr.bf16.mxu0 0
        %4884 = vmatmul.mubr.bf16.gmra.mrb[0].mxu0 %v4754
        %v4885 = vpop.f32.mrb[0].mxu0
        %v4886 = vadd.f32 %v4697, %v4885
        %v4887 = vpop.f32.mrb[0].mxu0
        %v4888 = vpop.f32.mrb[0].mxu0
        %v4889 = vadd.f32 %v4697, %v4888
        %v4890 = vpop.f32.mrb[0].mxu0
        %4891 = vmatprep.mubr.bf16.mxu0 0
        %4892 = vmatmul.mubr.bf16.gmra.mrb[0].mxu0 %v4757
        %v4893 = vpop.f32.mrb[0].mxu0
        %v4894 = vadd.f32 %v4697, %v4893
        %v4895 = vpop.f32.mrb[0].mxu0
        %v4896 = vpop.f32.mrb[0].mxu0
        %v4897 = vadd.f32 %v4697, %v4896
        %v4898 = vpop.f32.mrb[0].mxu0
        %4899 = vmatprep.mubr.bf16.mxu0 0
        %4900 = vmatmul.mubr.bf16.gmra.mrb[0].mxu0 %v4760
        %v4901 = vpop.f32.mrb[0].mxu0
        %v4902 = vadd.f32 %v4697, %v4901
        %v4903 = vpop.f32.mrb[0].mxu0
        %v4904 = vpop.f32.mrb[0].mxu0
        %v4905 = vadd.f32 %v4697, %v4904
        %v4906 = vpop.f32.mrb[0].mxu0
        %4907 = vmatprep.mubr.bf16.mxu0 0
        %4908 = vmatmul.mubr.bf16.gmra.mrb[0].mxu0 %v4763
        %v4909 = vpop.f32.mrb[0].mxu0
        %v4910 = vadd.f32 %v4697, %v4909
        %v4911 = vpop.f32.mrb[0].mxu0
        %v4912 = vpop.f32.mrb[0].mxu0
        %v4913 = vadd.f32 %v4697, %v4912
        %v4914 = vpop.f32.mrb[0].mxu0
        %4915 = vmatprep.mubr.bf16.mxu0 0
        %4916 = vmatmul.mubr.bf16.gmra.mrb[0].mxu0 %v4766
        %v4917 = vpop.f32.mrb[0].mxu0
        %v4918 = vadd.f32 %v4697, %v4917
        %v4919 = vpop.f32.mrb[0].mxu0
        %v4920 = vpop.f32.mrb[0].mxu0
        %v4921 = vadd.f32 %v4697, %v4920
        %v4922 = vpop.f32.mrb[0].mxu0
        %4923 = vmatprep.mubr.bf16.mxu0 0
        %4924 = vmatmul.mubr.bf16.gmra.mrb[0].mxu0 %v4769
        %v4925 = vpop.f32.mrb[0].mxu0
        %v4926 = vadd.f32 %v4697, %v4925
        %v4927 = vpop.f32.mrb[0].mxu0
        %v4928 = vpop.f32.mrb[0].mxu0
        %v4929 = vadd.f32 %v4697, %v4928
        %v4930 = vpop.f32.mrb[0].mxu0
        %4931 = vdwg.mxu0
        %v4932 = vld [vmem:[%s757] sm:$0xf]
        %v4933 = vld [vmem:[%s761] sm:$0xf]
        %v4934 = vpack.c.bf16 %v4809, %v4806
        %v4935 = vpack.c.bf16 %v4817, %v4814
        %v4936 = vpack.c.bf16 %v4825, %v4822
        %v4937 = vpack.c.bf16 %v4833, %v4830
        %v4938 = vpack.c.bf16 %v4841, %v4838
        %v4939 = vpack.c.bf16 %v4849, %v4846
        %v4940 = vpack.c.bf16 %v4857, %v4854
        %v4941 = vpack.c.bf16 %v4865, %v4862
        %v4942 = vpack.c.bf16 %v4873, %v4870
        %v4943 = vpack.c.bf16 %v4881, %v4878
        %v4944 = vpack.c.bf16 %v4889, %v4886
        %v4945 = vpack.c.bf16 %v4897, %v4894
        %v4946 = vpack.c.bf16 %v4905, %v4902
        %v4947 = vpack.c.bf16 %v4913, %v4910
        %v4948 = vpack.c.bf16 %v4921, %v4918
        %v4949 = vpack.c.bf16 %v4929, %v4926
        %v4951 = vsel %vm1980, %v4932, 0
        %v4954 = vsel %vm1980, %v4934, 0
        %v4957 = vsel %vm1980, %v4935, 0
        %v4960 = vsel %vm1980, %v4936, 0
        %v4963 = vsel %vm1980, %v4937, 0
        %v4966 = vsel %vm1980, %v4938, 0
        %v4969 = vsel %vm1980, %v4939, 0
        %v4972 = vsel %vm1980, %v4940, 0
        %v4975 = vsel %vm1980, %v4941, 0
        %v4978 = vsel %vm1980, %v4942, 0
        %v4981 = vsel %vm1980, %v4943, 0
        %v4984 = vsel %vm1980, %v4944, 0
        %v4987 = vsel %vm1980, %v4945, 0
        %v4990 = vsel %vm1980, %v4946, 0
        %v4993 = vsel %vm1980, %v4947, 0
        %v4996 = vsel %vm1980, %v4948, 0
        %v4999 = vsel %vm1980, %v4949, 0
        %5001 = vmatprep.subr.bf16.mxu0 0
        %5002 = vmatpush1.bf16.xpose.msra.mxu0 %v4954
        %5003 = vmatprep.subr.bf16.mxu0 0
        %5004 = vmatpush1.bf16.xpose.msra.mxu0 %v4957
        %5005 = vmatprep.subr.bf16.mxu0 0
        %5006 = vmatpush1.bf16.xpose.msra.mxu0 %v4960
        %5007 = vmatprep.subr.bf16.mxu0 0
        %5008 = vmatpush1.bf16.xpose.msra.mxu0 %v4963
        %5009 = vmatprep.subr.bf16.mxu0 0
        %5010 = vmatpush1.bf16.xpose.msra.mxu0 %v4966
        %5011 = vmatprep.subr.bf16.mxu0 0
        %5012 = vmatpush1.bf16.xpose.msra.mxu0 %v4969
        %5013 = vmatprep.subr.bf16.mxu0 0
        %5014 = vmatpush1.bf16.xpose.msra.mxu0 %v4972
        %5015 = vmatprep.subr.bf16.mxu0 0
        %5016 = vmatpush1.bf16.xpose.msra.mxu0 %v4975
        %5017 = vmatprep.subr.bf16.mxu0 0
        %5018 = vmatpush1.bf16.xpose.msra.mxu0 %v4978
        %5019 = vmatprep.subr.bf16.mxu0 0
        %5020 = vmatpush1.bf16.xpose.msra.mxu0 %v4981
        %5021 = vmatprep.subr.bf16.mxu0 0
        %5022 = vmatpush1.bf16.xpose.msra.mxu0 %v4984
        %5023 = vmatprep.subr.bf16.mxu0 0
        %5024 = vmatpush1.bf16.xpose.msra.mxu0 %v4987
        %5025 = vmatprep.subr.bf16.mxu0 0
        %5026 = vmatpush1.bf16.xpose.msra.mxu0 %v4990
        %5027 = vmatprep.subr.bf16.mxu0 0
        %5028 = vmatpush1.bf16.xpose.msra.mxu0 %v4993
        %5029 = vmatprep.subr.bf16.mxu0 0
        %5030 = vmatpush1.bf16.xpose.msra.mxu0 %v4996
        %5031 = vmatprep.subr.bf16.mxu0 0
        %5032 = vmatpush1.bf16.xpose.msra.mxu0 %v4999
        %5033 = vmatprep.mubr.bf16.mxu0 0
        %5034 = vmatmul.mubr.bf16.gmra.mrb[0].mxu0 %v4951
        %v5035 = vpop.f32.mrb[0].mxu0
        %v5036 = vadd.f32 0.0, %v5035
        %v5037 = vpop.f32.mrb[0].mxu0
        %v5038 = vadd.f32 0.0, %v5037
        %v5039 = vpop.f32.mrb[0].mxu0
        %v5040 = vpop.f32.mrb[0].mxu0
        %5041 = vdwg.mxu0
        %v5042 = vrot.slane %v5036, 4
        %v5043 = vmax.f32 %v5036, %v5042
        %v5044 = vrot.slane %v5043, 2
        %v5045 = vmax.f32 %v5043, %v5044
        %v5046 = vrot.slane %v5045, 1
        %v5047 = vmax.f32 %v5045, %v5046
        %v5048 = vrot.slane %v5038, 4
        %v5049 = vmax.f32 %v5038, %v5048
        %v5050 = vrot.slane %v5049, 2
        %v5051 = vmax.f32 %v5049, %v5050
        %v5052 = vrot.slane %v5051, 1
        %v5053 = vmax.f32 %v5051, %v5052
        %v5054 = vsub.f32 %v5036, %v5047
        %v5055 = vsub.f32 %v5038, %v5053
        %v5056 = vmul.f32 %v5054, 1.442695
        %v5057 = vpow.pop %v5056
        %v5058 = vmul.f32 %v5055, 1.442695
        %v5059 = vpow.pop %v5058
        %v5060 = vrot.slane %v5057, 4
        %v5061 = vadd.f32 %v5057, %v5060
        %v5062 = vrot.slane %v5061, 2
        %v5063 = vadd.f32 %v5061, %v5062
        %v5064 = vrot.slane %v5063, 1
        %v5065 = vadd.f32 %v5063, %v5064
        %v5066 = vrot.slane %v5059, 4
        %v5067 = vadd.f32 %v5059, %v5066
        %v5068 = vrot.slane %v5067, 2
        %v5069 = vadd.f32 %v5067, %v5068
        %v5070 = vrot.slane %v5069, 1
        %v5071 = vadd.f32 %v5069, %v5070
        %v5072 = vrcp.pop %v5065
        %v5073 = vrcp.pop %v5071
        %v5074 = vmul.f32 %v5057, %v5072
        %v5075 = vmul.f32 %v5059, %v5073
        %v5076 = vpack.c.bf16 %v5074, %v5074
        %v5077 = vpack.c.bf16 %v5075, %v5075
        %5078 = vxpose.xlu0.c.b16.start [1/8] %v5076, 128
        %5079 = vxpose.xlu0.c.b16.cont [2/8] 0, 128
        %5080 = vxpose.xlu0.c.b16.cont [3/8] 0, 128
        %5081 = vxpose.xlu0.c.b16.cont [4/8] 0, 128
        %5082 = vxpose.xlu0.c.b16.cont [5/8] 0, 128
        %5083 = vxpose.xlu0.c.b16.cont [6/8] 0, 128
        %5084 = vxpose.xlu0.c.b16.cont [7/8] 0, 128
        %5085 = vxpose.xlu0.c.b16.end [8/8] 0, 128
        %v5086 = vpop.trf.xlu0
        %v5087 = vpop.trf.xlu0
        %v5088 = vpop.trf.xlu0
        %v5089 = vpop.trf.xlu0
        %v5090 = vpop.trf.xlu0
        %v5091 = vpop.trf.xlu0
        %v5092 = vpop.trf.xlu0
        %v5093 = vpop.trf.xlu0
        %5094 = vxpose.xlu0.c.b16.start [1/8] %v5077, 128
        %5095 = vxpose.xlu0.c.b16.cont [2/8] 0, 128
        %5096 = vxpose.xlu0.c.b16.cont [3/8] 0, 128
        %5097 = vxpose.xlu0.c.b16.cont [4/8] 0, 128
        %5098 = vxpose.xlu0.c.b16.cont [5/8] 0, 128
        %5099 = vxpose.xlu0.c.b16.cont [6/8] 0, 128
        %5100 = vxpose.xlu0.c.b16.cont [7/8] 0, 128
        %5101 = vxpose.xlu0.c.b16.end [8/8] 0, 128
        %v5102 = vpop.trf.xlu0
        %v5103 = vpop.trf.xlu0
        %v5104 = vpop.trf.xlu0
        %v5105 = vpop.trf.xlu0
        %v5106 = vpop.trf.xlu0
        %v5107 = vpop.trf.xlu0
        %v5108 = vpop.trf.xlu0
        %v5109 = vpop.trf.xlu0
        %v5111 = vsel %vm2141, %v5086, 0
        %v5114 = vsel %vm2141, %v5087, 0
        %v5117 = vsel %vm2141, %v5088, 0
        %v5120 = vsel %vm2141, %v5089, 0
        %v5123 = vsel %vm2141, %v5090, 0
        %v5126 = vsel %vm2141, %v5091, 0
        %v5129 = vsel %vm2141, %v5092, 0
        %v5132 = vsel %vm2141, %v5093, 0
        %v5135 = vsel %vm2141, %v5102, 0
        %v5138 = vsel %vm2141, %v5103, 0
        %v5141 = vsel %vm2141, %v5104, 0
        %v5144 = vsel %vm2141, %v5105, 0
        %v5147 = vsel %vm2141, %v5106, 0
        %v5150 = vsel %vm2141, %v5107, 0
        %v5153 = vsel %vm2141, %v5108, 0
        %v5156 = vsel %vm2141, %v5109, 0
        %v5159 = vsel %vm2190, %v4933, 0
        %5161 = vmatprep.subr.bf16.mxu0 0
        %5162 = vmatpush1.bf16.msra.mxu0 %v5159
        %5163 = vmatprep.subr.bf16.mxu0 0
        %5164 = vmatpush1.bf16.msra.mxu0 0
        %5165 = vmatprep.subr.bf16.mxu0 0
        %5166 = vmatpush1.bf16.msra.mxu0 0
        %5167 = vmatprep.subr.bf16.mxu0 0
        %5168 = vmatpush1.bf16.msra.mxu0 0
        %5169 = vmatprep.subr.bf16.mxu0 0
        %5170 = vmatpush1.bf16.msra.mxu0 0
        %5171 = vmatprep.subr.bf16.mxu0 0
        %5172 = vmatpush1.bf16.msra.mxu0 0
        %5173 = vmatprep.subr.bf16.mxu0 0
        %5174 = vmatpush1.bf16.msra.mxu0 0
        %5175 = vmatprep.subr.bf16.mxu0 0
        %5176 = vmatpush1.bf16.msra.mxu0 0
        %5177 = vmatprep.subr.bf16.mxu0 0
        %5178 = vmatpush1.bf16.msra.mxu0 0
        %5179 = vmatprep.subr.bf16.mxu0 0
        %5180 = vmatpush1.bf16.msra.mxu0 0
        %5181 = vmatprep.subr.bf16.mxu0 0
        %5182 = vmatpush1.bf16.msra.mxu0 0
        %5183 = vmatprep.subr.bf16.mxu0 0
        %5184 = vmatpush1.bf16.msra.mxu0 0
        %5185 = vmatprep.subr.bf16.mxu0 0
        %5186 = vmatpush1.bf16.msra.mxu0 0
        %5187 = vmatprep.subr.bf16.mxu0 0
        %5188 = vmatpush1.bf16.msra.mxu0 0
        %5189 = vmatprep.subr.bf16.mxu0 0
        %5190 = vmatpush1.bf16.msra.mxu0 0
        %5191 = vmatprep.subr.bf16.mxu0 0
        %5192 = vmatpush1.bf16.msra.mxu0 0
        %5193 = vmatprep.mubr.bf16.mxu0 0
        %5194 = vmatmul.mubr.bf16.gmra.mrb[0].mxu0 %v5111
        %v5195 = vpop.f32.mrb[0].mxu0
        %v5196 = vadd.f32 0.0, %v5195
        %v5197 = vpop.f32.mrb[0].mxu0
        %v5198 = vpop.f32.mrb[0].mxu0
        %v5199 = vadd.f32 0.0, %v5198
        %v5200 = vpop.f32.mrb[0].mxu0
        %5201 = vmatprep.mubr.bf16.mxu0 0
        %5202 = vmatmul.mubr.bf16.gmra.mrb[0].mxu0 %v5114
        %v5203 = vpop.f32.mrb[0].mxu0
        %v5204 = vadd.f32 0.0, %v5203
        %v5205 = vpop.f32.mrb[0].mxu0
        %v5206 = vpop.f32.mrb[0].mxu0
        %v5207 = vadd.f32 0.0, %v5206
        %v5208 = vpop.f32.mrb[0].mxu0
        %5209 = vmatprep.mubr.bf16.mxu0 0
        %5210 = vmatmul.mubr.bf16.gmra.mrb[0].mxu0 %v5117
        %v5211 = vpop.f32.mrb[0].mxu0
        %v5212 = vadd.f32 0.0, %v5211
        %v5213 = vpop.f32.mrb[0].mxu0
        %v5214 = vpop.f32.mrb[0].mxu0
        %v5215 = vadd.f32 0.0, %v5214
        %v5216 = vpop.f32.mrb[0].mxu0
        %5217 = vmatprep.mubr.bf16.mxu0 0
        %5218 = vmatmul.mubr.bf16.gmra.mrb[0].mxu0 %v5120
        %v5219 = vpop.f32.mrb[0].mxu0
        %v5220 = vadd.f32 0.0, %v5219
        %v5221 = vpop.f32.mrb[0].mxu0
        %v5222 = vpop.f32.mrb[0].mxu0
        %v5223 = vadd.f32 0.0, %v5222
        %v5224 = vpop.f32.mrb[0].mxu0
        %5225 = vmatprep.mubr.bf16.mxu0 0
        %5226 = vmatmul.mubr.bf16.gmra.mrb[0].mxu0 %v5123
        %v5227 = vpop.f32.mrb[0].mxu0
        %v5228 = vadd.f32 0.0, %v5227
        %v5229 = vpop.f32.mrb[0].mxu0
        %v5230 = vpop.f32.mrb[0].mxu0
        %v5231 = vadd.f32 0.0, %v5230
        %v5232 = vpop.f32.mrb[0].mxu0
        %5233 = vmatprep.mubr.bf16.mxu0 0
        %5234 = vmatmul.mubr.bf16.gmra.mrb[0].mxu0 %v5126
        %v5235 = vpop.f32.mrb[0].mxu0
        %v5236 = vadd.f32 0.0, %v5235
        %v5237 = vpop.f32.mrb[0].mxu0
        %v5238 = vpop.f32.mrb[0].mxu0
        %v5239 = vadd.f32 0.0, %v5238
        %v5240 = vpop.f32.mrb[0].mxu0
        %5241 = vmatprep.mubr.bf16.mxu0 0
        %5242 = vmatmul.mubr.bf16.gmra.mrb[0].mxu0 %v5129
        %v5243 = vpop.f32.mrb[0].mxu0
        %v5244 = vadd.f32 0.0, %v5243
        %v5245 = vpop.f32.mrb[0].mxu0
        %v5246 = vpop.f32.mrb[0].mxu0
        %v5247 = vadd.f32 0.0, %v5246
        %v5248 = vpop.f32.mrb[0].mxu0
        %5249 = vmatprep.mubr.bf16.mxu0 0
        %5250 = vmatmul.mubr.bf16.gmra.mrb[0].mxu0 %v5132
        %v5251 = vpop.f32.mrb[0].mxu0
        %v5252 = vadd.f32 0.0, %v5251
        %v5253 = vpop.f32.mrb[0].mxu0
        %v5254 = vpop.f32.mrb[0].mxu0
        %v5255 = vadd.f32 0.0, %v5254
        %v5256 = vpop.f32.mrb[0].mxu0
        %5257 = vmatprep.mubr.bf16.mxu0 0
        %5258 = vmatmul.mubr.bf16.gmra.mrb[0].mxu0 %v5135
        %v5259 = vpop.f32.mrb[0].mxu0
        %v5260 = vadd.f32 0.0, %v5259
        %v5261 = vpop.f32.mrb[0].mxu0
        %v5262 = vpop.f32.mrb[0].mxu0
        %v5263 = vadd.f32 0.0, %v5262
        %v5264 = vpop.f32.mrb[0].mxu0
        %5265 = vmatprep.mubr.bf16.mxu0 0
        %5266 = vmatmul.mubr.bf16.gmra.mrb[0].mxu0 %v5138
        %v5267 = vpop.f32.mrb[0].mxu0
        %v5268 = vadd.f32 0.0, %v5267
        %v5269 = vpop.f32.mrb[0].mxu0
        %v5270 = vpop.f32.mrb[0].mxu0
        %v5271 = vadd.f32 0.0, %v5270
        %v5272 = vpop.f32.mrb[0].mxu0
        %5273 = vmatprep.mubr.bf16.mxu0 0
        %5274 = vmatmul.mubr.bf16.gmra.mrb[0].mxu0 %v5141
        %v5275 = vpop.f32.mrb[0].mxu0
        %v5276 = vadd.f32 0.0, %v5275
        %v5277 = vpop.f32.mrb[0].mxu0
        %v5278 = vpop.f32.mrb[0].mxu0
        %v5279 = vadd.f32 0.0, %v5278
        %v5280 = vpop.f32.mrb[0].mxu0
        %5281 = vmatprep.mubr.bf16.mxu0 0
        %5282 = vmatmul.mubr.bf16.gmra.mrb[0].mxu0 %v5144
        %v5283 = vpop.f32.mrb[0].mxu0
        %v5284 = vadd.f32 0.0, %v5283
        %v5285 = vpop.f32.mrb[0].mxu0
        %v5286 = vpop.f32.mrb[0].mxu0
        %v5287 = vadd.f32 0.0, %v5286
        %v5288 = vpop.f32.mrb[0].mxu0
        %5289 = vmatprep.mubr.bf16.mxu0 0
        %5290 = vmatmul.mubr.bf16.gmra.mrb[0].mxu0 %v5147
        %v5291 = vpop.f32.mrb[0].mxu0
        %v5292 = vadd.f32 0.0, %v5291
        %v5293 = vpop.f32.mrb[0].mxu0
        %v5294 = vpop.f32.mrb[0].mxu0
        %v5295 = vadd.f32 0.0, %v5294
        %v5296 = vpop.f32.mrb[0].mxu0
        %5297 = vmatprep.mubr.bf16.mxu0 0
        %5298 = vmatmul.mubr.bf16.gmra.mrb[0].mxu0 %v5150
        %v5299 = vpop.f32.mrb[0].mxu0
        %v5300 = vadd.f32 0.0, %v5299
        %v5301 = vpop.f32.mrb[0].mxu0
        %v5302 = vpop.f32.mrb[0].mxu0
        %v5303 = vadd.f32 0.0, %v5302
        %v5304 = vpop.f32.mrb[0].mxu0
        %5305 = vmatprep.mubr.bf16.mxu0 0
        %5306 = vmatmul.mubr.bf16.gmra.mrb[0].mxu0 %v5153
        %v5307 = vpop.f32.mrb[0].mxu0
        %v5308 = vadd.f32 0.0, %v5307
        %v5309 = vpop.f32.mrb[0].mxu0
        %v5310 = vpop.f32.mrb[0].mxu0
        %v5311 = vadd.f32 0.0, %v5310
        %v5312 = vpop.f32.mrb[0].mxu0
        %5313 = vmatprep.mubr.bf16.mxu0 0
        %5314 = vmatmul.mubr.bf16.gmra.mrb[0].mxu0 %v5156
        %v5315 = vpop.f32.mrb[0].mxu0
        %v5316 = vadd.f32 0.0, %v5315
        %v5317 = vpop.f32.mrb[0].mxu0
        %v5318 = vpop.f32.mrb[0].mxu0
        %v5319 = vadd.f32 0.0, %v5318
        %v5320 = vpop.f32.mrb[0].mxu0
        %5321 = vdwg.mxu0
        %v5322 = vpack.c.bf16 %v5199, %v5196
        %v5323 = vpack.c.bf16 %v5207, %v5204
        %v5324 = vpack.c.bf16 %v5215, %v5212
        %v5325 = vpack.c.bf16 %v5223, %v5220
        %v5326 = vpack.c.bf16 %v5231, %v5228
        %v5327 = vpack.c.bf16 %v5239, %v5236
        %v5328 = vpack.c.bf16 %v5247, %v5244
        %v5329 = vpack.c.bf16 %v5255, %v5252
        %v5330 = vpack.c.bf16 %v5263, %v5260
        %v5331 = vpack.c.bf16 %v5271, %v5268
        %v5332 = vpack.c.bf16 %v5279, %v5276
        %v5333 = vpack.c.bf16 %v5287, %v5284
        %v5334 = vpack.c.bf16 %v5295, %v5292
        %v5335 = vpack.c.bf16 %v5303, %v5300
        %v5336 = vpack.c.bf16 %v5311, %v5308
        %v5337 = vpack.c.bf16 %v5319, %v5316
        %v5338 = vld [vmem:[%s18] sm:$0xf]
        %v5339 = vld [vmem:[%s18 + $0x4] sm:$0xf]
        %v5341 = vunpack.c.l.b16 %v4932
        %v5342 = vpack.c.b16 %v5341, %v5341
        %5343 = vrot.lane.b32.xlu0 %v5342, 112
        %v5344 = vpop.permute.xlu0 %5343
        %5361 = vrot.lane.b32.xlu0 %v4934, 112
        %v5362 = vpop.permute.xlu0 %5361
        %5363 = vrot.lane.b32.xlu0 %v4935, 112
        %v5364 = vpop.permute.xlu0 %5363
        %5365 = vrot.lane.b32.xlu0 %v4936, 112
        %v5366 = vpop.permute.xlu0 %5365
        %5367 = vrot.lane.b32.xlu0 %v4937, 112
        %v5368 = vpop.permute.xlu0 %5367
        %5369 = vrot.lane.b32.xlu0 %v4938, 112
        %v5370 = vpop.permute.xlu0 %5369
        %5371 = vrot.lane.b32.xlu0 %v4939, 112
        %v5372 = vpop.permute.xlu0 %5371
        %5373 = vrot.lane.b32.xlu0 %v4940, 112
        %v5374 = vpop.permute.xlu0 %5373
        %5375 = vrot.lane.b32.xlu0 %v4941, 112
        %v5376 = vpop.permute.xlu0 %5375
        %5377 = vrot.lane.b32.xlu0 %v4942, 112
        %v5378 = vpop.permute.xlu0 %5377
        %5379 = vrot.lane.b32.xlu0 %v4943, 112
        %v5380 = vpop.permute.xlu0 %5379
        %5381 = vrot.lane.b32.xlu0 %v4944, 112
        %v5382 = vpop.permute.xlu0 %5381
        %5383 = vrot.lane.b32.xlu0 %v4945, 112
        %v5384 = vpop.permute.xlu0 %5383
        %5385 = vrot.lane.b32.xlu0 %v4946, 112
        %v5386 = vpop.permute.xlu0 %5385
        %5387 = vrot.lane.b32.xlu0 %v4947, 112
        %v5388 = vpop.permute.xlu0 %5387
        %5389 = vrot.lane.b32.xlu0 %v4948, 112
        %v5390 = vpop.permute.xlu0 %5389
        %5391 = vrot.lane.b32.xlu0 %v4949, 112
        %v5392 = vpop.permute.xlu0 %5391
        %v5394 = vsel %vm1980, %v5344, 0
        %v5397 = vsel %vm1980, %v5362, 0
        %v5400 = vsel %vm1980, %v5364, 0
        %v5403 = vsel %vm1980, %v5366, 0
        %v5406 = vsel %vm1980, %v5368, 0
        %v5409 = vsel %vm1980, %v5370, 0
        %v5412 = vsel %vm1980, %v5372, 0
        %v5415 = vsel %vm1980, %v5374, 0
        %v5418 = vsel %vm1980, %v5376, 0
        %v5421 = vsel %vm1980, %v5378, 0
        %v5424 = vsel %vm1980, %v5380, 0
        %v5427 = vsel %vm1980, %v5382, 0
        %v5430 = vsel %vm1980, %v5384, 0
        %v5433 = vsel %vm1980, %v5386, 0
        %v5436 = vsel %vm1980, %v5388, 0
        %v5439 = vsel %vm1980, %v5390, 0
        %v5442 = vsel %vm1980, %v5392, 0
        %5444 = vmatprep.subr.bf16.mxu0 0
        %5445 = vmatpush1.bf16.xpose.msra.mxu0 %v5397
        %5446 = vmatprep.subr.bf16.mxu0 0
        %5447 = vmatpush1.bf16.xpose.msra.mxu0 %v5400
        %5448 = vmatprep.subr.bf16.mxu0 0
        %5449 = vmatpush1.bf16.xpose.msra.mxu0 %v5403
        %5450 = vmatprep.subr.bf16.mxu0 0
        %5451 = vmatpush1.bf16.xpose.msra.mxu0 %v5406
        %5452 = vmatprep.subr.bf16.mxu0 0
        %5453 = vmatpush1.bf16.xpose.msra.mxu0 %v5409
        %5454 = vmatprep.subr.bf16.mxu0 0
        %5455 = vmatpush1.bf16.xpose.msra.mxu0 %v5412
        %5456 = vmatprep.subr.bf16.mxu0 0
        %5457 = vmatpush1.bf16.xpose.msra.mxu0 %v5415
        %5458 = vmatprep.subr.bf16.mxu0 0
        %5459 = vmatpush1.bf16.xpose.msra.mxu0 %v5418
        %5460 = vmatprep.subr.bf16.mxu0 0
        %5461 = vmatpush1.bf16.xpose.msra.mxu0 %v5421
        %5462 = vmatprep.subr.bf16.mxu0 0
        %5463 = vmatpush1.bf16.xpose.msra.mxu0 %v5424
        %5464 = vmatprep.subr.bf16.mxu0 0
        %5465 = vmatpush1.bf16.xpose.msra.mxu0 %v5427
        %5466 = vmatprep.subr.bf16.mxu0 0
        %5467 = vmatpush1.bf16.xpose.msra.mxu0 %v5430
        %5468 = vmatprep.subr.bf16.mxu0 0
        %5469 = vmatpush1.bf16.xpose.msra.mxu0 %v5433
        %5470 = vmatprep.subr.bf16.mxu0 0
        %5471 = vmatpush1.bf16.xpose.msra.mxu0 %v5436
        %5472 = vmatprep.subr.bf16.mxu0 0
        %5473 = vmatpush1.bf16.xpose.msra.mxu0 %v5439
        %5474 = vmatprep.subr.bf16.mxu0 0
        %5475 = vmatpush1.bf16.xpose.msra.mxu0 %v5442
        %5476 = vmatprep.mubr.bf16.mxu0 0
        %5477 = vmatmul.mubr.bf16.gmra.mrb[0].mxu0 %v5394
        %v5478 = vpop.f32.mrb[0].mxu0
        %v5479 = vadd.f32 0.0, %v5478
        %v5480 = vpop.f32.mrb[0].mxu0
        %v5481 = vadd.f32 0.0, %v5480
        %v5482 = vpop.f32.mrb[0].mxu0
        %v5483 = vpop.f32.mrb[0].mxu0
        %5484 = vdwg.mxu0
        %v5485 = vrot.slane %v5479, 4
        %v5486 = vmax.f32 %v5479, %v5485
        %v5487 = vrot.slane %v5486, 2
        %v5488 = vmax.f32 %v5486, %v5487
        %v5489 = vrot.slane %v5488, 1
        %v5490 = vmax.f32 %v5488, %v5489
        %v5491 = vrot.slane %v5481, 4
        %v5492 = vmax.f32 %v5481, %v5491
        %v5493 = vrot.slane %v5492, 2
        %v5494 = vmax.f32 %v5492, %v5493
        %v5495 = vrot.slane %v5494, 1
        %v5496 = vmax.f32 %v5494, %v5495
        %v5497 = vsub.f32 %v5479, %v5490
        %v5498 = vsub.f32 %v5481, %v5496
        %v5499 = vmul.f32 %v5497, 1.442695
        %v5500 = vpow.pop %v5499
        %v5501 = vmul.f32 %v5498, 1.442695
        %v5502 = vpow.pop %v5501
        %v5503 = vrot.slane %v5500, 4
        %v5504 = vadd.f32 %v5500, %v5503
        %v5505 = vrot.slane %v5504, 2
        %v5506 = vadd.f32 %v5504, %v5505
        %v5507 = vrot.slane %v5506, 1
        %v5508 = vadd.f32 %v5506, %v5507
        %v5509 = vrot.slane %v5502, 4
        %v5510 = vadd.f32 %v5502, %v5509
        %v5511 = vrot.slane %v5510, 2
        %v5512 = vadd.f32 %v5510, %v5511
        %v5513 = vrot.slane %v5512, 1
        %v5514 = vadd.f32 %v5512, %v5513
        %v5515 = vrcp.pop %v5508
        %v5516 = vrcp.pop %v5514
        %v5517 = vmul.f32 %v5500, %v5515
        %v5518 = vmul.f32 %v5502, %v5516
        %v5519 = vpack.c.bf16 %v5517, %v5517
        %v5520 = vpack.c.bf16 %v5518, %v5518
        %5521 = vxpose.xlu0.c.b16.start [1/8] %v5519, 128
        %5522 = vxpose.xlu0.c.b16.cont [2/8] 0, 128
        %5523 = vxpose.xlu0.c.b16.cont [3/8] 0, 128
        %5524 = vxpose.xlu0.c.b16.cont [4/8] 0, 128
        %5525 = vxpose.xlu0.c.b16.cont [5/8] 0, 128
        %5526 = vxpose.xlu0.c.b16.cont [6/8] 0, 128
        %5527 = vxpose.xlu0.c.b16.cont [7/8] 0, 128
        %5528 = vxpose.xlu0.c.b16.end [8/8] 0, 128
        %v5529 = vpop.trf.xlu0
        %v5530 = vpop.trf.xlu0
        %v5531 = vpop.trf.xlu0
        %v5532 = vpop.trf.xlu0
        %v5533 = vpop.trf.xlu0
        %v5534 = vpop.trf.xlu0
        %v5535 = vpop.trf.xlu0
        %v5536 = vpop.trf.xlu0
        %5537 = vxpose.xlu0.c.b16.start [1/8] %v5520, 128
        %5538 = vxpose.xlu0.c.b16.cont [2/8] 0, 128
        %5539 = vxpose.xlu0.c.b16.cont [3/8] 0, 128
        %5540 = vxpose.xlu0.c.b16.cont [4/8] 0, 128
        %5541 = vxpose.xlu0.c.b16.cont [5/8] 0, 128
        %5542 = vxpose.xlu0.c.b16.cont [6/8] 0, 128
        %5543 = vxpose.xlu0.c.b16.cont [7/8] 0, 128
        %5544 = vxpose.xlu0.c.b16.end [8/8] 0, 128
        %v5545 = vpop.trf.xlu0
        %v5546 = vpop.trf.xlu0
        %v5547 = vpop.trf.xlu0
        %v5548 = vpop.trf.xlu0
        %v5549 = vpop.trf.xlu0
        %v5550 = vpop.trf.xlu0
        %v5551 = vpop.trf.xlu0
        %v5552 = vpop.trf.xlu0
        %v5554 = vunpack.c.l.b16 %v4933
        %v5555 = vpack.c.b16 %v5554, %v5554
        %5556 = vrot.lane.b32.xlu0 %v5555, 112
        %v5557 = vpop.permute.xlu0 %5556
        %v5559 = vsel %vm2141, %v5529, 0
        %v5562 = vsel %vm2141, %v5530, 0
        %v5565 = vsel %vm2141, %v5531, 0
        %v5568 = vsel %vm2141, %v5532, 0
        %v5571 = vsel %vm2141, %v5533, 0
        %v5574 = vsel %vm2141, %v5534, 0
        %v5577 = vsel %vm2141, %v5535, 0
        %v5580 = vsel %vm2141, %v5536, 0
        %v5583 = vsel %vm2141, %v5545, 0
        %v5586 = vsel %vm2141, %v5546, 0
        %v5589 = vsel %vm2141, %v5547, 0
        %v5592 = vsel %vm2141, %v5548, 0
        %v5595 = vsel %vm2141, %v5549, 0
        %v5598 = vsel %vm2141, %v5550, 0
        %v5601 = vsel %vm2141, %v5551, 0
        %v5604 = vsel %vm2141, %v5552, 0
        %v5607 = vsel %vm2190, %v5557, 0
        %5609 = vmatprep.subr.bf16.mxu0 0
        %5610 = vmatpush1.bf16.msra.mxu0 %v5607
        %5611 = vmatprep.subr.bf16.mxu0 0
        %5612 = vmatpush1.bf16.msra.mxu0 0
        %5613 = vmatprep.subr.bf16.mxu0 0
        %5614 = vmatpush1.bf16.msra.mxu0 0
        %5615 = vmatprep.subr.bf16.mxu0 0
        %5616 = vmatpush1.bf16.msra.mxu0 0
        %5617 = vmatprep.subr.bf16.mxu0 0
        %5618 = vmatpush1.bf16.msra.mxu0 0
        %5619 = vmatprep.subr.bf16.mxu0 0
        %5620 = vmatpush1.bf16.msra.mxu0 0
        %5621 = vmatprep.subr.bf16.mxu0 0
        %5622 = vmatpush1.bf16.msra.mxu0 0
        %5623 = vmatprep.subr.bf16.mxu0 0
        %5624 = vmatpush1.bf16.msra.mxu0 0
        %5625 = vmatprep.subr.bf16.mxu0 0
        %5626 = vmatpush1.bf16.msra.mxu0 0
        %5627 = vmatprep.subr.bf16.mxu0 0
        %5628 = vmatpush1.bf16.msra.mxu0 0
        %5629 = vmatprep.subr.bf16.mxu0 0
        %5630 = vmatpush1.bf16.msra.mxu0 0
        %5631 = vmatprep.subr.bf16.mxu0 0
        %5632 = vmatpush1.bf16.msra.mxu0 0
        %5633 = vmatprep.subr.bf16.mxu0 0
        %5634 = vmatpush1.bf16.msra.mxu0 0
        %5635 = vmatprep.subr.bf16.mxu0 0
        %5636 = vmatpush1.bf16.msra.mxu0 0
        %5637 = vmatprep.subr.bf16.mxu0 0
        %5638 = vmatpush1.bf16.msra.mxu0 0
        %5639 = vmatprep.subr.bf16.mxu0 0
        %5640 = vmatpush1.bf16.msra.mxu0 0
        %5641 = vmatprep.mubr.bf16.mxu0 0
        %5642 = vmatmul.mubr.bf16.gmra.mrb[0].mxu0 %v5559
        %v5643 = vpop.f32.mrb[0].mxu0
        %v5644 = vadd.f32 0.0, %v5643
        %v5645 = vpop.f32.mrb[0].mxu0
        %v5646 = vpop.f32.mrb[0].mxu0
        %v5647 = vadd.f32 0.0, %v5646
        %v5648 = vpop.f32.mrb[0].mxu0
        %5649 = vmatprep.mubr.bf16.mxu0 0
        %5650 = vmatmul.mubr.bf16.gmra.mrb[0].mxu0 %v5562
        %v5651 = vpop.f32.mrb[0].mxu0
        %v5652 = vadd.f32 0.0, %v5651
        %v5653 = vpop.f32.mrb[0].mxu0
        %v5654 = vpop.f32.mrb[0].mxu0
        %v5655 = vadd.f32 0.0, %v5654
        %v5656 = vpop.f32.mrb[0].mxu0
        %5657 = vmatprep.mubr.bf16.mxu0 0
        %5658 = vmatmul.mubr.bf16.gmra.mrb[0].mxu0 %v5565
        %v5659 = vpop.f32.mrb[0].mxu0
        %v5660 = vadd.f32 0.0, %v5659
        %v5661 = vpop.f32.mrb[0].mxu0
        %v5662 = vpop.f32.mrb[0].mxu0
        %v5663 = vadd.f32 0.0, %v5662
        %v5664 = vpop.f32.mrb[0].mxu0
        %5665 = vmatprep.mubr.bf16.mxu0 0
        %5666 = vmatmul.mubr.bf16.gmra.mrb[0].mxu0 %v5568
        %v5667 = vpop.f32.mrb[0].mxu0
        %v5668 = vadd.f32 0.0, %v5667
        %v5669 = vpop.f32.mrb[0].mxu0
        %v5670 = vpop.f32.mrb[0].mxu0
        %v5671 = vadd.f32 0.0, %v5670
        %v5672 = vpop.f32.mrb[0].mxu0
        %5673 = vmatprep.mubr.bf16.mxu0 0
        %5674 = vmatmul.mubr.bf16.gmra.mrb[0].mxu0 %v5571
        %v5675 = vpop.f32.mrb[0].mxu0
        %v5676 = vadd.f32 0.0, %v5675
        %v5677 = vpop.f32.mrb[0].mxu0
        %v5678 = vpop.f32.mrb[0].mxu0
        %v5679 = vadd.f32 0.0, %v5678
        %v5680 = vpop.f32.mrb[0].mxu0
        %5681 = vmatprep.mubr.bf16.mxu0 0
        %5682 = vmatmul.mubr.bf16.gmra.mrb[0].mxu0 %v5574
        %v5683 = vpop.f32.mrb[0].mxu0
        %v5684 = vadd.f32 0.0, %v5683
        %v5685 = vpop.f32.mrb[0].mxu0
        %v5686 = vpop.f32.mrb[0].mxu0
        %v5687 = vadd.f32 0.0, %v5686
        %v5688 = vpop.f32.mrb[0].mxu0
        %5689 = vmatprep.mubr.bf16.mxu0 0
        %5690 = vmatmul.mubr.bf16.gmra.mrb[0].mxu0 %v5577
        %v5691 = vpop.f32.mrb[0].mxu0
        %v5692 = vadd.f32 0.0, %v5691
        %v5693 = vpop.f32.mrb[0].mxu0
        %v5694 = vpop.f32.mrb[0].mxu0
        %v5695 = vadd.f32 0.0, %v5694
        %v5696 = vpop.f32.mrb[0].mxu0
        %5697 = vmatprep.mubr.bf16.mxu0 0
        %5698 = vmatmul.mubr.bf16.gmra.mrb[0].mxu0 %v5580
        %v5699 = vpop.f32.mrb[0].mxu0
        %v5700 = vadd.f32 0.0, %v5699
        %v5701 = vpop.f32.mrb[0].mxu0
        %v5702 = vpop.f32.mrb[0].mxu0
        %v5703 = vadd.f32 0.0, %v5702
        %v5704 = vpop.f32.mrb[0].mxu0
        %5705 = vmatprep.mubr.bf16.mxu0 0
        %5706 = vmatmul.mubr.bf16.gmra.mrb[0].mxu0 %v5583
        %v5707 = vpop.f32.mrb[0].mxu0
        %v5708 = vadd.f32 0.0, %v5707
        %v5709 = vpop.f32.mrb[0].mxu0
        %v5710 = vpop.f32.mrb[0].mxu0
        %v5711 = vadd.f32 0.0, %v5710
        %v5712 = vpop.f32.mrb[0].mxu0
        %5713 = vmatprep.mubr.bf16.mxu0 0
        %5714 = vmatmul.mubr.bf16.gmra.mrb[0].mxu0 %v5586
        %v5715 = vpop.f32.mrb[0].mxu0
        %v5716 = vadd.f32 0.0, %v5715
        %v5717 = vpop.f32.mrb[0].mxu0
        %v5718 = vpop.f32.mrb[0].mxu0
        %v5719 = vadd.f32 0.0, %v5718
        %v5720 = vpop.f32.mrb[0].mxu0
        %5721 = vmatprep.mubr.bf16.mxu0 0
        %5722 = vmatmul.mubr.bf16.gmra.mrb[0].mxu0 %v5589
        %v5723 = vpop.f32.mrb[0].mxu0
        %v5724 = vadd.f32 0.0, %v5723
        %v5725 = vpop.f32.mrb[0].mxu0
        %v5726 = vpop.f32.mrb[0].mxu0
        %v5727 = vadd.f32 0.0, %v5726
        %v5728 = vpop.f32.mrb[0].mxu0
        %5729 = vmatprep.mubr.bf16.mxu0 0
        %5730 = vmatmul.mubr.bf16.gmra.mrb[0].mxu0 %v5592
        %v5731 = vpop.f32.mrb[0].mxu0
        %v5732 = vadd.f32 0.0, %v5731
        %v5733 = vpop.f32.mrb[0].mxu0
        %v5734 = vpop.f32.mrb[0].mxu0
        %v5735 = vadd.f32 0.0, %v5734
        %v5736 = vpop.f32.mrb[0].mxu0
        %5737 = vmatprep.mubr.bf16.mxu0 0
        %5738 = vmatmul.mubr.bf16.gmra.mrb[0].mxu0 %v5595
        %v5739 = vpop.f32.mrb[0].mxu0
        %v5740 = vadd.f32 0.0, %v5739
        %v5741 = vpop.f32.mrb[0].mxu0
        %v5742 = vpop.f32.mrb[0].mxu0
        %v5743 = vadd.f32 0.0, %v5742
        %v5744 = vpop.f32.mrb[0].mxu0
        %5745 = vmatprep.mubr.bf16.mxu0 0
        %5746 = vmatmul.mubr.bf16.gmra.mrb[0].mxu0 %v5598
        %v5747 = vpop.f32.mrb[0].mxu0
        %v5748 = vadd.f32 0.0, %v5747
        %v5749 = vpop.f32.mrb[0].mxu0
        %v5750 = vpop.f32.mrb[0].mxu0
        %v5751 = vadd.f32 0.0, %v5750
        %v5752 = vpop.f32.mrb[0].mxu0
        %5753 = vmatprep.mubr.bf16.mxu0 0
        %5754 = vmatmul.mubr.bf16.gmra.mrb[0].mxu0 %v5601
        %v5755 = vpop.f32.mrb[0].mxu0
        %v5756 = vadd.f32 0.0, %v5755
        %v5757 = vpop.f32.mrb[0].mxu0
        %v5758 = vpop.f32.mrb[0].mxu0
        %v5759 = vadd.f32 0.0, %v5758
        %v5760 = vpop.f32.mrb[0].mxu0
        %5761 = vmatprep.mubr.bf16.mxu0 0
        %5762 = vmatmul.mubr.bf16.gmra.mrb[0].mxu0 %v5604
        %v5763 = vpop.f32.mrb[0].mxu0
        %v5764 = vadd.f32 0.0, %v5763
        %v5765 = vpop.f32.mrb[0].mxu0
        %v5766 = vpop.f32.mrb[0].mxu0
        %v5767 = vadd.f32 0.0, %v5766
        %v5768 = vpop.f32.mrb[0].mxu0
        %5769 = vdwg.mxu0
        %v5770 = vpack.c.bf16 %v5647, %v5644
        %v5771 = vpack.c.bf16 %v5655, %v5652
        %v5772 = vpack.c.bf16 %v5663, %v5660
        %v5773 = vpack.c.bf16 %v5671, %v5668
        %v5774 = vpack.c.bf16 %v5679, %v5676
        %v5775 = vpack.c.bf16 %v5687, %v5684
        %v5776 = vpack.c.bf16 %v5695, %v5692
        %v5777 = vpack.c.bf16 %v5703, %v5700
        %v5778 = vpack.c.bf16 %v5711, %v5708
        %v5779 = vpack.c.bf16 %v5719, %v5716
        %v5780 = vpack.c.bf16 %v5727, %v5724
        %v5781 = vpack.c.bf16 %v5735, %v5732
        %v5782 = vpack.c.bf16 %v5743, %v5740
        %v5783 = vpack.c.bf16 %v5751, %v5748
        %v5784 = vpack.c.bf16 %v5759, %v5756
        %v5785 = vpack.c.bf16 %v5767, %v5764
        %v5786 = vld [vmem:[%s18 + $0x8] sm:$0xf]
        %v5787 = vld [vmem:[%s18 + $0xc] sm:$0xf]
        %v5790 = vunpack.c.l.b16 %v5786
        %v5791 = vunpack.c.l.b16 %v5787
        %v5792 = vpack.c.b16 %v5791, %v5790
        %v5795 = vsel %vm1980, %v5770, 0
        %v5798 = vsel %vm1980, %v5771, 0
        %v5801 = vsel %vm1980, %v5772, 0
        %v5804 = vsel %vm1980, %v5773, 0
        %v5807 = vsel %vm1980, %v5774, 0
        %v5810 = vsel %vm1980, %v5775, 0
        %v5813 = vsel %vm1980, %v5776, 0
        %v5816 = vsel %vm1980, %v5777, 0
        %v5819 = vsel %vm1980, %v5778, 0
        %v5822 = vsel %vm1980, %v5779, 0
        %v5825 = vsel %vm1980, %v5780, 0
        %v5828 = vsel %vm1980, %v5781, 0
        %v5831 = vsel %vm1980, %v5782, 0
        %v5834 = vsel %vm1980, %v5783, 0
        %v5837 = vsel %vm1980, %v5784, 0
        %v5840 = vsel %vm1980, %v5785, 0
        %5842 = vmatprep.subr.bf16.mxu0 0
        %5843 = vmatpush1.bf16.msra.mxu0 %v5792
        %5844 = vmatprep.subr.bf16.mxu0 0
        %5845 = vmatpush1.bf16.msra.mxu0 0
        %5846 = vmatprep.subr.bf16.mxu0 0
        %5847 = vmatpush1.bf16.msra.mxu0 0
        %5848 = vmatprep.subr.bf16.mxu0 0
        %5849 = vmatpush1.bf16.msra.mxu0 0
        %5850 = vmatprep.subr.bf16.mxu0 0
        %5851 = vmatpush1.bf16.msra.mxu0 0
        %5852 = vmatprep.subr.bf16.mxu0 0
        %5853 = vmatpush1.bf16.msra.mxu0 0
        %5854 = vmatprep.subr.bf16.mxu0 0
        %5855 = vmatpush1.bf16.msra.mxu0 0
        %5856 = vmatprep.subr.bf16.mxu0 0
        %5857 = vmatpush1.bf16.msra.mxu0 0
        %5858 = vmatprep.subr.bf16.mxu0 0
        %5859 = vmatpush1.bf16.msra.mxu0 0
        %5860 = vmatprep.subr.bf16.mxu0 0
        %5861 = vmatpush1.bf16.msra.mxu0 0
        %5862 = vmatprep.subr.bf16.mxu0 0
        %5863 = vmatpush1.bf16.msra.mxu0 0
        %5864 = vmatprep.subr.bf16.mxu0 0
        %5865 = vmatpush1.bf16.msra.mxu0 0
        %5866 = vmatprep.subr.bf16.mxu0 0
        %5867 = vmatpush1.bf16.msra.mxu0 0
        %5868 = vmatprep.subr.bf16.mxu0 0
        %5869 = vmatpush1.bf16.msra.mxu0 0
        %5870 = vmatprep.subr.bf16.mxu0 0
        %5871 = vmatpush1.bf16.msra.mxu0 0
        %5872 = vmatprep.subr.bf16.mxu0 0
        %5873 = vmatpush1.bf16.msra.mxu0 0
        %5874 = vmatprep.mubr.bf16.mxu0 0
        %5875 = vmatmul.mubr.bf16.gmra.mrb[0].mxu0 %v5795
        %v5876 = vpop.f32.mrb[0].mxu0
        %v5877 = vadd.f32 0.0, %v5876
        %v5878 = vpop.f32.mrb[0].mxu0
        %v5879 = vpop.f32.mrb[0].mxu0
        %v5880 = vadd.f32 0.0, %v5879
        %v5881 = vpop.f32.mrb[0].mxu0
        %5882 = vmatprep.mubr.bf16.mxu0 0
        %5883 = vmatmul.mubr.bf16.gmra.mrb[0].mxu0 %v5798
        %v5884 = vpop.f32.mrb[0].mxu0
        %v5885 = vadd.f32 0.0, %v5884
        %v5886 = vpop.f32.mrb[0].mxu0
        %v5887 = vpop.f32.mrb[0].mxu0
        %v5888 = vadd.f32 0.0, %v5887
        %v5889 = vpop.f32.mrb[0].mxu0
        %5890 = vmatprep.mubr.bf16.mxu0 0
        %5891 = vmatmul.mubr.bf16.gmra.mrb[0].mxu0 %v5801
        %v5892 = vpop.f32.mrb[0].mxu0
        %v5893 = vadd.f32 0.0, %v5892
        %v5894 = vpop.f32.mrb[0].mxu0
        %v5895 = vpop.f32.mrb[0].mxu0
        %v5896 = vadd.f32 0.0, %v5895
        %v5897 = vpop.f32.mrb[0].mxu0
        %5898 = vmatprep.mubr.bf16.mxu0 0
        %5899 = vmatmul.mubr.bf16.gmra.mrb[0].mxu0 %v5804
        %v5900 = vpop.f32.mrb[0].mxu0
        %v5901 = vadd.f32 0.0, %v5900
        %v5902 = vpop.f32.mrb[0].mxu0
        %v5903 = vpop.f32.mrb[0].mxu0
        %v5904 = vadd.f32 0.0, %v5903
        %v5905 = vpop.f32.mrb[0].mxu0
        %5906 = vmatprep.mubr.bf16.mxu0 0
        %5907 = vmatmul.mubr.bf16.gmra.mrb[0].mxu0 %v5807
        %v5908 = vpop.f32.mrb[0].mxu0
        %v5909 = vadd.f32 0.0, %v5908
        %v5910 = vpop.f32.mrb[0].mxu0
        %v5911 = vpop.f32.mrb[0].mxu0
        %v5912 = vadd.f32 0.0, %v5911
        %v5913 = vpop.f32.mrb[0].mxu0
        %5914 = vmatprep.mubr.bf16.mxu0 0
        %5915 = vmatmul.mubr.bf16.gmra.mrb[0].mxu0 %v5810
        %v5916 = vpop.f32.mrb[0].mxu0
        %v5917 = vadd.f32 0.0, %v5916
        %v5918 = vpop.f32.mrb[0].mxu0
        %v5919 = vpop.f32.mrb[0].mxu0
        %v5920 = vadd.f32 0.0, %v5919
        %v5921 = vpop.f32.mrb[0].mxu0
        %5922 = vmatprep.mubr.bf16.mxu0 0
        %5923 = vmatmul.mubr.bf16.gmra.mrb[0].mxu0 %v5813
        %v5924 = vpop.f32.mrb[0].mxu0
        %v5925 = vadd.f32 0.0, %v5924
        %v5926 = vpop.f32.mrb[0].mxu0
        %v5927 = vpop.f32.mrb[0].mxu0
        %v5928 = vadd.f32 0.0, %v5927
        %v5929 = vpop.f32.mrb[0].mxu0
        %5930 = vmatprep.mubr.bf16.mxu0 0
        %5931 = vmatmul.mubr.bf16.gmra.mrb[0].mxu0 %v5816
        %v5932 = vpop.f32.mrb[0].mxu0
        %v5933 = vadd.f32 0.0, %v5932
        %v5934 = vpop.f32.mrb[0].mxu0
        %v5935 = vpop.f32.mrb[0].mxu0
        %v5936 = vadd.f32 0.0, %v5935
        %v5937 = vpop.f32.mrb[0].mxu0
        %5938 = vmatprep.mubr.bf16.mxu0 0
        %5939 = vmatmul.mubr.bf16.gmra.mrb[0].mxu0 %v5819
        %v5940 = vpop.f32.mrb[0].mxu0
        %v5941 = vadd.f32 0.0, %v5940
        %v5942 = vpop.f32.mrb[0].mxu0
        %v5943 = vpop.f32.mrb[0].mxu0
        %v5944 = vadd.f32 0.0, %v5943
        %v5945 = vpop.f32.mrb[0].mxu0
        %5946 = vmatprep.mubr.bf16.mxu0 0
        %5947 = vmatmul.mubr.bf16.gmra.mrb[0].mxu0 %v5822
        %v5948 = vpop.f32.mrb[0].mxu0
        %v5949 = vadd.f32 0.0, %v5948
        %v5950 = vpop.f32.mrb[0].mxu0
        %v5951 = vpop.f32.mrb[0].mxu0
        %v5952 = vadd.f32 0.0, %v5951
        %v5953 = vpop.f32.mrb[0].mxu0
        %5954 = vmatprep.mubr.bf16.mxu0 0
        %5955 = vmatmul.mubr.bf16.gmra.mrb[0].mxu0 %v5825
        %v5956 = vpop.f32.mrb[0].mxu0
        %v5957 = vadd.f32 0.0, %v5956
        %v5958 = vpop.f32.mrb[0].mxu0
        %v5959 = vpop.f32.mrb[0].mxu0
        %v5960 = vadd.f32 0.0, %v5959
        %v5961 = vpop.f32.mrb[0].mxu0
        %5962 = vmatprep.mubr.bf16.mxu0 0
        %5963 = vmatmul.mubr.bf16.gmra.mrb[0].mxu0 %v5828
        %v5964 = vpop.f32.mrb[0].mxu0
        %v5965 = vadd.f32 0.0, %v5964
        %v5966 = vpop.f32.mrb[0].mxu0
        %v5967 = vpop.f32.mrb[0].mxu0
        %v5968 = vadd.f32 0.0, %v5967
        %v5969 = vpop.f32.mrb[0].mxu0
        %5970 = vmatprep.mubr.bf16.mxu0 0
        %5971 = vmatmul.mubr.bf16.gmra.mrb[0].mxu0 %v5831
        %v5972 = vpop.f32.mrb[0].mxu0
        %v5973 = vadd.f32 0.0, %v5972
        %v5974 = vpop.f32.mrb[0].mxu0
        %v5975 = vpop.f32.mrb[0].mxu0
        %v5976 = vadd.f32 0.0, %v5975
        %v5977 = vpop.f32.mrb[0].mxu0
        %5978 = vmatprep.mubr.bf16.mxu0 0
        %5979 = vmatmul.mubr.bf16.gmra.mrb[0].mxu0 %v5834
        %v5980 = vpop.f32.mrb[0].mxu0
        %v5981 = vadd.f32 0.0, %v5980
        %v5982 = vpop.f32.mrb[0].mxu0
        %v5983 = vpop.f32.mrb[0].mxu0
        %v5984 = vadd.f32 0.0, %v5983
        %v5985 = vpop.f32.mrb[0].mxu0
        %5986 = vmatprep.mubr.bf16.mxu0 0
        %5987 = vmatmul.mubr.bf16.gmra.mrb[0].mxu0 %v5837
        %v5988 = vpop.f32.mrb[0].mxu0
        %v5989 = vadd.f32 0.0, %v5988
        %v5990 = vpop.f32.mrb[0].mxu0
        %v5991 = vpop.f32.mrb[0].mxu0
        %v5992 = vadd.f32 0.0, %v5991
        %v5993 = vpop.f32.mrb[0].mxu0
        %5994 = vmatprep.mubr.bf16.mxu0 0
        %5995 = vmatmul.mubr.bf16.gmra.mrb[0].mxu0 %v5840
        %v5996 = vpop.f32.mrb[0].mxu0
        %v5997 = vadd.f32 0.0, %v5996
        %v5998 = vpop.f32.mrb[0].mxu0
        %v5999 = vpop.f32.mrb[0].mxu0
        %v6000 = vadd.f32 0.0, %v5999
        %v6001 = vpop.f32.mrb[0].mxu0
        %6002 = vdwg.mxu0
        %v6005 = vunpack.c.l.b16 %v5338
        %v6006 = vunpack.c.l.b16 %v5339
        %v6007 = vpack.c.b16 %v6006, %v6005
        %v6010 = vsel %vm1980, %v5322, 0
        %v6013 = vsel %vm1980, %v5323, 0
        %v6016 = vsel %vm1980, %v5324, 0
        %v6019 = vsel %vm1980, %v5325, 0
        %v6022 = vsel %vm1980, %v5326, 0
        %v6025 = vsel %vm1980, %v5327, 0
        %v6028 = vsel %vm1980, %v5328, 0
        %v6031 = vsel %vm1980, %v5329, 0
        %v6034 = vsel %vm1980, %v5330, 0
        %v6037 = vsel %vm1980, %v5331, 0
        %v6040 = vsel %vm1980, %v5332, 0
        %v6043 = vsel %vm1980, %v5333, 0
        %v6046 = vsel %vm1980, %v5334, 0
        %v6049 = vsel %vm1980, %v5335, 0
        %v6052 = vsel %vm1980, %v5336, 0
        %v6055 = vsel %vm1980, %v5337, 0
        %6057 = vmatprep.subr.bf16.mxu0 0
        %6058 = vmatpush1.bf16.msra.mxu0 %v6007
        %6059 = vmatprep.subr.bf16.mxu0 0
        %6060 = vmatpush1.bf16.msra.mxu0 0
        %6061 = vmatprep.subr.bf16.mxu0 0
        %6062 = vmatpush1.bf16.msra.mxu0 0
        %6063 = vmatprep.subr.bf16.mxu0 0
        %6064 = vmatpush1.bf16.msra.mxu0 0
        %6065 = vmatprep.subr.bf16.mxu0 0
        %6066 = vmatpush1.bf16.msra.mxu0 0
        %6067 = vmatprep.subr.bf16.mxu0 0
        %6068 = vmatpush1.bf16.msra.mxu0 0
        %6069 = vmatprep.subr.bf16.mxu0 0
        %6070 = vmatpush1.bf16.msra.mxu0 0
        %6071 = vmatprep.subr.bf16.mxu0 0
        %6072 = vmatpush1.bf16.msra.mxu0 0
        %6073 = vmatprep.subr.bf16.mxu0 0
        %6074 = vmatpush1.bf16.msra.mxu0 0
        %6075 = vmatprep.subr.bf16.mxu0 0
        %6076 = vmatpush1.bf16.msra.mxu0 0
        %6077 = vmatprep.subr.bf16.mxu0 0
        %6078 = vmatpush1.bf16.msra.mxu0 0
        %6079 = vmatprep.subr.bf16.mxu0 0
        %6080 = vmatpush1.bf16.msra.mxu0 0
        %6081 = vmatprep.subr.bf16.mxu0 0
        %6082 = vmatpush1.bf16.msra.mxu0 0
        %6083 = vmatprep.subr.bf16.mxu0 0
        %6084 = vmatpush1.bf16.msra.mxu0 0
        %6085 = vmatprep.subr.bf16.mxu0 0
        %6086 = vmatpush1.bf16.msra.mxu0 0
        %6087 = vmatprep.subr.bf16.mxu0 0
        %6088 = vmatpush1.bf16.msra.mxu0 0
        %6089 = vmatprep.mubr.bf16.mxu0 0
        %6090 = vmatmul.mubr.bf16.gmra.mrb[0].mxu0 %v6010
        %v6091 = vpop.f32.mrb[0].mxu0
        %v6092 = vadd.f32 %v5877, %v6091
        %v6093 = vpop.f32.mrb[0].mxu0
        %v6094 = vpop.f32.mrb[0].mxu0
        %v6095 = vadd.f32 %v5880, %v6094
        %v6096 = vpop.f32.mrb[0].mxu0
        %6097 = vmatprep.mubr.bf16.mxu0 0
        %6098 = vmatmul.mubr.bf16.gmra.mrb[0].mxu0 %v6013
        %v6099 = vpop.f32.mrb[0].mxu0
        %v6100 = vadd.f32 %v5885, %v6099
        %v6101 = vpop.f32.mrb[0].mxu0
        %v6102 = vpop.f32.mrb[0].mxu0
        %v6103 = vadd.f32 %v5888, %v6102
        %v6104 = vpop.f32.mrb[0].mxu0
        %6105 = vmatprep.mubr.bf16.mxu0 0
        %6106 = vmatmul.mubr.bf16.gmra.mrb[0].mxu0 %v6016
        %v6107 = vpop.f32.mrb[0].mxu0
        %v6108 = vadd.f32 %v5893, %v6107
        %v6109 = vpop.f32.mrb[0].mxu0
        %v6110 = vpop.f32.mrb[0].mxu0
        %v6111 = vadd.f32 %v5896, %v6110
        %v6112 = vpop.f32.mrb[0].mxu0
        %6113 = vmatprep.mubr.bf16.mxu0 0
        %6114 = vmatmul.mubr.bf16.gmra.mrb[0].mxu0 %v6019
        %v6115 = vpop.f32.mrb[0].mxu0
        %v6116 = vadd.f32 %v5901, %v6115
        %v6117 = vpop.f32.mrb[0].mxu0
        %v6118 = vpop.f32.mrb[0].mxu0
        %v6119 = vadd.f32 %v5904, %v6118
        %v6120 = vpop.f32.mrb[0].mxu0
        %6121 = vmatprep.mubr.bf16.mxu0 0
        %6122 = vmatmul.mubr.bf16.gmra.mrb[0].mxu0 %v6022
        %v6123 = vpop.f32.mrb[0].mxu0
        %v6124 = vadd.f32 %v5909, %v6123
        %v6125 = vpop.f32.mrb[0].mxu0
        %v6126 = vpop.f32.mrb[0].mxu0
        %v6127 = vadd.f32 %v5912, %v6126
        %v6128 = vpop.f32.mrb[0].mxu0
        %6129 = vmatprep.mubr.bf16.mxu0 0
        %6130 = vmatmul.mubr.bf16.gmra.mrb[0].mxu0 %v6025
        %v6131 = vpop.f32.mrb[0].mxu0
        %v6132 = vadd.f32 %v5917, %v6131
        %v6133 = vpop.f32.mrb[0].mxu0
        %v6134 = vpop.f32.mrb[0].mxu0
        %v6135 = vadd.f32 %v5920, %v6134
        %v6136 = vpop.f32.mrb[0].mxu0
        %6137 = vmatprep.mubr.bf16.mxu0 0
        %6138 = vmatmul.mubr.bf16.gmra.mrb[0].mxu0 %v6028
        %v6139 = vpop.f32.mrb[0].mxu0
        %v6140 = vadd.f32 %v5925, %v6139
        %v6141 = vpop.f32.mrb[0].mxu0
        %v6142 = vpop.f32.mrb[0].mxu0
        %v6143 = vadd.f32 %v5928, %v6142
        %v6144 = vpop.f32.mrb[0].mxu0
        %6145 = vmatprep.mubr.bf16.mxu0 0
        %6146 = vmatmul.mubr.bf16.gmra.mrb[0].mxu0 %v6031
        %v6147 = vpop.f32.mrb[0].mxu0
        %v6148 = vadd.f32 %v5933, %v6147
        %v6149 = vpop.f32.mrb[0].mxu0
        %v6150 = vpop.f32.mrb[0].mxu0
        %v6151 = vadd.f32 %v5936, %v6150
        %v6152 = vpop.f32.mrb[0].mxu0
        %6153 = vmatprep.mubr.bf16.mxu0 0
        %6154 = vmatmul.mubr.bf16.gmra.mrb[0].mxu0 %v6034
        %v6155 = vpop.f32.mrb[0].mxu0
        %v6156 = vadd.f32 %v5941, %v6155
        %v6157 = vpop.f32.mrb[0].mxu0
        %v6158 = vpop.f32.mrb[0].mxu0
        %v6159 = vadd.f32 %v5944, %v6158
        %v6160 = vpop.f32.mrb[0].mxu0
        %6161 = vmatprep.mubr.bf16.mxu0 0
        %6162 = vmatmul.mubr.bf16.gmra.mrb[0].mxu0 %v6037
        %v6163 = vpop.f32.mrb[0].mxu0
        %v6164 = vadd.f32 %v5949, %v6163
        %v6165 = vpop.f32.mrb[0].mxu0
        %v6166 = vpop.f32.mrb[0].mxu0
        %v6167 = vadd.f32 %v5952, %v6166
        %v6168 = vpop.f32.mrb[0].mxu0
        %6169 = vmatprep.mubr.bf16.mxu0 0
        %6170 = vmatmul.mubr.bf16.gmra.mrb[0].mxu0 %v6040
        %v6171 = vpop.f32.mrb[0].mxu0
        %v6172 = vadd.f32 %v5957, %v6171
        %v6173 = vpop.f32.mrb[0].mxu0
        %v6174 = vpop.f32.mrb[0].mxu0
        %v6175 = vadd.f32 %v5960, %v6174
        %v6176 = vpop.f32.mrb[0].mxu0
        %6177 = vmatprep.mubr.bf16.mxu0 0
        %6178 = vmatmul.mubr.bf16.gmra.mrb[0].mxu0 %v6043
        %v6179 = vpop.f32.mrb[0].mxu0
        %v6180 = vadd.f32 %v5965, %v6179
        %v6181 = vpop.f32.mrb[0].mxu0
        %v6182 = vpop.f32.mrb[0].mxu0
        %v6183 = vadd.f32 %v5968, %v6182
        %v6184 = vpop.f32.mrb[0].mxu0
        %6185 = vmatprep.mubr.bf16.mxu0 0
        %6186 = vmatmul.mubr.bf16.gmra.mrb[0].mxu0 %v6046
        %v6187 = vpop.f32.mrb[0].mxu0
        %v6188 = vadd.f32 %v5973, %v6187
        %v6189 = vpop.f32.mrb[0].mxu0
        %v6190 = vpop.f32.mrb[0].mxu0
        %v6191 = vadd.f32 %v5976, %v6190
        %v6192 = vpop.f32.mrb[0].mxu0
        %6193 = vmatprep.mubr.bf16.mxu0 0
        %6194 = vmatmul.mubr.bf16.gmra.mrb[0].mxu0 %v6049
        %v6195 = vpop.f32.mrb[0].mxu0
        %v6196 = vadd.f32 %v5981, %v6195
        %v6197 = vpop.f32.mrb[0].mxu0
        %v6198 = vpop.f32.mrb[0].mxu0
        %v6199 = vadd.f32 %v5984, %v6198
        %v6200 = vpop.f32.mrb[0].mxu0
        %6201 = vmatprep.mubr.bf16.mxu0 0
        %6202 = vmatmul.mubr.bf16.gmra.mrb[0].mxu0 %v6052
        %v6203 = vpop.f32.mrb[0].mxu0
        %v6204 = vadd.f32 %v5989, %v6203
        %v6205 = vpop.f32.mrb[0].mxu0
        %v6206 = vpop.f32.mrb[0].mxu0
        %v6207 = vadd.f32 %v5992, %v6206
        %v6208 = vpop.f32.mrb[0].mxu0
        %6209 = vmatprep.mubr.bf16.mxu0 0
        %6210 = vmatmul.mubr.bf16.gmra.mrb[0].mxu0 %v6055
        %v6211 = vpop.f32.mrb[0].mxu0
        %v6212 = vadd.f32 %v5997, %v6211
        %v6213 = vpop.f32.mrb[0].mxu0
        %v6214 = vpop.f32.mrb[0].mxu0
        %v6215 = vadd.f32 %v6000, %v6214
        %v6216 = vpop.f32.mrb[0].mxu0
        %6217 = vdwg.mxu0
        %6218 = vrot.lane.b32.xlu0 %v5342, 96
        %v6219 = vpop.permute.xlu0 %6218
        %6220 = vrot.lane.b32.xlu0 %v4934, 96
        %v6221 = vpop.permute.xlu0 %6220
        %6222 = vrot.lane.b32.xlu0 %v4935, 96
        %v6223 = vpop.permute.xlu0 %6222
        %6224 = vrot.lane.b32.xlu0 %v4936, 96
        %v6225 = vpop.permute.xlu0 %6224
        %6226 = vrot.lane.b32.xlu0 %v4937, 96
        %v6227 = vpop.permute.xlu0 %6226
        %6228 = vrot.lane.b32.xlu0 %v4938, 96
        %v6229 = vpop.permute.xlu0 %6228
        %6230 = vrot.lane.b32.xlu0 %v4939, 96
        %v6231 = vpop.permute.xlu0 %6230
        %6232 = vrot.lane.b32.xlu0 %v4940, 96
        %v6233 = vpop.permute.xlu0 %6232
        %6234 = vrot.lane.b32.xlu0 %v4941, 96
        %v6235 = vpop.permute.xlu0 %6234
        %6236 = vrot.lane.b32.xlu0 %v4942, 96
        %v6237 = vpop.permute.xlu0 %6236
        %6238 = vrot.lane.b32.xlu0 %v4943, 96
        %v6239 = vpop.permute.xlu0 %6238
        %6240 = vrot.lane.b32.xlu0 %v4944, 96
        %v6241 = vpop.permute.xlu0 %6240
        %6242 = vrot.lane.b32.xlu0 %v4945, 96
        %v6243 = vpop.permute.xlu0 %6242
        %6244 = vrot.lane.b32.xlu0 %v4946, 96
        %v6245 = vpop.permute.xlu0 %6244
        %6246 = vrot.lane.b32.xlu0 %v4947, 96
        %v6247 = vpop.permute.xlu0 %6246
        %6248 = vrot.lane.b32.xlu0 %v4948, 96
        %v6249 = vpop.permute.xlu0 %6248
        %6250 = vrot.lane.b32.xlu0 %v4949, 96
        %v6251 = vpop.permute.xlu0 %6250
        %v6253 = vsel %vm1980, %v6219, 0
        %v6256 = vsel %vm1980, %v6221, 0
        %v6259 = vsel %vm1980, %v6223, 0
        %v6262 = vsel %vm1980, %v6225, 0
        %v6265 = vsel %vm1980, %v6227, 0
        %v6268 = vsel %vm1980, %v6229, 0
        %v6271 = vsel %vm1980, %v6231, 0
        %v6274 = vsel %vm1980, %v6233, 0
        %v6277 = vsel %vm1980, %v6235, 0
        %v6280 = vsel %vm1980, %v6237, 0
        %v6283 = vsel %vm1980, %v6239, 0
        %v6286 = vsel %vm1980, %v6241, 0
        %v6289 = vsel %vm1980, %v6243, 0
        %v6292 = vsel %vm1980, %v6245, 0
        %v6295 = vsel %vm1980, %v6247, 0
        %v6298 = vsel %vm1980, %v6249, 0
        %v6301 = vsel %vm1980, %v6251, 0
        %6303 = vmatprep.subr.bf16.mxu0 0
        %6304 = vmatpush1.bf16.xpose.msra.mxu0 %v6256
        %6305 = vmatprep.subr.bf16.mxu0 0
        %6306 = vmatpush1.bf16.xpose.msra.mxu0 %v6259
        %6307 = vmatprep.subr.bf16.mxu0 0
        %6308 = vmatpush1.bf16.xpose.msra.mxu0 %v6262
        %6309 = vmatprep.subr.bf16.mxu0 0
        %6310 = vmatpush1.bf16.xpose.msra.mxu0 %v6265
        %6311 = vmatprep.subr.bf16.mxu0 0
        %6312 = vmatpush1.bf16.xpose.msra.mxu0 %v6268
        %6313 = vmatprep.subr.bf16.mxu0 0
        %6314 = vmatpush1.bf16.xpose.msra.mxu0 %v6271
        %6315 = vmatprep.subr.bf16.mxu0 0
        %6316 = vmatpush1.bf16.xpose.msra.mxu0 %v6274
        %6317 = vmatprep.subr.bf16.mxu0 0
        %6318 = vmatpush1.bf16.xpose.msra.mxu0 %v6277
        %6319 = vmatprep.subr.bf16.mxu0 0
        %6320 = vmatpush1.bf16.xpose.msra.mxu0 %v6280
        %6321 = vmatprep.subr.bf16.mxu0 0
        %6322 = vmatpush1.bf16.xpose.msra.mxu0 %v6283
        %6323 = vmatprep.subr.bf16.mxu0 0
        %6324 = vmatpush1.bf16.xpose.msra.mxu0 %v6286
        %6325 = vmatprep.subr.bf16.mxu0 0
        %6326 = vmatpush1.bf16.xpose.msra.mxu0 %v6289
        %6327 = vmatprep.subr.bf16.mxu0 0
        %6328 = vmatpush1.bf16.xpose.msra.mxu0 %v6292
        %6329 = vmatprep.subr.bf16.mxu0 0
        %6330 = vmatpush1.bf16.xpose.msra.mxu0 %v6295
        %6331 = vmatprep.subr.bf16.mxu0 0
        %6332 = vmatpush1.bf16.xpose.msra.mxu0 %v6298
        %6333 = vmatprep.subr.bf16.mxu0 0
        %6334 = vmatpush1.bf16.xpose.msra.mxu0 %v6301
        %6335 = vmatprep.mubr.bf16.mxu0 0
        %6336 = vmatmul.mubr.bf16.gmra.mrb[0].mxu0 %v6253
        %v6337 = vpop.f32.mrb[0].mxu0
        %v6338 = vadd.f32 0.0, %v6337
        %v6339 = vpop.f32.mrb[0].mxu0
        %v6340 = vadd.f32 0.0, %v6339
        %v6341 = vpop.f32.mrb[0].mxu0
        %v6342 = vpop.f32.mrb[0].mxu0
        %6343 = vdwg.mxu0
        %v6344 = vrot.slane %v6338, 4
        %v6345 = vmax.f32 %v6338, %v6344
        %v6346 = vrot.slane %v6345, 2
        %v6347 = vmax.f32 %v6345, %v6346
        %v6348 = vrot.slane %v6347, 1
        %v6349 = vmax.f32 %v6347, %v6348
        %v6350 = vrot.slane %v6340, 4
        %v6351 = vmax.f32 %v6340, %v6350
        %v6352 = vrot.slane %v6351, 2
        %v6353 = vmax.f32 %v6351, %v6352
        %v6354 = vrot.slane %v6353, 1
        %v6355 = vmax.f32 %v6353, %v6354
        %v6356 = vsub.f32 %v6338, %v6349
        %v6357 = vsub.f32 %v6340, %v6355
        %v6358 = vmul.f32 %v6356, 1.442695
        %v6359 = vpow.pop %v6358
        %v6360 = vmul.f32 %v6357, 1.442695
        %v6361 = vpow.pop %v6360
        %v6362 = vrot.slane %v6359, 4
        %v6363 = vadd.f32 %v6359, %v6362
        %v6364 = vrot.slane %v6363, 2
        %v6365 = vadd.f32 %v6363, %v6364
        %v6366 = vrot.slane %v6365, 1
        %v6367 = vadd.f32 %v6365, %v6366
        %v6368 = vrot.slane %v6361, 4
        %v6369 = vadd.f32 %v6361, %v6368
        %v6370 = vrot.slane %v6369, 2
        %v6371 = vadd.f32 %v6369, %v6370
        %v6372 = vrot.slane %v6371, 1
        %v6373 = vadd.f32 %v6371, %v6372
        %v6374 = vrcp.pop %v6367
        %v6375 = vrcp.pop %v6373
        %v6376 = vmul.f32 %v6359, %v6374
        %v6377 = vmul.f32 %v6361, %v6375
        %v6378 = vpack.c.bf16 %v6376, %v6376
        %v6379 = vpack.c.bf16 %v6377, %v6377
        %6380 = vxpose.xlu0.c.b16.start [1/8] %v6378, 128
        %6381 = vxpose.xlu0.c.b16.cont [2/8] 0, 128
        %6382 = vxpose.xlu0.c.b16.cont [3/8] 0, 128
        %6383 = vxpose.xlu0.c.b16.cont [4/8] 0, 128
        %6384 = vxpose.xlu0.c.b16.cont [5/8] 0, 128
        %6385 = vxpose.xlu0.c.b16.cont [6/8] 0, 128
        %6386 = vxpose.xlu0.c.b16.cont [7/8] 0, 128
        %6387 = vxpose.xlu0.c.b16.end [8/8] 0, 128
        %v6388 = vpop.trf.xlu0
        %v6389 = vpop.trf.xlu0
        %v6390 = vpop.trf.xlu0
        %v6391 = vpop.trf.xlu0
        %v6392 = vpop.trf.xlu0
        %v6393 = vpop.trf.xlu0
        %v6394 = vpop.trf.xlu0
        %v6395 = vpop.trf.xlu0
        %6396 = vxpose.xlu0.c.b16.start [1/8] %v6379, 128
        %6397 = vxpose.xlu0.c.b16.cont [2/8] 0, 128
        %6398 = vxpose.xlu0.c.b16.cont [3/8] 0, 128
        %6399 = vxpose.xlu0.c.b16.cont [4/8] 0, 128
        %6400 = vxpose.xlu0.c.b16.cont [5/8] 0, 128
        %6401 = vxpose.xlu0.c.b16.cont [6/8] 0, 128
        %6402 = vxpose.xlu0.c.b16.cont [7/8] 0, 128
        %6403 = vxpose.xlu0.c.b16.end [8/8] 0, 128
        %v6404 = vpop.trf.xlu0
        %v6405 = vpop.trf.xlu0
        %v6406 = vpop.trf.xlu0
        %v6407 = vpop.trf.xlu0
        %v6408 = vpop.trf.xlu0
        %v6409 = vpop.trf.xlu0
        %v6410 = vpop.trf.xlu0
        %v6411 = vpop.trf.xlu0
        %6412 = vrot.lane.b32.xlu0 %v5555, 96
        %v6413 = vpop.permute.xlu0 %6412
        %v6415 = vsel %vm2141, %v6388, 0
        %v6418 = vsel %vm2141, %v6389, 0
        %v6421 = vsel %vm2141, %v6390, 0
        %v6424 = vsel %vm2141, %v6391, 0
        %v6427 = vsel %vm2141, %v6392, 0
        %v6430 = vsel %vm2141, %v6393, 0
        %v6433 = vsel %vm2141, %v6394, 0
        %v6436 = vsel %vm2141, %v6395, 0
        %v6439 = vsel %vm2141, %v6404, 0
        %v6442 = vsel %vm2141, %v6405, 0
        %v6445 = vsel %vm2141, %v6406, 0
        %v6448 = vsel %vm2141, %v6407, 0
        %v6451 = vsel %vm2141, %v6408, 0
        %v6454 = vsel %vm2141, %v6409, 0
        %v6457 = vsel %vm2141, %v6410, 0
        %v6460 = vsel %vm2141, %v6411, 0
        %v6463 = vsel %vm2190, %v6413, 0
        %6465 = vmatprep.subr.bf16.mxu0 0
        %6466 = vmatpush1.bf16.msra.mxu0 %v6463
        %6467 = vmatprep.subr.bf16.mxu0 0
        %6468 = vmatpush1.bf16.msra.mxu0 0
        %6469 = vmatprep.subr.bf16.mxu0 0
        %6470 = vmatpush1.bf16.msra.mxu0 0
        %6471 = vmatprep.subr.bf16.mxu0 0
        %6472 = vmatpush1.bf16.msra.mxu0 0
        %6473 = vmatprep.subr.bf16.mxu0 0
        %6474 = vmatpush1.bf16.msra.mxu0 0
        %6475 = vmatprep.subr.bf16.mxu0 0
        %6476 = vmatpush1.bf16.msra.mxu0 0
        %6477 = vmatprep.subr.bf16.mxu0 0
        %6478 = vmatpush1.bf16.msra.mxu0 0
        %6479 = vmatprep.subr.bf16.mxu0 0
        %6480 = vmatpush1.bf16.msra.mxu0 0
        %6481 = vmatprep.subr.bf16.mxu0 0
        %6482 = vmatpush1.bf16.msra.mxu0 0
        %6483 = vmatprep.subr.bf16.mxu0 0
        %6484 = vmatpush1.bf16.msra.mxu0 0
        %6485 = vmatprep.subr.bf16.mxu0 0
        %6486 = vmatpush1.bf16.msra.mxu0 0
        %6487 = vmatprep.subr.bf16.mxu0 0
        %6488 = vmatpush1.bf16.msra.mxu0 0
        %6489 = vmatprep.subr.bf16.mxu0 0
        %6490 = vmatpush1.bf16.msra.mxu0 0
        %6491 = vmatprep.subr.bf16.mxu0 0
        %6492 = vmatpush1.bf16.msra.mxu0 0
        %6493 = vmatprep.subr.bf16.mxu0 0
        %6494 = vmatpush1.bf16.msra.mxu0 0
        %6495 = vmatprep.subr.bf16.mxu0 0
        %6496 = vmatpush1.bf16.msra.mxu0 0
        %6497 = vmatprep.mubr.bf16.mxu0 0
        %6498 = vmatmul.mubr.bf16.gmra.mrb[0].mxu0 %v6415
        %v6499 = vpop.f32.mrb[0].mxu0
        %v6500 = vadd.f32 0.0, %v6499
        %v6501 = vpop.f32.mrb[0].mxu0
        %v6502 = vpop.f32.mrb[0].mxu0
        %v6503 = vadd.f32 0.0, %v6502
        %v6504 = vpop.f32.mrb[0].mxu0
        %6505 = vmatprep.mubr.bf16.mxu0 0
        %6506 = vmatmul.mubr.bf16.gmra.mrb[0].mxu0 %v6418
        %v6507 = vpop.f32.mrb[0].mxu0
        %v6508 = vadd.f32 0.0, %v6507
        %v6509 = vpop.f32.mrb[0].mxu0
        %v6510 = vpop.f32.mrb[0].mxu0
        %v6511 = vadd.f32 0.0, %v6510
        %v6512 = vpop.f32.mrb[0].mxu0
        %6513 = vmatprep.mubr.bf16.mxu0 0
        %6514 = vmatmul.mubr.bf16.gmra.mrb[0].mxu0 %v6421
        %v6515 = vpop.f32.mrb[0].mxu0
        %v6516 = vadd.f32 0.0, %v6515
        %v6517 = vpop.f32.mrb[0].mxu0
        %v6518 = vpop.f32.mrb[0].mxu0
        %v6519 = vadd.f32 0.0, %v6518
        %v6520 = vpop.f32.mrb[0].mxu0
        %6521 = vmatprep.mubr.bf16.mxu0 0
        %6522 = vmatmul.mubr.bf16.gmra.mrb[0].mxu0 %v6424
        %v6523 = vpop.f32.mrb[0].mxu0
        %v6524 = vadd.f32 0.0, %v6523
        %v6525 = vpop.f32.mrb[0].mxu0
        %v6526 = vpop.f32.mrb[0].mxu0
        %v6527 = vadd.f32 0.0, %v6526
        %v6528 = vpop.f32.mrb[0].mxu0
        %6529 = vmatprep.mubr.bf16.mxu0 0
        %6530 = vmatmul.mubr.bf16.gmra.mrb[0].mxu0 %v6427
        %v6531 = vpop.f32.mrb[0].mxu0
        %v6532 = vadd.f32 0.0, %v6531
        %v6533 = vpop.f32.mrb[0].mxu0
        %v6534 = vpop.f32.mrb[0].mxu0
        %v6535 = vadd.f32 0.0, %v6534
        %v6536 = vpop.f32.mrb[0].mxu0
        %6537 = vmatprep.mubr.bf16.mxu0 0
        %6538 = vmatmul.mubr.bf16.gmra.mrb[0].mxu0 %v6430
        %v6539 = vpop.f32.mrb[0].mxu0
        %v6540 = vadd.f32 0.0, %v6539
        %v6541 = vpop.f32.mrb[0].mxu0
        %v6542 = vpop.f32.mrb[0].mxu0
        %v6543 = vadd.f32 0.0, %v6542
        %v6544 = vpop.f32.mrb[0].mxu0
        %6545 = vmatprep.mubr.bf16.mxu0 0
        %6546 = vmatmul.mubr.bf16.gmra.mrb[0].mxu0 %v6433
        %v6547 = vpop.f32.mrb[0].mxu0
        %v6548 = vadd.f32 0.0, %v6547
        %v6549 = vpop.f32.mrb[0].mxu0
        %v6550 = vpop.f32.mrb[0].mxu0
        %v6551 = vadd.f32 0.0, %v6550
        %v6552 = vpop.f32.mrb[0].mxu0
        %6553 = vmatprep.mubr.bf16.mxu0 0
        %6554 = vmatmul.mubr.bf16.gmra.mrb[0].mxu0 %v6436
        %v6555 = vpop.f32.mrb[0].mxu0
        %v6556 = vadd.f32 0.0, %v6555
        %v6557 = vpop.f32.mrb[0].mxu0
        %v6558 = vpop.f32.mrb[0].mxu0
        %v6559 = vadd.f32 0.0, %v6558
        %v6560 = vpop.f32.mrb[0].mxu0
        %6561 = vmatprep.mubr.bf16.mxu0 0
        %6562 = vmatmul.mubr.bf16.gmra.mrb[0].mxu0 %v6439
        %v6563 = vpop.f32.mrb[0].mxu0
        %v6564 = vadd.f32 0.0, %v6563
        %v6565 = vpop.f32.mrb[0].mxu0
        %v6566 = vpop.f32.mrb[0].mxu0
        %v6567 = vadd.f32 0.0, %v6566
        %v6568 = vpop.f32.mrb[0].mxu0
        %6569 = vmatprep.mubr.bf16.mxu0 0
        %6570 = vmatmul.mubr.bf16.gmra.mrb[0].mxu0 %v6442
        %v6571 = vpop.f32.mrb[0].mxu0
        %v6572 = vadd.f32 0.0, %v6571
        %v6573 = vpop.f32.mrb[0].mxu0
        %v6574 = vpop.f32.mrb[0].mxu0
        %v6575 = vadd.f32 0.0, %v6574
        %v6576 = vpop.f32.mrb[0].mxu0
        %6577 = vmatprep.mubr.bf16.mxu0 0
        %6578 = vmatmul.mubr.bf16.gmra.mrb[0].mxu0 %v6445
        %v6579 = vpop.f32.mrb[0].mxu0
        %v6580 = vadd.f32 0.0, %v6579
        %v6581 = vpop.f32.mrb[0].mxu0
        %v6582 = vpop.f32.mrb[0].mxu0
        %v6583 = vadd.f32 0.0, %v6582
        %v6584 = vpop.f32.mrb[0].mxu0
        %6585 = vmatprep.mubr.bf16.mxu0 0
        %6586 = vmatmul.mubr.bf16.gmra.mrb[0].mxu0 %v6448
        %v6587 = vpop.f32.mrb[0].mxu0
        %v6588 = vadd.f32 0.0, %v6587
        %v6589 = vpop.f32.mrb[0].mxu0
        %v6590 = vpop.f32.mrb[0].mxu0
        %v6591 = vadd.f32 0.0, %v6590
        %v6592 = vpop.f32.mrb[0].mxu0
        %6593 = vmatprep.mubr.bf16.mxu0 0
        %6594 = vmatmul.mubr.bf16.gmra.mrb[0].mxu0 %v6451
        %v6595 = vpop.f32.mrb[0].mxu0
        %v6596 = vadd.f32 0.0, %v6595
        %v6597 = vpop.f32.mrb[0].mxu0
        %v6598 = vpop.f32.mrb[0].mxu0
        %v6599 = vadd.f32 0.0, %v6598
        %v6600 = vpop.f32.mrb[0].mxu0
        %6601 = vmatprep.mubr.bf16.mxu0 0
        %6602 = vmatmul.mubr.bf16.gmra.mrb[0].mxu0 %v6454
        %v6603 = vpop.f32.mrb[0].mxu0
        %v6604 = vadd.f32 0.0, %v6603
        %v6605 = vpop.f32.mrb[0].mxu0
        %v6606 = vpop.f32.mrb[0].mxu0
        %v6607 = vadd.f32 0.0, %v6606
        %v6608 = vpop.f32.mrb[0].mxu0
        %6609 = vmatprep.mubr.bf16.mxu0 0
        %6610 = vmatmul.mubr.bf16.gmra.mrb[0].mxu0 %v6457
        %v6611 = vpop.f32.mrb[0].mxu0
        %v6612 = vadd.f32 0.0, %v6611
        %v6613 = vpop.f32.mrb[0].mxu0
        %v6614 = vpop.f32.mrb[0].mxu0
        %v6615 = vadd.f32 0.0, %v6614
        %v6616 = vpop.f32.mrb[0].mxu0
        %6617 = vmatprep.mubr.bf16.mxu0 0
        %6618 = vmatmul.mubr.bf16.gmra.mrb[0].mxu0 %v6460
        %v6619 = vpop.f32.mrb[0].mxu0
        %v6620 = vadd.f32 0.0, %v6619
        %v6621 = vpop.f32.mrb[0].mxu0
        %v6622 = vpop.f32.mrb[0].mxu0
        %v6623 = vadd.f32 0.0, %v6622
        %v6624 = vpop.f32.mrb[0].mxu0
        %6625 = vdwg.mxu0
        %v6626 = vpack.c.bf16 %v6503, %v6500
        %v6627 = vpack.c.bf16 %v6511, %v6508
        %v6628 = vpack.c.bf16 %v6519, %v6516
        %v6629 = vpack.c.bf16 %v6527, %v6524
        %v6630 = vpack.c.bf16 %v6535, %v6532
        %v6631 = vpack.c.bf16 %v6543, %v6540
        %v6632 = vpack.c.bf16 %v6551, %v6548
        %v6633 = vpack.c.bf16 %v6559, %v6556
        %v6634 = vpack.c.bf16 %v6567, %v6564
        %v6635 = vpack.c.bf16 %v6575, %v6572
        %v6636 = vpack.c.bf16 %v6583, %v6580
        %v6637 = vpack.c.bf16 %v6591, %v6588
        %v6638 = vpack.c.bf16 %v6599, %v6596
        %v6639 = vpack.c.bf16 %v6607, %v6604
        %v6640 = vpack.c.bf16 %v6615, %v6612
        %v6641 = vpack.c.bf16 %v6623, %v6620
        %v6642 = vld [vmem:[%s18 + $0x10] sm:$0xf]
        %v6643 = vld [vmem:[%s18 + $0x14] sm:$0xf]
        %v6646 = vunpack.c.l.b16 %v6642
        %v6647 = vunpack.c.l.b16 %v6643
        %v6648 = vpack.c.b16 %v6647, %v6646
        %v6651 = vsel %vm1980, %v6626, 0
        %v6654 = vsel %vm1980, %v6627, 0
        %v6657 = vsel %vm1980, %v6628, 0
        %v6660 = vsel %vm1980, %v6629, 0
        %v6663 = vsel %vm1980, %v6630, 0
        %v6666 = vsel %vm1980, %v6631, 0
        %v6669 = vsel %vm1980, %v6632, 0
        %v6672 = vsel %vm1980, %v6633, 0
        %v6675 = vsel %vm1980, %v6634, 0
        %v6678 = vsel %vm1980, %v6635, 0
        %v6681 = vsel %vm1980, %v6636, 0
        %v6684 = vsel %vm1980, %v6637, 0
        %v6687 = vsel %vm1980, %v6638, 0
        %v6690 = vsel %vm1980, %v6639, 0
        %v6693 = vsel %vm1980, %v6640, 0
        %v6696 = vsel %vm1980, %v6641, 0
        %6698 = vmatprep.subr.bf16.mxu0 0
        %6699 = vmatpush1.bf16.msra.mxu0 %v6648
        %6700 = vmatprep.subr.bf16.mxu0 0
        %6701 = vmatpush1.bf16.msra.mxu0 0
        %6702 = vmatprep.subr.bf16.mxu0 0
        %6703 = vmatpush1.bf16.msra.mxu0 0
        %6704 = vmatprep.subr.bf16.mxu0 0
        %6705 = vmatpush1.bf16.msra.mxu0 0
        %6706 = vmatprep.subr.bf16.mxu0 0
        %6707 = vmatpush1.bf16.msra.mxu0 0
        %6708 = vmatprep.subr.bf16.mxu0 0
        %6709 = vmatpush1.bf16.msra.mxu0 0
        %6710 = vmatprep.subr.bf16.mxu0 0
        %6711 = vmatpush1.bf16.msra.mxu0 0
        %6712 = vmatprep.subr.bf16.mxu0 0
        %6713 = vmatpush1.bf16.msra.mxu0 0
        %6714 = vmatprep.subr.bf16.mxu0 0
        %6715 = vmatpush1.bf16.msra.mxu0 0
        %6716 = vmatprep.subr.bf16.mxu0 0
        %6717 = vmatpush1.bf16.msra.mxu0 0
        %6718 = vmatprep.subr.bf16.mxu0 0
        %6719 = vmatpush1.bf16.msra.mxu0 0
        %6720 = vmatprep.subr.bf16.mxu0 0
        %6721 = vmatpush1.bf16.msra.mxu0 0
        %6722 = vmatprep.subr.bf16.mxu0 0
        %6723 = vmatpush1.bf16.msra.mxu0 0
        %6724 = vmatprep.subr.bf16.mxu0 0
        %6725 = vmatpush1.bf16.msra.mxu0 0
        %6726 = vmatprep.subr.bf16.mxu0 0
        %6727 = vmatpush1.bf16.msra.mxu0 0
        %6728 = vmatprep.subr.bf16.mxu0 0
        %6729 = vmatpush1.bf16.msra.mxu0 0
        %6730 = vmatprep.mubr.bf16.mxu0 0
        %6731 = vmatmul.mubr.bf16.gmra.mrb[0].mxu0 %v6651
        %v6732 = vpop.f32.mrb[0].mxu0
        %v6733 = vadd.f32 0.0, %v6732
        %v6734 = vpop.f32.mrb[0].mxu0
        %v6735 = vpop.f32.mrb[0].mxu0
        %v6736 = vadd.f32 0.0, %v6735
        %v6737 = vpop.f32.mrb[0].mxu0
        %6738 = vmatprep.mubr.bf16.mxu0 0
        %6739 = vmatmul.mubr.bf16.gmra.mrb[0].mxu0 %v6654
        %v6740 = vpop.f32.mrb[0].mxu0
        %v6741 = vadd.f32 0.0, %v6740
        %v6742 = vpop.f32.mrb[0].mxu0
        %v6743 = vpop.f32.mrb[0].mxu0
        %v6744 = vadd.f32 0.0, %v6743
        %v6745 = vpop.f32.mrb[0].mxu0
        %6746 = vmatprep.mubr.bf16.mxu0 0
        %6747 = vmatmul.mubr.bf16.gmra.mrb[0].mxu0 %v6657
        %v6748 = vpop.f32.mrb[0].mxu0
        %v6749 = vadd.f32 0.0, %v6748
        %v6750 = vpop.f32.mrb[0].mxu0
        %v6751 = vpop.f32.mrb[0].mxu0
        %v6752 = vadd.f32 0.0, %v6751
        %v6753 = vpop.f32.mrb[0].mxu0
        %6754 = vmatprep.mubr.bf16.mxu0 0
        %6755 = vmatmul.mubr.bf16.gmra.mrb[0].mxu0 %v6660
        %v6756 = vpop.f32.mrb[0].mxu0
        %v6757 = vadd.f32 0.0, %v6756
        %v6758 = vpop.f32.mrb[0].mxu0
        %v6759 = vpop.f32.mrb[0].mxu0
        %v6760 = vadd.f32 0.0, %v6759
        %v6761 = vpop.f32.mrb[0].mxu0
        %6762 = vmatprep.mubr.bf16.mxu0 0
        %6763 = vmatmul.mubr.bf16.gmra.mrb[0].mxu0 %v6663
        %v6764 = vpop.f32.mrb[0].mxu0
        %v6765 = vadd.f32 0.0, %v6764
        %v6766 = vpop.f32.mrb[0].mxu0
        %v6767 = vpop.f32.mrb[0].mxu0
        %v6768 = vadd.f32 0.0, %v6767
        %v6769 = vpop.f32.mrb[0].mxu0
        %6770 = vmatprep.mubr.bf16.mxu0 0
        %6771 = vmatmul.mubr.bf16.gmra.mrb[0].mxu0 %v6666
        %v6772 = vpop.f32.mrb[0].mxu0
        %v6773 = vadd.f32 0.0, %v6772
        %v6774 = vpop.f32.mrb[0].mxu0
        %v6775 = vpop.f32.mrb[0].mxu0
        %v6776 = vadd.f32 0.0, %v6775
        %v6777 = vpop.f32.mrb[0].mxu0
        %6778 = vmatprep.mubr.bf16.mxu0 0
        %6779 = vmatmul.mubr.bf16.gmra.mrb[0].mxu0 %v6669
        %v6780 = vpop.f32.mrb[0].mxu0
        %v6781 = vadd.f32 0.0, %v6780
        %v6782 = vpop.f32.mrb[0].mxu0
        %v6783 = vpop.f32.mrb[0].mxu0
        %v6784 = vadd.f32 0.0, %v6783
        %v6785 = vpop.f32.mrb[0].mxu0
        %6786 = vmatprep.mubr.bf16.mxu0 0
        %6787 = vmatmul.mubr.bf16.gmra.mrb[0].mxu0 %v6672
        %v6788 = vpop.f32.mrb[0].mxu0
        %v6789 = vadd.f32 0.0, %v6788
        %v6790 = vpop.f32.mrb[0].mxu0
        %v6791 = vpop.f32.mrb[0].mxu0
        %v6792 = vadd.f32 0.0, %v6791
        %v6793 = vpop.f32.mrb[0].mxu0
        %6794 = vmatprep.mubr.bf16.mxu0 0
        %6795 = vmatmul.mubr.bf16.gmra.mrb[0].mxu0 %v6675
        %v6796 = vpop.f32.mrb[0].mxu0
        %v6797 = vadd.f32 0.0, %v6796
        %v6798 = vpop.f32.mrb[0].mxu0
        %v6799 = vpop.f32.mrb[0].mxu0
        %v6800 = vadd.f32 0.0, %v6799
        %v6801 = vpop.f32.mrb[0].mxu0
        %6802 = vmatprep.mubr.bf16.mxu0 0
        %6803 = vmatmul.mubr.bf16.gmra.mrb[0].mxu0 %v6678
        %v6804 = vpop.f32.mrb[0].mxu0
        %v6805 = vadd.f32 0.0, %v6804
        %v6806 = vpop.f32.mrb[0].mxu0
        %v6807 = vpop.f32.mrb[0].mxu0
        %v6808 = vadd.f32 0.0, %v6807
        %v6809 = vpop.f32.mrb[0].mxu0
        %6810 = vmatprep.mubr.bf16.mxu0 0
        %6811 = vmatmul.mubr.bf16.gmra.mrb[0].mxu0 %v6681
        %v6812 = vpop.f32.mrb[0].mxu0
        %v6813 = vadd.f32 0.0, %v6812
        %v6814 = vpop.f32.mrb[0].mxu0
        %v6815 = vpop.f32.mrb[0].mxu0
        %v6816 = vadd.f32 0.0, %v6815
        %v6817 = vpop.f32.mrb[0].mxu0
        %6818 = vmatprep.mubr.bf16.mxu0 0
        %6819 = vmatmul.mubr.bf16.gmra.mrb[0].mxu0 %v6684
        %v6820 = vpop.f32.mrb[0].mxu0
        %v6821 = vadd.f32 0.0, %v6820
        %v6822 = vpop.f32.mrb[0].mxu0
        %v6823 = vpop.f32.mrb[0].mxu0
        %v6824 = vadd.f32 0.0, %v6823
        %v6825 = vpop.f32.mrb[0].mxu0
        %6826 = vmatprep.mubr.bf16.mxu0 0
        %6827 = vmatmul.mubr.bf16.gmra.mrb[0].mxu0 %v6687
        %v6828 = vpop.f32.mrb[0].mxu0
        %v6829 = vadd.f32 0.0, %v6828
        %v6830 = vpop.f32.mrb[0].mxu0
        %v6831 = vpop.f32.mrb[0].mxu0
        %v6832 = vadd.f32 0.0, %v6831
        %v6833 = vpop.f32.mrb[0].mxu0
        %6834 = vmatprep.mubr.bf16.mxu0 0
        %6835 = vmatmul.mubr.bf16.gmra.mrb[0].mxu0 %v6690
        %v6836 = vpop.f32.mrb[0].mxu0
        %v6837 = vadd.f32 0.0, %v6836
        %v6838 = vpop.f32.mrb[0].mxu0
        %v6839 = vpop.f32.mrb[0].mxu0
        %v6840 = vadd.f32 0.0, %v6839
        %v6841 = vpop.f32.mrb[0].mxu0
        %6842 = vmatprep.mubr.bf16.mxu0 0
        %6843 = vmatmul.mubr.bf16.gmra.mrb[0].mxu0 %v6693
        %v6844 = vpop.f32.mrb[0].mxu0
        %v6845 = vadd.f32 0.0, %v6844
        %v6846 = vpop.f32.mrb[0].mxu0
        %v6847 = vpop.f32.mrb[0].mxu0
        %v6848 = vadd.f32 0.0, %v6847
        %v6849 = vpop.f32.mrb[0].mxu0
        %6850 = vmatprep.mubr.bf16.mxu0 0
        %6851 = vmatmul.mubr.bf16.gmra.mrb[0].mxu0 %v6696
        %v6852 = vpop.f32.mrb[0].mxu0
        %v6853 = vadd.f32 0.0, %v6852
        %v6854 = vpop.f32.mrb[0].mxu0
        %v6855 = vpop.f32.mrb[0].mxu0
        %v6856 = vadd.f32 0.0, %v6855
        %v6857 = vpop.f32.mrb[0].mxu0
        %6858 = vdwg.mxu0
        %v6859 = vadd.f32 %v6092, %v6733
        %v6860 = vadd.f32 %v6095, %v6736
        %v6861 = vadd.f32 %v6100, %v6741
        %v6862 = vadd.f32 %v6103, %v6744
        %v6863 = vadd.f32 %v6108, %v6749
        %v6864 = vadd.f32 %v6111, %v6752
        %v6865 = vadd.f32 %v6116, %v6757
        %v6866 = vadd.f32 %v6119, %v6760
        %v6867 = vadd.f32 %v6124, %v6765
        %v6868 = vadd.f32 %v6127, %v6768
        %v6869 = vadd.f32 %v6132, %v6773
        %v6870 = vadd.f32 %v6135, %v6776
        %v6871 = vadd.f32 %v6140, %v6781
        %v6872 = vadd.f32 %v6143, %v6784
        %v6873 = vadd.f32 %v6148, %v6789
        %v6874 = vadd.f32 %v6151, %v6792
        %v6875 = vadd.f32 %v6156, %v6797
        %v6876 = vadd.f32 %v6159, %v6800
        %v6877 = vadd.f32 %v6164, %v6805
        %v6878 = vadd.f32 %v6167, %v6808
        %v6879 = vadd.f32 %v6172, %v6813
        %v6880 = vadd.f32 %v6175, %v6816
        %v6881 = vadd.f32 %v6180, %v6821
        %v6882 = vadd.f32 %v6183, %v6824
        %v6883 = vadd.f32 %v6188, %v6829
        %v6884 = vadd.f32 %v6191, %v6832
        %v6885 = vadd.f32 %v6196, %v6837
        %v6886 = vadd.f32 %v6199, %v6840
        %v6887 = vadd.f32 %v6204, %v6845
        %v6888 = vadd.f32 %v6207, %v6848
        %v6889 = vadd.f32 %v6212, %v6853
        %v6890 = vadd.f32 %v6215, %v6856
        %6891 = vrot.lane.b32.xlu0 %v5342, 80
        %v6892 = vpop.permute.xlu0 %6891
        %6893 = vrot.lane.b32.xlu0 %v4934, 80
        %v6894 = vpop.permute.xlu0 %6893
        %6895 = vrot.lane.b32.xlu0 %v4935, 80
        %v6896 = vpop.permute.xlu0 %6895
        %6897 = vrot.lane.b32.xlu0 %v4936, 80
        %v6898 = vpop.permute.xlu0 %6897
        %6899 = vrot.lane.b32.xlu0 %v4937, 80
        %v6900 = vpop.permute.xlu0 %6899
        %6901 = vrot.lane.b32.xlu0 %v4938, 80
        %v6902 = vpop.permute.xlu0 %6901
        %6903 = vrot.lane.b32.xlu0 %v4939, 80
        %v6904 = vpop.permute.xlu0 %6903
        %6905 = vrot.lane.b32.xlu0 %v4940, 80
        %v6906 = vpop.permute.xlu0 %6905
        %6907 = vrot.lane.b32.xlu0 %v4941, 80
        %v6908 = vpop.permute.xlu0 %6907
        %6909 = vrot.lane.b32.xlu0 %v4942, 80
        %v6910 = vpop.permute.xlu0 %6909
        %6911 = vrot.lane.b32.xlu0 %v4943, 80
        %v6912 = vpop.permute.xlu0 %6911
        %6913 = vrot.lane.b32.xlu0 %v4944, 80
        %v6914 = vpop.permute.xlu0 %6913
        %6915 = vrot.lane.b32.xlu0 %v4945, 80
        %v6916 = vpop.permute.xlu0 %6915
        %6917 = vrot.lane.b32.xlu0 %v4946, 80
        %v6918 = vpop.permute.xlu0 %6917
        %6919 = vrot.lane.b32.xlu0 %v4947, 80
        %v6920 = vpop.permute.xlu0 %6919
        %6921 = vrot.lane.b32.xlu0 %v4948, 80
        %v6922 = vpop.permute.xlu0 %6921
        %6923 = vrot.lane.b32.xlu0 %v4949, 80
        %v6924 = vpop.permute.xlu0 %6923
        %v6926 = vsel %vm1980, %v6892, 0
        %v6929 = vsel %vm1980, %v6894, 0
        %v6932 = vsel %vm1980, %v6896, 0
        %v6935 = vsel %vm1980, %v6898, 0
        %v6938 = vsel %vm1980, %v6900, 0
        %v6941 = vsel %vm1980, %v6902, 0
        %v6944 = vsel %vm1980, %v6904, 0
        %v6947 = vsel %vm1980, %v6906, 0
        %v6950 = vsel %vm1980, %v6908, 0
        %v6953 = vsel %vm1980, %v6910, 0
        %v6956 = vsel %vm1980, %v6912, 0
        %v6959 = vsel %vm1980, %v6914, 0
        %v6962 = vsel %vm1980, %v6916, 0
        %v6965 = vsel %vm1980, %v6918, 0
        %v6968 = vsel %vm1980, %v6920, 0
        %v6971 = vsel %vm1980, %v6922, 0
        %v6974 = vsel %vm1980, %v6924, 0
        %6976 = vmatprep.subr.bf16.mxu0 0
        %6977 = vmatpush1.bf16.xpose.msra.mxu0 %v6929
        %6978 = vmatprep.subr.bf16.mxu0 0
        %6979 = vmatpush1.bf16.xpose.msra.mxu0 %v6932
        %6980 = vmatprep.subr.bf16.mxu0 0
        %6981 = vmatpush1.bf16.xpose.msra.mxu0 %v6935
        %6982 = vmatprep.subr.bf16.mxu0 0
        %6983 = vmatpush1.bf16.xpose.msra.mxu0 %v6938
        %6984 = vmatprep.subr.bf16.mxu0 0
        %6985 = vmatpush1.bf16.xpose.msra.mxu0 %v6941
        %6986 = vmatprep.subr.bf16.mxu0 0
        %6987 = vmatpush1.bf16.xpose.msra.mxu0 %v6944
        %6988 = vmatprep.subr.bf16.mxu0 0
        %6989 = vmatpush1.bf16.xpose.msra.mxu0 %v6947
        %6990 = vmatprep.subr.bf16.mxu0 0
        %6991 = vmatpush1.bf16.xpose.msra.mxu0 %v6950
        %6992 = vmatprep.subr.bf16.mxu0 0
        %6993 = vmatpush1.bf16.xpose.msra.mxu0 %v6953
        %6994 = vmatprep.subr.bf16.mxu0 0
        %6995 = vmatpush1.bf16.xpose.msra.mxu0 %v6956
        %6996 = vmatprep.subr.bf16.mxu0 0
        %6997 = vmatpush1.bf16.xpose.msra.mxu0 %v6959
        %6998 = vmatprep.subr.bf16.mxu0 0
        %6999 = vmatpush1.bf16.xpose.msra.mxu0 %v6962
        %7000 = vmatprep.subr.bf16.mxu0 0
        %7001 = vmatpush1.bf16.xpose.msra.mxu0 %v6965
        %7002 = vmatprep.subr.bf16.mxu0 0
        %7003 = vmatpush1.bf16.xpose.msra.mxu0 %v6968
        %7004 = vmatprep.subr.bf16.mxu0 0
        %7005 = vmatpush1.bf16.xpose.msra.mxu0 %v6971
        %7006 = vmatprep.subr.bf16.mxu0 0
        %7007 = vmatpush1.bf16.xpose.msra.mxu0 %v6974
        %7008 = vmatprep.mubr.bf16.mxu0 0
        %7009 = vmatmul.mubr.bf16.gmra.mrb[0].mxu0 %v6926
        %v7010 = vpop.f32.mrb[0].mxu0
        %v7011 = vadd.f32 0.0, %v7010
        %v7012 = vpop.f32.mrb[0].mxu0
        %v7013 = vadd.f32 0.0, %v7012
        %v7014 = vpop.f32.mrb[0].mxu0
        %v7015 = vpop.f32.mrb[0].mxu0
        %7016 = vdwg.mxu0
        %v7017 = vrot.slane %v7011, 4
        %v7018 = vmax.f32 %v7011, %v7017
        %v7019 = vrot.slane %v7018, 2
        %v7020 = vmax.f32 %v7018, %v7019
        %v7021 = vrot.slane %v7020, 1
        %v7022 = vmax.f32 %v7020, %v7021
        %v7023 = vrot.slane %v7013, 4
        %v7024 = vmax.f32 %v7013, %v7023
        %v7025 = vrot.slane %v7024, 2
        %v7026 = vmax.f32 %v7024, %v7025
        %v7027 = vrot.slane %v7026, 1
        %v7028 = vmax.f32 %v7026, %v7027
        %v7029 = vsub.f32 %v7011, %v7022
        %v7030 = vsub.f32 %v7013, %v7028
        %v7031 = vmul.f32 %v7029, 1.442695
        %v7032 = vpow.pop %v7031
        %v7033 = vmul.f32 %v7030, 1.442695
        %v7034 = vpow.pop %v7033
        %v7035 = vrot.slane %v7032, 4
        %v7036 = vadd.f32 %v7032, %v7035
        %v7037 = vrot.slane %v7036, 2
        %v7038 = vadd.f32 %v7036, %v7037
        %v7039 = vrot.slane %v7038, 1
        %v7040 = vadd.f32 %v7038, %v7039
        %v7041 = vrot.slane %v7034, 4
        %v7042 = vadd.f32 %v7034, %v7041
        %v7043 = vrot.slane %v7042, 2
        %v7044 = vadd.f32 %v7042, %v7043
        %v7045 = vrot.slane %v7044, 1
        %v7046 = vadd.f32 %v7044, %v7045
        %v7047 = vrcp.pop %v7040
        %v7048 = vrcp.pop %v7046
        %v7049 = vmul.f32 %v7032, %v7047
        %v7050 = vmul.f32 %v7034, %v7048
        %v7051 = vpack.c.bf16 %v7049, %v7049
        %v7052 = vpack.c.bf16 %v7050, %v7050
        %7053 = vxpose.xlu0.c.b16.start [1/8] %v7051, 128
        %7054 = vxpose.xlu0.c.b16.cont [2/8] 0, 128
        %7055 = vxpose.xlu0.c.b16.cont [3/8] 0, 128
        %7056 = vxpose.xlu0.c.b16.cont [4/8] 0, 128
        %7057 = vxpose.xlu0.c.b16.cont [5/8] 0, 128
        %7058 = vxpose.xlu0.c.b16.cont [6/8] 0, 128
        %7059 = vxpose.xlu0.c.b16.cont [7/8] 0, 128
        %7060 = vxpose.xlu0.c.b16.end [8/8] 0, 128
        %v7061 = vpop.trf.xlu0
        %v7062 = vpop.trf.xlu0
        %v7063 = vpop.trf.xlu0
        %v7064 = vpop.trf.xlu0
        %v7065 = vpop.trf.xlu0
        %v7066 = vpop.trf.xlu0
        %v7067 = vpop.trf.xlu0
        %v7068 = vpop.trf.xlu0
        %7069 = vxpose.xlu0.c.b16.start [1/8] %v7052, 128
        %7070 = vxpose.xlu0.c.b16.cont [2/8] 0, 128
        %7071 = vxpose.xlu0.c.b16.cont [3/8] 0, 128
        %7072 = vxpose.xlu0.c.b16.cont [4/8] 0, 128
        %7073 = vxpose.xlu0.c.b16.cont [5/8] 0, 128
        %7074 = vxpose.xlu0.c.b16.cont [6/8] 0, 128
        %7075 = vxpose.xlu0.c.b16.cont [7/8] 0, 128
        %7076 = vxpose.xlu0.c.b16.end [8/8] 0, 128
        %v7077 = vpop.trf.xlu0
        %v7078 = vpop.trf.xlu0
        %v7079 = vpop.trf.xlu0
        %v7080 = vpop.trf.xlu0
        %v7081 = vpop.trf.xlu0
        %v7082 = vpop.trf.xlu0
        %v7083 = vpop.trf.xlu0
        %v7084 = vpop.trf.xlu0
        %7085 = vrot.lane.b32.xlu0 %v5555, 80
        %v7086 = vpop.permute.xlu0 %7085
        %v7088 = vsel %vm2141, %v7061, 0
        %v7091 = vsel %vm2141, %v7062, 0
        %v7094 = vsel %vm2141, %v7063, 0
        %v7097 = vsel %vm2141, %v7064, 0
        %v7100 = vsel %vm2141, %v7065, 0
        %v7103 = vsel %vm2141, %v7066, 0
        %v7106 = vsel %vm2141, %v7067, 0
        %v7109 = vsel %vm2141, %v7068, 0
        %v7112 = vsel %vm2141, %v7077, 0
        %v7115 = vsel %vm2141, %v7078, 0
        %v7118 = vsel %vm2141, %v7079, 0
        %v7121 = vsel %vm2141, %v7080, 0
        %v7124 = vsel %vm2141, %v7081, 0
        %v7127 = vsel %vm2141, %v7082, 0
        %v7130 = vsel %vm2141, %v7083, 0
        %v7133 = vsel %vm2141, %v7084, 0
        %v7136 = vsel %vm2190, %v7086, 0
        %7138 = vmatprep.subr.bf16.mxu0 0
        %7139 = vmatpush1.bf16.msra.mxu0 %v7136
        %7140 = vmatprep.subr.bf16.mxu0 0
        %7141 = vmatpush1.bf16.msra.mxu0 0
        %7142 = vmatprep.subr.bf16.mxu0 0
        %7143 = vmatpush1.bf16.msra.mxu0 0
        %7144 = vmatprep.subr.bf16.mxu0 0
        %7145 = vmatpush1.bf16.msra.mxu0 0
        %7146 = vmatprep.subr.bf16.mxu0 0
        %7147 = vmatpush1.bf16.msra.mxu0 0
        %7148 = vmatprep.subr.bf16.mxu0 0
        %7149 = vmatpush1.bf16.msra.mxu0 0
        %7150 = vmatprep.subr.bf16.mxu0 0
        %7151 = vmatpush1.bf16.msra.mxu0 0
        %7152 = vmatprep.subr.bf16.mxu0 0
        %7153 = vmatpush1.bf16.msra.mxu0 0
        %7154 = vmatprep.subr.bf16.mxu0 0
        %7155 = vmatpush1.bf16.msra.mxu0 0
        %7156 = vmatprep.subr.bf16.mxu0 0
        %7157 = vmatpush1.bf16.msra.mxu0 0
        %7158 = vmatprep.subr.bf16.mxu0 0
        %7159 = vmatpush1.bf16.msra.mxu0 0
        %7160 = vmatprep.subr.bf16.mxu0 0
        %7161 = vmatpush1.bf16.msra.mxu0 0
        %7162 = vmatprep.subr.bf16.mxu0 0
        %7163 = vmatpush1.bf16.msra.mxu0 0
        %7164 = vmatprep.subr.bf16.mxu0 0
        %7165 = vmatpush1.bf16.msra.mxu0 0
        %7166 = vmatprep.subr.bf16.mxu0 0
        %7167 = vmatpush1.bf16.msra.mxu0 0
        %7168 = vmatprep.subr.bf16.mxu0 0
        %7169 = vmatpush1.bf16.msra.mxu0 0
        %7170 = vmatprep.mubr.bf16.mxu0 0
        %7171 = vmatmul.mubr.bf16.gmra.mrb[0].mxu0 %v7088
        %v7172 = vpop.f32.mrb[0].mxu0
        %v7173 = vadd.f32 0.0, %v7172
        %v7174 = vpop.f32.mrb[0].mxu0
        %v7175 = vpop.f32.mrb[0].mxu0
        %v7176 = vadd.f32 0.0, %v7175
        %v7177 = vpop.f32.mrb[0].mxu0
        %7178 = vmatprep.mubr.bf16.mxu0 0
        %7179 = vmatmul.mubr.bf16.gmra.mrb[0].mxu0 %v7091
        %v7180 = vpop.f32.mrb[0].mxu0
        %v7181 = vadd.f32 0.0, %v7180
        %v7182 = vpop.f32.mrb[0].mxu0
        %v7183 = vpop.f32.mrb[0].mxu0
        %v7184 = vadd.f32 0.0, %v7183
        %v7185 = vpop.f32.mrb[0].mxu0
        %7186 = vmatprep.mubr.bf16.mxu0 0
        %7187 = vmatmul.mubr.bf16.gmra.mrb[0].mxu0 %v7094
        %v7188 = vpop.f32.mrb[0].mxu0
        %v7189 = vadd.f32 0.0, %v7188
        %v7190 = vpop.f32.mrb[0].mxu0
        %v7191 = vpop.f32.mrb[0].mxu0
        %v7192 = vadd.f32 0.0, %v7191
        %v7193 = vpop.f32.mrb[0].mxu0
        %7194 = vmatprep.mubr.bf16.mxu0 0
        %7195 = vmatmul.mubr.bf16.gmra.mrb[0].mxu0 %v7097
        %v7196 = vpop.f32.mrb[0].mxu0
        %v7197 = vadd.f32 0.0, %v7196
        %v7198 = vpop.f32.mrb[0].mxu0
        %v7199 = vpop.f32.mrb[0].mxu0
        %v7200 = vadd.f32 0.0, %v7199
        %v7201 = vpop.f32.mrb[0].mxu0
        %7202 = vmatprep.mubr.bf16.mxu0 0
        %7203 = vmatmul.mubr.bf16.gmra.mrb[0].mxu0 %v7100
        %v7204 = vpop.f32.mrb[0].mxu0
        %v7205 = vadd.f32 0.0, %v7204
        %v7206 = vpop.f32.mrb[0].mxu0
        %v7207 = vpop.f32.mrb[0].mxu0
        %v7208 = vadd.f32 0.0, %v7207
        %v7209 = vpop.f32.mrb[0].mxu0
        %7210 = vmatprep.mubr.bf16.mxu0 0
        %7211 = vmatmul.mubr.bf16.gmra.mrb[0].mxu0 %v7103
        %v7212 = vpop.f32.mrb[0].mxu0
        %v7213 = vadd.f32 0.0, %v7212
        %v7214 = vpop.f32.mrb[0].mxu0
        %v7215 = vpop.f32.mrb[0].mxu0
        %v7216 = vadd.f32 0.0, %v7215
        %v7217 = vpop.f32.mrb[0].mxu0
        %7218 = vmatprep.mubr.bf16.mxu0 0
        %7219 = vmatmul.mubr.bf16.gmra.mrb[0].mxu0 %v7106
        %v7220 = vpop.f32.mrb[0].mxu0
        %v7221 = vadd.f32 0.0, %v7220
        %v7222 = vpop.f32.mrb[0].mxu0
        %v7223 = vpop.f32.mrb[0].mxu0
        %v7224 = vadd.f32 0.0, %v7223
        %v7225 = vpop.f32.mrb[0].mxu0
        %7226 = vmatprep.mubr.bf16.mxu0 0
        %7227 = vmatmul.mubr.bf16.gmra.mrb[0].mxu0 %v7109
        %v7228 = vpop.f32.mrb[0].mxu0
        %v7229 = vadd.f32 0.0, %v7228
        %v7230 = vpop.f32.mrb[0].mxu0
        %v7231 = vpop.f32.mrb[0].mxu0
        %v7232 = vadd.f32 0.0, %v7231
        %v7233 = vpop.f32.mrb[0].mxu0
        %7234 = vmatprep.mubr.bf16.mxu0 0
        %7235 = vmatmul.mubr.bf16.gmra.mrb[0].mxu0 %v7112
        %v7236 = vpop.f32.mrb[0].mxu0
        %v7237 = vadd.f32 0.0, %v7236
        %v7238 = vpop.f32.mrb[0].mxu0
        %v7239 = vpop.f32.mrb[0].mxu0
        %v7240 = vadd.f32 0.0, %v7239
        %v7241 = vpop.f32.mrb[0].mxu0
        %7242 = vmatprep.mubr.bf16.mxu0 0
        %7243 = vmatmul.mubr.bf16.gmra.mrb[0].mxu0 %v7115
        %v7244 = vpop.f32.mrb[0].mxu0
        %v7245 = vadd.f32 0.0, %v7244
        %v7246 = vpop.f32.mrb[0].mxu0
        %v7247 = vpop.f32.mrb[0].mxu0
        %v7248 = vadd.f32 0.0, %v7247
        %v7249 = vpop.f32.mrb[0].mxu0
        %7250 = vmatprep.mubr.bf16.mxu0 0
        %7251 = vmatmul.mubr.bf16.gmra.mrb[0].mxu0 %v7118
        %v7252 = vpop.f32.mrb[0].mxu0
        %v7253 = vadd.f32 0.0, %v7252
        %v7254 = vpop.f32.mrb[0].mxu0
        %v7255 = vpop.f32.mrb[0].mxu0
        %v7256 = vadd.f32 0.0, %v7255
        %v7257 = vpop.f32.mrb[0].mxu0
        %7258 = vmatprep.mubr.bf16.mxu0 0
        %7259 = vmatmul.mubr.bf16.gmra.mrb[0].mxu0 %v7121
        %v7260 = vpop.f32.mrb[0].mxu0
        %v7261 = vadd.f32 0.0, %v7260
        %v7262 = vpop.f32.mrb[0].mxu0
        %v7263 = vpop.f32.mrb[0].mxu0
        %v7264 = vadd.f32 0.0, %v7263
        %v7265 = vpop.f32.mrb[0].mxu0
        %7266 = vmatprep.mubr.bf16.mxu0 0
        %7267 = vmatmul.mubr.bf16.gmra.mrb[0].mxu0 %v7124
        %v7268 = vpop.f32.mrb[0].mxu0
        %v7269 = vadd.f32 0.0, %v7268
        %v7270 = vpop.f32.mrb[0].mxu0
        %v7271 = vpop.f32.mrb[0].mxu0
        %v7272 = vadd.f32 0.0, %v7271
        %v7273 = vpop.f32.mrb[0].mxu0
        %7274 = vmatprep.mubr.bf16.mxu0 0
        %7275 = vmatmul.mubr.bf16.gmra.mrb[0].mxu0 %v7127
        %v7276 = vpop.f32.mrb[0].mxu0
        %v7277 = vadd.f32 0.0, %v7276
        %v7278 = vpop.f32.mrb[0].mxu0
        %v7279 = vpop.f32.mrb[0].mxu0
        %v7280 = vadd.f32 0.0, %v7279
        %v7281 = vpop.f32.mrb[0].mxu0
        %7282 = vmatprep.mubr.bf16.mxu0 0
        %7283 = vmatmul.mubr.bf16.gmra.mrb[0].mxu0 %v7130
        %v7284 = vpop.f32.mrb[0].mxu0
        %v7285 = vadd.f32 0.0, %v7284
        %v7286 = vpop.f32.mrb[0].mxu0
        %v7287 = vpop.f32.mrb[0].mxu0
        %v7288 = vadd.f32 0.0, %v7287
        %v7289 = vpop.f32.mrb[0].mxu0
        %7290 = vmatprep.mubr.bf16.mxu0 0
        %7291 = vmatmul.mubr.bf16.gmra.mrb[0].mxu0 %v7133
        %v7292 = vpop.f32.mrb[0].mxu0
        %v7293 = vadd.f32 0.0, %v7292
        %v7294 = vpop.f32.mrb[0].mxu0
        %v7295 = vpop.f32.mrb[0].mxu0
        %v7296 = vadd.f32 0.0, %v7295
        %v7297 = vpop.f32.mrb[0].mxu0
        %7298 = vdwg.mxu0
        %v7299 = vpack.c.bf16 %v7176, %v7173
        %v7300 = vpack.c.bf16 %v7184, %v7181
        %v7301 = vpack.c.bf16 %v7192, %v7189
        %v7302 = vpack.c.bf16 %v7200, %v7197
        %v7303 = vpack.c.bf16 %v7208, %v7205
        %v7304 = vpack.c.bf16 %v7216, %v7213
        %v7305 = vpack.c.bf16 %v7224, %v7221
        %v7306 = vpack.c.bf16 %v7232, %v7229
        %v7307 = vpack.c.bf16 %v7240, %v7237
        %v7308 = vpack.c.bf16 %v7248, %v7245
        %v7309 = vpack.c.bf16 %v7256, %v7253
        %v7310 = vpack.c.bf16 %v7264, %v7261
        %v7311 = vpack.c.bf16 %v7272, %v7269
        %v7312 = vpack.c.bf16 %v7280, %v7277
        %v7313 = vpack.c.bf16 %v7288, %v7285
        %v7314 = vpack.c.bf16 %v7296, %v7293
        %v7315 = vld [vmem:[%s18 + $0x18] sm:$0xf]
        %v7316 = vld [vmem:[%s18 + $0x1c] sm:$0xf]
        %v7319 = vunpack.c.l.b16 %v7315
        %v7320 = vunpack.c.l.b16 %v7316
        %v7321 = vpack.c.b16 %v7320, %v7319
        %v7324 = vsel %vm1980, %v7299, 0
        %v7327 = vsel %vm1980, %v7300, 0
        %v7330 = vsel %vm1980, %v7301, 0
        %v7333 = vsel %vm1980, %v7302, 0
        %v7336 = vsel %vm1980, %v7303, 0
        %v7339 = vsel %vm1980, %v7304, 0
        %v7342 = vsel %vm1980, %v7305, 0
        %v7345 = vsel %vm1980, %v7306, 0
        %v7348 = vsel %vm1980, %v7307, 0
        %v7351 = vsel %vm1980, %v7308, 0
        %v7354 = vsel %vm1980, %v7309, 0
        %v7357 = vsel %vm1980, %v7310, 0
        %v7360 = vsel %vm1980, %v7311, 0
        %v7363 = vsel %vm1980, %v7312, 0
        %v7366 = vsel %vm1980, %v7313, 0
        %v7369 = vsel %vm1980, %v7314, 0
        %7371 = vmatprep.subr.bf16.mxu0 0
        %7372 = vmatpush1.bf16.msra.mxu0 %v7321
        %7373 = vmatprep.subr.bf16.mxu0 0
        %7374 = vmatpush1.bf16.msra.mxu0 0
        %7375 = vmatprep.subr.bf16.mxu0 0
        %7376 = vmatpush1.bf16.msra.mxu0 0
        %7377 = vmatprep.subr.bf16.mxu0 0
        %7378 = vmatpush1.bf16.msra.mxu0 0
        %7379 = vmatprep.subr.bf16.mxu0 0
        %7380 = vmatpush1.bf16.msra.mxu0 0
        %7381 = vmatprep.subr.bf16.mxu0 0
        %7382 = vmatpush1.bf16.msra.mxu0 0
        %7383 = vmatprep.subr.bf16.mxu0 0
        %7384 = vmatpush1.bf16.msra.mxu0 0
        %7385 = vmatprep.subr.bf16.mxu0 0
        %7386 = vmatpush1.bf16.msra.mxu0 0
        %7387 = vmatprep.subr.bf16.mxu0 0
        %7388 = vmatpush1.bf16.msra.mxu0 0
        %7389 = vmatprep.subr.bf16.mxu0 0
        %7390 = vmatpush1.bf16.msra.mxu0 0
        %7391 = vmatprep.subr.bf16.mxu0 0
        %7392 = vmatpush1.bf16.msra.mxu0 0
        %7393 = vmatprep.subr.bf16.mxu0 0
        %7394 = vmatpush1.bf16.msra.mxu0 0
        %7395 = vmatprep.subr.bf16.mxu0 0
        %7396 = vmatpush1.bf16.msra.mxu0 0
        %7397 = vmatprep.subr.bf16.mxu0 0
        %7398 = vmatpush1.bf16.msra.mxu0 0
        %7399 = vmatprep.subr.bf16.mxu0 0
        %7400 = vmatpush1.bf16.msra.mxu0 0
        %7401 = vmatprep.subr.bf16.mxu0 0
        %7402 = vmatpush1.bf16.msra.mxu0 0
        %7403 = vmatprep.mubr.bf16.mxu0 0
        %7404 = vmatmul.mubr.bf16.gmra.mrb[0].mxu0 %v7324
        %v7405 = vpop.f32.mrb[0].mxu0
        %v7406 = vadd.f32 0.0, %v7405
        %v7407 = vpop.f32.mrb[0].mxu0
        %v7408 = vpop.f32.mrb[0].mxu0
        %v7409 = vadd.f32 0.0, %v7408
        %v7410 = vpop.f32.mrb[0].mxu0
        %7411 = vmatprep.mubr.bf16.mxu0 0
        %7412 = vmatmul.mubr.bf16.gmra.mrb[0].mxu0 %v7327
        %v7413 = vpop.f32.mrb[0].mxu0
        %v7414 = vadd.f32 0.0, %v7413
        %v7415 = vpop.f32.mrb[0].mxu0
        %v7416 = vpop.f32.mrb[0].mxu0
        %v7417 = vadd.f32 0.0, %v7416
        %v7418 = vpop.f32.mrb[0].mxu0
        %7419 = vmatprep.mubr.bf16.mxu0 0
        %7420 = vmatmul.mubr.bf16.gmra.mrb[0].mxu0 %v7330
        %v7421 = vpop.f32.mrb[0].mxu0
        %v7422 = vadd.f32 0.0, %v7421
        %v7423 = vpop.f32.mrb[0].mxu0
        %v7424 = vpop.f32.mrb[0].mxu0
        %v7425 = vadd.f32 0.0, %v7424
        %v7426 = vpop.f32.mrb[0].mxu0
        %7427 = vmatprep.mubr.bf16.mxu0 0
        %7428 = vmatmul.mubr.bf16.gmra.mrb[0].mxu0 %v7333
        %v7429 = vpop.f32.mrb[0].mxu0
        %v7430 = vadd.f32 0.0, %v7429
        %v7431 = vpop.f32.mrb[0].mxu0
        %v7432 = vpop.f32.mrb[0].mxu0
        %v7433 = vadd.f32 0.0, %v7432
        %v7434 = vpop.f32.mrb[0].mxu0
        %7435 = vmatprep.mubr.bf16.mxu0 0
        %7436 = vmatmul.mubr.bf16.gmra.mrb[0].mxu0 %v7336
        %v7437 = vpop.f32.mrb[0].mxu0
        %v7438 = vadd.f32 0.0, %v7437
        %v7439 = vpop.f32.mrb[0].mxu0
        %v7440 = vpop.f32.mrb[0].mxu0
        %v7441 = vadd.f32 0.0, %v7440
        %v7442 = vpop.f32.mrb[0].mxu0
        %7443 = vmatprep.mubr.bf16.mxu0 0
        %7444 = vmatmul.mubr.bf16.gmra.mrb[0].mxu0 %v7339
        %v7445 = vpop.f32.mrb[0].mxu0
        %v7446 = vadd.f32 0.0, %v7445
        %v7447 = vpop.f32.mrb[0].mxu0
        %v7448 = vpop.f32.mrb[0].mxu0
        %v7449 = vadd.f32 0.0, %v7448
        %v7450 = vpop.f32.mrb[0].mxu0
        %7451 = vmatprep.mubr.bf16.mxu0 0
        %7452 = vmatmul.mubr.bf16.gmra.mrb[0].mxu0 %v7342
        %v7453 = vpop.f32.mrb[0].mxu0
        %v7454 = vadd.f32 0.0, %v7453
        %v7455 = vpop.f32.mrb[0].mxu0
        %v7456 = vpop.f32.mrb[0].mxu0
        %v7457 = vadd.f32 0.0, %v7456
        %v7458 = vpop.f32.mrb[0].mxu0
        %7459 = vmatprep.mubr.bf16.mxu0 0
        %7460 = vmatmul.mubr.bf16.gmra.mrb[0].mxu0 %v7345
        %v7461 = vpop.f32.mrb[0].mxu0
        %v7462 = vadd.f32 0.0, %v7461
        %v7463 = vpop.f32.mrb[0].mxu0
        %v7464 = vpop.f32.mrb[0].mxu0
        %v7465 = vadd.f32 0.0, %v7464
        %v7466 = vpop.f32.mrb[0].mxu0
        %7467 = vmatprep.mubr.bf16.mxu0 0
        %7468 = vmatmul.mubr.bf16.gmra.mrb[0].mxu0 %v7348
        %v7469 = vpop.f32.mrb[0].mxu0
        %v7470 = vadd.f32 0.0, %v7469
        %v7471 = vpop.f32.mrb[0].mxu0
        %v7472 = vpop.f32.mrb[0].mxu0
        %v7473 = vadd.f32 0.0, %v7472
        %v7474 = vpop.f32.mrb[0].mxu0
        %7475 = vmatprep.mubr.bf16.mxu0 0
        %7476 = vmatmul.mubr.bf16.gmra.mrb[0].mxu0 %v7351
        %v7477 = vpop.f32.mrb[0].mxu0
        %v7478 = vadd.f32 0.0, %v7477
        %v7479 = vpop.f32.mrb[0].mxu0
        %v7480 = vpop.f32.mrb[0].mxu0
        %v7481 = vadd.f32 0.0, %v7480
        %v7482 = vpop.f32.mrb[0].mxu0
        %7483 = vmatprep.mubr.bf16.mxu0 0
        %7484 = vmatmul.mubr.bf16.gmra.mrb[0].mxu0 %v7354
        %v7485 = vpop.f32.mrb[0].mxu0
        %v7486 = vadd.f32 0.0, %v7485
        %v7487 = vpop.f32.mrb[0].mxu0
        %v7488 = vpop.f32.mrb[0].mxu0
        %v7489 = vadd.f32 0.0, %v7488
        %v7490 = vpop.f32.mrb[0].mxu0
        %7491 = vmatprep.mubr.bf16.mxu0 0
        %7492 = vmatmul.mubr.bf16.gmra.mrb[0].mxu0 %v7357
        %v7493 = vpop.f32.mrb[0].mxu0
        %v7494 = vadd.f32 0.0, %v7493
        %v7495 = vpop.f32.mrb[0].mxu0
        %v7496 = vpop.f32.mrb[0].mxu0
        %v7497 = vadd.f32 0.0, %v7496
        %v7498 = vpop.f32.mrb[0].mxu0
        %7499 = vmatprep.mubr.bf16.mxu0 0
        %7500 = vmatmul.mubr.bf16.gmra.mrb[0].mxu0 %v7360
        %v7501 = vpop.f32.mrb[0].mxu0
        %v7502 = vadd.f32 0.0, %v7501
        %v7503 = vpop.f32.mrb[0].mxu0
        %v7504 = vpop.f32.mrb[0].mxu0
        %v7505 = vadd.f32 0.0, %v7504
        %v7506 = vpop.f32.mrb[0].mxu0
        %7507 = vmatprep.mubr.bf16.mxu0 0
        %7508 = vmatmul.mubr.bf16.gmra.mrb[0].mxu0 %v7363
        %v7509 = vpop.f32.mrb[0].mxu0
        %v7510 = vadd.f32 0.0, %v7509
        %v7511 = vpop.f32.mrb[0].mxu0
        %v7512 = vpop.f32.mrb[0].mxu0
        %v7513 = vadd.f32 0.0, %v7512
        %v7514 = vpop.f32.mrb[0].mxu0
        %7515 = vmatprep.mubr.bf16.mxu0 0
        %7516 = vmatmul.mubr.bf16.gmra.mrb[0].mxu0 %v7366
        %v7517 = vpop.f32.mrb[0].mxu0
        %v7518 = vadd.f32 0.0, %v7517
        %v7519 = vpop.f32.mrb[0].mxu0
        %v7520 = vpop.f32.mrb[0].mxu0
        %v7521 = vadd.f32 0.0, %v7520
        %v7522 = vpop.f32.mrb[0].mxu0
        %7523 = vmatprep.mubr.bf16.mxu0 0
        %7524 = vmatmul.mubr.bf16.gmra.mrb[0].mxu0 %v7369
        %v7525 = vpop.f32.mrb[0].mxu0
        %v7526 = vadd.f32 0.0, %v7525
        %v7527 = vpop.f32.mrb[0].mxu0
        %v7528 = vpop.f32.mrb[0].mxu0
        %v7529 = vadd.f32 0.0, %v7528
        %v7530 = vpop.f32.mrb[0].mxu0
        %7531 = vdwg.mxu0
        %v7532 = vadd.f32 %v6859, %v7406
        %v7533 = vadd.f32 %v6860, %v7409
        %v7534 = vadd.f32 %v6861, %v7414
        %v7535 = vadd.f32 %v6862, %v7417
        %v7536 = vadd.f32 %v6863, %v7422
        %v7537 = vadd.f32 %v6864, %v7425
        %v7538 = vadd.f32 %v6865, %v7430
        %v7539 = vadd.f32 %v6866, %v7433
        %v7540 = vadd.f32 %v6867, %v7438
        %v7541 = vadd.f32 %v6868, %v7441
        %v7542 = vadd.f32 %v6869, %v7446
        %v7543 = vadd.f32 %v6870, %v7449
        %v7544 = vadd.f32 %v6871, %v7454
        %v7545 = vadd.f32 %v6872, %v7457
        %v7546 = vadd.f32 %v6873, %v7462
        %v7547 = vadd.f32 %v6874, %v7465
        %v7548 = vadd.f32 %v6875, %v7470
        %v7549 = vadd.f32 %v6876, %v7473
        %v7550 = vadd.f32 %v6877, %v7478
        %v7551 = vadd.f32 %v6878, %v7481
        %v7552 = vadd.f32 %v6879, %v7486
        %v7553 = vadd.f32 %v6880, %v7489
        %v7554 = vadd.f32 %v6881, %v7494
        %v7555 = vadd.f32 %v6882, %v7497
        %v7556 = vadd.f32 %v6883, %v7502
        %v7557 = vadd.f32 %v6884, %v7505
        %v7558 = vadd.f32 %v6885, %v7510
        %v7559 = vadd.f32 %v6886, %v7513
        %v7560 = vadd.f32 %v6887, %v7518
        %v7561 = vadd.f32 %v6888, %v7521
        %v7562 = vadd.f32 %v6889, %v7526
        %v7563 = vadd.f32 %v6890, %v7529
        %v7564 = vld [vmem:[%s19] sm:$0x1]
        %v7566 = vlaneseq
        %v7567 = vshrl.u32 %v7566, 7
        %v7568 = vsub.s32 0, %v7567
        %v7569 = vrot.slane %v7564, %v7568
        %v7571 = vadd.f32 %v7532, %v7569
        %v7572 = vadd.f32 %v7533, %v7569
        %v7573 = vadd.f32 %v7534, %v7569
        %v7574 = vadd.f32 %v7535, %v7569
        %v7575 = vadd.f32 %v7536, %v7569
        %v7576 = vadd.f32 %v7537, %v7569
        %v7577 = vadd.f32 %v7538, %v7569
        %v7578 = vadd.f32 %v7539, %v7569
        %v7579 = vadd.f32 %v7540, %v7569
        %v7580 = vadd.f32 %v7541, %v7569
        %v7581 = vadd.f32 %v7542, %v7569
        %v7582 = vadd.f32 %v7543, %v7569
        %v7583 = vadd.f32 %v7544, %v7569
        %v7584 = vadd.f32 %v7545, %v7569
        %v7585 = vadd.f32 %v7546, %v7569
        %v7586 = vadd.f32 %v7547, %v7569
        %v7587 = vadd.f32 %v7548, %v7569
        %v7588 = vadd.f32 %v7549, %v7569
        %v7589 = vadd.f32 %v7550, %v7569
        %v7590 = vadd.f32 %v7551, %v7569
        %v7591 = vadd.f32 %v7552, %v7569
        %v7592 = vadd.f32 %v7553, %v7569
        %v7593 = vadd.f32 %v7554, %v7569
        %v7594 = vadd.f32 %v7555, %v7569
        %v7595 = vadd.f32 %v7556, %v7569
        %v7596 = vadd.f32 %v7557, %v7569
        %v7597 = vadd.f32 %v7558, %v7569
        %v7598 = vadd.f32 %v7559, %v7569
        %v7599 = vadd.f32 %v7560, %v7569
        %v7600 = vadd.f32 %v7561, %v7569
        %v7601 = vadd.f32 %v7562, %v7569
        %v7602 = vadd.f32 %v7563, %v7569
        %7603 = vxpose.xlu0.b32.start [1/16] %v7571, 128
        %7604 = vxpose.xlu0.b32.cont [2/16] %v7572, 128
        %7605 = vxpose.xlu0.b32.cont [3/16] %v7573, 128
        %7606 = vxpose.xlu0.b32.cont [4/16] %v7574, 128
        %7607 = vxpose.xlu0.b32.cont [5/16] %v7575, 128
        %7608 = vxpose.xlu0.b32.cont [6/16] %v7576, 128
        %7609 = vxpose.xlu0.b32.cont [7/16] %v7577, 128
        %7610 = vxpose.xlu0.b32.cont [8/16] %v7578, 128
        %7611 = vxpose.xlu0.b32.cont [9/16] %v7579, 128
        %7612 = vxpose.xlu0.b32.cont [10/16] %v7580, 128
        %7613 = vxpose.xlu0.b32.cont [11/16] %v7581, 128
        %7614 = vxpose.xlu0.b32.cont [12/16] %v7582, 128
        %7615 = vxpose.xlu0.b32.cont [13/16] %v7583, 128
        %7616 = vxpose.xlu0.b32.cont [14/16] %v7584, 128
        %7617 = vxpose.xlu0.b32.cont [15/16] %v7585, 128
        %7618 = vxpose.xlu0.b32.end [16/16] %v7586, 128
        %v7619 = vpop.trf.xlu0
        %v7620 = vpop.trf.xlu0
        %v7621 = vpop.trf.xlu0
        %v7622 = vpop.trf.xlu0
        %v7623 = vpop.trf.xlu0
        %v7624 = vpop.trf.xlu0
        %v7625 = vpop.trf.xlu0
        %v7626 = vpop.trf.xlu0
        %v7627 = vpop.trf.xlu0
        %v7628 = vpop.trf.xlu0
        %v7629 = vpop.trf.xlu0
        %v7630 = vpop.trf.xlu0
        %v7631 = vpop.trf.xlu0
        %v7632 = vpop.trf.xlu0
        %v7633 = vpop.trf.xlu0
        %v7634 = vpop.trf.xlu0
        %7635 = vxpose.xlu0.b32.start [1/16] %v7587, 128
        %7636 = vxpose.xlu0.b32.cont [2/16] %v7588, 128
        %7637 = vxpose.xlu0.b32.cont [3/16] %v7589, 128
        %7638 = vxpose.xlu0.b32.cont [4/16] %v7590, 128
        %7639 = vxpose.xlu0.b32.cont [5/16] %v7591, 128
        %7640 = vxpose.xlu0.b32.cont [6/16] %v7592, 128
        %7641 = vxpose.xlu0.b32.cont [7/16] %v7593, 128
        %7642 = vxpose.xlu0.b32.cont [8/16] %v7594, 128
        %7643 = vxpose.xlu0.b32.cont [9/16] %v7595, 128
        %7644 = vxpose.xlu0.b32.cont [10/16] %v7596, 128
        %7645 = vxpose.xlu0.b32.cont [11/16] %v7597, 128
        %7646 = vxpose.xlu0.b32.cont [12/16] %v7598, 128
        %7647 = vxpose.xlu0.b32.cont [13/16] %v7599, 128
        %7648 = vxpose.xlu0.b32.cont [14/16] %v7600, 128
        %7649 = vxpose.xlu0.b32.cont [15/16] %v7601, 128
        %7650 = vxpose.xlu0.b32.end [16/16] %v7602, 128
        %v7651 = vpop.trf.xlu0
        %v7652 = vpop.trf.xlu0
        %v7653 = vpop.trf.xlu0
        %v7654 = vpop.trf.xlu0
        %v7655 = vpop.trf.xlu0
        %v7656 = vpop.trf.xlu0
        %v7657 = vpop.trf.xlu0
        %v7658 = vpop.trf.xlu0
        %v7659 = vpop.trf.xlu0
        %v7660 = vpop.trf.xlu0
        %v7661 = vpop.trf.xlu0
        %v7662 = vpop.trf.xlu0
        %v7663 = vpop.trf.xlu0
        %v7664 = vpop.trf.xlu0
        %v7665 = vpop.trf.xlu0
        %v7666 = vpop.trf.xlu0
        %7667 = vst [vmem:[%s725] sm:$0xff] %v7619
        %7668 = vst [vmem:[%s725 + $0x8] sm:$0xff] %v7651
        %7669 = vst [vmem:[%s725 + $0x10] sm:$0xff] %v7620
        %7670 = vst [vmem:[%s725 + $0x18] sm:$0xff] %v7652
        %7671 = vst [vmem:[%s725 + $0x20] sm:$0xff] %v7621
        %7672 = vst [vmem:[%s725 + $0x28] sm:$0xff] %v7653
        %7673 = vst [vmem:[%s725 + $0x30] sm:$0xff] %v7622
        %7674 = vst [vmem:[%s725 + $0x38] sm:$0xff] %v7654
        %7675 = vst [vmem:[%s725 + $0x40] sm:$0xff] %v7623
        %7676 = vst [vmem:[%s725 + $0x48] sm:$0xff] %v7655
        %7677 = vst [vmem:[%s725 + $0x50] sm:$0xff] %v7624
        %7678 = vst [vmem:[%s725 + $0x58] sm:$0xff] %v7656
        %7679 = vst [vmem:[%s725 + $0x60] sm:$0xff] %v7625
        %7680 = vst [vmem:[%s725 + $0x68] sm:$0xff] %v7657
        %7681 = vst [vmem:[%s725 + $0x70] sm:$0xff] %v7626
        %7682 = vst [vmem:[%s725 + $0x78] sm:$0xff] %v7658
        %s7683 = sand.u32 %s510, 1
        %s7684 = scalar_lea.sflag [#allocation3], %s7683
        %s7685 = sand.u32 %s510, 1
        %s7686 = smul.addr %s7685, 128
        %s7687 = scalar_lea.vmem [#allocation2], %s7686
        // Predicated region
        $region101: #{mlp_mask_decoder_forward.3} parent=99 // pred_check
          %p7688 = pneg %p520
        $region102: #{mlp_mask_decoder_forward.3} parent=99 // pred_check_branch
          %7690 = sbr.rel (%p7688) target = $region104
        $region103: #{mlp_mask_decoder_forward.3} parent=99 // pred_region
          %s7691 = smul.u32 2, %s39
          %s7693 = ssub.s32 2048, 2048
          %7694 = vsyncadd %s7684, %s7693
          %s7695 = smul.addr %s38, 16
          %s7696 = sadd.s32 %s7691, %s7695
          %s7697 = smul.addr %s7696, 128
          %s7698 = scalar_lea.hbm %s20, %s7697
          %s7699 = sshll.u32 %s7687, 4
          %s7700 = int_to_ptr.vmem [resolvable:$true] %s7699
          %7705 = dma.vmem_to_hbm [thread:$0]  %s7700, 2048, %s7698, %s7684, 256, 256, 16
        $region104: #{mlp_mask_decoder_forward.3} parent=99 // pred_fallthru
          _
      $region100: #{mlp_mask_decoder_forward.3} parent=5 // pred_fallthru
        _
      %p7706 = scmp.le.s32.totalorder 2, %s29
      // Predicated region
      $region105: #{mlp_mask_decoder_forward.3} parent=5 // pred_check
        %p7707 = pneg %p7706
      $region106: #{mlp_mask_decoder_forward.3} parent=5 // pred_check_branch
        %7709 = sbr.rel (%p7707) target = $region108
      $region107: #{mlp_mask_decoder_forward.3} parent=5 // pred_region
        %s7710 = ssub.s32 %s29, 2
        // Predicated region
        $region109: #{mlp_mask_decoder_forward.3} parent=107 // pred_check
          %p7711 = pneg %p526
        $region110: #{mlp_mask_decoder_forward.3} parent=107 // pred_check_branch
          %7713 = sbr.rel (%p7711) target = $region112
        $region111: #{mlp_mask_decoder_forward.3} parent=107 // pred_region
          %s7714 = sand.u32 %s511, 1
          %s7715 = scalar_lea.sflag [#allocation3], %s7714
          %s7716 = sand.u32 %s511, 1
          %s7717 = smul.addr %s7716, 128
          %s7718 = scalar_lea.vmem [#allocation2], %s7717
          %7719 = dma.done %s7715, 2048
        $region112: #{mlp_mask_decoder_forward.3} parent=107 // pred_fallthru
          _
      $region108: #{mlp_mask_decoder_forward.3} parent=5 // pred_fallthru
        _
    $region6: #{mlp_mask_decoder_forward.3} parent=1 // loop_footer
      %s33 = sadd.s32 1, %s29
    $region7: #{mlp_mask_decoder_forward.3} parent=1 // loop_footer_branch
      %28 = sbr.rel target = $region3
    $region8: #{mlp_mask_decoder_forward.3} parent=1 // loop_exit
      _
    %7720 = vsyncpa [#allocation3], 1
    %s7721 = scalar_lea.sflag [#allocation3], 1
    %7722 = vsyncpa %s7721, 1

</llo_original>
